<compile_context>
chip_gen: v7x
topology: tpu7x:2x2x1
jax: 0.10.0
libtpu: 0.0.40
codegen_flags: <defaults>
</compile_context>

<pallas_src>
import math

import jax
import jax.numpy as jnp
from jax.experimental import pallas as pl
from jax.experimental.pallas import tpu as pltpu

HIDDEN = 512
N_FC4 = 7
PTS_PAD = 8          # points are zero-padded from 3 -> 8 channels
TM_MAX = 1024        # fits v7x's 64 MiB/TC VMEM with large headroom


def _round_up(x, m):
    return ((x + m - 1) // m) * m


def _choose_tm(M):
    """Row tile: amortize per-step overhead, keep grid >= 2 for v7x's 2 TCs."""
    if M <= 256:
        return _round_up(M, 16)              # single small tile (16 = bf16 sublane tile)
    if M <= 2 * TM_MAX:
        return _round_up(pl.cdiv(M, 2), 256)  # exactly 2 row tiles -> both TCs busy
    return TM_MAX


# ----------------------------------------------------------------------------
# Kernel: the full SDF MLP hot path for one tile of M rows.
# ----------------------------------------------------------------------------
def sdf_mlp_kernel(feat_ref, pts_ref,
                   w1_ref, b1_ref,
                   w2_ref, b2_ref,
                   w3p_ref, w3f_ref, b3_ref,
                   w4_ref, b4_ref,
                   w5_ref, b5_ref,
                   out_ref):
    f32 = jnp.float32
    bf16 = jnp.bfloat16

    # Features arrive as f32 from HBM; cast to bf16 here (hidden under MXU).
    feat = feat_ref[...].astype(bf16)    # (tm, F)   bf16
    pts = pts_ref[...]                   # (tm, 8)   bf16

    # fc1 / fc2: bf16 MXU matmul, f32 accumulate + bias + ReLU, store bf16.
    fe = jnp.maximum(
        jnp.dot(feat, w1_ref[...], preferred_element_type=f32) + b1_ref[...],
        0.0).astype(bf16)                # (tm, 512) bf16
    pe = jnp.maximum(
        jnp.dot(pts, w2_ref[...], preferred_element_type=f32) + b2_ref[...],
        0.0).astype(bf16)                # (tm, 512) bf16

    # fc3 via split weight — identical to concat([pe, fe], -1) @ W3 + b3,
    # without materializing a (tm, 1024) buffer each step.
    net = jnp.maximum(
        jnp.dot(pe, w3p_ref[...], preferred_element_type=f32)
        + jnp.dot(fe, w3f_ref[...], preferred_element_type=f32)
        + b3_ref[...],
        0.0).astype(bf16)                # (tm, 512) bf16

    # 7 weight-normed Linear(512, 512) + ReLU (weights pre-normalized in glue).
    # Kept as an unrolled Python loop (good LLO visibility; no spill evidence).
    for i in range(N_FC4):
        net = jnp.maximum(
            jnp.dot(net, w4_ref[i], preferred_element_type=f32) + b4_ref[i, :],
            0.0).astype(bf16)

    # fc5 (512 -> 1): f32 VPU multiply + lane reduction (keeps the ~1e-6
    # weight perturbation, and avoids a 1-wide MXU output pass).
    out_ref[...] = (jnp.sum(net.astype(f32) * w5_ref[...], axis=-1, keepdims=True)
                    + b5_ref[...])       # (tm, 1) f32


# ----------------------------------------------------------------------------
# Wrapper
# ----------------------------------------------------------------------------
def neural_implicit_field_forward(features, points, kparams, *, tm=None):
    """features: [B, N, F] f32, points: [B, N, 3] f32 -> sdf: [B, N, 1] f32."""
    B, N, F = features.shape
    M = B * N

    if tm is None:
        tm = _choose_tm(M)
    grid = pl.cdiv(M, tm)

    # Metadata-only reshape; no full-array astype/pad HBM pass on features.
    feat2d = features.reshape(M, F)
    # Points are tiny: pad 3 -> 8 lanes + cast bf16 (negligible HBM traffic).
    pts2d = jnp.pad(points.reshape(M, 3).astype(jnp.bfloat16),
                    ((0, 0), (0, PTS_PAD - 3)))

    (w1, b1, w2, b2, w3p, w3f, b3, w4, b4, w5, b5) = kparams

    H = HIDDEN
    flops = 2 * grid * tm * (F * H + PTS_PAD * H + 2 * H * H + N_FC4 * H * H + H)
    weight_bytes = sum(int(a.size) * a.dtype.itemsize for a in kparams)
    bytes_accessed = (int(feat2d.size) * 4 + int(pts2d.size) * 2
                      + weight_bytes + M * 4)

    # Grid-invariant operands: whole array resident in VMEM, single-buffered,
    # DMA'd once per kernel invocation (not per grid step).
    vmem = pl.BlockSpec(memory_space=pltpu.MemorySpace.VMEM)

    out = pl.pallas_call(
        sdf_mlp_kernel,
        out_shape=jax.ShapeDtypeStruct((M, 1), jnp.float32),
        grid=(grid,),
        in_specs=[
            pl.BlockSpec((tm, F), lambda i: (i, 0)),          # features tile (f32)
            pl.BlockSpec((tm, PTS_PAD), lambda i: (i, 0)),    # points tile (bf16)
            vmem, vmem,            # w1, b1
            vmem, vmem,            # w2, b2
            vmem, vmem, vmem,      # w3p, w3f, b3
            vmem, vmem,            # w4, b4
            vmem, vmem,            # w5, b5
        ],
        out_specs=pl.BlockSpec((tm, 1), lambda i: (i, 0)),
        compiler_params=pltpu.CompilerParams(
            dimension_semantics=("parallel",),
            vmem_limit_bytes=48 * 1024 * 1024,   # safe on v7x (64 MiB/TC)
        ),
        cost_estimate=pl.CostEstimate(
            flops=flops, transcendentals=0, bytes_accessed=bytes_accessed),
    )(feat2d, pts2d, w1, b1, w2, b2, w3p, w3f, b3, w4, b4, w5, b5)

    return out.reshape(B, N, 1)


# ----------------------------------------------------------------------------
# Parameter prep: module params ([in, out] f32) -> kernel layout / dtypes.
# ----------------------------------------------------------------------------
def prepare_kernel_params(params):
    (w1, b1, w2, b2, w3, b3, w4, b4, w5, b5) = params
    H = HIDDEN
    bf16 = jnp.bfloat16

    # Zero-pad fc2 weight rows 3 -> 8 to match the lane-padded points.
    w2p = jnp.pad(w2, ((0, PTS_PAD - w2.shape[0]), (0, 0)))

    return (
        w1.astype(bf16), b1,                                   # fc1
        w2p.astype(bf16), b2,                                  # fc2 (K padded)
        w3[:H].astype(bf16), w3[H:].astype(bf16), b3,          # fc3 split
        w4.astype(bf16), b4,                                   # fc4 stack
        w5.reshape(1, H).astype(jnp.float32),                  # fc5 kept f32
        b5.reshape(1, 1).astype(jnp.float32),
    )


# ----------------------------------------------------------------------------
# Deterministic parameter init mirroring the PyTorch module's __init__.
# Weights stored pre-transposed as [in, out]; biases as [1, out].
# ----------------------------------------------------------------------------
def init_params(key, feature_dim):
    keys = jax.random.split(key, 16)
    H = HIDDEN

    def linear_default(k, fan_in, fan_out):
        kw, kb = jax.random.split(k)
        bound = 1.0 / math.sqrt(fan_in)
        w = jax.random.uniform(kw, (fan_out, fan_in), jnp.float32, -bound, bound)
        b = jax.random.uniform(kb, (fan_out,), jnp.float32, -bound, bound)
        return w, b

    # fc1: Linear(feature_dim, 512), fc2: Linear(3, 512)  (default init)
    w1, b1 = linear_default(keys[0], feature_dim, H)
    w2, b2 = linear_default(keys[1], 3, H)

    # fc3: Linear(1024, 512), bias=0, weight ~ N(0, sqrt(2)/sqrt(512))
    std = math.sqrt(2.0) / math.sqrt(H)
    w3 = std * jax.random.normal(keys[2], (H, 2 * H), jnp.float32)
    b3 = jnp.zeros((H,), jnp.float32)

    # fc4_i: weight-normed Linear(512, 512); v ~ N(0, std), bias=0,
    # g initialized to ||v|| per output row -> effective W == v at init
    # (weight_norm reparameterization applied explicitly).
    w4_list, b4_list = [], []
    for i in range(N_FC4):
        v = std * jax.random.normal(keys[3 + i], (H, H), jnp.float32)   # [out, in]
        v_norm = jnp.sqrt(jnp.sum(v ** 2, axis=1, keepdims=True))       # [out, 1]
        g = v_norm[:, 0]
        w_eff = g[:, None] * v / v_norm
        w4_list.append(w_eff)
        b4_list.append(jnp.zeros((H,), jnp.float32))
    w4 = jnp.stack(w4_list, axis=0)                                     # [7, out, in]
    b4 = jnp.stack(b4_list, axis=0)                                     # [7, out]

    # fc5: Linear(512, 1), weight ~ N(2*sqrt(pi)/sqrt(512), 1e-6), bias=-0.5
    mean5 = 2.0 * math.sqrt(math.pi) / math.sqrt(H)
    w5 = mean5 + 1e-6 * jax.random.normal(keys[10], (1, H), jnp.float32)
    b5 = jnp.full((1,), -0.5, jnp.float32)

    return (
        w1.T, b1[None, :],
        w2.T, b2[None, :],
        w3.T, b3[None, :],
        jnp.transpose(w4, (0, 2, 1)), b4,
        w5.T, b5[None, :],
    )


# ----------------------------------------------------------------------------
# Pure-JAX reference (f32, for correctness sanity check).
# ----------------------------------------------------------------------------
def reference_forward(features, points, params):
    (w1, b1, w2, b2, w3, b3, w4, b4, w5, b5) = params
    fe = jax.nn.relu(features @ w1 + b1[0])
    pe = jax.nn.relu(points @ w2 + b2[0])
    net = jnp.concatenate([pe, fe], axis=-1)
    net = jax.nn.relu(net @ w3 + b3[0])
    for i in range(N_FC4):
        net = jax.nn.relu(net @ w4[i] + b4[i])
    return net @ w5 + b5[0]


if __name__ == "__main__":
    key = jax.random.PRNGKey(0)
    k_feat, k_pts, k_params = jax.random.split(key, 3)

    B, N, FEATURE_DIM = 2, 8, 128
    features = jax.random.normal(k_feat, (B, N, FEATURE_DIM), jnp.float32)
    points = jax.random.normal(k_pts, (B, N, 3), jnp.float32)

    params = init_params(k_params, FEATURE_DIM)
    kparams = prepare_kernel_params(params)

    sdf = neural_implicit_field_forward(features, points, kparams)
    sdf = jax.block_until_ready(sdf)

    ref = reference_forward(features, points, params)
    assert sdf.shape == (B, N, 1)
    # bf16 weights/activations vs f32 reference -> loosened tolerance
    # (matmul accumulation and fc5 stay f32, same precision as before).
    assert jnp.allclose(sdf, ref, atol=0.15, rtol=0.02), "mismatch vs reference"

    # TODO(synk): get_gradient (autograd of SDF w.r.t. points) is not part of
    # forward; it would require a hand-written backward-pass kernel.
    print("KERNEL_OK")
</pallas_src>

<mosaic_0001>
module attributes {stable_mosaic.version = 11 : i64} {
  func.func @sdf_mlp_kernel(%arg0: i32, %arg1: memref<16x128xf32, #tpu.memory_space<vmem>>, %arg2: memref<16x8xbf16, #tpu.memory_space<vmem>>, %arg3: memref<128x512xbf16, #tpu.memory_space<vmem>>, %arg4: memref<1x512xf32, #tpu.memory_space<vmem>>, %arg5: memref<8x512xbf16, #tpu.memory_space<vmem>>, %arg6: memref<1x512xf32, #tpu.memory_space<vmem>>, %arg7: memref<512x512xbf16, #tpu.memory_space<vmem>>, %arg8: memref<512x512xbf16, #tpu.memory_space<vmem>>, %arg9: memref<1x512xf32, #tpu.memory_space<vmem>>, %arg10: memref<7x512x512xbf16, #tpu.memory_space<vmem>>, %arg11: memref<7x512xf32, #tpu.memory_space<vmem>>, %arg12: memref<1x512xf32, #tpu.memory_space<vmem>>, %arg13: memref<1x1xf32, #tpu.memory_space<vmem>>, %arg14: memref<16x1xf32, #tpu.memory_space<vmem>>) attributes {dimension_semantics = [#tpu.dimension_semantics<parallel>], iteration_bounds = array<i64: 1>, scalar_prefetch = 0 : i64, scratch_operands = 0 : i64, tpu.core_type = #tpu.core_type<tc>, window_params = [{transform_indices = @transform_0, window_bounds = array<i64: 16, 128>}, {transform_indices = @transform_1, window_bounds = array<i64: 16, 8>}, {pipeline_mode = #tpu.pipeline_mode<synchronous>, transform_indices = @transform_2, window_bounds = array<i64: 128, 512>}, {pipeline_mode = #tpu.pipeline_mode<synchronous>, transform_indices = @transform_3, window_bounds = array<i64: 1, 512>}, {pipeline_mode = #tpu.pipeline_mode<synchronous>, transform_indices = @transform_4, window_bounds = array<i64: 8, 512>}, {pipeline_mode = #tpu.pipeline_mode<synchronous>, transform_indices = @transform_5, window_bounds = array<i64: 1, 512>}, {pipeline_mode = #tpu.pipeline_mode<synchronous>, transform_indices = @transform_6, window_bounds = array<i64: 512, 512>}, {pipeline_mode = #tpu.pipeline_mode<synchronous>, transform_indices = @transform_7, window_bounds = array<i64: 512, 512>}, {pipeline_mode = #tpu.pipeline_mode<synchronous>, transform_indices = @transform_8, window_bounds = array<i64: 1, 512>}, {pipeline_mode = #tpu.pipeline_mode<synchronous>, transform_indices = @transform_9, window_bounds = array<i64: 7, 512, 512>}, {pipeline_mode = #tpu.pipeline_mode<synchronous>, transform_indices = @transform_10, window_bounds = array<i64: 7, 512>}, {pipeline_mode = #tpu.pipeline_mode<synchronous>, transform_indices = @transform_11, window_bounds = array<i64: 1, 512>}, {pipeline_mode = #tpu.pipeline_mode<synchronous>, transform_indices = @transform_12, window_bounds = array<i64: 1, 1>}, {transform_indices = @transform_13, window_bounds = array<i64: 16, 1>}]} {
    %c0 = arith.constant 0 : index
    %c0_0 = arith.constant 0 : index
    %0 = vector.load %arg1[%c0, %c0_0] : memref<16x128xf32, #tpu.memory_space<vmem>>, vector<16x128xf32>
    %1 = arith.truncf %0 : vector<16x128xf32> to vector<16x128xbf16>
    %c0_1 = arith.constant 0 : index
    %c0_2 = arith.constant 0 : index
    %2 = vector.load %arg2[%c0_1, %c0_2] : memref<16x8xbf16, #tpu.memory_space<vmem>>, vector<16x8xbf16>
    %c0_3 = arith.constant 0 : index
    %c0_4 = arith.constant 0 : index
    %3 = vector.load %arg3[%c0_3, %c0_4] : memref<128x512xbf16, #tpu.memory_space<vmem>>, vector<128x512xbf16>
    %cst = arith.constant dense<0.000000e+00> : vector<16x512xf32>
    %4 = tpu.matmul %1, %3, %cst {dimension_numbers = #tpu.dot_dimension_numbers<[1], [0], [0], [1], [0, 0, 1, 1], [], []>} : vector<16x128xbf16>, vector<128x512xbf16>, vector<16x512xf32> -> vector<16x512xf32>
    %c0_5 = arith.constant 0 : index
    %c0_6 = arith.constant 0 : index
    %5 = vector.load %arg4[%c0_5, %c0_6] : memref<1x512xf32, #tpu.memory_space<vmem>>, vector<1x512xf32>
    %6 = vector.broadcast %5 : vector<1x512xf32> to vector<16x512xf32>
    %7 = arith.addf %4, %6 : vector<16x512xf32>
    %cst_7 = arith.constant 0.000000e+00 : f32
    %8 = vector.broadcast %cst_7 : f32 to vector<16x512xf32>
    %9 = arith.maximumf %7, %8 : vector<16x512xf32>
    %10 = arith.truncf %9 : vector<16x512xf32> to vector<16x512xbf16>
    %c0_8 = arith.constant 0 : index
    %c0_9 = arith.constant 0 : index
    %11 = vector.load %arg5[%c0_8, %c0_9] : memref<8x512xbf16, #tpu.memory_space<vmem>>, vector<8x512xbf16>
    %cst_10 = arith.constant dense<0.000000e+00> : vector<16x512xf32>
    %12 = tpu.matmul %2, %11, %cst_10 {dimension_numbers = #tpu.dot_dimension_numbers<[1], [0], [0], [1], [0, 0, 1, 1], [], []>} : vector<16x8xbf16>, vector<8x512xbf16>, vector<16x512xf32> -> vector<16x512xf32>
    %c0_11 = arith.constant 0 : index
    %c0_12 = arith.constant 0 : index
    %13 = vector.load %arg6[%c0_11, %c0_12] : memref<1x512xf32, #tpu.memory_space<vmem>>, vector<1x512xf32>
    %14 = vector.broadcast %13 : vector<1x512xf32> to vector<16x512xf32>
    %15 = arith.addf %12, %14 : vector<16x512xf32>
    %cst_13 = arith.constant 0.000000e+00 : f32
    %16 = vector.broadcast %cst_13 : f32 to vector<16x512xf32>
    %17 = arith.maximumf %15, %16 : vector<16x512xf32>
    %18 = arith.truncf %17 : vector<16x512xf32> to vector<16x512xbf16>
    %c0_14 = arith.constant 0 : index
    %c0_15 = arith.constant 0 : index
    %19 = vector.load %arg7[%c0_14, %c0_15] : memref<512x512xbf16, #tpu.memory_space<vmem>>, vector<512x512xbf16>
    %cst_16 = arith.constant dense<0.000000e+00> : vector<16x512xf32>
    %20 = tpu.matmul %18, %19, %cst_16 {dimension_numbers = #tpu.dot_dimension_numbers<[1], [0], [0], [1], [0, 0, 1, 1], [], []>} : vector<16x512xbf16>, vector<512x512xbf16>, vector<16x512xf32> -> vector<16x512xf32>
    %c0_17 = arith.constant 0 : index
    %c0_18 = arith.constant 0 : index
    %21 = vector.load %arg8[%c0_17, %c0_18] : memref<512x512xbf16, #tpu.memory_space<vmem>>, vector<512x512xbf16>
    %cst_19 = arith.constant dense<0.000000e+00> : vector<16x512xf32>
    %22 = tpu.matmul %10, %21, %cst_19 {dimension_numbers = #tpu.dot_dimension_numbers<[1], [0], [0], [1], [0, 0, 1, 1], [], []>} : vector<16x512xbf16>, vector<512x512xbf16>, vector<16x512xf32> -> vector<16x512xf32>
    %23 = arith.addf %20, %22 : vector<16x512xf32>
    %c0_20 = arith.constant 0 : index
    %c0_21 = arith.constant 0 : index
    %24 = vector.load %arg9[%c0_20, %c0_21] : memref<1x512xf32, #tpu.memory_space<vmem>>, vector<1x512xf32>
    %25 = vector.broadcast %24 : vector<1x512xf32> to vector<16x512xf32>
    %26 = arith.addf %23, %25 : vector<16x512xf32>
    %cst_22 = arith.constant 0.000000e+00 : f32
    %27 = vector.broadcast %cst_22 : f32 to vector<16x512xf32>
    %28 = arith.maximumf %26, %27 : vector<16x512xf32>
    %29 = arith.truncf %28 : vector<16x512xf32> to vector<16x512xbf16>
    %c0_23 = arith.constant 0 : index
    %c0_24 = arith.constant 0 : index
    %c0_25 = arith.constant 0 : index
    %30 = vector.load %arg10[%c0_23, %c0_24, %c0_25] : memref<7x512x512xbf16, #tpu.memory_space<vmem>>, vector<1x512x512xbf16>
    %31 = vector.shape_cast %30 : vector<1x512x512xbf16> to vector<512x512xbf16>
    %cst_26 = arith.constant dense<0.000000e+00> : vector<16x512xf32>
    %32 = tpu.matmul %29, %31, %cst_26 {dimension_numbers = #tpu.dot_dimension_numbers<[1], [0], [0], [1], [0, 0, 1, 1], [], []>} : vector<16x512xbf16>, vector<512x512xbf16>, vector<16x512xf32> -> vector<16x512xf32>
    %c0_27 = arith.constant 0 : index
    %c0_28 = arith.constant 0 : index
    %33 = vector.load %arg11[%c0_27, %c0_28] : memref<7x512xf32, #tpu.memory_space<vmem>>, vector<1x512xf32>
    %34 = vector.shape_cast %33 : vector<1x512xf32> to vector<512xf32>
    %35 = vector.shape_cast %34 : vector<512xf32> to vector<1x512xf32>
    %36 = vector.broadcast %35 : vector<1x512xf32> to vector<16x512xf32>
    %37 = arith.addf %32, %36 : vector<16x512xf32>
    %cst_29 = arith.constant 0.000000e+00 : f32
    %38 = vector.broadcast %cst_29 : f32 to vector<16x512xf32>
    %39 = arith.maximumf %37, %38 : vector<16x512xf32>
    %40 = arith.truncf %39 : vector<16x512xf32> to vector<16x512xbf16>
    %c1 = arith.constant 1 : index
    %c0_30 = arith.constant 0 : index
    %c0_31 = arith.constant 0 : index
    %41 = vector.load %arg10[%c1, %c0_30, %c0_31] : memref<7x512x512xbf16, #tpu.memory_space<vmem>>, vector<1x512x512xbf16>
    %42 = vector.shape_cast %41 : vector<1x512x512xbf16> to vector<512x512xbf16>
    %cst_32 = arith.constant dense<0.000000e+00> : vector<16x512xf32>
    %43 = tpu.matmul %40, %42, %cst_32 {dimension_numbers = #tpu.dot_dimension_numbers<[1], [0], [0], [1], [0, 0, 1, 1], [], []>} : vector<16x512xbf16>, vector<512x512xbf16>, vector<16x512xf32> -> vector<16x512xf32>
    %c1_33 = arith.constant 1 : index
    %c0_34 = arith.constant 0 : index
    %44 = vector.load %arg11[%c1_33, %c0_34] : memref<7x512xf32, #tpu.memory_space<vmem>>, vector<1x512xf32>
    %45 = vector.shape_cast %44 : vector<1x512xf32> to vector<512xf32>
    %46 = vector.shape_cast %45 : vector<512xf32> to vector<1x512xf32>
    %47 = vector.broadcast %46 : vector<1x512xf32> to vector<16x512xf32>
    %48 = arith.addf %43, %47 : vector<16x512xf32>
    %cst_35 = arith.constant 0.000000e+00 : f32
    %49 = vector.broadcast %cst_35 : f32 to vector<16x512xf32>
    %50 = arith.maximumf %48, %49 : vector<16x512xf32>
    %51 = arith.truncf %50 : vector<16x512xf32> to vector<16x512xbf16>
    %c2 = arith.constant 2 : index
    %c0_36 = arith.constant 0 : index
    %c0_37 = arith.constant 0 : index
    %52 = vector.load %arg10[%c2, %c0_36, %c0_37] : memref<7x512x512xbf16, #tpu.memory_space<vmem>>, vector<1x512x512xbf16>
    %53 = vector.shape_cast %52 : vector<1x512x512xbf16> to vector<512x512xbf16>
    %cst_38 = arith.constant dense<0.000000e+00> : vector<16x512xf32>
    %54 = tpu.matmul %51, %53, %cst_38 {dimension_numbers = #tpu.dot_dimension_numbers<[1], [0], [0], [1], [0, 0, 1, 1], [], []>} : vector<16x512xbf16>, vector<512x512xbf16>, vector<16x512xf32> -> vector<16x512xf32>
    %c2_39 = arith.constant 2 : index
    %c0_40 = arith.constant 0 : index
    %55 = vector.load %arg11[%c2_39, %c0_40] : memref<7x512xf32, #tpu.memory_space<vmem>>, vector<1x512xf32>
    %56 = vector.shape_cast %55 : vector<1x512xf32> to vector<512xf32>
    %57 = vector.shape_cast %56 : vector<512xf32> to vector<1x512xf32>
    %58 = vector.broadcast %57 : vector<1x512xf32> to vector<16x512xf32>
    %59 = arith.addf %54, %58 : vector<16x512xf32>
    %cst_41 = arith.constant 0.000000e+00 : f32
    %60 = vector.broadcast %cst_41 : f32 to vector<16x512xf32>
    %61 = arith.maximumf %59, %60 : vector<16x512xf32>
    %62 = arith.truncf %61 : vector<16x512xf32> to vector<16x512xbf16>
    %c3 = arith.constant 3 : index
    %c0_42 = arith.constant 0 : index
    %c0_43 = arith.constant 0 : index
    %63 = vector.load %arg10[%c3, %c0_42, %c0_43] : memref<7x512x512xbf16, #tpu.memory_space<vmem>>, vector<1x512x512xbf16>
    %64 = vector.shape_cast %63 : vector<1x512x512xbf16> to vector<512x512xbf16>
    %cst_44 = arith.constant dense<0.000000e+00> : vector<16x512xf32>
    %65 = tpu.matmul %62, %64, %cst_44 {dimension_numbers = #tpu.dot_dimension_numbers<[1], [0], [0], [1], [0, 0, 1, 1], [], []>} : vector<16x512xbf16>, vector<512x512xbf16>, vector<16x512xf32> -> vector<16x512xf32>
    %c3_45 = arith.constant 3 : index
    %c0_46 = arith.constant 0 : index
    %66 = vector.load %arg11[%c3_45, %c0_46] : memref<7x512xf32, #tpu.memory_space<vmem>>, vector<1x512xf32>
    %67 = vector.shape_cast %66 : vector<1x512xf32> to vector<512xf32>
    %68 = vector.shape_cast %67 : vector<512xf32> to vector<1x512xf32>
    %69 = vector.broadcast %68 : vector<1x512xf32> to vector<16x512xf32>
    %70 = arith.addf %65, %69 : vector<16x512xf32>
    %cst_47 = arith.constant 0.000000e+00 : f32
    %71 = vector.broadcast %cst_47 : f32 to vector<16x512xf32>
    %72 = arith.maximumf %70, %71 : vector<16x512xf32>
    %73 = arith.truncf %72 : vector<16x512xf32> to vector<16x512xbf16>
    %c4 = arith.constant 4 : index
    %c0_48 = arith.constant 0 : index
    %c0_49 = arith.constant 0 : index
    %74 = vector.load %arg10[%c4, %c0_48, %c0_49] : memref<7x512x512xbf16, #tpu.memory_space<vmem>>, vector<1x512x512xbf16>
    %75 = vector.shape_cast %74 : vector<1x512x512xbf16> to vector<512x512xbf16>
    %cst_50 = arith.constant dense<0.000000e+00> : vector<16x512xf32>
    %76 = tpu.matmul %73, %75, %cst_50 {dimension_numbers = #tpu.dot_dimension_numbers<[1], [0], [0], [1], [0, 0, 1, 1], [], []>} : vector<16x512xbf16>, vector<512x512xbf16>, vector<16x512xf32> -> vector<16x512xf32>
    %c4_51 = arith.constant 4 : index
    %c0_52 = arith.constant 0 : index
    %77 = vector.load %arg11[%c4_51, %c0_52] : memref<7x512xf32, #tpu.memory_space<vmem>>, vector<1x512xf32>
    %78 = vector.shape_cast %77 : vector<1x512xf32> to vector<512xf32>
    %79 = vector.shape_cast %78 : vector<512xf32> to vector<1x512xf32>
    %80 = vector.broadcast %79 : vector<1x512xf32> to vector<16x512xf32>
    %81 = arith.addf %76, %80 : vector<16x512xf32>
    %cst_53 = arith.constant 0.000000e+00 : f32
    %82 = vector.broadcast %cst_53 : f32 to vector<16x512xf32>
    %83 = arith.maximumf %81, %82 : vector<16x512xf32>
    %84 = arith.truncf %83 : vector<16x512xf32> to vector<16x512xbf16>
    %c5 = arith.constant 5 : index
    %c0_54 = arith.constant 0 : index
    %c0_55 = arith.constant 0 : index
    %85 = vector.load %arg10[%c5, %c0_54, %c0_55] : memref<7x512x512xbf16, #tpu.memory_space<vmem>>, vector<1x512x512xbf16>
    %86 = vector.shape_cast %85 : vector<1x512x512xbf16> to vector<512x512xbf16>
    %cst_56 = arith.constant dense<0.000000e+00> : vector<16x512xf32>
    %87 = tpu.matmul %84, %86, %cst_56 {dimension_numbers = #tpu.dot_dimension_numbers<[1], [0], [0], [1], [0, 0, 1, 1], [], []>} : vector<16x512xbf16>, vector<512x512xbf16>, vector<16x512xf32> -> vector<16x512xf32>
    %c5_57 = arith.constant 5 : index
    %c0_58 = arith.constant 0 : index
    %88 = vector.load %arg11[%c5_57, %c0_58] : memref<7x512xf32, #tpu.memory_space<vmem>>, vector<1x512xf32>
    %89 = vector.shape_cast %88 : vector<1x512xf32> to vector<512xf32>
    %90 = vector.shape_cast %89 : vector<512xf32> to vector<1x512xf32>
    %91 = vector.broadcast %90 : vector<1x512xf32> to vector<16x512xf32>
    %92 = arith.addf %87, %91 : vector<16x512xf32>
    %cst_59 = arith.constant 0.000000e+00 : f32
    %93 = vector.broadcast %cst_59 : f32 to vector<16x512xf32>
    %94 = arith.maximumf %92, %93 : vector<16x512xf32>
    %95 = arith.truncf %94 : vector<16x512xf32> to vector<16x512xbf16>
    %c6 = arith.constant 6 : index
    %c0_60 = arith.constant 0 : index
    %c0_61 = arith.constant 0 : index
    %96 = vector.load %arg10[%c6, %c0_60, %c0_61] : memref<7x512x512xbf16, #tpu.memory_space<vmem>>, vector<1x512x512xbf16>
    %97 = vector.shape_cast %96 : vector<1x512x512xbf16> to vector<512x512xbf16>
    %cst_62 = arith.constant dense<0.000000e+00> : vector<16x512xf32>
    %98 = tpu.matmul %95, %97, %cst_62 {dimension_numbers = #tpu.dot_dimension_numbers<[1], [0], [0], [1], [0, 0, 1, 1], [], []>} : vector<16x512xbf16>, vector<512x512xbf16>, vector<16x512xf32> -> vector<16x512xf32>
    %c6_63 = arith.constant 6 : index
    %c0_64 = arith.constant 0 : index
    %99 = vector.load %arg11[%c6_63, %c0_64] : memref<7x512xf32, #tpu.memory_space<vmem>>, vector<1x512xf32>
    %100 = vector.shape_cast %99 : vector<1x512xf32> to vector<512xf32>
    %101 = vector.shape_cast %100 : vector<512xf32> to vector<1x512xf32>
    %102 = vector.broadcast %101 : vector<1x512xf32> to vector<16x512xf32>
    %103 = arith.addf %98, %102 : vector<16x512xf32>
    %cst_65 = arith.constant 0.000000e+00 : f32
    %104 = vector.broadcast %cst_65 : f32 to vector<16x512xf32>
    %105 = arith.maximumf %103, %104 : vector<16x512xf32>
    %106 = arith.truncf %105 : vector<16x512xf32> to vector<16x512xbf16>
    %107 = arith.extf %106 : vector<16x512xbf16> to vector<16x512xf32>
    %c0_66 = arith.constant 0 : index
    %c0_67 = arith.constant 0 : index
    %108 = vector.load %arg12[%c0_66, %c0_67] : memref<1x512xf32, #tpu.memory_space<vmem>>, vector<1x512xf32>
    %109 = vector.broadcast %108 : vector<1x512xf32> to vector<16x512xf32>
    %110 = arith.mulf %107, %109 : vector<16x512xf32>
    %cst_68 = arith.constant dense<0.000000e+00> : vector<16xf32>
    %111 = vector.multi_reduction <add>, %110, %cst_68 [1] : vector<16x512xf32> to vector<16xf32>
    %112 = vector.shape_cast %111 : vector<16xf32> to vector<16x1xf32>
    %c0_69 = arith.constant 0 : index
    %c0_70 = arith.constant 0 : index
    %113 = vector.load %arg13[%c0_69, %c0_70] : memref<1x1xf32, #tpu.memory_space<vmem>>, vector<1x1xf32>
    %114 = vector.broadcast %113 : vector<1x1xf32> to vector<16x1xf32>
    %115 = arith.addf %112, %114 : vector<16x1xf32>
    %c0_71 = arith.constant 0 : index
    %c0_72 = arith.constant 0 : index
    %116 = vector.load %arg14[%c0_71, %c0_72] : memref<16x1xf32, #tpu.memory_space<vmem>>, vector<16x1xf32>
    tpu.vector_store %arg14[%c0_71, %c0_72], %115 {strides = array<i32>} : memref<16x1xf32, #tpu.memory_space<vmem>>, vector<16x1xf32>,
    return
  }
  func.func @transform_0(%arg0: i32) -> (i32, i32) {
    %c0_i32 = arith.constant 0 : i32
    %c0_i32_0 = arith.constant 0 : i32
    return %arg0, %c0_i32 : i32, i32
  }
  func.func @transform_1(%arg0: i32) -> (i32, i32) {
    %c0_i32 = arith.constant 0 : i32
    %c0_i32_0 = arith.constant 0 : i32
    return %arg0, %c0_i32 : i32, i32
  }
  func.func @transform_2(%arg0: i32) -> (i32, i32) {
    %c0_i32 = arith.constant 0 : i32
    %c0_i32_0 = arith.constant 0 : i32
    %c0_i32_1 = arith.constant 0 : i32
    return %c0_i32, %c0_i32_0 : i32, i32
  }
  func.func @transform_3(%arg0: i32) -> (i32, i32) {
    %c0_i32 = arith.constant 0 : i32
    %c0_i32_0 = arith.constant 0 : i32
    %c0_i32_1 = arith.constant 0 : i32
    return %c0_i32, %c0_i32_0 : i32, i32
  }
  func.func @transform_4(%arg0: i32) -> (i32, i32) {
    %c0_i32 = arith.constant 0 : i32
    %c0_i32_0 = arith.constant 0 : i32
    %c0_i32_1 = arith.constant 0 : i32
    return %c0_i32, %c0_i32_0 : i32, i32
  }
  func.func @transform_5(%arg0: i32) -> (i32, i32) {
    %c0_i32 = arith.constant 0 : i32
    %c0_i32_0 = arith.constant 0 : i32
    %c0_i32_1 = arith.constant 0 : i32
    return %c0_i32, %c0_i32_0 : i32, i32
  }
  func.func @transform_6(%arg0: i32) -> (i32, i32) {
    %c0_i32 = arith.constant 0 : i32
    %c0_i32_0 = arith.constant 0 : i32
    %c0_i32_1 = arith.constant 0 : i32
    return %c0_i32, %c0_i32_0 : i32, i32
  }
  func.func @transform_7(%arg0: i32) -> (i32, i32) {
    %c0_i32 = arith.constant 0 : i32
    %c0_i32_0 = arith.constant 0 : i32
    %c0_i32_1 = arith.constant 0 : i32
    return %c0_i32, %c0_i32_0 : i32, i32
  }
  func.func @transform_8(%arg0: i32) -> (i32, i32) {
    %c0_i32 = arith.constant 0 : i32
    %c0_i32_0 = arith.constant 0 : i32
    %c0_i32_1 = arith.constant 0 : i32
    return %c0_i32, %c0_i32_0 : i32, i32
  }
  func.func @transform_9(%arg0: i32) -> (i32, i32, i32) {
    %c0_i32 = arith.constant 0 : i32
    %c0_i32_0 = arith.constant 0 : i32
    %c0_i32_1 = arith.constant 0 : i32
    %c0_i32_2 = arith.constant 0 : i32
    return %c0_i32, %c0_i32_0, %c0_i32_1 : i32, i32, i32
  }
  func.func @transform_10(%arg0: i32) -> (i32, i32) {
    %c0_i32 = arith.constant 0 : i32
    %c0_i32_0 = arith.constant 0 : i32
    %c0_i32_1 = arith.constant 0 : i32
    return %c0_i32, %c0_i32_0 : i32, i32
  }
  func.func @transform_11(%arg0: i32) -> (i32, i32) {
    %c0_i32 = arith.constant 0 : i32
    %c0_i32_0 = arith.constant 0 : i32
    %c0_i32_1 = arith.constant 0 : i32
    return %c0_i32, %c0_i32_0 : i32, i32
  }
  func.func @transform_12(%arg0: i32) -> (i32, i32) {
    %c0_i32 = arith.constant 0 : i32
    %c0_i32_0 = arith.constant 0 : i32
    %c0_i32_1 = arith.constant 0 : i32
    return %c0_i32, %c0_i32_0 : i32, i32
  }
  func.func @transform_13(%arg0: i32) -> (i32, i32) {
    %c0_i32 = arith.constant 0 : i32
    %c0_i32_0 = arith.constant 0 : i32
    return %arg0, %c0_i32 : i32, i32
  }
}

</mosaic_0001>

<llo_original>
// kernel: tpu_custom_call.1
$region0: #{tpu_custom_call.1}
  #allocation0 [shape = 'u32[]', space=smem, size = 0x4, offset = 0x4, fixed_abs, tag = 'smem constant byte address 0x4 - core index']
  #allocation1 [shape = 'u32[144,128]{1,0:T(1,128)}', space=vmem, size = 0x12000, scoped, tag = 'internal scratch']
  #allocation2 [shape = 'f32[1,1]{1,0:T(1,128)S(1)}', space=vmem, size = 0x200, scoped, tag = 'scoped memory for tpu_custom_call.1']
  %s0 = inlined_call_operand.hbm [shape: f32[16,128], index: 0, kind: input, shape index: {}]
  %s1 = inlined_call_operand.vmem [shape: bf16[16,8], index: 1, kind: input, shape index: {}]
  %s2 = inlined_call_operand.hbm [shape: bf16[128,512], index: 2, kind: input, shape index: {}]
  %s3 = inlined_call_operand.hbm [shape: f32[1,512], index: 3, kind: input, shape index: {}]
  %s4 = inlined_call_operand.hbm [shape: bf16[8,512], index: 4, kind: input, shape index: {}]
  %s5 = inlined_call_operand.hbm [shape: f32[1,512], index: 5, kind: input, shape index: {}]
  %s6 = inlined_call_operand.hbm [shape: bf16[512,512], index: 6, kind: input, shape index: {}]
  %s7 = inlined_call_operand.hbm [shape: bf16[512,512], index: 7, kind: input, shape index: {}]
  %s8 = inlined_call_operand.hbm [shape: f32[1,512], index: 8, kind: input, shape index: {}]
  %s9 = inlined_call_operand.hbm [shape: bf16[7,512,512], index: 9, kind: input, shape index: {}]
  %s10 = inlined_call_operand.hbm [shape: f32[7,512], index: 10, kind: input, shape index: {}]
  %s11 = inlined_call_operand.hbm [shape: f32[1,512], index: 11, kind: input, shape index: {}]
  %s12 = inlined_call_operand.<no memory space> [shape: f32[1,1], index: 12, kind: input, shape index: {}]
  %s13 = inlined_call_operand.vmem [shape: f32[16,1], index: 13, kind: output, shape index: {}]
  %s14 = sld [smem:[#allocation0]]
  $region106: #{tpu_custom_call.1} parent=0
    _
  %s16 = ssub.s32 1, %s14
  %s17 = scalar_select 0, %s16, %s14
  %v18 = vstv %s12
  %19 = vst [vmem:[#allocation2] sm:$0x1] %v18
  $region1: #{tpu_custom_call.1} parent=0
    #allocation3 [shape = 'u8[8192]{0}', space=vmem, size = 0x2000, scoped, tag = 'input window, operand 0, single buffered']
    #allocation4 [shape = 's32[1]{0}', space=sflag, size = 0x4, scoped, tag = 'scoped memory for tpu_custom_call.1']
    #allocation5 [shape = 'u8[131072]{0}', space=vmem, size = 0x20000, scoped, tag = 'input window, operand 2, single buffered']
    #allocation6 [shape = 's32[1]{0}', space=sflag, size = 0x4, scoped, tag = 'scoped memory for tpu_custom_call.1']
    #allocation7 [shape = 'u8[2048]{0}', space=vmem, size = 0x800, scoped, tag = 'input window, operand 3, single buffered']
    #allocation8 [shape = 'u8[8192]{0}', space=vmem, size = 0x2000, scoped, tag = 'input window, operand 4, single buffered']
    #allocation9 [shape = 's32[1]{0}', space=sflag, size = 0x4, scoped, tag = 'scoped memory for tpu_custom_call.1']
    #allocation10 [shape = 'u8[2048]{0}', space=vmem, size = 0x800, scoped, tag = 'input window, operand 5, single buffered']
    #allocation11 [shape = 'u8[524288]{0}', space=vmem, size = 0x80000, scoped, tag = 'input window, operand 6, single buffered']
    #allocation12 [shape = 's32[1]{0}', space=sflag, size = 0x4, scoped, tag = 'scoped memory for tpu_custom_call.1']
    #allocation13 [shape = 'u8[524288]{0}', space=vmem, size = 0x80000, scoped, tag = 'input window, operand 7, single buffered']
    #allocation14 [shape = 'u8[2048]{0}', space=vmem, size = 0x800, scoped, tag = 'input window, operand 8, single buffered']
    #allocation15 [shape = 's32[1]{0}', space=sflag, size = 0x4, scoped, tag = 'scoped memory for tpu_custom_call.1']
    #allocation16 [shape = 'u8[3670016]{0}', space=vmem, size = 0x380000, scoped, tag = 'input window, operand 9, single buffered']
    #allocation17 [shape = 'u8[16384]{0}', space=vmem, size = 0x4000, scoped, tag = 'input window, operand 10, single buffered']
    #allocation18 [shape = 's32[1]{0}', space=sflag, size = 0x4, scoped, tag = 'scoped memory for tpu_custom_call.1']
    #allocation19 [shape = 'u8[2048]{0}', space=vmem, size = 0x800, scoped, tag = 'input window, operand 11, single buffered']
    %20 = vsyncpa [#allocation4], 0
    %21 = vsyncpa [#allocation6], 0
    %22 = vsyncpa [#allocation9], 0
    %23 = vsyncpa [#allocation12], 0
    %24 = vsyncpa [#allocation15], 0
    %25 = vsyncpa [#allocation18], 0
    // Predicated region
    $region2: #{tpu_custom_call.1} parent=1 // pred_check
      _
    $region3: #{tpu_custom_call.1} parent=1 // pred_check_branch
      %27 = sbr.rel (0) target = $region5
    $region4: #{tpu_custom_call.1} parent=1 // pred_region
      %s29 = ssub.s32 256, 256
      %30 = vsyncadd [#allocation4], %s29
      %s31 = sshll.u32 [#allocation3], 4
      %s32 = int_to_ptr.vmem [resolvable:$true] %s31
      %37 = dma.hbm_to_vmem [thread:$0]  %s0, 256, %s32, [#allocation4], 128, 128, 8
    $region5: #{tpu_custom_call.1} parent=1 // pred_fallthru
      _
    // Predicated region
    $region6: #{tpu_custom_call.1} parent=1 // pred_check
      _
    $region7: #{tpu_custom_call.1} parent=1 // pred_check_branch
      %39 = sbr.rel (0) target = $region9
    $region8: #{tpu_custom_call.1} parent=1 // pred_region
      _
    $region9: #{tpu_custom_call.1} parent=1 // pred_fallthru
      _
    // Predicated region
    $region10: #{tpu_custom_call.1} parent=1 // pred_check
      _
    $region11: #{tpu_custom_call.1} parent=1 // pred_check_branch
      %41 = sbr.rel (0) target = $region13
    $region12: #{tpu_custom_call.1} parent=1 // pred_region
      %s43 = ssub.s32 4096, 4096
      %44 = vsyncadd [#allocation6], %s43
      %s45 = sshll.u32 [#allocation5], 4
      %s46 = int_to_ptr.vmem [resolvable:$true] %s45
      %51 = dma.hbm_to_vmem [thread:$0]  %s2, 4096, %s46, [#allocation6], 256, 256, 16
    $region13: #{tpu_custom_call.1} parent=1 // pred_fallthru
      _
    // Predicated region
    $region14: #{tpu_custom_call.1} parent=1 // pred_check
      _
    $region15: #{tpu_custom_call.1} parent=1 // pred_check_branch
      %53 = sbr.rel (0) target = $region17
    $region16: #{tpu_custom_call.1} parent=1 // pred_region
      %s55 = ssub.s32 64, 64
      %56 = vsyncadd [#allocation6], %s55
      %s58 = sshll.u32 [#allocation7], 4
      %s59 = int_to_ptr.vmem [resolvable:$true] %s58
      %61 = dma.hbm_to_vmem [thread:$0]  %s3, 64, %s59, [#allocation6]
    $region17: #{tpu_custom_call.1} parent=1 // pred_fallthru
      _
    // Predicated region
    $region18: #{tpu_custom_call.1} parent=1 // pred_check
      _
    $region19: #{tpu_custom_call.1} parent=1 // pred_check_branch
      %63 = sbr.rel (0) target = $region21
    $region20: #{tpu_custom_call.1} parent=1 // pred_region
      %s65 = ssub.s32 256, 256
      %66 = vsyncadd [#allocation9], %s65
      %s68 = sshll.u32 [#allocation8], 4
      %s69 = int_to_ptr.vmem [resolvable:$true] %s68
      %71 = dma.hbm_to_vmem [thread:$0]  %s4, 256, %s69, [#allocation9]
    $region21: #{tpu_custom_call.1} parent=1 // pred_fallthru
      _
    // Predicated region
    $region22: #{tpu_custom_call.1} parent=1 // pred_check
      _
    $region23: #{tpu_custom_call.1} parent=1 // pred_check_branch
      %73 = sbr.rel (0) target = $region25
    $region24: #{tpu_custom_call.1} parent=1 // pred_region
      %s75 = ssub.s32 64, 64
      %76 = vsyncadd [#allocation9], %s75
      %s78 = sshll.u32 [#allocation10], 4
      %s79 = int_to_ptr.vmem [resolvable:$true] %s78
      %81 = dma.hbm_to_vmem [thread:$0]  %s5, 64, %s79, [#allocation9]
    $region25: #{tpu_custom_call.1} parent=1 // pred_fallthru
      _
    // Predicated region
    $region26: #{tpu_custom_call.1} parent=1 // pred_check
      _
    $region27: #{tpu_custom_call.1} parent=1 // pred_check_branch
      %83 = sbr.rel (0) target = $region29
    $region28: #{tpu_custom_call.1} parent=1 // pred_region
      %s85 = ssub.s32 16384, 16384
      %86 = vsyncadd [#allocation12], %s85
      %s87 = sshll.u32 [#allocation11], 4
      %s88 = int_to_ptr.vmem [resolvable:$true] %s87
      %93 = dma.hbm_to_vmem [thread:$0]  %s6, 16384, %s88, [#allocation12], 256, 256, 16
    $region29: #{tpu_custom_call.1} parent=1 // pred_fallthru
      _
    // Predicated region
    $region30: #{tpu_custom_call.1} parent=1 // pred_check
      _
    $region31: #{tpu_custom_call.1} parent=1 // pred_check_branch
      %95 = sbr.rel (0) target = $region33
    $region32: #{tpu_custom_call.1} parent=1 // pred_region
      %s97 = ssub.s32 16384, 16384
      %98 = vsyncadd [#allocation12], %s97
      %s99 = sshll.u32 [#allocation13], 4
      %s100 = int_to_ptr.vmem [resolvable:$true] %s99
      %105 = dma.hbm_to_vmem [thread:$0]  %s7, 16384, %s100, [#allocation12], 256, 256, 16
    $region33: #{tpu_custom_call.1} parent=1 // pred_fallthru
      _
    // Predicated region
    $region34: #{tpu_custom_call.1} parent=1 // pred_check
      _
    $region35: #{tpu_custom_call.1} parent=1 // pred_check_branch
      %107 = sbr.rel (0) target = $region37
    $region36: #{tpu_custom_call.1} parent=1 // pred_region
      %s109 = ssub.s32 64, 64
      %110 = vsyncadd [#allocation15], %s109
      %s112 = sshll.u32 [#allocation14], 4
      %s113 = int_to_ptr.vmem [resolvable:$true] %s112
      %115 = dma.hbm_to_vmem [thread:$0]  %s8, 64, %s113, [#allocation15]
    $region37: #{tpu_custom_call.1} parent=1 // pred_fallthru
      _
    // Predicated region
    $region38: #{tpu_custom_call.1} parent=1 // pred_check
      _
    $region39: #{tpu_custom_call.1} parent=1 // pred_check_branch
      %117 = sbr.rel (0) target = $region41
    $region40: #{tpu_custom_call.1} parent=1 // pred_region
      %s119 = ssub.s32 114688, 114688
      %120 = vsyncadd [#allocation15], %s119
      %s121 = sshll.u32 [#allocation16], 4
      %s122 = int_to_ptr.vmem [resolvable:$true] %s121
      %127 = dma.hbm_to_vmem [thread:$0]  %s9, 114688, %s122, [#allocation15], 256, 256, 16
    $region41: #{tpu_custom_call.1} parent=1 // pred_fallthru
      _
    // Predicated region
    $region42: #{tpu_custom_call.1} parent=1 // pred_check
      _
    $region43: #{tpu_custom_call.1} parent=1 // pred_check_branch
      %129 = sbr.rel (0) target = $region45
    $region44: #{tpu_custom_call.1} parent=1 // pred_region
      %s131 = ssub.s32 512, 512
      %132 = vsyncadd [#allocation18], %s131
      %s134 = sshll.u32 [#allocation17], 4
      %s135 = int_to_ptr.vmem [resolvable:$true] %s134
      %137 = dma.hbm_to_vmem [thread:$0]  %s10, 512, %s135, [#allocation18]
    $region45: #{tpu_custom_call.1} parent=1 // pred_fallthru
      _
    // Predicated region
    $region46: #{tpu_custom_call.1} parent=1 // pred_check
      _
    $region47: #{tpu_custom_call.1} parent=1 // pred_check_branch
      %139 = sbr.rel (0) target = $region49
    $region48: #{tpu_custom_call.1} parent=1 // pred_region
      %s141 = ssub.s32 64, 64
      %142 = vsyncadd [#allocation18], %s141
      %s144 = sshll.u32 [#allocation19], 4
      %s145 = int_to_ptr.vmem [resolvable:$true] %s144
      %147 = dma.hbm_to_vmem [thread:$0]  %s11, 64, %s145, [#allocation18]
    $region49: #{tpu_custom_call.1} parent=1 // pred_fallthru
      _
    // Predicated region
    $region50: #{tpu_custom_call.1} parent=1 // pred_check
      _
    $region51: #{tpu_custom_call.1} parent=1 // pred_check_branch
      %149 = sbr.rel (0) target = $region53
    $region52: #{tpu_custom_call.1} parent=1 // pred_region
      _
    $region53: #{tpu_custom_call.1} parent=1 // pred_fallthru
      _
    // Predicated region
    $region54: #{tpu_custom_call.1} parent=1 // pred_check
      _
    $region55: #{tpu_custom_call.1} parent=1 // pred_check_branch
      %151 = sbr.rel (0) target = $region57
    $region56: #{tpu_custom_call.1} parent=1 // pred_region
      %152 = dma.done [#allocation4], 256
    $region57: #{tpu_custom_call.1} parent=1 // pred_fallthru
      _
    // Predicated region
    $region58: #{tpu_custom_call.1} parent=1 // pred_check
      _
    $region59: #{tpu_custom_call.1} parent=1 // pred_check_branch
      %154 = sbr.rel (0) target = $region61
    $region60: #{tpu_custom_call.1} parent=1 // pred_region
      %155 = dma.done [#allocation6], 4096
    $region61: #{tpu_custom_call.1} parent=1 // pred_fallthru
      _
    // Predicated region
    $region62: #{tpu_custom_call.1} parent=1 // pred_check
      _
    $region63: #{tpu_custom_call.1} parent=1 // pred_check_branch
      %157 = sbr.rel (0) target = $region65
    $region64: #{tpu_custom_call.1} parent=1 // pred_region
      %158 = dma.done [#allocation6], 64
    $region65: #{tpu_custom_call.1} parent=1 // pred_fallthru
      _
    // Predicated region
    $region66: #{tpu_custom_call.1} parent=1 // pred_check
      _
    $region67: #{tpu_custom_call.1} parent=1 // pred_check_branch
      %160 = sbr.rel (0) target = $region69
    $region68: #{tpu_custom_call.1} parent=1 // pred_region
      %161 = dma.done [#allocation9], 256
    $region69: #{tpu_custom_call.1} parent=1 // pred_fallthru
      _
    // Predicated region
    $region70: #{tpu_custom_call.1} parent=1 // pred_check
      _
    $region71: #{tpu_custom_call.1} parent=1 // pred_check_branch
      %163 = sbr.rel (0) target = $region73
    $region72: #{tpu_custom_call.1} parent=1 // pred_region
      %164 = dma.done [#allocation9], 64
    $region73: #{tpu_custom_call.1} parent=1 // pred_fallthru
      _
    // Predicated region
    $region74: #{tpu_custom_call.1} parent=1 // pred_check
      _
    $region75: #{tpu_custom_call.1} parent=1 // pred_check_branch
      %166 = sbr.rel (0) target = $region77
    $region76: #{tpu_custom_call.1} parent=1 // pred_region
      %167 = dma.done [#allocation12], 16384
    $region77: #{tpu_custom_call.1} parent=1 // pred_fallthru
      _
    // Predicated region
    $region78: #{tpu_custom_call.1} parent=1 // pred_check
      _
    $region79: #{tpu_custom_call.1} parent=1 // pred_check_branch
      %169 = sbr.rel (0) target = $region81
    $region80: #{tpu_custom_call.1} parent=1 // pred_region
      %170 = dma.done [#allocation12], 16384
    $region81: #{tpu_custom_call.1} parent=1 // pred_fallthru
      _
    // Predicated region
    $region82: #{tpu_custom_call.1} parent=1 // pred_check
      _
    $region83: #{tpu_custom_call.1} parent=1 // pred_check_branch
      %172 = sbr.rel (0) target = $region85
    $region84: #{tpu_custom_call.1} parent=1 // pred_region
      %173 = dma.done [#allocation15], 64
    $region85: #{tpu_custom_call.1} parent=1 // pred_fallthru
      _
    // Predicated region
    $region86: #{tpu_custom_call.1} parent=1 // pred_check
      _
    $region87: #{tpu_custom_call.1} parent=1 // pred_check_branch
      %175 = sbr.rel (0) target = $region89
    $region88: #{tpu_custom_call.1} parent=1 // pred_region
      %176 = dma.done [#allocation15], 114688
    $region89: #{tpu_custom_call.1} parent=1 // pred_fallthru
      _
    // Predicated region
    $region90: #{tpu_custom_call.1} parent=1 // pred_check
      _
    $region91: #{tpu_custom_call.1} parent=1 // pred_check_branch
      %178 = sbr.rel (0) target = $region93
    $region92: #{tpu_custom_call.1} parent=1 // pred_region
      %179 = dma.done [#allocation18], 512
    $region93: #{tpu_custom_call.1} parent=1 // pred_fallthru
      _
    // Predicated region
    $region94: #{tpu_custom_call.1} parent=1 // pred_check
      _
    $region95: #{tpu_custom_call.1} parent=1 // pred_check_branch
      %181 = sbr.rel (0) target = $region97
    $region96: #{tpu_custom_call.1} parent=1 // pred_region
      %182 = dma.done [#allocation18], 64
    $region97: #{tpu_custom_call.1} parent=1 // pred_fallthru
      _
    %v184 = vld [vmem:[#allocation3] sm:$0xff]
    %v185 = vld [vmem:[#allocation3 + $0x8] sm:$0xff]
    %v186 = vpack.c.bf16 %v185, %v184
    %v187 = vld [vmem:[%s1] sm:$0xf]
    %v188 = vld [vmem:[%s1 + $0x4] sm:$0xf]
    %v189 = vld [vmem:[#allocation5] sm:$0xff]
    %v190 = vld [vmem:[#allocation5 + $0x8] sm:$0xff]
    %v191 = vld [vmem:[#allocation5 + $0x10] sm:$0xff]
    %v192 = vld [vmem:[#allocation5 + $0x18] sm:$0xff]
    %v193 = vld [vmem:[#allocation5 + $0x20] sm:$0xff]
    %v194 = vld [vmem:[#allocation5 + $0x28] sm:$0xff]
    %v195 = vld [vmem:[#allocation5 + $0x30] sm:$0xff]
    %v196 = vld [vmem:[#allocation5 + $0x38] sm:$0xff]
    %v197 = vld [vmem:[#allocation5 + $0x40] sm:$0xff]
    %v198 = vld [vmem:[#allocation5 + $0x48] sm:$0xff]
    %v199 = vld [vmem:[#allocation5 + $0x50] sm:$0xff]
    %v200 = vld [vmem:[#allocation5 + $0x58] sm:$0xff]
    %v201 = vld [vmem:[#allocation5 + $0x60] sm:$0xff]
    %v202 = vld [vmem:[#allocation5 + $0x68] sm:$0xff]
    %v203 = vld [vmem:[#allocation5 + $0x70] sm:$0xff]
    %v204 = vld [vmem:[#allocation5 + $0x78] sm:$0xff]
    %v205 = vld [vmem:[#allocation5 + $0x80] sm:$0xff]
    %v206 = vld [vmem:[#allocation5 + $0x88] sm:$0xff]
    %v207 = vld [vmem:[#allocation5 + $0x90] sm:$0xff]
    %v208 = vld [vmem:[#allocation5 + $0x98] sm:$0xff]
    %v209 = vld [vmem:[#allocation5 + $0xa0] sm:$0xff]
    %v210 = vld [vmem:[#allocation5 + $0xa8] sm:$0xff]
    %v211 = vld [vmem:[#allocation5 + $0xb0] sm:$0xff]
    %v212 = vld [vmem:[#allocation5 + $0xb8] sm:$0xff]
    %v213 = vld [vmem:[#allocation5 + $0xc0] sm:$0xff]
    %v214 = vld [vmem:[#allocation5 + $0xc8] sm:$0xff]
    %v215 = vld [vmem:[#allocation5 + $0xd0] sm:$0xff]
    %v216 = vld [vmem:[#allocation5 + $0xd8] sm:$0xff]
    %v217 = vld [vmem:[#allocation5 + $0xe0] sm:$0xff]
    %v218 = vld [vmem:[#allocation5 + $0xe8] sm:$0xff]
    %v219 = vld [vmem:[#allocation5 + $0xf0] sm:$0xff]
    %v220 = vld [vmem:[#allocation5 + $0xf8] sm:$0xff]
    %v221 = vld [vmem:[#allocation7] sm:$0xf]
    %v223 = vlaneseq
    %v224 = vshrl.u32 %v223, 7
    %v225 = vsub.s32 0, %v224
    %v226 = vrot.slane %v221, %v225
    %v227 = vlaneseq
    %v228 = vshrl.u32 %v227, 7
    %v229 = vsub.s32 1, %v228
    %v230 = vrot.slane %v221, %v229
    %v231 = vlaneseq
    %v232 = vshrl.u32 %v231, 7
    %v233 = vsub.s32 2, %v232
    %v234 = vrot.slane %v221, %v233
    %v235 = vlaneseq
    %v236 = vshrl.u32 %v235, 7
    %v237 = vsub.s32 3, %v236
    %v238 = vrot.slane %v221, %v237
    %v275 = vunpack.c.l.b16 %v189
    %v276 = vunpack.c.h.b16 %v189
    %v277 = vunpack.c.l.b16 %v190
    %v278 = vunpack.c.h.b16 %v190
    %v279 = vunpack.c.l.b16 %v191
    %v280 = vunpack.c.h.b16 %v191
    %v281 = vunpack.c.l.b16 %v192
    %v282 = vunpack.c.h.b16 %v192
    %v283 = vunpack.c.l.b16 %v193
    %v284 = vunpack.c.h.b16 %v193
    %v285 = vunpack.c.l.b16 %v194
    %v286 = vunpack.c.h.b16 %v194
    %v287 = vunpack.c.l.b16 %v195
    %v288 = vunpack.c.h.b16 %v195
    %v289 = vunpack.c.l.b16 %v196
    %v290 = vunpack.c.h.b16 %v196
    %v291 = vunpack.c.l.b16 %v197
    %v292 = vunpack.c.h.b16 %v197
    %v293 = vunpack.c.l.b16 %v198
    %v294 = vunpack.c.h.b16 %v198
    %v295 = vunpack.c.l.b16 %v199
    %v296 = vunpack.c.h.b16 %v199
    %v297 = vunpack.c.l.b16 %v200
    %v298 = vunpack.c.h.b16 %v200
    %v299 = vunpack.c.l.b16 %v201
    %v300 = vunpack.c.h.b16 %v201
    %v301 = vunpack.c.l.b16 %v202
    %v302 = vunpack.c.h.b16 %v202
    %v303 = vunpack.c.l.b16 %v203
    %v304 = vunpack.c.h.b16 %v203
    %v305 = vunpack.c.l.b16 %v204
    %v306 = vunpack.c.h.b16 %v204
    %v307 = vunpack.c.l.b16 %v205
    %v308 = vunpack.c.h.b16 %v205
    %v309 = vunpack.c.l.b16 %v206
    %v310 = vunpack.c.h.b16 %v206
    %v311 = vunpack.c.l.b16 %v207
    %v312 = vunpack.c.h.b16 %v207
    %v313 = vunpack.c.l.b16 %v208
    %v314 = vunpack.c.h.b16 %v208
    %v315 = vunpack.c.l.b16 %v209
    %v316 = vunpack.c.h.b16 %v209
    %v317 = vunpack.c.l.b16 %v210
    %v318 = vunpack.c.h.b16 %v210
    %v319 = vunpack.c.l.b16 %v211
    %v320 = vunpack.c.h.b16 %v211
    %v321 = vunpack.c.l.b16 %v212
    %v322 = vunpack.c.h.b16 %v212
    %v323 = vunpack.c.l.b16 %v213
    %v324 = vunpack.c.h.b16 %v213
    %v325 = vunpack.c.l.b16 %v214
    %v326 = vunpack.c.h.b16 %v214
    %v327 = vunpack.c.l.b16 %v215
    %v328 = vunpack.c.h.b16 %v215
    %v329 = vunpack.c.l.b16 %v216
    %v330 = vunpack.c.h.b16 %v216
    %v331 = vunpack.c.l.b16 %v217
    %v332 = vunpack.c.h.b16 %v217
    %v333 = vunpack.c.l.b16 %v218
    %v334 = vunpack.c.h.b16 %v218
    %v335 = vunpack.c.l.b16 %v219
    %v336 = vunpack.c.h.b16 %v219
    %v337 = vunpack.c.l.b16 %v220
    %v338 = vunpack.c.h.b16 %v220
    %v339 = vpack.c.b16 %v279, %v275
    %v340 = vpack.c.b16 %v280, %v276
    %v341 = vpack.c.b16 %v281, %v277
    %v342 = vpack.c.b16 %v282, %v278
    %v343 = vpack.c.b16 %v287, %v283
    %v344 = vpack.c.b16 %v288, %v284
    %v345 = vpack.c.b16 %v289, %v285
    %v346 = vpack.c.b16 %v290, %v286
    %v347 = vpack.c.b16 %v295, %v291
    %v348 = vpack.c.b16 %v296, %v292
    %v349 = vpack.c.b16 %v297, %v293
    %v350 = vpack.c.b16 %v298, %v294
    %v351 = vpack.c.b16 %v303, %v299
    %v352 = vpack.c.b16 %v304, %v300
    %v353 = vpack.c.b16 %v305, %v301
    %v354 = vpack.c.b16 %v306, %v302
    %v355 = vpack.c.b16 %v311, %v307
    %v356 = vpack.c.b16 %v312, %v308
    %v357 = vpack.c.b16 %v313, %v309
    %v358 = vpack.c.b16 %v314, %v310
    %v359 = vpack.c.b16 %v319, %v315
    %v360 = vpack.c.b16 %v320, %v316
    %v361 = vpack.c.b16 %v321, %v317
    %v362 = vpack.c.b16 %v322, %v318
    %v363 = vpack.c.b16 %v327, %v323
    %v364 = vpack.c.b16 %v328, %v324
    %v365 = vpack.c.b16 %v329, %v325
    %v366 = vpack.c.b16 %v330, %v326
    %v367 = vpack.c.b16 %v335, %v331
    %v368 = vpack.c.b16 %v336, %v332
    %v369 = vpack.c.b16 %v337, %v333
    %v370 = vpack.c.b16 %v338, %v334
    %403 = vmatprep.subr.bf16.mxu0 %v340
    %404 = vmatpush1.bf16.msra.mxu0 %v339
    %405 = vmatprep.subr.bf16.mxu0 %v344
    %406 = vmatpush1.bf16.msra.mxu0 %v343
    %407 = vmatprep.subr.bf16.mxu0 %v348
    %408 = vmatpush1.bf16.msra.mxu0 %v347
    %409 = vmatprep.subr.bf16.mxu0 %v352
    %410 = vmatpush1.bf16.msra.mxu0 %v351
    %411 = vmatprep.subr.bf16.mxu0 %v356
    %412 = vmatpush1.bf16.msra.mxu0 %v355
    %413 = vmatprep.subr.bf16.mxu0 %v360
    %414 = vmatpush1.bf16.msra.mxu0 %v359
    %415 = vmatprep.subr.bf16.mxu0 %v364
    %416 = vmatpush1.bf16.msra.mxu0 %v363
    %417 = vmatprep.subr.bf16.mxu0 %v368
    %418 = vmatpush1.bf16.msra.mxu0 %v367
    %419 = vmatprep.subr.bf16.mxu0 0
    %420 = vmatpush1.bf16.msra.mxu0 0
    %421 = vmatprep.subr.bf16.mxu0 0
    %422 = vmatpush1.bf16.msra.mxu0 0
    %423 = vmatprep.subr.bf16.mxu0 0
    %424 = vmatpush1.bf16.msra.mxu0 0
    %425 = vmatprep.subr.bf16.mxu0 0
    %426 = vmatpush1.bf16.msra.mxu0 0
    %427 = vmatprep.subr.bf16.mxu0 0
    %428 = vmatpush1.bf16.msra.mxu0 0
    %429 = vmatprep.subr.bf16.mxu0 0
    %430 = vmatpush1.bf16.msra.mxu0 0
    %431 = vmatprep.subr.bf16.mxu0 0
    %432 = vmatpush1.bf16.msra.mxu0 0
    %433 = vmatprep.subr.bf16.mxu0 0
    %434 = vmatpush1.bf16.msra.mxu0 0
    %435 = vmatprep.mubr.bf16.mxu0 0
    %436 = vmatmul.mubr.bf16.gmra.mrb[0].mxu0 %v186
    %v437 = vpop.f32.mrb[0].mxu0
    %v438 = vadd.f32 %v226, %v437
    %v439 = vpop.f32.mrb[0].mxu0
    %v440 = vadd.f32 %v230, %v439
    %v441 = vpop.f32.mrb[0].mxu0
    %v442 = vadd.f32 %v226, %v441
    %v443 = vpop.f32.mrb[0].mxu0
    %v444 = vadd.f32 %v230, %v443
    %445 = vdwg.mxu0
    %446 = vmatprep.subr.bf16.mxu0 %v342
    %447 = vmatpush1.bf16.msra.mxu0 %v341
    %448 = vmatprep.subr.bf16.mxu0 %v346
    %449 = vmatpush1.bf16.msra.mxu0 %v345
    %450 = vmatprep.subr.bf16.mxu0 %v350
    %451 = vmatpush1.bf16.msra.mxu0 %v349
    %452 = vmatprep.subr.bf16.mxu0 %v354
    %453 = vmatpush1.bf16.msra.mxu0 %v353
    %454 = vmatprep.subr.bf16.mxu0 %v358
    %455 = vmatpush1.bf16.msra.mxu0 %v357
    %456 = vmatprep.subr.bf16.mxu0 %v362
    %457 = vmatpush1.bf16.msra.mxu0 %v361
    %458 = vmatprep.subr.bf16.mxu0 %v366
    %459 = vmatpush1.bf16.msra.mxu0 %v365
    %460 = vmatprep.subr.bf16.mxu0 %v370
    %461 = vmatpush1.bf16.msra.mxu0 %v369
    %462 = vmatprep.subr.bf16.mxu0 0
    %463 = vmatpush1.bf16.msra.mxu0 0
    %464 = vmatprep.subr.bf16.mxu0 0
    %465 = vmatpush1.bf16.msra.mxu0 0
    %466 = vmatprep.subr.bf16.mxu0 0
    %467 = vmatpush1.bf16.msra.mxu0 0
    %468 = vmatprep.subr.bf16.mxu0 0
    %469 = vmatpush1.bf16.msra.mxu0 0
    %470 = vmatprep.subr.bf16.mxu0 0
    %471 = vmatpush1.bf16.msra.mxu0 0
    %472 = vmatprep.subr.bf16.mxu0 0
    %473 = vmatpush1.bf16.msra.mxu0 0
    %474 = vmatprep.subr.bf16.mxu0 0
    %475 = vmatpush1.bf16.msra.mxu0 0
    %476 = vmatprep.subr.bf16.mxu0 0
    %477 = vmatpush1.bf16.msra.mxu0 0
    %478 = vmatprep.mubr.bf16.mxu0 0
    %479 = vmatmul.mubr.bf16.gmra.mrb[0].mxu0 %v186
    %v480 = vpop.f32.mrb[0].mxu0
    %v481 = vadd.f32 %v234, %v480
    %v482 = vpop.f32.mrb[0].mxu0
    %v483 = vadd.f32 %v238, %v482
    %v484 = vpop.f32.mrb[0].mxu0
    %v485 = vadd.f32 %v234, %v484
    %v486 = vpop.f32.mrb[0].mxu0
    %v487 = vadd.f32 %v238, %v486
    %488 = vdwg.mxu0
    %v489 = vmax.f32 %v438, 0.0
    %v490 = vmax.f32 %v440, 0.0
    %v491 = vmax.f32 %v481, 0.0
    %v492 = vmax.f32 %v483, 0.0
    %v493 = vmax.f32 %v442, 0.0
    %v494 = vmax.f32 %v444, 0.0
    %v495 = vmax.f32 %v485, 0.0
    %v496 = vmax.f32 %v487, 0.0
    %v497 = vpack.c.bf16 %v493, %v489
    %v498 = vpack.c.bf16 %v494, %v490
    %v499 = vpack.c.bf16 %v495, %v491
    %v500 = vpack.c.bf16 %v496, %v492
    %v501 = vld [vmem:[#allocation8] sm:$0xff]
    %v502 = vld [vmem:[#allocation8 + $0x8] sm:$0xff]
    %v503 = vld [vmem:[#allocation10] sm:$0xf]
    %v505 = vlaneseq
    %v506 = vshrl.u32 %v505, 7
    %v507 = vsub.s32 0, %v506
    %v508 = vrot.slane %v503, %v507
    %v509 = vlaneseq
    %v510 = vshrl.u32 %v509, 7
    %v511 = vsub.s32 1, %v510
    %v512 = vrot.slane %v503, %v511
    %v513 = vlaneseq
    %v514 = vshrl.u32 %v513, 7
    %v515 = vsub.s32 2, %v514
    %v516 = vrot.slane %v503, %v515
    %v517 = vlaneseq
    %v518 = vshrl.u32 %v517, 7
    %v519 = vsub.s32 3, %v518
    %v520 = vrot.slane %v503, %v519
    %v527 = vunpack.c.l.b16 %v187
    %v528 = vunpack.c.l.b16 %v188
    %v529 = vpack.c.b16 %v528, %v527
    %v532 = vunpack.c.l.b16 %v501
    %v533 = vunpack.c.h.b16 %v501
    %v534 = vunpack.c.l.b16 %v502
    %v535 = vunpack.c.h.b16 %v502
    %v536 = vpack.c.b16 %v532, %v532
    %v537 = vpack.c.b16 %v533, %v533
    %v538 = vpack.c.b16 %v534, %v534
    %v539 = vpack.c.b16 %v535, %v535
    %vm540 = vcmask 64512
    %v542 = vsel %vm540, %v529, 0
    %vm544 = vcmask 1043456
    %v546 = vsel %vm544, %v536, 0
    %v549 = vsel %vm544, %v537, 0
    %v552 = vsel %vm544, %v538, 0
    %v555 = vsel %vm544, %v539, 0
    %557 = vmatprep.subr.bf16.mxu0 %v549
    %558 = vmatpush1.bf16.msra.mxu0 %v546
    %559 = vmatprep.subr.bf16.mxu0 0
    %560 = vmatpush1.bf16.msra.mxu0 0
    %561 = vmatprep.subr.bf16.mxu0 0
    %562 = vmatpush1.bf16.msra.mxu0 0
    %563 = vmatprep.subr.bf16.mxu0 0
    %564 = vmatpush1.bf16.msra.mxu0 0
    %565 = vmatprep.subr.bf16.mxu0 0
    %566 = vmatpush1.bf16.msra.mxu0 0
    %567 = vmatprep.subr.bf16.mxu0 0
    %568 = vmatpush1.bf16.msra.mxu0 0
    %569 = vmatprep.subr.bf16.mxu0 0
    %570 = vmatpush1.bf16.msra.mxu0 0
    %571 = vmatprep.subr.bf16.mxu0 0
    %572 = vmatpush1.bf16.msra.mxu0 0
    %573 = vmatprep.subr.bf16.mxu0 0
    %574 = vmatpush1.bf16.msra.mxu0 0
    %575 = vmatprep.subr.bf16.mxu0 0
    %576 = vmatpush1.bf16.msra.mxu0 0
    %577 = vmatprep.subr.bf16.mxu0 0
    %578 = vmatpush1.bf16.msra.mxu0 0
    %579 = vmatprep.subr.bf16.mxu0 0
    %580 = vmatpush1.bf16.msra.mxu0 0
    %581 = vmatprep.subr.bf16.mxu0 0
    %582 = vmatpush1.bf16.msra.mxu0 0
    %583 = vmatprep.subr.bf16.mxu0 0
    %584 = vmatpush1.bf16.msra.mxu0 0
    %585 = vmatprep.subr.bf16.mxu0 0
    %586 = vmatpush1.bf16.msra.mxu0 0
    %587 = vmatprep.subr.bf16.mxu0 0
    %588 = vmatpush1.bf16.msra.mxu0 0
    %589 = vmatprep.mubr.bf16.mxu0 0
    %590 = vmatmul.mubr.bf16.gmra.mrb[0].mxu0 %v542
    %v591 = vpop.f32.mrb[0].mxu0
    %v592 = vadd.f32 %v508, %v591
    %v593 = vpop.f32.mrb[0].mxu0
    %v594 = vadd.f32 %v512, %v593
    %v595 = vpop.f32.mrb[0].mxu0
    %v596 = vadd.f32 %v508, %v595
    %v597 = vpop.f32.mrb[0].mxu0
    %v598 = vadd.f32 %v512, %v597
    %599 = vdwg.mxu0
    %600 = vmatprep.subr.bf16.mxu0 %v555
    %601 = vmatpush1.bf16.msra.mxu0 %v552
    %602 = vmatprep.subr.bf16.mxu0 0
    %603 = vmatpush1.bf16.msra.mxu0 0
    %604 = vmatprep.subr.bf16.mxu0 0
    %605 = vmatpush1.bf16.msra.mxu0 0
    %606 = vmatprep.subr.bf16.mxu0 0
    %607 = vmatpush1.bf16.msra.mxu0 0
    %608 = vmatprep.subr.bf16.mxu0 0
    %609 = vmatpush1.bf16.msra.mxu0 0
    %610 = vmatprep.subr.bf16.mxu0 0
    %611 = vmatpush1.bf16.msra.mxu0 0
    %612 = vmatprep.subr.bf16.mxu0 0
    %613 = vmatpush1.bf16.msra.mxu0 0
    %614 = vmatprep.subr.bf16.mxu0 0
    %615 = vmatpush1.bf16.msra.mxu0 0
    %616 = vmatprep.subr.bf16.mxu0 0
    %617 = vmatpush1.bf16.msra.mxu0 0
    %618 = vmatprep.subr.bf16.mxu0 0
    %619 = vmatpush1.bf16.msra.mxu0 0
    %620 = vmatprep.subr.bf16.mxu0 0
    %621 = vmatpush1.bf16.msra.mxu0 0
    %622 = vmatprep.subr.bf16.mxu0 0
    %623 = vmatpush1.bf16.msra.mxu0 0
    %624 = vmatprep.subr.bf16.mxu0 0
    %625 = vmatpush1.bf16.msra.mxu0 0
    %626 = vmatprep.subr.bf16.mxu0 0
    %627 = vmatpush1.bf16.msra.mxu0 0
    %628 = vmatprep.subr.bf16.mxu0 0
    %629 = vmatpush1.bf16.msra.mxu0 0
    %630 = vmatprep.subr.bf16.mxu0 0
    %631 = vmatpush1.bf16.msra.mxu0 0
    %632 = vmatprep.mubr.bf16.mxu0 0
    %633 = vmatmul.mubr.bf16.gmra.mrb[0].mxu0 %v542
    %v634 = vpop.f32.mrb[0].mxu0
    %v635 = vadd.f32 %v516, %v634
    %v636 = vpop.f32.mrb[0].mxu0
    %v637 = vadd.f32 %v520, %v636
    %v638 = vpop.f32.mrb[0].mxu0
    %v639 = vadd.f32 %v516, %v638
    %v640 = vpop.f32.mrb[0].mxu0
    %v641 = vadd.f32 %v520, %v640
    %642 = vdwg.mxu0
    %v643 = vmax.f32 %v592, 0.0
    %v644 = vmax.f32 %v594, 0.0
    %v645 = vmax.f32 %v635, 0.0
    %v646 = vmax.f32 %v637, 0.0
    %v647 = vmax.f32 %v596, 0.0
    %v648 = vmax.f32 %v598, 0.0
    %v649 = vmax.f32 %v639, 0.0
    %v650 = vmax.f32 %v641, 0.0
    %v651 = vpack.c.bf16 %v647, %v643
    %v652 = vpack.c.bf16 %v648, %v644
    %v653 = vpack.c.bf16 %v649, %v645
    %v654 = vpack.c.bf16 %v650, %v646
    %v655 = vld [vmem:[#allocation11] sm:$0xff]
    %v656 = vld [vmem:[#allocation11 + $0x8] sm:$0xff]
    %v657 = vld [vmem:[#allocation11 + $0x10] sm:$0xff]
    %v658 = vld [vmem:[#allocation11 + $0x18] sm:$0xff]
    %v659 = vld [vmem:[#allocation11 + $0x20] sm:$0xff]
    %v660 = vld [vmem:[#allocation11 + $0x28] sm:$0xff]
    %v661 = vld [vmem:[#allocation11 + $0x30] sm:$0xff]
    %v662 = vld [vmem:[#allocation11 + $0x38] sm:$0xff]
    %v663 = vld [vmem:[#allocation11 + $0x40] sm:$0xff]
    %v664 = vld [vmem:[#allocation11 + $0x48] sm:$0xff]
    %v665 = vld [vmem:[#allocation11 + $0x50] sm:$0xff]
    %v666 = vld [vmem:[#allocation11 + $0x58] sm:$0xff]
    %v667 = vld [vmem:[#allocation11 + $0x60] sm:$0xff]
    %v668 = vld [vmem:[#allocation11 + $0x68] sm:$0xff]
    %v669 = vld [vmem:[#allocation11 + $0x70] sm:$0xff]
    %v670 = vld [vmem:[#allocation11 + $0x78] sm:$0xff]
    %v671 = vld [vmem:[#allocation11 + $0x80] sm:$0xff]
    %v672 = vld [vmem:[#allocation11 + $0x88] sm:$0xff]
    %v673 = vld [vmem:[#allocation11 + $0x90] sm:$0xff]
    %v674 = vld [vmem:[#allocation11 + $0x98] sm:$0xff]
    %v675 = vld [vmem:[#allocation11 + $0xa0] sm:$0xff]
    %v676 = vld [vmem:[#allocation11 + $0xa8] sm:$0xff]
    %v677 = vld [vmem:[#allocation11 + $0xb0] sm:$0xff]
    %v678 = vld [vmem:[#allocation11 + $0xb8] sm:$0xff]
    %v679 = vld [vmem:[#allocation11 + $0xc0] sm:$0xff]
    %v680 = vld [vmem:[#allocation11 + $0xc8] sm:$0xff]
    %v681 = vld [vmem:[#allocation11 + $0xd0] sm:$0xff]
    %v682 = vld [vmem:[#allocation11 + $0xd8] sm:$0xff]
    %v683 = vld [vmem:[#allocation11 + $0xe0] sm:$0xff]
    %v684 = vld [vmem:[#allocation11 + $0xe8] sm:$0xff]
    %v685 = vld [vmem:[#allocation11 + $0xf0] sm:$0xff]
    %v686 = vld [vmem:[#allocation11 + $0xf8] sm:$0xff]
    %v687 = vld [vmem:[#allocation11 + $0x100] sm:$0xff]
    %v688 = vld [vmem:[#allocation11 + $0x108] sm:$0xff]
    %v689 = vld [vmem:[#allocation11 + $0x110] sm:$0xff]
    %v690 = vld [vmem:[#allocation11 + $0x118] sm:$0xff]
    %v691 = vld [vmem:[#allocation11 + $0x120] sm:$0xff]
    %v692 = vld [vmem:[#allocation11 + $0x128] sm:$0xff]
    %v693 = vld [vmem:[#allocation11 + $0x130] sm:$0xff]
    %v694 = vld [vmem:[#allocation11 + $0x138] sm:$0xff]
    %v695 = vld [vmem:[#allocation11 + $0x140] sm:$0xff]
    %v696 = vld [vmem:[#allocation11 + $0x148] sm:$0xff]
    %v697 = vld [vmem:[#allocation11 + $0x150] sm:$0xff]
    %v698 = vld [vmem:[#allocation11 + $0x158] sm:$0xff]
    %v699 = vld [vmem:[#allocation11 + $0x160] sm:$0xff]
    %v700 = vld [vmem:[#allocation11 + $0x168] sm:$0xff]
    %v701 = vld [vmem:[#allocation11 + $0x170] sm:$0xff]
    %v702 = vld [vmem:[#allocation11 + $0x178] sm:$0xff]
    %v703 = vld [vmem:[#allocation11 + $0x180] sm:$0xff]
    %v704 = vld [vmem:[#allocation11 + $0x188] sm:$0xff]
    %v705 = vld [vmem:[#allocation11 + $0x190] sm:$0xff]
    %v706 = vld [vmem:[#allocation11 + $0x198] sm:$0xff]
    %v707 = vld [vmem:[#allocation11 + $0x1a0] sm:$0xff]
    %v708 = vld [vmem:[#allocation11 + $0x1a8] sm:$0xff]
    %v709 = vld [vmem:[#allocation11 + $0x1b0] sm:$0xff]
    %v710 = vld [vmem:[#allocation11 + $0x1b8] sm:$0xff]
    %v711 = vld [vmem:[#allocation11 + $0x1c0] sm:$0xff]
    %v712 = vld [vmem:[#allocation11 + $0x1c8] sm:$0xff]
    %v713 = vld [vmem:[#allocation11 + $0x1d0] sm:$0xff]
    %v714 = vld [vmem:[#allocation11 + $0x1d8] sm:$0xff]
    %v715 = vld [vmem:[#allocation11 + $0x1e0] sm:$0xff]
    %v716 = vld [vmem:[#allocation11 + $0x1e8] sm:$0xff]
    %v717 = vld [vmem:[#allocation11 + $0x1f0] sm:$0xff]
    %v718 = vld [vmem:[#allocation11 + $0x1f8] sm:$0xff]
    %v719 = vld [vmem:[#allocation11 + $0x200] sm:$0xff]
    %v720 = vld [vmem:[#allocation11 + $0x208] sm:$0xff]
    %v721 = vld [vmem:[#allocation11 + $0x210] sm:$0xff]
    %v722 = vld [vmem:[#allocation11 + $0x218] sm:$0xff]
    %v723 = vld [vmem:[#allocation11 + $0x220] sm:$0xff]
    %v724 = vld [vmem:[#allocation11 + $0x228] sm:$0xff]
    %v725 = vld [vmem:[#allocation11 + $0x230] sm:$0xff]
    %v726 = vld [vmem:[#allocation11 + $0x238] sm:$0xff]
    %v727 = vld [vmem:[#allocation11 + $0x240] sm:$0xff]
    %v728 = vld [vmem:[#allocation11 + $0x248] sm:$0xff]
    %v729 = vld [vmem:[#allocation11 + $0x250] sm:$0xff]
    %v730 = vld [vmem:[#allocation11 + $0x258] sm:$0xff]
    %v731 = vld [vmem:[#allocation11 + $0x260] sm:$0xff]
    %v732 = vld [vmem:[#allocation11 + $0x268] sm:$0xff]
    %v733 = vld [vmem:[#allocation11 + $0x270] sm:$0xff]
    %v734 = vld [vmem:[#allocation11 + $0x278] sm:$0xff]
    %v735 = vld [vmem:[#allocation11 + $0x280] sm:$0xff]
    %v736 = vld [vmem:[#allocation11 + $0x288] sm:$0xff]
    %v737 = vld [vmem:[#allocation11 + $0x290] sm:$0xff]
    %v738 = vld [vmem:[#allocation11 + $0x298] sm:$0xff]
    %v739 = vld [vmem:[#allocation11 + $0x2a0] sm:$0xff]
    %v740 = vld [vmem:[#allocation11 + $0x2a8] sm:$0xff]
    %v741 = vld [vmem:[#allocation11 + $0x2b0] sm:$0xff]
    %v742 = vld [vmem:[#allocation11 + $0x2b8] sm:$0xff]
    %v743 = vld [vmem:[#allocation11 + $0x2c0] sm:$0xff]
    %v744 = vld [vmem:[#allocation11 + $0x2c8] sm:$0xff]
    %v745 = vld [vmem:[#allocation11 + $0x2d0] sm:$0xff]
    %v746 = vld [vmem:[#allocation11 + $0x2d8] sm:$0xff]
    %v747 = vld [vmem:[#allocation11 + $0x2e0] sm:$0xff]
    %v748 = vld [vmem:[#allocation11 + $0x2e8] sm:$0xff]
    %v749 = vld [vmem:[#allocation11 + $0x2f0] sm:$0xff]
    %v750 = vld [vmem:[#allocation11 + $0x2f8] sm:$0xff]
    %v751 = vld [vmem:[#allocation11 + $0x300] sm:$0xff]
    %v752 = vld [vmem:[#allocation11 + $0x308] sm:$0xff]
    %v753 = vld [vmem:[#allocation11 + $0x310] sm:$0xff]
    %v754 = vld [vmem:[#allocation11 + $0x318] sm:$0xff]
    %v755 = vld [vmem:[#allocation11 + $0x320] sm:$0xff]
    %v756 = vld [vmem:[#allocation11 + $0x328] sm:$0xff]
    %v757 = vld [vmem:[#allocation11 + $0x330] sm:$0xff]
    %v758 = vld [vmem:[#allocation11 + $0x338] sm:$0xff]
    %v759 = vld [vmem:[#allocation11 + $0x340] sm:$0xff]
    %v760 = vld [vmem:[#allocation11 + $0x348] sm:$0xff]
    %v761 = vld [vmem:[#allocation11 + $0x350] sm:$0xff]
    %v762 = vld [vmem:[#allocation11 + $0x358] sm:$0xff]
    %v763 = vld [vmem:[#allocation11 + $0x360] sm:$0xff]
    %v764 = vld [vmem:[#allocation11 + $0x368] sm:$0xff]
    %v765 = vld [vmem:[#allocation11 + $0x370] sm:$0xff]
    %v766 = vld [vmem:[#allocation11 + $0x378] sm:$0xff]
    %v767 = vld [vmem:[#allocation11 + $0x380] sm:$0xff]
    %v768 = vld [vmem:[#allocation11 + $0x388] sm:$0xff]
    %v769 = vld [vmem:[#allocation11 + $0x390] sm:$0xff]
    %v770 = vld [vmem:[#allocation11 + $0x398] sm:$0xff]
    %v771 = vld [vmem:[#allocation11 + $0x3a0] sm:$0xff]
    %v772 = vld [vmem:[#allocation11 + $0x3a8] sm:$0xff]
    %v773 = vld [vmem:[#allocation11 + $0x3b0] sm:$0xff]
    %v774 = vld [vmem:[#allocation11 + $0x3b8] sm:$0xff]
    %v775 = vld [vmem:[#allocation11 + $0x3c0] sm:$0xff]
    %v776 = vld [vmem:[#allocation11 + $0x3c8] sm:$0xff]
    %v777 = vld [vmem:[#allocation11 + $0x3d0] sm:$0xff]
    %v778 = vld [vmem:[#allocation11 + $0x3d8] sm:$0xff]
    %v779 = vld [vmem:[#allocation11 + $0x3e0] sm:$0xff]
    %v780 = vld [vmem:[#allocation11 + $0x3e8] sm:$0xff]
    %v781 = vld [vmem:[#allocation11 + $0x3f0] sm:$0xff]
    %v782 = vld [vmem:[#allocation11 + $0x3f8] sm:$0xff]
    %v783 = vld [vmem:[#allocation13] sm:$0xff]
    %v784 = vld [vmem:[#allocation13 + $0x8] sm:$0xff]
    %v785 = vld [vmem:[#allocation13 + $0x10] sm:$0xff]
    %v786 = vld [vmem:[#allocation13 + $0x18] sm:$0xff]
    %v787 = vld [vmem:[#allocation13 + $0x20] sm:$0xff]
    %v788 = vld [vmem:[#allocation13 + $0x28] sm:$0xff]
    %v789 = vld [vmem:[#allocation13 + $0x30] sm:$0xff]
    %v790 = vld [vmem:[#allocation13 + $0x38] sm:$0xff]
    %v791 = vld [vmem:[#allocation13 + $0x40] sm:$0xff]
    %v792 = vld [vmem:[#allocation13 + $0x48] sm:$0xff]
    %v793 = vld [vmem:[#allocation13 + $0x50] sm:$0xff]
    %v794 = vld [vmem:[#allocation13 + $0x58] sm:$0xff]
    %v795 = vld [vmem:[#allocation13 + $0x60] sm:$0xff]
    %v796 = vld [vmem:[#allocation13 + $0x68] sm:$0xff]
    %v797 = vld [vmem:[#allocation13 + $0x70] sm:$0xff]
    %v798 = vld [vmem:[#allocation13 + $0x78] sm:$0xff]
    %v799 = vld [vmem:[#allocation13 + $0x80] sm:$0xff]
    %v800 = vld [vmem:[#allocation13 + $0x88] sm:$0xff]
    %v801 = vld [vmem:[#allocation13 + $0x90] sm:$0xff]
    %v802 = vld [vmem:[#allocation13 + $0x98] sm:$0xff]
    %v803 = vld [vmem:[#allocation13 + $0xa0] sm:$0xff]
    %v804 = vld [vmem:[#allocation13 + $0xa8] sm:$0xff]
    %v805 = vld [vmem:[#allocation13 + $0xb0] sm:$0xff]
    %v806 = vld [vmem:[#allocation13 + $0xb8] sm:$0xff]
    %v807 = vld [vmem:[#allocation13 + $0xc0] sm:$0xff]
    %v808 = vld [vmem:[#allocation13 + $0xc8] sm:$0xff]
    %v809 = vld [vmem:[#allocation13 + $0xd0] sm:$0xff]
    %v810 = vld [vmem:[#allocation13 + $0xd8] sm:$0xff]
    %v811 = vld [vmem:[#allocation13 + $0xe0] sm:$0xff]
    %v812 = vld [vmem:[#allocation13 + $0xe8] sm:$0xff]
    %v813 = vld [vmem:[#allocation13 + $0xf0] sm:$0xff]
    %v814 = vld [vmem:[#allocation13 + $0xf8] sm:$0xff]
    %v815 = vld [vmem:[#allocation13 + $0x100] sm:$0xff]
    %v816 = vld [vmem:[#allocation13 + $0x108] sm:$0xff]
    %v817 = vld [vmem:[#allocation13 + $0x110] sm:$0xff]
    %v818 = vld [vmem:[#allocation13 + $0x118] sm:$0xff]
    %v819 = vld [vmem:[#allocation13 + $0x120] sm:$0xff]
    %v820 = vld [vmem:[#allocation13 + $0x128] sm:$0xff]
    %v821 = vld [vmem:[#allocation13 + $0x130] sm:$0xff]
    %v822 = vld [vmem:[#allocation13 + $0x138] sm:$0xff]
    %v823 = vld [vmem:[#allocation13 + $0x140] sm:$0xff]
    %v824 = vld [vmem:[#allocation13 + $0x148] sm:$0xff]
    %v825 = vld [vmem:[#allocation13 + $0x150] sm:$0xff]
    %v826 = vld [vmem:[#allocation13 + $0x158] sm:$0xff]
    %v827 = vld [vmem:[#allocation13 + $0x160] sm:$0xff]
    %v828 = vld [vmem:[#allocation13 + $0x168] sm:$0xff]
    %v829 = vld [vmem:[#allocation13 + $0x170] sm:$0xff]
    %v830 = vld [vmem:[#allocation13 + $0x178] sm:$0xff]
    %v831 = vld [vmem:[#allocation13 + $0x180] sm:$0xff]
    %v832 = vld [vmem:[#allocation13 + $0x188] sm:$0xff]
    %v833 = vld [vmem:[#allocation13 + $0x190] sm:$0xff]
    %v834 = vld [vmem:[#allocation13 + $0x198] sm:$0xff]
    %v835 = vld [vmem:[#allocation13 + $0x1a0] sm:$0xff]
    %v836 = vld [vmem:[#allocation13 + $0x1a8] sm:$0xff]
    %v837 = vld [vmem:[#allocation13 + $0x1b0] sm:$0xff]
    %v838 = vld [vmem:[#allocation13 + $0x1b8] sm:$0xff]
    %v839 = vld [vmem:[#allocation13 + $0x1c0] sm:$0xff]
    %v840 = vld [vmem:[#allocation13 + $0x1c8] sm:$0xff]
    %v841 = vld [vmem:[#allocation13 + $0x1d0] sm:$0xff]
    %v842 = vld [vmem:[#allocation13 + $0x1d8] sm:$0xff]
    %v843 = vld [vmem:[#allocation13 + $0x1e0] sm:$0xff]
    %v844 = vld [vmem:[#allocation13 + $0x1e8] sm:$0xff]
    %v845 = vld [vmem:[#allocation13 + $0x1f0] sm:$0xff]
    %v846 = vld [vmem:[#allocation13 + $0x1f8] sm:$0xff]
    %v847 = vld [vmem:[#allocation13 + $0x200] sm:$0xff]
    %v848 = vld [vmem:[#allocation13 + $0x208] sm:$0xff]
    %v849 = vld [vmem:[#allocation13 + $0x210] sm:$0xff]
    %v850 = vld [vmem:[#allocation13 + $0x218] sm:$0xff]
    %v851 = vld [vmem:[#allocation13 + $0x220] sm:$0xff]
    %v852 = vld [vmem:[#allocation13 + $0x228] sm:$0xff]
    %v853 = vld [vmem:[#allocation13 + $0x230] sm:$0xff]
    %v854 = vld [vmem:[#allocation13 + $0x238] sm:$0xff]
    %v855 = vld [vmem:[#allocation13 + $0x240] sm:$0xff]
    %v856 = vld [vmem:[#allocation13 + $0x248] sm:$0xff]
    %v857 = vld [vmem:[#allocation13 + $0x250] sm:$0xff]
    %v858 = vld [vmem:[#allocation13 + $0x258] sm:$0xff]
    %v859 = vld [vmem:[#allocation13 + $0x260] sm:$0xff]
    %v860 = vld [vmem:[#allocation13 + $0x268] sm:$0xff]
    %v861 = vld [vmem:[#allocation13 + $0x270] sm:$0xff]
    %v862 = vld [vmem:[#allocation13 + $0x278] sm:$0xff]
    %v863 = vld [vmem:[#allocation13 + $0x280] sm:$0xff]
    %v864 = vld [vmem:[#allocation13 + $0x288] sm:$0xff]
    %v865 = vld [vmem:[#allocation13 + $0x290] sm:$0xff]
    %v866 = vld [vmem:[#allocation13 + $0x298] sm:$0xff]
    %v867 = vld [vmem:[#allocation13 + $0x2a0] sm:$0xff]
    %v868 = vld [vmem:[#allocation13 + $0x2a8] sm:$0xff]
    %v869 = vld [vmem:[#allocation13 + $0x2b0] sm:$0xff]
    %v870 = vld [vmem:[#allocation13 + $0x2b8] sm:$0xff]
    %v871 = vld [vmem:[#allocation13 + $0x2c0] sm:$0xff]
    %v872 = vld [vmem:[#allocation13 + $0x2c8] sm:$0xff]
    %v873 = vld [vmem:[#allocation13 + $0x2d0] sm:$0xff]
    %v874 = vld [vmem:[#allocation13 + $0x2d8] sm:$0xff]
    %v875 = vld [vmem:[#allocation13 + $0x2e0] sm:$0xff]
    %v876 = vld [vmem:[#allocation13 + $0x2e8] sm:$0xff]
    %v877 = vld [vmem:[#allocation13 + $0x2f0] sm:$0xff]
    %v878 = vld [vmem:[#allocation13 + $0x2f8] sm:$0xff]
    %v879 = vld [vmem:[#allocation13 + $0x300] sm:$0xff]
    %v880 = vld [vmem:[#allocation13 + $0x308] sm:$0xff]
    %v881 = vld [vmem:[#allocation13 + $0x310] sm:$0xff]
    %v882 = vld [vmem:[#allocation13 + $0x318] sm:$0xff]
    %v883 = vld [vmem:[#allocation13 + $0x320] sm:$0xff]
    %v884 = vld [vmem:[#allocation13 + $0x328] sm:$0xff]
    %v885 = vld [vmem:[#allocation13 + $0x330] sm:$0xff]
    %v886 = vld [vmem:[#allocation13 + $0x338] sm:$0xff]
    %v887 = vld [vmem:[#allocation13 + $0x340] sm:$0xff]
    %v888 = vld [vmem:[#allocation13 + $0x348] sm:$0xff]
    %v889 = vld [vmem:[#allocation13 + $0x350] sm:$0xff]
    %v890 = vld [vmem:[#allocation13 + $0x358] sm:$0xff]
    %v891 = vld [vmem:[#allocation13 + $0x360] sm:$0xff]
    %v892 = vld [vmem:[#allocation13 + $0x368] sm:$0xff]
    %v893 = vld [vmem:[#allocation13 + $0x370] sm:$0xff]
    %v894 = vld [vmem:[#allocation13 + $0x378] sm:$0xff]
    %v895 = vld [vmem:[#allocation13 + $0x380] sm:$0xff]
    %v896 = vld [vmem:[#allocation13 + $0x388] sm:$0xff]
    %v897 = vld [vmem:[#allocation13 + $0x390] sm:$0xff]
    %v898 = vld [vmem:[#allocation13 + $0x398] sm:$0xff]
    %v899 = vld [vmem:[#allocation13 + $0x3a0] sm:$0xff]
    %v900 = vld [vmem:[#allocation13 + $0x3a8] sm:$0xff]
    %v901 = vld [vmem:[#allocation13 + $0x3b0] sm:$0xff]
    %v902 = vld [vmem:[#allocation13 + $0x3b8] sm:$0xff]
    %v903 = vld [vmem:[#allocation13 + $0x3c0] sm:$0xff]
    %v904 = vld [vmem:[#allocation13 + $0x3c8] sm:$0xff]
    %v905 = vld [vmem:[#allocation13 + $0x3d0] sm:$0xff]
    %v906 = vld [vmem:[#allocation13 + $0x3d8] sm:$0xff]
    %v907 = vld [vmem:[#allocation13 + $0x3e0] sm:$0xff]
    %v908 = vld [vmem:[#allocation13 + $0x3e8] sm:$0xff]
    %v909 = vld [vmem:[#allocation13 + $0x3f0] sm:$0xff]
    %v910 = vld [vmem:[#allocation13 + $0x3f8] sm:$0xff]
    %v1039 = vunpack.c.l.b16 %v783
    %v1040 = vunpack.c.h.b16 %v783
    %v1041 = vunpack.c.l.b16 %v784
    %v1042 = vunpack.c.h.b16 %v784
    %v1043 = vunpack.c.l.b16 %v785
    %v1044 = vunpack.c.h.b16 %v785
    %v1045 = vunpack.c.l.b16 %v786
    %v1046 = vunpack.c.h.b16 %v786
    %v1047 = vunpack.c.l.b16 %v787
    %v1048 = vunpack.c.h.b16 %v787
    %v1049 = vunpack.c.l.b16 %v788
    %v1050 = vunpack.c.h.b16 %v788
    %v1051 = vunpack.c.l.b16 %v789
    %v1052 = vunpack.c.h.b16 %v789
    %v1053 = vunpack.c.l.b16 %v790
    %v1054 = vunpack.c.h.b16 %v790
    %v1055 = vunpack.c.l.b16 %v791
    %v1056 = vunpack.c.h.b16 %v791
    %v1057 = vunpack.c.l.b16 %v792
    %v1058 = vunpack.c.h.b16 %v792
    %v1059 = vunpack.c.l.b16 %v793
    %v1060 = vunpack.c.h.b16 %v793
    %v1061 = vunpack.c.l.b16 %v794
    %v1062 = vunpack.c.h.b16 %v794
    %v1063 = vunpack.c.l.b16 %v795
    %v1064 = vunpack.c.h.b16 %v795
    %v1065 = vunpack.c.l.b16 %v796
    %v1066 = vunpack.c.h.b16 %v796
    %v1067 = vunpack.c.l.b16 %v797
    %v1068 = vunpack.c.h.b16 %v797
    %v1069 = vunpack.c.l.b16 %v798
    %v1070 = vunpack.c.h.b16 %v798
    %v1071 = vunpack.c.l.b16 %v799
    %v1072 = vunpack.c.h.b16 %v799
    %v1073 = vunpack.c.l.b16 %v800
    %v1074 = vunpack.c.h.b16 %v800
    %v1075 = vunpack.c.l.b16 %v801
    %v1076 = vunpack.c.h.b16 %v801
    %v1077 = vunpack.c.l.b16 %v802
    %v1078 = vunpack.c.h.b16 %v802
    %v1079 = vunpack.c.l.b16 %v803
    %v1080 = vunpack.c.h.b16 %v803
    %v1081 = vunpack.c.l.b16 %v804
    %v1082 = vunpack.c.h.b16 %v804
    %v1083 = vunpack.c.l.b16 %v805
    %v1084 = vunpack.c.h.b16 %v805
    %v1085 = vunpack.c.l.b16 %v806
    %v1086 = vunpack.c.h.b16 %v806
    %v1087 = vunpack.c.l.b16 %v807
    %v1088 = vunpack.c.h.b16 %v807
    %v1089 = vunpack.c.l.b16 %v808
    %v1090 = vunpack.c.h.b16 %v808
    %v1091 = vunpack.c.l.b16 %v809
    %v1092 = vunpack.c.h.b16 %v809
    %v1093 = vunpack.c.l.b16 %v810
    %v1094 = vunpack.c.h.b16 %v810
    %v1095 = vunpack.c.l.b16 %v811
    %v1096 = vunpack.c.h.b16 %v811
    %v1097 = vunpack.c.l.b16 %v812
    %v1098 = vunpack.c.h.b16 %v812
    %v1099 = vunpack.c.l.b16 %v813
    %v1100 = vunpack.c.h.b16 %v813
    %v1101 = vunpack.c.l.b16 %v814
    %v1102 = vunpack.c.h.b16 %v814
    %v1103 = vunpack.c.l.b16 %v815
    %v1104 = vunpack.c.h.b16 %v815
    %v1105 = vunpack.c.l.b16 %v816
    %v1106 = vunpack.c.h.b16 %v816
    %v1107 = vunpack.c.l.b16 %v817
    %v1108 = vunpack.c.h.b16 %v817
    %v1109 = vunpack.c.l.b16 %v818
    %v1110 = vunpack.c.h.b16 %v818
    %v1111 = vunpack.c.l.b16 %v819
    %v1112 = vunpack.c.h.b16 %v819
    %v1113 = vunpack.c.l.b16 %v820
    %v1114 = vunpack.c.h.b16 %v820
    %v1115 = vunpack.c.l.b16 %v821
    %v1116 = vunpack.c.h.b16 %v821
    %v1117 = vunpack.c.l.b16 %v822
    %v1118 = vunpack.c.h.b16 %v822
    %v1119 = vunpack.c.l.b16 %v823
    %v1120 = vunpack.c.h.b16 %v823
    %v1121 = vunpack.c.l.b16 %v824
    %v1122 = vunpack.c.h.b16 %v824
    %v1123 = vunpack.c.l.b16 %v825
    %v1124 = vunpack.c.h.b16 %v825
    %v1125 = vunpack.c.l.b16 %v826
    %v1126 = vunpack.c.h.b16 %v826
    %v1127 = vunpack.c.l.b16 %v827
    %v1128 = vunpack.c.h.b16 %v827
    %v1129 = vunpack.c.l.b16 %v828
    %v1130 = vunpack.c.h.b16 %v828
    %v1131 = vunpack.c.l.b16 %v829
    %v1132 = vunpack.c.h.b16 %v829
    %v1133 = vunpack.c.l.b16 %v830
    %v1134 = vunpack.c.h.b16 %v830
    %v1135 = vunpack.c.l.b16 %v831
    %v1136 = vunpack.c.h.b16 %v831
    %v1137 = vunpack.c.l.b16 %v832
    %v1138 = vunpack.c.h.b16 %v832
    %v1139 = vunpack.c.l.b16 %v833
    %v1140 = vunpack.c.h.b16 %v833
    %v1141 = vunpack.c.l.b16 %v834
    %v1142 = vunpack.c.h.b16 %v834
    %v1143 = vunpack.c.l.b16 %v835
    %v1144 = vunpack.c.h.b16 %v835
    %v1145 = vunpack.c.l.b16 %v836
    %v1146 = vunpack.c.h.b16 %v836
    %v1147 = vunpack.c.l.b16 %v837
    %v1148 = vunpack.c.h.b16 %v837
    %v1149 = vunpack.c.l.b16 %v838
    %v1150 = vunpack.c.h.b16 %v838
    %v1151 = vunpack.c.l.b16 %v839
    %v1152 = vunpack.c.h.b16 %v839
    %v1153 = vunpack.c.l.b16 %v840
    %v1154 = vunpack.c.h.b16 %v840
    %v1155 = vunpack.c.l.b16 %v841
    %v1156 = vunpack.c.h.b16 %v841
    %v1157 = vunpack.c.l.b16 %v842
    %v1158 = vunpack.c.h.b16 %v842
    %v1159 = vunpack.c.l.b16 %v843
    %v1160 = vunpack.c.h.b16 %v843
    %v1161 = vunpack.c.l.b16 %v844
    %v1162 = vunpack.c.h.b16 %v844
    %v1163 = vunpack.c.l.b16 %v845
    %v1164 = vunpack.c.h.b16 %v845
    %v1165 = vunpack.c.l.b16 %v846
    %v1166 = vunpack.c.h.b16 %v846
    %v1167 = vunpack.c.l.b16 %v847
    %v1168 = vunpack.c.h.b16 %v847
    %v1169 = vunpack.c.l.b16 %v848
    %v1170 = vunpack.c.h.b16 %v848
    %v1171 = vunpack.c.l.b16 %v849
    %v1172 = vunpack.c.h.b16 %v849
    %v1173 = vunpack.c.l.b16 %v850
    %v1174 = vunpack.c.h.b16 %v850
    %v1175 = vunpack.c.l.b16 %v851
    %v1176 = vunpack.c.h.b16 %v851
    %v1177 = vunpack.c.l.b16 %v852
    %v1178 = vunpack.c.h.b16 %v852
    %v1179 = vunpack.c.l.b16 %v853
    %v1180 = vunpack.c.h.b16 %v853
    %v1181 = vunpack.c.l.b16 %v854
    %v1182 = vunpack.c.h.b16 %v854
    %v1183 = vunpack.c.l.b16 %v855
    %v1184 = vunpack.c.h.b16 %v855
    %v1185 = vunpack.c.l.b16 %v856
    %v1186 = vunpack.c.h.b16 %v856
    %v1187 = vunpack.c.l.b16 %v857
    %v1188 = vunpack.c.h.b16 %v857
    %v1189 = vunpack.c.l.b16 %v858
    %v1190 = vunpack.c.h.b16 %v858
    %v1191 = vunpack.c.l.b16 %v859
    %v1192 = vunpack.c.h.b16 %v859
    %v1193 = vunpack.c.l.b16 %v860
    %v1194 = vunpack.c.h.b16 %v860
    %v1195 = vunpack.c.l.b16 %v861
    %v1196 = vunpack.c.h.b16 %v861
    %v1197 = vunpack.c.l.b16 %v862
    %v1198 = vunpack.c.h.b16 %v862
    %v1199 = vunpack.c.l.b16 %v863
    %v1200 = vunpack.c.h.b16 %v863
    %v1201 = vunpack.c.l.b16 %v864
    %v1202 = vunpack.c.h.b16 %v864
    %v1203 = vunpack.c.l.b16 %v865
    %v1204 = vunpack.c.h.b16 %v865
    %v1205 = vunpack.c.l.b16 %v866
    %v1206 = vunpack.c.h.b16 %v866
    %v1207 = vunpack.c.l.b16 %v867
    %v1208 = vunpack.c.h.b16 %v867
    %v1209 = vunpack.c.l.b16 %v868
    %v1210 = vunpack.c.h.b16 %v868
    %v1211 = vunpack.c.l.b16 %v869
    %v1212 = vunpack.c.h.b16 %v869
    %v1213 = vunpack.c.l.b16 %v870
    %v1214 = vunpack.c.h.b16 %v870
    %v1215 = vunpack.c.l.b16 %v871
    %v1216 = vunpack.c.h.b16 %v871
    %v1217 = vunpack.c.l.b16 %v872
    %v1218 = vunpack.c.h.b16 %v872
    %v1219 = vunpack.c.l.b16 %v873
    %v1220 = vunpack.c.h.b16 %v873
    %v1221 = vunpack.c.l.b16 %v874
    %v1222 = vunpack.c.h.b16 %v874
    %v1223 = vunpack.c.l.b16 %v875
    %v1224 = vunpack.c.h.b16 %v875
    %v1225 = vunpack.c.l.b16 %v876
    %v1226 = vunpack.c.h.b16 %v876
    %v1227 = vunpack.c.l.b16 %v877
    %v1228 = vunpack.c.h.b16 %v877
    %v1229 = vunpack.c.l.b16 %v878
    %v1230 = vunpack.c.h.b16 %v878
    %v1231 = vunpack.c.l.b16 %v879
    %v1232 = vunpack.c.h.b16 %v879
    %v1233 = vunpack.c.l.b16 %v880
    %v1234 = vunpack.c.h.b16 %v880
    %v1235 = vunpack.c.l.b16 %v881
    %v1236 = vunpack.c.h.b16 %v881
    %v1237 = vunpack.c.l.b16 %v882
    %v1238 = vunpack.c.h.b16 %v882
    %v1239 = vunpack.c.l.b16 %v883
    %v1240 = vunpack.c.h.b16 %v883
    %v1241 = vunpack.c.l.b16 %v884
    %v1242 = vunpack.c.h.b16 %v884
    %v1243 = vunpack.c.l.b16 %v885
    %v1244 = vunpack.c.h.b16 %v885
    %v1245 = vunpack.c.l.b16 %v886
    %v1246 = vunpack.c.h.b16 %v886
    %v1247 = vunpack.c.l.b16 %v887
    %v1248 = vunpack.c.h.b16 %v887
    %v1249 = vunpack.c.l.b16 %v888
    %v1250 = vunpack.c.h.b16 %v888
    %v1251 = vunpack.c.l.b16 %v889
    %v1252 = vunpack.c.h.b16 %v889
    %v1253 = vunpack.c.l.b16 %v890
    %v1254 = vunpack.c.h.b16 %v890
    %v1255 = vunpack.c.l.b16 %v891
    %v1256 = vunpack.c.h.b16 %v891
    %v1257 = vunpack.c.l.b16 %v892
    %v1258 = vunpack.c.h.b16 %v892
    %v1259 = vunpack.c.l.b16 %v893
    %v1260 = vunpack.c.h.b16 %v893
    %v1261 = vunpack.c.l.b16 %v894
    %v1262 = vunpack.c.h.b16 %v894
    %v1263 = vunpack.c.l.b16 %v895
    %v1264 = vunpack.c.h.b16 %v895
    %v1265 = vunpack.c.l.b16 %v896
    %v1266 = vunpack.c.h.b16 %v896
    %v1267 = vunpack.c.l.b16 %v897
    %v1268 = vunpack.c.h.b16 %v897
    %v1269 = vunpack.c.l.b16 %v898
    %v1270 = vunpack.c.h.b16 %v898
    %v1271 = vunpack.c.l.b16 %v899
    %v1272 = vunpack.c.h.b16 %v899
    %v1273 = vunpack.c.l.b16 %v900
    %v1274 = vunpack.c.h.b16 %v900
    %v1275 = vunpack.c.l.b16 %v901
    %v1276 = vunpack.c.h.b16 %v901
    %v1277 = vunpack.c.l.b16 %v902
    %v1278 = vunpack.c.h.b16 %v902
    %v1279 = vunpack.c.l.b16 %v903
    %v1280 = vunpack.c.h.b16 %v903
    %v1281 = vunpack.c.l.b16 %v904
    %v1282 = vunpack.c.h.b16 %v904
    %v1283 = vunpack.c.l.b16 %v905
    %v1284 = vunpack.c.h.b16 %v905
    %v1285 = vunpack.c.l.b16 %v906
    %v1286 = vunpack.c.h.b16 %v906
    %v1287 = vunpack.c.l.b16 %v907
    %v1288 = vunpack.c.h.b16 %v907
    %v1289 = vunpack.c.l.b16 %v908
    %v1290 = vunpack.c.h.b16 %v908
    %v1291 = vunpack.c.l.b16 %v909
    %v1292 = vunpack.c.h.b16 %v909
    %v1293 = vunpack.c.l.b16 %v910
    %v1294 = vunpack.c.h.b16 %v910
    %v1295 = vpack.c.b16 %v1043, %v1039
    %v1296 = vpack.c.b16 %v1044, %v1040
    %v1297 = vpack.c.b16 %v1045, %v1041
    %v1298 = vpack.c.b16 %v1046, %v1042
    %v1299 = vpack.c.b16 %v1051, %v1047
    %v1300 = vpack.c.b16 %v1052, %v1048
    %v1301 = vpack.c.b16 %v1053, %v1049
    %v1302 = vpack.c.b16 %v1054, %v1050
    %v1303 = vpack.c.b16 %v1059, %v1055
    %v1304 = vpack.c.b16 %v1060, %v1056
    %v1305 = vpack.c.b16 %v1061, %v1057
    %v1306 = vpack.c.b16 %v1062, %v1058
    %v1307 = vpack.c.b16 %v1067, %v1063
    %v1308 = vpack.c.b16 %v1068, %v1064
    %v1309 = vpack.c.b16 %v1069, %v1065
    %v1310 = vpack.c.b16 %v1070, %v1066
    %v1311 = vpack.c.b16 %v1075, %v1071
    %v1312 = vpack.c.b16 %v1076, %v1072
    %v1313 = vpack.c.b16 %v1077, %v1073
    %v1314 = vpack.c.b16 %v1078, %v1074
    %v1315 = vpack.c.b16 %v1083, %v1079
    %v1316 = vpack.c.b16 %v1084, %v1080
    %v1317 = vpack.c.b16 %v1085, %v1081
    %v1318 = vpack.c.b16 %v1086, %v1082
    %v1319 = vpack.c.b16 %v1091, %v1087
    %v1320 = vpack.c.b16 %v1092, %v1088
    %v1321 = vpack.c.b16 %v1093, %v1089
    %v1322 = vpack.c.b16 %v1094, %v1090
    %v1323 = vpack.c.b16 %v1099, %v1095
    %v1324 = vpack.c.b16 %v1100, %v1096
    %v1325 = vpack.c.b16 %v1101, %v1097
    %v1326 = vpack.c.b16 %v1102, %v1098
    %v1327 = vpack.c.b16 %v1107, %v1103
    %v1328 = vpack.c.b16 %v1108, %v1104
    %v1329 = vpack.c.b16 %v1109, %v1105
    %v1330 = vpack.c.b16 %v1110, %v1106
    %v1331 = vpack.c.b16 %v1115, %v1111
    %v1332 = vpack.c.b16 %v1116, %v1112
    %v1333 = vpack.c.b16 %v1117, %v1113
    %v1334 = vpack.c.b16 %v1118, %v1114
    %v1335 = vpack.c.b16 %v1123, %v1119
    %v1336 = vpack.c.b16 %v1124, %v1120
    %v1337 = vpack.c.b16 %v1125, %v1121
    %v1338 = vpack.c.b16 %v1126, %v1122
    %v1339 = vpack.c.b16 %v1131, %v1127
    %v1340 = vpack.c.b16 %v1132, %v1128
    %v1341 = vpack.c.b16 %v1133, %v1129
    %v1342 = vpack.c.b16 %v1134, %v1130
    %v1343 = vpack.c.b16 %v1139, %v1135
    %v1344 = vpack.c.b16 %v1140, %v1136
    %v1345 = vpack.c.b16 %v1141, %v1137
    %v1346 = vpack.c.b16 %v1142, %v1138
    %v1347 = vpack.c.b16 %v1147, %v1143
    %v1348 = vpack.c.b16 %v1148, %v1144
    %v1349 = vpack.c.b16 %v1149, %v1145
    %v1350 = vpack.c.b16 %v1150, %v1146
    %v1351 = vpack.c.b16 %v1155, %v1151
    %v1352 = vpack.c.b16 %v1156, %v1152
    %v1353 = vpack.c.b16 %v1157, %v1153
    %v1354 = vpack.c.b16 %v1158, %v1154
    %v1355 = vpack.c.b16 %v1163, %v1159
    %v1356 = vpack.c.b16 %v1164, %v1160
    %v1357 = vpack.c.b16 %v1165, %v1161
    %v1358 = vpack.c.b16 %v1166, %v1162
    %v1359 = vpack.c.b16 %v1171, %v1167
    %v1360 = vpack.c.b16 %v1172, %v1168
    %v1361 = vpack.c.b16 %v1173, %v1169
    %v1362 = vpack.c.b16 %v1174, %v1170
    %v1363 = vpack.c.b16 %v1179, %v1175
    %v1364 = vpack.c.b16 %v1180, %v1176
    %v1365 = vpack.c.b16 %v1181, %v1177
    %v1366 = vpack.c.b16 %v1182, %v1178
    %v1367 = vpack.c.b16 %v1187, %v1183
    %v1368 = vpack.c.b16 %v1188, %v1184
    %v1369 = vpack.c.b16 %v1189, %v1185
    %v1370 = vpack.c.b16 %v1190, %v1186
    %v1371 = vpack.c.b16 %v1195, %v1191
    %v1372 = vpack.c.b16 %v1196, %v1192
    %v1373 = vpack.c.b16 %v1197, %v1193
    %v1374 = vpack.c.b16 %v1198, %v1194
    %v1375 = vpack.c.b16 %v1203, %v1199
    %v1376 = vpack.c.b16 %v1204, %v1200
    %v1377 = vpack.c.b16 %v1205, %v1201
    %v1378 = vpack.c.b16 %v1206, %v1202
    %v1379 = vpack.c.b16 %v1211, %v1207
    %v1380 = vpack.c.b16 %v1212, %v1208
    %v1381 = vpack.c.b16 %v1213, %v1209
    %v1382 = vpack.c.b16 %v1214, %v1210
    %v1383 = vpack.c.b16 %v1219, %v1215
    %v1384 = vpack.c.b16 %v1220, %v1216
    %v1385 = vpack.c.b16 %v1221, %v1217
    %v1386 = vpack.c.b16 %v1222, %v1218
    %v1387 = vpack.c.b16 %v1227, %v1223
    %v1388 = vpack.c.b16 %v1228, %v1224
    %v1389 = vpack.c.b16 %v1229, %v1225
    %v1390 = vpack.c.b16 %v1230, %v1226
    %v1391 = vpack.c.b16 %v1235, %v1231
    %v1392 = vpack.c.b16 %v1236, %v1232
    %v1393 = vpack.c.b16 %v1237, %v1233
    %v1394 = vpack.c.b16 %v1238, %v1234
    %v1395 = vpack.c.b16 %v1243, %v1239
    %v1396 = vpack.c.b16 %v1244, %v1240
    %v1397 = vpack.c.b16 %v1245, %v1241
    %v1398 = vpack.c.b16 %v1246, %v1242
    %v1399 = vpack.c.b16 %v1251, %v1247
    %v1400 = vpack.c.b16 %v1252, %v1248
    %v1401 = vpack.c.b16 %v1253, %v1249
    %v1402 = vpack.c.b16 %v1254, %v1250
    %v1403 = vpack.c.b16 %v1259, %v1255
    %v1404 = vpack.c.b16 %v1260, %v1256
    %v1405 = vpack.c.b16 %v1261, %v1257
    %v1406 = vpack.c.b16 %v1262, %v1258
    %v1407 = vpack.c.b16 %v1267, %v1263
    %v1408 = vpack.c.b16 %v1268, %v1264
    %v1409 = vpack.c.b16 %v1269, %v1265
    %v1410 = vpack.c.b16 %v1270, %v1266
    %v1411 = vpack.c.b16 %v1275, %v1271
    %v1412 = vpack.c.b16 %v1276, %v1272
    %v1413 = vpack.c.b16 %v1277, %v1273
    %v1414 = vpack.c.b16 %v1278, %v1274
    %v1415 = vpack.c.b16 %v1283, %v1279
    %v1416 = vpack.c.b16 %v1284, %v1280
    %v1417 = vpack.c.b16 %v1285, %v1281
    %v1418 = vpack.c.b16 %v1286, %v1282
    %v1419 = vpack.c.b16 %v1291, %v1287
    %v1420 = vpack.c.b16 %v1292, %v1288
    %v1421 = vpack.c.b16 %v1293, %v1289
    %v1422 = vpack.c.b16 %v1294, %v1290
    %1551 = vmatprep.subr.bf16.mxu0 %v1296
    %1552 = vmatpush1.bf16.msra.mxu0 %v1295
    %1553 = vmatprep.subr.bf16.mxu0 %v1300
    %1554 = vmatpush1.bf16.msra.mxu0 %v1299
    %1555 = vmatprep.subr.bf16.mxu0 %v1304
    %1556 = vmatpush1.bf16.msra.mxu0 %v1303
    %1557 = vmatprep.subr.bf16.mxu0 %v1308
    %1558 = vmatpush1.bf16.msra.mxu0 %v1307
    %1559 = vmatprep.subr.bf16.mxu0 %v1312
    %1560 = vmatpush1.bf16.msra.mxu0 %v1311
    %1561 = vmatprep.subr.bf16.mxu0 %v1316
    %1562 = vmatpush1.bf16.msra.mxu0 %v1315
    %1563 = vmatprep.subr.bf16.mxu0 %v1320
    %1564 = vmatpush1.bf16.msra.mxu0 %v1319
    %1565 = vmatprep.subr.bf16.mxu0 %v1324
    %1566 = vmatpush1.bf16.msra.mxu0 %v1323
    %1567 = vmatprep.subr.bf16.mxu0 %v1328
    %1568 = vmatpush1.bf16.msra.mxu0 %v1327
    %1569 = vmatprep.subr.bf16.mxu0 %v1332
    %1570 = vmatpush1.bf16.msra.mxu0 %v1331
    %1571 = vmatprep.subr.bf16.mxu0 %v1336
    %1572 = vmatpush1.bf16.msra.mxu0 %v1335
    %1573 = vmatprep.subr.bf16.mxu0 %v1340
    %1574 = vmatpush1.bf16.msra.mxu0 %v1339
    %1575 = vmatprep.subr.bf16.mxu0 %v1344
    %1576 = vmatpush1.bf16.msra.mxu0 %v1343
    %1577 = vmatprep.subr.bf16.mxu0 %v1348
    %1578 = vmatpush1.bf16.msra.mxu0 %v1347
    %1579 = vmatprep.subr.bf16.mxu0 %v1352
    %1580 = vmatpush1.bf16.msra.mxu0 %v1351
    %1581 = vmatprep.subr.bf16.mxu0 %v1356
    %1582 = vmatpush1.bf16.msra.mxu0 %v1355
    %1583 = vmatprep.mubr.bf16.mxu0 %v498
    %1584 = vmatmul.mubr.bf16.gmra.mrb[0].mxu0 %v497
    %v1585 = vpop.f32.mrb[0].mxu0
    %v1586 = vadd.f32 0.0, %v1585
    %v1587 = vpop.f32.mrb[0].mxu0
    %v1588 = vadd.f32 0.0, %v1587
    %v1589 = vpop.f32.mrb[0].mxu0
    %v1590 = vadd.f32 0.0, %v1589
    %v1591 = vpop.f32.mrb[0].mxu0
    %v1592 = vadd.f32 0.0, %v1591
    %1593 = vdwg.mxu0
    %1594 = vmatprep.subr.bf16.mxu0 %v1360
    %1595 = vmatpush1.bf16.msra.mxu0 %v1359
    %1596 = vmatprep.subr.bf16.mxu0 %v1364
    %1597 = vmatpush1.bf16.msra.mxu0 %v1363
    %1598 = vmatprep.subr.bf16.mxu0 %v1368
    %1599 = vmatpush1.bf16.msra.mxu0 %v1367
    %1600 = vmatprep.subr.bf16.mxu0 %v1372
    %1601 = vmatpush1.bf16.msra.mxu0 %v1371
    %1602 = vmatprep.subr.bf16.mxu0 %v1376
    %1603 = vmatpush1.bf16.msra.mxu0 %v1375
    %1604 = vmatprep.subr.bf16.mxu0 %v1380
    %1605 = vmatpush1.bf16.msra.mxu0 %v1379
    %1606 = vmatprep.subr.bf16.mxu0 %v1384
    %1607 = vmatpush1.bf16.msra.mxu0 %v1383
    %1608 = vmatprep.subr.bf16.mxu0 %v1388
    %1609 = vmatpush1.bf16.msra.mxu0 %v1387
    %1610 = vmatprep.subr.bf16.mxu0 %v1392
    %1611 = vmatpush1.bf16.msra.mxu0 %v1391
    %1612 = vmatprep.subr.bf16.mxu0 %v1396
    %1613 = vmatpush1.bf16.msra.mxu0 %v1395
    %1614 = vmatprep.subr.bf16.mxu0 %v1400
    %1615 = vmatpush1.bf16.msra.mxu0 %v1399
    %1616 = vmatprep.subr.bf16.mxu0 %v1404
    %1617 = vmatpush1.bf16.msra.mxu0 %v1403
    %1618 = vmatprep.subr.bf16.mxu0 %v1408
    %1619 = vmatpush1.bf16.msra.mxu0 %v1407
    %1620 = vmatprep.subr.bf16.mxu0 %v1412
    %1621 = vmatpush1.bf16.msra.mxu0 %v1411
    %1622 = vmatprep.subr.bf16.mxu0 %v1416
    %1623 = vmatpush1.bf16.msra.mxu0 %v1415
    %1624 = vmatprep.subr.bf16.mxu0 %v1420
    %1625 = vmatpush1.bf16.msra.mxu0 %v1419
    %1626 = vmatprep.mubr.bf16.mxu0 %v500
    %1627 = vmatmul.mubr.bf16.gmra.mrb[0].mxu0 %v499
    %v1628 = vpop.f32.mrb[0].mxu0
    %v1629 = vadd.f32 %v1586, %v1628
    %v1630 = vpop.f32.mrb[0].mxu0
    %v1631 = vadd.f32 %v1588, %v1630
    %v1632 = vpop.f32.mrb[0].mxu0
    %v1633 = vadd.f32 %v1590, %v1632
    %v1634 = vpop.f32.mrb[0].mxu0
    %v1635 = vadd.f32 %v1592, %v1634
    %1636 = vdwg.mxu0
    %1637 = vmatprep.subr.bf16.mxu0 %v1298
    %1638 = vmatpush1.bf16.msra.mxu0 %v1297
    %1639 = vmatprep.subr.bf16.mxu0 %v1302
    %1640 = vmatpush1.bf16.msra.mxu0 %v1301
    %1641 = vmatprep.subr.bf16.mxu0 %v1306
    %1642 = vmatpush1.bf16.msra.mxu0 %v1305
    %1643 = vmatprep.subr.bf16.mxu0 %v1310
    %1644 = vmatpush1.bf16.msra.mxu0 %v1309
    %1645 = vmatprep.subr.bf16.mxu0 %v1314
    %1646 = vmatpush1.bf16.msra.mxu0 %v1313
    %1647 = vmatprep.subr.bf16.mxu0 %v1318
    %1648 = vmatpush1.bf16.msra.mxu0 %v1317
    %1649 = vmatprep.subr.bf16.mxu0 %v1322
    %1650 = vmatpush1.bf16.msra.mxu0 %v1321
    %1651 = vmatprep.subr.bf16.mxu0 %v1326
    %1652 = vmatpush1.bf16.msra.mxu0 %v1325
    %1653 = vmatprep.subr.bf16.mxu0 %v1330
    %1654 = vmatpush1.bf16.msra.mxu0 %v1329
    %1655 = vmatprep.subr.bf16.mxu0 %v1334
    %1656 = vmatpush1.bf16.msra.mxu0 %v1333
    %1657 = vmatprep.subr.bf16.mxu0 %v1338
    %1658 = vmatpush1.bf16.msra.mxu0 %v1337
    %1659 = vmatprep.subr.bf16.mxu0 %v1342
    %1660 = vmatpush1.bf16.msra.mxu0 %v1341
    %1661 = vmatprep.subr.bf16.mxu0 %v1346
    %1662 = vmatpush1.bf16.msra.mxu0 %v1345
    %1663 = vmatprep.subr.bf16.mxu0 %v1350
    %1664 = vmatpush1.bf16.msra.mxu0 %v1349
    %1665 = vmatprep.subr.bf16.mxu0 %v1354
    %1666 = vmatpush1.bf16.msra.mxu0 %v1353
    %1667 = vmatprep.subr.bf16.mxu0 %v1358
    %1668 = vmatpush1.bf16.msra.mxu0 %v1357
    %1669 = vmatprep.mubr.bf16.mxu0 %v498
    %1670 = vmatmul.mubr.bf16.gmra.mrb[0].mxu0 %v497
    %v1671 = vpop.f32.mrb[0].mxu0
    %v1672 = vadd.f32 0.0, %v1671
    %v1673 = vpop.f32.mrb[0].mxu0
    %v1674 = vadd.f32 0.0, %v1673
    %v1675 = vpop.f32.mrb[0].mxu0
    %v1676 = vadd.f32 0.0, %v1675
    %v1677 = vpop.f32.mrb[0].mxu0
    %v1678 = vadd.f32 0.0, %v1677
    %1679 = vdwg.mxu0
    %1680 = vmatprep.subr.bf16.mxu0 %v1362
    %1681 = vmatpush1.bf16.msra.mxu0 %v1361
    %1682 = vmatprep.subr.bf16.mxu0 %v1366
    %1683 = vmatpush1.bf16.msra.mxu0 %v1365
    %1684 = vmatprep.subr.bf16.mxu0 %v1370
    %1685 = vmatpush1.bf16.msra.mxu0 %v1369
    %1686 = vmatprep.subr.bf16.mxu0 %v1374
    %1687 = vmatpush1.bf16.msra.mxu0 %v1373
    %1688 = vmatprep.subr.bf16.mxu0 %v1378
    %1689 = vmatpush1.bf16.msra.mxu0 %v1377
    %1690 = vmatprep.subr.bf16.mxu0 %v1382
    %1691 = vmatpush1.bf16.msra.mxu0 %v1381
    %1692 = vmatprep.subr.bf16.mxu0 %v1386
    %1693 = vmatpush1.bf16.msra.mxu0 %v1385
    %1694 = vmatprep.subr.bf16.mxu0 %v1390
    %1695 = vmatpush1.bf16.msra.mxu0 %v1389
    %1696 = vmatprep.subr.bf16.mxu0 %v1394
    %1697 = vmatpush1.bf16.msra.mxu0 %v1393
    %1698 = vmatprep.subr.bf16.mxu0 %v1398
    %1699 = vmatpush1.bf16.msra.mxu0 %v1397
    %1700 = vmatprep.subr.bf16.mxu0 %v1402
    %1701 = vmatpush1.bf16.msra.mxu0 %v1401
    %1702 = vmatprep.subr.bf16.mxu0 %v1406
    %1703 = vmatpush1.bf16.msra.mxu0 %v1405
    %1704 = vmatprep.subr.bf16.mxu0 %v1410
    %1705 = vmatpush1.bf16.msra.mxu0 %v1409
    %1706 = vmatprep.subr.bf16.mxu0 %v1414
    %1707 = vmatpush1.bf16.msra.mxu0 %v1413
    %1708 = vmatprep.subr.bf16.mxu0 %v1418
    %1709 = vmatpush1.bf16.msra.mxu0 %v1417
    %1710 = vmatprep.subr.bf16.mxu0 %v1422
    %1711 = vmatpush1.bf16.msra.mxu0 %v1421
    %1712 = vmatprep.mubr.bf16.mxu0 %v500
    %1713 = vmatmul.mubr.bf16.gmra.mrb[0].mxu0 %v499
    %v1714 = vpop.f32.mrb[0].mxu0
    %v1715 = vadd.f32 %v1672, %v1714
    %v1716 = vpop.f32.mrb[0].mxu0
    %v1717 = vadd.f32 %v1674, %v1716
    %v1718 = vpop.f32.mrb[0].mxu0
    %v1719 = vadd.f32 %v1676, %v1718
    %v1720 = vpop.f32.mrb[0].mxu0
    %v1721 = vadd.f32 %v1678, %v1720
    %1722 = vdwg.mxu0
    %v1851 = vunpack.c.l.b16 %v655
    %v1852 = vunpack.c.h.b16 %v655
    %v1853 = vunpack.c.l.b16 %v656
    %v1854 = vunpack.c.h.b16 %v656
    %v1855 = vunpack.c.l.b16 %v657
    %v1856 = vunpack.c.h.b16 %v657
    %v1857 = vunpack.c.l.b16 %v658
    %v1858 = vunpack.c.h.b16 %v658
    %v1859 = vunpack.c.l.b16 %v659
    %v1860 = vunpack.c.h.b16 %v659
    %v1861 = vunpack.c.l.b16 %v660
    %v1862 = vunpack.c.h.b16 %v660
    %v1863 = vunpack.c.l.b16 %v661
    %v1864 = vunpack.c.h.b16 %v661
    %v1865 = vunpack.c.l.b16 %v662
    %v1866 = vunpack.c.h.b16 %v662
    %v1867 = vunpack.c.l.b16 %v663
    %v1868 = vunpack.c.h.b16 %v663
    %v1869 = vunpack.c.l.b16 %v664
    %v1870 = vunpack.c.h.b16 %v664
    %v1871 = vunpack.c.l.b16 %v665
    %v1872 = vunpack.c.h.b16 %v665
    %v1873 = vunpack.c.l.b16 %v666
    %v1874 = vunpack.c.h.b16 %v666
    %v1875 = vunpack.c.l.b16 %v667
    %v1876 = vunpack.c.h.b16 %v667
    %v1877 = vunpack.c.l.b16 %v668
    %v1878 = vunpack.c.h.b16 %v668
    %v1879 = vunpack.c.l.b16 %v669
    %v1880 = vunpack.c.h.b16 %v669
    %v1881 = vunpack.c.l.b16 %v670
    %v1882 = vunpack.c.h.b16 %v670
    %v1883 = vunpack.c.l.b16 %v671
    %v1884 = vunpack.c.h.b16 %v671
    %v1885 = vunpack.c.l.b16 %v672
    %v1886 = vunpack.c.h.b16 %v672
    %v1887 = vunpack.c.l.b16 %v673
    %v1888 = vunpack.c.h.b16 %v673
    %v1889 = vunpack.c.l.b16 %v674
    %v1890 = vunpack.c.h.b16 %v674
    %v1891 = vunpack.c.l.b16 %v675
    %v1892 = vunpack.c.h.b16 %v675
    %v1893 = vunpack.c.l.b16 %v676
    %v1894 = vunpack.c.h.b16 %v676
    %v1895 = vunpack.c.l.b16 %v677
    %v1896 = vunpack.c.h.b16 %v677
    %v1897 = vunpack.c.l.b16 %v678
    %v1898 = vunpack.c.h.b16 %v678
    %v1899 = vunpack.c.l.b16 %v679
    %v1900 = vunpack.c.h.b16 %v679
    %v1901 = vunpack.c.l.b16 %v680
    %v1902 = vunpack.c.h.b16 %v680
    %v1903 = vunpack.c.l.b16 %v681
    %v1904 = vunpack.c.h.b16 %v681
    %v1905 = vunpack.c.l.b16 %v682
    %v1906 = vunpack.c.h.b16 %v682
    %v1907 = vunpack.c.l.b16 %v683
    %v1908 = vunpack.c.h.b16 %v683
    %v1909 = vunpack.c.l.b16 %v684
    %v1910 = vunpack.c.h.b16 %v684
    %v1911 = vunpack.c.l.b16 %v685
    %v1912 = vunpack.c.h.b16 %v685
    %v1913 = vunpack.c.l.b16 %v686
    %v1914 = vunpack.c.h.b16 %v686
    %v1915 = vunpack.c.l.b16 %v687
    %v1916 = vunpack.c.h.b16 %v687
    %v1917 = vunpack.c.l.b16 %v688
    %v1918 = vunpack.c.h.b16 %v688
    %v1919 = vunpack.c.l.b16 %v689
    %v1920 = vunpack.c.h.b16 %v689
    %v1921 = vunpack.c.l.b16 %v690
    %v1922 = vunpack.c.h.b16 %v690
    %v1923 = vunpack.c.l.b16 %v691
    %v1924 = vunpack.c.h.b16 %v691
    %v1925 = vunpack.c.l.b16 %v692
    %v1926 = vunpack.c.h.b16 %v692
    %v1927 = vunpack.c.l.b16 %v693
    %v1928 = vunpack.c.h.b16 %v693
    %v1929 = vunpack.c.l.b16 %v694
    %v1930 = vunpack.c.h.b16 %v694
    %v1931 = vunpack.c.l.b16 %v695
    %v1932 = vunpack.c.h.b16 %v695
    %v1933 = vunpack.c.l.b16 %v696
    %v1934 = vunpack.c.h.b16 %v696
    %v1935 = vunpack.c.l.b16 %v697
    %v1936 = vunpack.c.h.b16 %v697
    %v1937 = vunpack.c.l.b16 %v698
    %v1938 = vunpack.c.h.b16 %v698
    %v1939 = vunpack.c.l.b16 %v699
    %v1940 = vunpack.c.h.b16 %v699
    %v1941 = vunpack.c.l.b16 %v700
    %v1942 = vunpack.c.h.b16 %v700
    %v1943 = vunpack.c.l.b16 %v701
    %v1944 = vunpack.c.h.b16 %v701
    %v1945 = vunpack.c.l.b16 %v702
    %v1946 = vunpack.c.h.b16 %v702
    %v1947 = vunpack.c.l.b16 %v703
    %v1948 = vunpack.c.h.b16 %v703
    %v1949 = vunpack.c.l.b16 %v704
    %v1950 = vunpack.c.h.b16 %v704
    %v1951 = vunpack.c.l.b16 %v705
    %v1952 = vunpack.c.h.b16 %v705
    %v1953 = vunpack.c.l.b16 %v706
    %v1954 = vunpack.c.h.b16 %v706
    %v1955 = vunpack.c.l.b16 %v707
    %v1956 = vunpack.c.h.b16 %v707
    %v1957 = vunpack.c.l.b16 %v708
    %v1958 = vunpack.c.h.b16 %v708
    %v1959 = vunpack.c.l.b16 %v709
    %v1960 = vunpack.c.h.b16 %v709
    %v1961 = vunpack.c.l.b16 %v710
    %v1962 = vunpack.c.h.b16 %v710
    %v1963 = vunpack.c.l.b16 %v711
    %v1964 = vunpack.c.h.b16 %v711
    %v1965 = vunpack.c.l.b16 %v712
    %v1966 = vunpack.c.h.b16 %v712
    %v1967 = vunpack.c.l.b16 %v713
    %v1968 = vunpack.c.h.b16 %v713
    %v1969 = vunpack.c.l.b16 %v714
    %v1970 = vunpack.c.h.b16 %v714
    %v1971 = vunpack.c.l.b16 %v715
    %v1972 = vunpack.c.h.b16 %v715
    %v1973 = vunpack.c.l.b16 %v716
    %v1974 = vunpack.c.h.b16 %v716
    %v1975 = vunpack.c.l.b16 %v717
    %v1976 = vunpack.c.h.b16 %v717
    %v1977 = vunpack.c.l.b16 %v718
    %v1978 = vunpack.c.h.b16 %v718
    %v1979 = vunpack.c.l.b16 %v719
    %v1980 = vunpack.c.h.b16 %v719
    %v1981 = vunpack.c.l.b16 %v720
    %v1982 = vunpack.c.h.b16 %v720
    %v1983 = vunpack.c.l.b16 %v721
    %v1984 = vunpack.c.h.b16 %v721
    %v1985 = vunpack.c.l.b16 %v722
    %v1986 = vunpack.c.h.b16 %v722
    %v1987 = vunpack.c.l.b16 %v723
    %v1988 = vunpack.c.h.b16 %v723
    %v1989 = vunpack.c.l.b16 %v724
    %v1990 = vunpack.c.h.b16 %v724
    %v1991 = vunpack.c.l.b16 %v725
    %v1992 = vunpack.c.h.b16 %v725
    %v1993 = vunpack.c.l.b16 %v726
    %v1994 = vunpack.c.h.b16 %v726
    %v1995 = vunpack.c.l.b16 %v727
    %v1996 = vunpack.c.h.b16 %v727
    %v1997 = vunpack.c.l.b16 %v728
    %v1998 = vunpack.c.h.b16 %v728
    %v1999 = vunpack.c.l.b16 %v729
    %v2000 = vunpack.c.h.b16 %v729
    %v2001 = vunpack.c.l.b16 %v730
    %v2002 = vunpack.c.h.b16 %v730
    %v2003 = vunpack.c.l.b16 %v731
    %v2004 = vunpack.c.h.b16 %v731
    %v2005 = vunpack.c.l.b16 %v732
    %v2006 = vunpack.c.h.b16 %v732
    %v2007 = vunpack.c.l.b16 %v733
    %v2008 = vunpack.c.h.b16 %v733
    %v2009 = vunpack.c.l.b16 %v734
    %v2010 = vunpack.c.h.b16 %v734
    %v2011 = vunpack.c.l.b16 %v735
    %v2012 = vunpack.c.h.b16 %v735
    %v2013 = vunpack.c.l.b16 %v736
    %v2014 = vunpack.c.h.b16 %v736
    %v2015 = vunpack.c.l.b16 %v737
    %v2016 = vunpack.c.h.b16 %v737
    %v2017 = vunpack.c.l.b16 %v738
    %v2018 = vunpack.c.h.b16 %v738
    %v2019 = vunpack.c.l.b16 %v739
    %v2020 = vunpack.c.h.b16 %v739
    %v2021 = vunpack.c.l.b16 %v740
    %v2022 = vunpack.c.h.b16 %v740
    %v2023 = vunpack.c.l.b16 %v741
    %v2024 = vunpack.c.h.b16 %v741
    %v2025 = vunpack.c.l.b16 %v742
    %v2026 = vunpack.c.h.b16 %v742
    %v2027 = vunpack.c.l.b16 %v743
    %v2028 = vunpack.c.h.b16 %v743
    %v2029 = vunpack.c.l.b16 %v744
    %v2030 = vunpack.c.h.b16 %v744
    %v2031 = vunpack.c.l.b16 %v745
    %v2032 = vunpack.c.h.b16 %v745
    %v2033 = vunpack.c.l.b16 %v746
    %v2034 = vunpack.c.h.b16 %v746
    %v2035 = vunpack.c.l.b16 %v747
    %v2036 = vunpack.c.h.b16 %v747
    %v2037 = vunpack.c.l.b16 %v748
    %v2038 = vunpack.c.h.b16 %v748
    %v2039 = vunpack.c.l.b16 %v749
    %v2040 = vunpack.c.h.b16 %v749
    %v2041 = vunpack.c.l.b16 %v750
    %v2042 = vunpack.c.h.b16 %v750
    %v2043 = vunpack.c.l.b16 %v751
    %v2044 = vunpack.c.h.b16 %v751
    %v2045 = vunpack.c.l.b16 %v752
    %v2046 = vunpack.c.h.b16 %v752
    %v2047 = vunpack.c.l.b16 %v753
    %v2048 = vunpack.c.h.b16 %v753
    %v2049 = vunpack.c.l.b16 %v754
    %v2050 = vunpack.c.h.b16 %v754
    %v2051 = vunpack.c.l.b16 %v755
    %v2052 = vunpack.c.h.b16 %v755
    %v2053 = vunpack.c.l.b16 %v756
    %v2054 = vunpack.c.h.b16 %v756
    %v2055 = vunpack.c.l.b16 %v757
    %v2056 = vunpack.c.h.b16 %v757
    %v2057 = vunpack.c.l.b16 %v758
    %v2058 = vunpack.c.h.b16 %v758
    %v2059 = vunpack.c.l.b16 %v759
    %v2060 = vunpack.c.h.b16 %v759
    %v2061 = vunpack.c.l.b16 %v760
    %v2062 = vunpack.c.h.b16 %v760
    %v2063 = vunpack.c.l.b16 %v761
    %v2064 = vunpack.c.h.b16 %v761
    %v2065 = vunpack.c.l.b16 %v762
    %v2066 = vunpack.c.h.b16 %v762
    %v2067 = vunpack.c.l.b16 %v763
    %v2068 = vunpack.c.h.b16 %v763
    %v2069 = vunpack.c.l.b16 %v764
    %v2070 = vunpack.c.h.b16 %v764
    %v2071 = vunpack.c.l.b16 %v765
    %v2072 = vunpack.c.h.b16 %v765
    %v2073 = vunpack.c.l.b16 %v766
    %v2074 = vunpack.c.h.b16 %v766
    %v2075 = vunpack.c.l.b16 %v767
    %v2076 = vunpack.c.h.b16 %v767
    %v2077 = vunpack.c.l.b16 %v768
    %v2078 = vunpack.c.h.b16 %v768
    %v2079 = vunpack.c.l.b16 %v769
    %v2080 = vunpack.c.h.b16 %v769
    %v2081 = vunpack.c.l.b16 %v770
    %v2082 = vunpack.c.h.b16 %v770
    %v2083 = vunpack.c.l.b16 %v771
    %v2084 = vunpack.c.h.b16 %v771
    %v2085 = vunpack.c.l.b16 %v772
    %v2086 = vunpack.c.h.b16 %v772
    %v2087 = vunpack.c.l.b16 %v773
    %v2088 = vunpack.c.h.b16 %v773
    %v2089 = vunpack.c.l.b16 %v774
    %v2090 = vunpack.c.h.b16 %v774
    %v2091 = vunpack.c.l.b16 %v775
    %v2092 = vunpack.c.h.b16 %v775
    %v2093 = vunpack.c.l.b16 %v776
    %v2094 = vunpack.c.h.b16 %v776
    %v2095 = vunpack.c.l.b16 %v777
    %v2096 = vunpack.c.h.b16 %v777
    %v2097 = vunpack.c.l.b16 %v778
    %v2098 = vunpack.c.h.b16 %v778
    %v2099 = vunpack.c.l.b16 %v779
    %v2100 = vunpack.c.h.b16 %v779
    %v2101 = vunpack.c.l.b16 %v780
    %v2102 = vunpack.c.h.b16 %v780
    %v2103 = vunpack.c.l.b16 %v781
    %v2104 = vunpack.c.h.b16 %v781
    %v2105 = vunpack.c.l.b16 %v782
    %v2106 = vunpack.c.h.b16 %v782
    %v2107 = vpack.c.b16 %v1855, %v1851
    %v2108 = vpack.c.b16 %v1856, %v1852
    %v2109 = vpack.c.b16 %v1857, %v1853
    %v2110 = vpack.c.b16 %v1858, %v1854
    %v2111 = vpack.c.b16 %v1863, %v1859
    %v2112 = vpack.c.b16 %v1864, %v1860
    %v2113 = vpack.c.b16 %v1865, %v1861
    %v2114 = vpack.c.b16 %v1866, %v1862
    %v2115 = vpack.c.b16 %v1871, %v1867
    %v2116 = vpack.c.b16 %v1872, %v1868
    %v2117 = vpack.c.b16 %v1873, %v1869
    %v2118 = vpack.c.b16 %v1874, %v1870
    %v2119 = vpack.c.b16 %v1879, %v1875
    %v2120 = vpack.c.b16 %v1880, %v1876
    %v2121 = vpack.c.b16 %v1881, %v1877
    %v2122 = vpack.c.b16 %v1882, %v1878
    %v2123 = vpack.c.b16 %v1887, %v1883
    %v2124 = vpack.c.b16 %v1888, %v1884
    %v2125 = vpack.c.b16 %v1889, %v1885
    %v2126 = vpack.c.b16 %v1890, %v1886
    %v2127 = vpack.c.b16 %v1895, %v1891
    %v2128 = vpack.c.b16 %v1896, %v1892
    %v2129 = vpack.c.b16 %v1897, %v1893
    %v2130 = vpack.c.b16 %v1898, %v1894
    %v2131 = vpack.c.b16 %v1903, %v1899
    %v2132 = vpack.c.b16 %v1904, %v1900
    %v2133 = vpack.c.b16 %v1905, %v1901
    %v2134 = vpack.c.b16 %v1906, %v1902
    %v2135 = vpack.c.b16 %v1911, %v1907
    %v2136 = vpack.c.b16 %v1912, %v1908
    %v2137 = vpack.c.b16 %v1913, %v1909
    %v2138 = vpack.c.b16 %v1914, %v1910
    %v2139 = vpack.c.b16 %v1919, %v1915
    %v2140 = vpack.c.b16 %v1920, %v1916
    %v2141 = vpack.c.b16 %v1921, %v1917
    %v2142 = vpack.c.b16 %v1922, %v1918
    %v2143 = vpack.c.b16 %v1927, %v1923
    %v2144 = vpack.c.b16 %v1928, %v1924
    %v2145 = vpack.c.b16 %v1929, %v1925
    %v2146 = vpack.c.b16 %v1930, %v1926
    %v2147 = vpack.c.b16 %v1935, %v1931
    %v2148 = vpack.c.b16 %v1936, %v1932
    %v2149 = vpack.c.b16 %v1937, %v1933
    %v2150 = vpack.c.b16 %v1938, %v1934
    %v2151 = vpack.c.b16 %v1943, %v1939
    %v2152 = vpack.c.b16 %v1944, %v1940
    %v2153 = vpack.c.b16 %v1945, %v1941
    %v2154 = vpack.c.b16 %v1946, %v1942
    %v2155 = vpack.c.b16 %v1951, %v1947
    %v2156 = vpack.c.b16 %v1952, %v1948
    %v2157 = vpack.c.b16 %v1953, %v1949
    %v2158 = vpack.c.b16 %v1954, %v1950
    %v2159 = vpack.c.b16 %v1959, %v1955
    %v2160 = vpack.c.b16 %v1960, %v1956
    %v2161 = vpack.c.b16 %v1961, %v1957
    %v2162 = vpack.c.b16 %v1962, %v1958
    %v2163 = vpack.c.b16 %v1967, %v1963
    %v2164 = vpack.c.b16 %v1968, %v1964
    %v2165 = vpack.c.b16 %v1969, %v1965
    %v2166 = vpack.c.b16 %v1970, %v1966
    %v2167 = vpack.c.b16 %v1975, %v1971
    %v2168 = vpack.c.b16 %v1976, %v1972
    %v2169 = vpack.c.b16 %v1977, %v1973
    %v2170 = vpack.c.b16 %v1978, %v1974
    %v2171 = vpack.c.b16 %v1983, %v1979
    %v2172 = vpack.c.b16 %v1984, %v1980
    %v2173 = vpack.c.b16 %v1985, %v1981
    %v2174 = vpack.c.b16 %v1986, %v1982
    %v2175 = vpack.c.b16 %v1991, %v1987
    %v2176 = vpack.c.b16 %v1992, %v1988
    %v2177 = vpack.c.b16 %v1993, %v1989
    %v2178 = vpack.c.b16 %v1994, %v1990
    %v2179 = vpack.c.b16 %v1999, %v1995
    %v2180 = vpack.c.b16 %v2000, %v1996
    %v2181 = vpack.c.b16 %v2001, %v1997
    %v2182 = vpack.c.b16 %v2002, %v1998
    %v2183 = vpack.c.b16 %v2007, %v2003
    %v2184 = vpack.c.b16 %v2008, %v2004
    %v2185 = vpack.c.b16 %v2009, %v2005
    %v2186 = vpack.c.b16 %v2010, %v2006
    %v2187 = vpack.c.b16 %v2015, %v2011
    %v2188 = vpack.c.b16 %v2016, %v2012
    %v2189 = vpack.c.b16 %v2017, %v2013
    %v2190 = vpack.c.b16 %v2018, %v2014
    %v2191 = vpack.c.b16 %v2023, %v2019
    %v2192 = vpack.c.b16 %v2024, %v2020
    %v2193 = vpack.c.b16 %v2025, %v2021
    %v2194 = vpack.c.b16 %v2026, %v2022
    %v2195 = vpack.c.b16 %v2031, %v2027
    %v2196 = vpack.c.b16 %v2032, %v2028
    %v2197 = vpack.c.b16 %v2033, %v2029
    %v2198 = vpack.c.b16 %v2034, %v2030
    %v2199 = vpack.c.b16 %v2039, %v2035
    %v2200 = vpack.c.b16 %v2040, %v2036
    %v2201 = vpack.c.b16 %v2041, %v2037
    %v2202 = vpack.c.b16 %v2042, %v2038
    %v2203 = vpack.c.b16 %v2047, %v2043
    %v2204 = vpack.c.b16 %v2048, %v2044
    %v2205 = vpack.c.b16 %v2049, %v2045
    %v2206 = vpack.c.b16 %v2050, %v2046
    %v2207 = vpack.c.b16 %v2055, %v2051
    %v2208 = vpack.c.b16 %v2056, %v2052
    %v2209 = vpack.c.b16 %v2057, %v2053
    %v2210 = vpack.c.b16 %v2058, %v2054
    %v2211 = vpack.c.b16 %v2063, %v2059
    %v2212 = vpack.c.b16 %v2064, %v2060
    %v2213 = vpack.c.b16 %v2065, %v2061
    %v2214 = vpack.c.b16 %v2066, %v2062
    %v2215 = vpack.c.b16 %v2071, %v2067
    %v2216 = vpack.c.b16 %v2072, %v2068
    %v2217 = vpack.c.b16 %v2073, %v2069
    %v2218 = vpack.c.b16 %v2074, %v2070
    %v2219 = vpack.c.b16 %v2079, %v2075
    %v2220 = vpack.c.b16 %v2080, %v2076
    %v2221 = vpack.c.b16 %v2081, %v2077
    %v2222 = vpack.c.b16 %v2082, %v2078
    %v2223 = vpack.c.b16 %v2087, %v2083
    %v2224 = vpack.c.b16 %v2088, %v2084
    %v2225 = vpack.c.b16 %v2089, %v2085
    %v2226 = vpack.c.b16 %v2090, %v2086
    %v2227 = vpack.c.b16 %v2095, %v2091
    %v2228 = vpack.c.b16 %v2096, %v2092
    %v2229 = vpack.c.b16 %v2097, %v2093
    %v2230 = vpack.c.b16 %v2098, %v2094
    %v2231 = vpack.c.b16 %v2103, %v2099
    %v2232 = vpack.c.b16 %v2104, %v2100
    %v2233 = vpack.c.b16 %v2105, %v2101
    %v2234 = vpack.c.b16 %v2106, %v2102
    %2363 = vmatprep.subr.bf16.mxu0 %v2108
    %2364 = vmatpush1.bf16.msra.mxu0 %v2107
    %2365 = vmatprep.subr.bf16.mxu0 %v2112
    %2366 = vmatpush1.bf16.msra.mxu0 %v2111
    %2367 = vmatprep.subr.bf16.mxu0 %v2116
    %2368 = vmatpush1.bf16.msra.mxu0 %v2115
    %2369 = vmatprep.subr.bf16.mxu0 %v2120
    %2370 = vmatpush1.bf16.msra.mxu0 %v2119
    %2371 = vmatprep.subr.bf16.mxu0 %v2124
    %2372 = vmatpush1.bf16.msra.mxu0 %v2123
    %2373 = vmatprep.subr.bf16.mxu0 %v2128
    %2374 = vmatpush1.bf16.msra.mxu0 %v2127
    %2375 = vmatprep.subr.bf16.mxu0 %v2132
    %2376 = vmatpush1.bf16.msra.mxu0 %v2131
    %2377 = vmatprep.subr.bf16.mxu0 %v2136
    %2378 = vmatpush1.bf16.msra.mxu0 %v2135
    %2379 = vmatprep.subr.bf16.mxu0 %v2140
    %2380 = vmatpush1.bf16.msra.mxu0 %v2139
    %2381 = vmatprep.subr.bf16.mxu0 %v2144
    %2382 = vmatpush1.bf16.msra.mxu0 %v2143
    %2383 = vmatprep.subr.bf16.mxu0 %v2148
    %2384 = vmatpush1.bf16.msra.mxu0 %v2147
    %2385 = vmatprep.subr.bf16.mxu0 %v2152
    %2386 = vmatpush1.bf16.msra.mxu0 %v2151
    %2387 = vmatprep.subr.bf16.mxu0 %v2156
    %2388 = vmatpush1.bf16.msra.mxu0 %v2155
    %2389 = vmatprep.subr.bf16.mxu0 %v2160
    %2390 = vmatpush1.bf16.msra.mxu0 %v2159
    %2391 = vmatprep.subr.bf16.mxu0 %v2164
    %2392 = vmatpush1.bf16.msra.mxu0 %v2163
    %2393 = vmatprep.subr.bf16.mxu0 %v2168
    %2394 = vmatpush1.bf16.msra.mxu0 %v2167
    %2395 = vmatprep.mubr.bf16.mxu0 %v652
    %2396 = vmatmul.mubr.bf16.gmra.mrb[0].mxu0 %v651
    %v2397 = vpop.f32.mrb[0].mxu0
    %v2398 = vadd.f32 %v1629, %v2397
    %v2399 = vpop.f32.mrb[0].mxu0
    %v2400 = vadd.f32 %v1631, %v2399
    %v2401 = vpop.f32.mrb[0].mxu0
    %v2402 = vadd.f32 %v1633, %v2401
    %v2403 = vpop.f32.mrb[0].mxu0
    %v2404 = vadd.f32 %v1635, %v2403
    %2405 = vdwg.mxu0
    %2406 = vmatprep.subr.bf16.mxu0 %v2172
    %2407 = vmatpush1.bf16.msra.mxu0 %v2171
    %2408 = vmatprep.subr.bf16.mxu0 %v2176
    %2409 = vmatpush1.bf16.msra.mxu0 %v2175
    %2410 = vmatprep.subr.bf16.mxu0 %v2180
    %2411 = vmatpush1.bf16.msra.mxu0 %v2179
    %2412 = vmatprep.subr.bf16.mxu0 %v2184
    %2413 = vmatpush1.bf16.msra.mxu0 %v2183
    %2414 = vmatprep.subr.bf16.mxu0 %v2188
    %2415 = vmatpush1.bf16.msra.mxu0 %v2187
    %2416 = vmatprep.subr.bf16.mxu0 %v2192
    %2417 = vmatpush1.bf16.msra.mxu0 %v2191
    %2418 = vmatprep.subr.bf16.mxu0 %v2196
    %2419 = vmatpush1.bf16.msra.mxu0 %v2195
    %2420 = vmatprep.subr.bf16.mxu0 %v2200
    %2421 = vmatpush1.bf16.msra.mxu0 %v2199
    %2422 = vmatprep.subr.bf16.mxu0 %v2204
    %2423 = vmatpush1.bf16.msra.mxu0 %v2203
    %2424 = vmatprep.subr.bf16.mxu0 %v2208
    %2425 = vmatpush1.bf16.msra.mxu0 %v2207
    %2426 = vmatprep.subr.bf16.mxu0 %v2212
    %2427 = vmatpush1.bf16.msra.mxu0 %v2211
    %2428 = vmatprep.subr.bf16.mxu0 %v2216
    %2429 = vmatpush1.bf16.msra.mxu0 %v2215
    %2430 = vmatprep.subr.bf16.mxu0 %v2220
    %2431 = vmatpush1.bf16.msra.mxu0 %v2219
    %2432 = vmatprep.subr.bf16.mxu0 %v2224
    %2433 = vmatpush1.bf16.msra.mxu0 %v2223
    %2434 = vmatprep.subr.bf16.mxu0 %v2228
    %2435 = vmatpush1.bf16.msra.mxu0 %v2227
    %2436 = vmatprep.subr.bf16.mxu0 %v2232
    %2437 = vmatpush1.bf16.msra.mxu0 %v2231
    %2438 = vmatprep.mubr.bf16.mxu0 %v654
    %2439 = vmatmul.mubr.bf16.gmra.mrb[0].mxu0 %v653
    %v2440 = vpop.f32.mrb[0].mxu0
    %v2441 = vadd.f32 %v2398, %v2440
    %v2442 = vpop.f32.mrb[0].mxu0
    %v2443 = vadd.f32 %v2400, %v2442
    %v2444 = vpop.f32.mrb[0].mxu0
    %v2445 = vadd.f32 %v2402, %v2444
    %v2446 = vpop.f32.mrb[0].mxu0
    %v2447 = vadd.f32 %v2404, %v2446
    %2448 = vdwg.mxu0
    %2449 = vmatprep.subr.bf16.mxu0 %v2110
    %2450 = vmatpush1.bf16.msra.mxu0 %v2109
    %2451 = vmatprep.subr.bf16.mxu0 %v2114
    %2452 = vmatpush1.bf16.msra.mxu0 %v2113
    %2453 = vmatprep.subr.bf16.mxu0 %v2118
    %2454 = vmatpush1.bf16.msra.mxu0 %v2117
    %2455 = vmatprep.subr.bf16.mxu0 %v2122
    %2456 = vmatpush1.bf16.msra.mxu0 %v2121
    %2457 = vmatprep.subr.bf16.mxu0 %v2126
    %2458 = vmatpush1.bf16.msra.mxu0 %v2125
    %2459 = vmatprep.subr.bf16.mxu0 %v2130
    %2460 = vmatpush1.bf16.msra.mxu0 %v2129
    %2461 = vmatprep.subr.bf16.mxu0 %v2134
    %2462 = vmatpush1.bf16.msra.mxu0 %v2133
    %2463 = vmatprep.subr.bf16.mxu0 %v2138
    %2464 = vmatpush1.bf16.msra.mxu0 %v2137
    %2465 = vmatprep.subr.bf16.mxu0 %v2142
    %2466 = vmatpush1.bf16.msra.mxu0 %v2141
    %2467 = vmatprep.subr.bf16.mxu0 %v2146
    %2468 = vmatpush1.bf16.msra.mxu0 %v2145
    %2469 = vmatprep.subr.bf16.mxu0 %v2150
    %2470 = vmatpush1.bf16.msra.mxu0 %v2149
    %2471 = vmatprep.subr.bf16.mxu0 %v2154
    %2472 = vmatpush1.bf16.msra.mxu0 %v2153
    %2473 = vmatprep.subr.bf16.mxu0 %v2158
    %2474 = vmatpush1.bf16.msra.mxu0 %v2157
    %2475 = vmatprep.subr.bf16.mxu0 %v2162
    %2476 = vmatpush1.bf16.msra.mxu0 %v2161
    %2477 = vmatprep.subr.bf16.mxu0 %v2166
    %2478 = vmatpush1.bf16.msra.mxu0 %v2165
    %2479 = vmatprep.subr.bf16.mxu0 %v2170
    %2480 = vmatpush1.bf16.msra.mxu0 %v2169
    %2481 = vmatprep.mubr.bf16.mxu0 %v652
    %2482 = vmatmul.mubr.bf16.gmra.mrb[0].mxu0 %v651
    %v2483 = vpop.f32.mrb[0].mxu0
    %v2484 = vadd.f32 %v1715, %v2483
    %v2485 = vpop.f32.mrb[0].mxu0
    %v2486 = vadd.f32 %v1717, %v2485
    %v2487 = vpop.f32.mrb[0].mxu0
    %v2488 = vadd.f32 %v1719, %v2487
    %v2489 = vpop.f32.mrb[0].mxu0
    %v2490 = vadd.f32 %v1721, %v2489
    %2491 = vdwg.mxu0
    %2492 = vmatprep.subr.bf16.mxu0 %v2174
    %2493 = vmatpush1.bf16.msra.mxu0 %v2173
    %2494 = vmatprep.subr.bf16.mxu0 %v2178
    %2495 = vmatpush1.bf16.msra.mxu0 %v2177
    %2496 = vmatprep.subr.bf16.mxu0 %v2182
    %2497 = vmatpush1.bf16.msra.mxu0 %v2181
    %2498 = vmatprep.subr.bf16.mxu0 %v2186
    %2499 = vmatpush1.bf16.msra.mxu0 %v2185
    %2500 = vmatprep.subr.bf16.mxu0 %v2190
    %2501 = vmatpush1.bf16.msra.mxu0 %v2189
    %2502 = vmatprep.subr.bf16.mxu0 %v2194
    %2503 = vmatpush1.bf16.msra.mxu0 %v2193
    %2504 = vmatprep.subr.bf16.mxu0 %v2198
    %2505 = vmatpush1.bf16.msra.mxu0 %v2197
    %2506 = vmatprep.subr.bf16.mxu0 %v2202
    %2507 = vmatpush1.bf16.msra.mxu0 %v2201
    %2508 = vmatprep.subr.bf16.mxu0 %v2206
    %2509 = vmatpush1.bf16.msra.mxu0 %v2205
    %2510 = vmatprep.subr.bf16.mxu0 %v2210
    %2511 = vmatpush1.bf16.msra.mxu0 %v2209
    %2512 = vmatprep.subr.bf16.mxu0 %v2214
    %2513 = vmatpush1.bf16.msra.mxu0 %v2213
    %2514 = vmatprep.subr.bf16.mxu0 %v2218
    %2515 = vmatpush1.bf16.msra.mxu0 %v2217
    %2516 = vmatprep.subr.bf16.mxu0 %v2222
    %2517 = vmatpush1.bf16.msra.mxu0 %v2221
    %2518 = vmatprep.subr.bf16.mxu0 %v2226
    %2519 = vmatpush1.bf16.msra.mxu0 %v2225
    %2520 = vmatprep.subr.bf16.mxu0 %v2230
    %2521 = vmatpush1.bf16.msra.mxu0 %v2229
    %2522 = vmatprep.subr.bf16.mxu0 %v2234
    %2523 = vmatpush1.bf16.msra.mxu0 %v2233
    %2524 = vmatprep.mubr.bf16.mxu0 %v654
    %2525 = vmatmul.mubr.bf16.gmra.mrb[0].mxu0 %v653
    %v2526 = vpop.f32.mrb[0].mxu0
    %v2527 = vadd.f32 %v2484, %v2526
    %v2528 = vpop.f32.mrb[0].mxu0
    %v2529 = vadd.f32 %v2486, %v2528
    %v2530 = vpop.f32.mrb[0].mxu0
    %v2531 = vadd.f32 %v2488, %v2530
    %v2532 = vpop.f32.mrb[0].mxu0
    %v2533 = vadd.f32 %v2490, %v2532
    %2534 = vdwg.mxu0
    %v2535 = vld [vmem:[#allocation14] sm:$0xf]
    %v2537 = vlaneseq
    %v2538 = vshrl.u32 %v2537, 7
    %v2539 = vsub.s32 0, %v2538
    %v2540 = vrot.slane %v2535, %v2539
    %v2541 = vlaneseq
    %v2542 = vshrl.u32 %v2541, 7
    %v2543 = vsub.s32 1, %v2542
    %v2544 = vrot.slane %v2535, %v2543
    %v2545 = vlaneseq
    %v2546 = vshrl.u32 %v2545, 7
    %v2547 = vsub.s32 2, %v2546
    %v2548 = vrot.slane %v2535, %v2547
    %v2549 = vlaneseq
    %v2550 = vshrl.u32 %v2549, 7
    %v2551 = vsub.s32 3, %v2550
    %v2552 = vrot.slane %v2535, %v2551
    %v2557 = vadd.f32 %v2441, %v2540
    %v2558 = vadd.f32 %v2443, %v2544
    %v2559 = vadd.f32 %v2527, %v2548
    %v2560 = vadd.f32 %v2529, %v2552
    %v2561 = vadd.f32 %v2445, %v2540
    %v2562 = vadd.f32 %v2447, %v2544
    %v2563 = vadd.f32 %v2531, %v2548
    %v2564 = vadd.f32 %v2533, %v2552
    %v2565 = vmax.f32 %v2557, 0.0
    %v2566 = vmax.f32 %v2558, 0.0
    %v2567 = vmax.f32 %v2559, 0.0
    %v2568 = vmax.f32 %v2560, 0.0
    %v2569 = vmax.f32 %v2561, 0.0
    %v2570 = vmax.f32 %v2562, 0.0
    %v2571 = vmax.f32 %v2563, 0.0
    %v2572 = vmax.f32 %v2564, 0.0
    %v2573 = vpack.c.bf16 %v2569, %v2565
    %v2574 = vpack.c.bf16 %v2570, %v2566
    %v2575 = vpack.c.bf16 %v2571, %v2567
    %v2576 = vpack.c.bf16 %v2572, %v2568
    %v2577 = vld [vmem:[#allocation16] sm:$0xff]
    %v2578 = vld [vmem:[#allocation16 + $0x8] sm:$0xff]
    %v2579 = vld [vmem:[#allocation16 + $0x10] sm:$0xff]
    %v2580 = vld [vmem:[#allocation16 + $0x18] sm:$0xff]
    %v2581 = vld [vmem:[#allocation16 + $0x20] sm:$0xff]
    %v2582 = vld [vmem:[#allocation16 + $0x28] sm:$0xff]
    %v2583 = vld [vmem:[#allocation16 + $0x30] sm:$0xff]
    %v2584 = vld [vmem:[#allocation16 + $0x38] sm:$0xff]
    %v2585 = vld [vmem:[#allocation16 + $0x40] sm:$0xff]
    %v2586 = vld [vmem:[#allocation16 + $0x48] sm:$0xff]
    %v2587 = vld [vmem:[#allocation16 + $0x50] sm:$0xff]
    %v2588 = vld [vmem:[#allocation16 + $0x58] sm:$0xff]
    %v2589 = vld [vmem:[#allocation16 + $0x60] sm:$0xff]
    %v2590 = vld [vmem:[#allocation16 + $0x68] sm:$0xff]
    %v2591 = vld [vmem:[#allocation16 + $0x70] sm:$0xff]
    %v2592 = vld [vmem:[#allocation16 + $0x78] sm:$0xff]
    %v2593 = vld [vmem:[#allocation16 + $0x80] sm:$0xff]
    %v2594 = vld [vmem:[#allocation16 + $0x88] sm:$0xff]
    %v2595 = vld [vmem:[#allocation16 + $0x90] sm:$0xff]
    %v2596 = vld [vmem:[#allocation16 + $0x98] sm:$0xff]
    %v2597 = vld [vmem:[#allocation16 + $0xa0] sm:$0xff]
    %v2598 = vld [vmem:[#allocation16 + $0xa8] sm:$0xff]
    %v2599 = vld [vmem:[#allocation16 + $0xb0] sm:$0xff]
    %v2600 = vld [vmem:[#allocation16 + $0xb8] sm:$0xff]
    %v2601 = vld [vmem:[#allocation16 + $0xc0] sm:$0xff]
    %v2602 = vld [vmem:[#allocation16 + $0xc8] sm:$0xff]
    %v2603 = vld [vmem:[#allocation16 + $0xd0] sm:$0xff]
    %v2604 = vld [vmem:[#allocation16 + $0xd8] sm:$0xff]
    %v2605 = vld [vmem:[#allocation16 + $0xe0] sm:$0xff]
    %v2606 = vld [vmem:[#allocation16 + $0xe8] sm:$0xff]
    %v2607 = vld [vmem:[#allocation16 + $0xf0] sm:$0xff]
    %v2608 = vld [vmem:[#allocation16 + $0xf8] sm:$0xff]
    %v2609 = vld [vmem:[#allocation16 + $0x100] sm:$0xff]
    %v2610 = vld [vmem:[#allocation16 + $0x108] sm:$0xff]
    %v2611 = vld [vmem:[#allocation16 + $0x110] sm:$0xff]
    %v2612 = vld [vmem:[#allocation16 + $0x118] sm:$0xff]
    %v2613 = vld [vmem:[#allocation16 + $0x120] sm:$0xff]
    %v2614 = vld [vmem:[#allocation16 + $0x128] sm:$0xff]
    %v2615 = vld [vmem:[#allocation16 + $0x130] sm:$0xff]
    %v2616 = vld [vmem:[#allocation16 + $0x138] sm:$0xff]
    %v2617 = vld [vmem:[#allocation16 + $0x140] sm:$0xff]
    %v2618 = vld [vmem:[#allocation16 + $0x148] sm:$0xff]
    %v2619 = vld [vmem:[#allocation16 + $0x150] sm:$0xff]
    %v2620 = vld [vmem:[#allocation16 + $0x158] sm:$0xff]
    %v2621 = vld [vmem:[#allocation16 + $0x160] sm:$0xff]
    %v2622 = vld [vmem:[#allocation16 + $0x168] sm:$0xff]
    %v2623 = vld [vmem:[#allocation16 + $0x170] sm:$0xff]
    %v2624 = vld [vmem:[#allocation16 + $0x178] sm:$0xff]
    %v2625 = vld [vmem:[#allocation16 + $0x180] sm:$0xff]
    %v2626 = vld [vmem:[#allocation16 + $0x188] sm:$0xff]
    %v2627 = vld [vmem:[#allocation16 + $0x190] sm:$0xff]
    %v2628 = vld [vmem:[#allocation16 + $0x198] sm:$0xff]
    %v2629 = vld [vmem:[#allocation16 + $0x1a0] sm:$0xff]
    %v2630 = vld [vmem:[#allocation16 + $0x1a8] sm:$0xff]
    %v2631 = vld [vmem:[#allocation16 + $0x1b0] sm:$0xff]
    %v2632 = vld [vmem:[#allocation16 + $0x1b8] sm:$0xff]
    %v2633 = vld [vmem:[#allocation16 + $0x1c0] sm:$0xff]
    %v2634 = vld [vmem:[#allocation16 + $0x1c8] sm:$0xff]
    %v2635 = vld [vmem:[#allocation16 + $0x1d0] sm:$0xff]
    %v2636 = vld [vmem:[#allocation16 + $0x1d8] sm:$0xff]
    %v2637 = vld [vmem:[#allocation16 + $0x1e0] sm:$0xff]
    %v2638 = vld [vmem:[#allocation16 + $0x1e8] sm:$0xff]
    %v2639 = vld [vmem:[#allocation16 + $0x1f0] sm:$0xff]
    %v2640 = vld [vmem:[#allocation16 + $0x1f8] sm:$0xff]
    %v2641 = vld [vmem:[#allocation16 + $0x200] sm:$0xff]
    %v2642 = vld [vmem:[#allocation16 + $0x208] sm:$0xff]
    %v2643 = vld [vmem:[#allocation16 + $0x210] sm:$0xff]
    %v2644 = vld [vmem:[#allocation16 + $0x218] sm:$0xff]
    %v2645 = vld [vmem:[#allocation16 + $0x220] sm:$0xff]
    %v2646 = vld [vmem:[#allocation16 + $0x228] sm:$0xff]
    %v2647 = vld [vmem:[#allocation16 + $0x230] sm:$0xff]
    %v2648 = vld [vmem:[#allocation16 + $0x238] sm:$0xff]
    %v2649 = vld [vmem:[#allocation16 + $0x240] sm:$0xff]
    %v2650 = vld [vmem:[#allocation16 + $0x248] sm:$0xff]
    %v2651 = vld [vmem:[#allocation16 + $0x250] sm:$0xff]
    %v2652 = vld [vmem:[#allocation16 + $0x258] sm:$0xff]
    %v2653 = vld [vmem:[#allocation16 + $0x260] sm:$0xff]
    %v2654 = vld [vmem:[#allocation16 + $0x268] sm:$0xff]
    %v2655 = vld [vmem:[#allocation16 + $0x270] sm:$0xff]
    %v2656 = vld [vmem:[#allocation16 + $0x278] sm:$0xff]
    %v2657 = vld [vmem:[#allocation16 + $0x280] sm:$0xff]
    %v2658 = vld [vmem:[#allocation16 + $0x288] sm:$0xff]
    %v2659 = vld [vmem:[#allocation16 + $0x290] sm:$0xff]
    %v2660 = vld [vmem:[#allocation16 + $0x298] sm:$0xff]
    %v2661 = vld [vmem:[#allocation16 + $0x2a0] sm:$0xff]
    %v2662 = vld [vmem:[#allocation16 + $0x2a8] sm:$0xff]
    %v2663 = vld [vmem:[#allocation16 + $0x2b0] sm:$0xff]
    %v2664 = vld [vmem:[#allocation16 + $0x2b8] sm:$0xff]
    %v2665 = vld [vmem:[#allocation16 + $0x2c0] sm:$0xff]
    %v2666 = vld [vmem:[#allocation16 + $0x2c8] sm:$0xff]
    %v2667 = vld [vmem:[#allocation16 + $0x2d0] sm:$0xff]
    %v2668 = vld [vmem:[#allocation16 + $0x2d8] sm:$0xff]
    %v2669 = vld [vmem:[#allocation16 + $0x2e0] sm:$0xff]
    %v2670 = vld [vmem:[#allocation16 + $0x2e8] sm:$0xff]
    %v2671 = vld [vmem:[#allocation16 + $0x2f0] sm:$0xff]
    %v2672 = vld [vmem:[#allocation16 + $0x2f8] sm:$0xff]
    %v2673 = vld [vmem:[#allocation16 + $0x300] sm:$0xff]
    %v2674 = vld [vmem:[#allocation16 + $0x308] sm:$0xff]
    %v2675 = vld [vmem:[#allocation16 + $0x310] sm:$0xff]
    %v2676 = vld [vmem:[#allocation16 + $0x318] sm:$0xff]
    %v2677 = vld [vmem:[#allocation16 + $0x320] sm:$0xff]
    %v2678 = vld [vmem:[#allocation16 + $0x328] sm:$0xff]
    %v2679 = vld [vmem:[#allocation16 + $0x330] sm:$0xff]
    %v2680 = vld [vmem:[#allocation16 + $0x338] sm:$0xff]
    %v2681 = vld [vmem:[#allocation16 + $0x340] sm:$0xff]
    %v2682 = vld [vmem:[#allocation16 + $0x348] sm:$0xff]
    %v2683 = vld [vmem:[#allocation16 + $0x350] sm:$0xff]
    %v2684 = vld [vmem:[#allocation16 + $0x358] sm:$0xff]
    %v2685 = vld [vmem:[#allocation16 + $0x360] sm:$0xff]
    %v2686 = vld [vmem:[#allocation16 + $0x368] sm:$0xff]
    %v2687 = vld [vmem:[#allocation16 + $0x370] sm:$0xff]
    %v2688 = vld [vmem:[#allocation16 + $0x378] sm:$0xff]
    %v2689 = vld [vmem:[#allocation16 + $0x380] sm:$0xff]
    %v2690 = vld [vmem:[#allocation16 + $0x388] sm:$0xff]
    %v2691 = vld [vmem:[#allocation16 + $0x390] sm:$0xff]
    %v2692 = vld [vmem:[#allocation16 + $0x398] sm:$0xff]
    %v2693 = vld [vmem:[#allocation16 + $0x3a0] sm:$0xff]
    %v2694 = vld [vmem:[#allocation16 + $0x3a8] sm:$0xff]
    %v2695 = vld [vmem:[#allocation16 + $0x3b0] sm:$0xff]
    %v2696 = vld [vmem:[#allocation16 + $0x3b8] sm:$0xff]
    %v2697 = vld [vmem:[#allocation16 + $0x3c0] sm:$0xff]
    %v2698 = vld [vmem:[#allocation16 + $0x3c8] sm:$0xff]
    %v2699 = vld [vmem:[#allocation16 + $0x3d0] sm:$0xff]
    %v2700 = vld [vmem:[#allocation16 + $0x3d8] sm:$0xff]
    %v2701 = vld [vmem:[#allocation16 + $0x3e0] sm:$0xff]
    %v2702 = vld [vmem:[#allocation16 + $0x3e8] sm:$0xff]
    %v2703 = vld [vmem:[#allocation16 + $0x3f0] sm:$0xff]
    %v2704 = vld [vmem:[#allocation16 + $0x3f8] sm:$0xff]
    %v2705 = vld [vmem:[#allocation17] ss:$8 sm:$0xf]
    %v2707 = vlaneseq
    %v2708 = vshrl.u32 %v2707, 7
    %v2709 = vsub.s32 0, %v2708
    %v2710 = vrot.slane %v2705, %v2709
    %v2711 = vlaneseq
    %v2712 = vshrl.u32 %v2711, 7
    %v2713 = vsub.s32 1, %v2712
    %v2714 = vrot.slane %v2705, %v2713
    %v2715 = vlaneseq
    %v2716 = vshrl.u32 %v2715, 7
    %v2717 = vsub.s32 2, %v2716
    %v2718 = vrot.slane %v2705, %v2717
    %v2719 = vlaneseq
    %v2720 = vshrl.u32 %v2719, 7
    %v2721 = vsub.s32 3, %v2720
    %v2722 = vrot.slane %v2705, %v2721
    %v2855 = vunpack.c.l.b16 %v2577
    %v2856 = vunpack.c.h.b16 %v2577
    %v2857 = vunpack.c.l.b16 %v2578
    %v2858 = vunpack.c.h.b16 %v2578
    %v2859 = vunpack.c.l.b16 %v2579
    %v2860 = vunpack.c.h.b16 %v2579
    %v2861 = vunpack.c.l.b16 %v2580
    %v2862 = vunpack.c.h.b16 %v2580
    %v2863 = vunpack.c.l.b16 %v2581
    %v2864 = vunpack.c.h.b16 %v2581
    %v2865 = vunpack.c.l.b16 %v2582
    %v2866 = vunpack.c.h.b16 %v2582
    %v2867 = vunpack.c.l.b16 %v2583
    %v2868 = vunpack.c.h.b16 %v2583
    %v2869 = vunpack.c.l.b16 %v2584
    %v2870 = vunpack.c.h.b16 %v2584
    %v2871 = vunpack.c.l.b16 %v2585
    %v2872 = vunpack.c.h.b16 %v2585
    %v2873 = vunpack.c.l.b16 %v2586
    %v2874 = vunpack.c.h.b16 %v2586
    %v2875 = vunpack.c.l.b16 %v2587
    %v2876 = vunpack.c.h.b16 %v2587
    %v2877 = vunpack.c.l.b16 %v2588
    %v2878 = vunpack.c.h.b16 %v2588
    %v2879 = vunpack.c.l.b16 %v2589
    %v2880 = vunpack.c.h.b16 %v2589
    %v2881 = vunpack.c.l.b16 %v2590
    %v2882 = vunpack.c.h.b16 %v2590
    %v2883 = vunpack.c.l.b16 %v2591
    %v2884 = vunpack.c.h.b16 %v2591
    %v2885 = vunpack.c.l.b16 %v2592
    %v2886 = vunpack.c.h.b16 %v2592
    %v2887 = vunpack.c.l.b16 %v2593
    %v2888 = vunpack.c.h.b16 %v2593
    %v2889 = vunpack.c.l.b16 %v2594
    %v2890 = vunpack.c.h.b16 %v2594
    %v2891 = vunpack.c.l.b16 %v2595
    %v2892 = vunpack.c.h.b16 %v2595
    %v2893 = vunpack.c.l.b16 %v2596
    %v2894 = vunpack.c.h.b16 %v2596
    %v2895 = vunpack.c.l.b16 %v2597
    %v2896 = vunpack.c.h.b16 %v2597
    %v2897 = vunpack.c.l.b16 %v2598
    %v2898 = vunpack.c.h.b16 %v2598
    %v2899 = vunpack.c.l.b16 %v2599
    %v2900 = vunpack.c.h.b16 %v2599
    %v2901 = vunpack.c.l.b16 %v2600
    %v2902 = vunpack.c.h.b16 %v2600
    %v2903 = vunpack.c.l.b16 %v2601
    %v2904 = vunpack.c.h.b16 %v2601
    %v2905 = vunpack.c.l.b16 %v2602
    %v2906 = vunpack.c.h.b16 %v2602
    %v2907 = vunpack.c.l.b16 %v2603
    %v2908 = vunpack.c.h.b16 %v2603
    %v2909 = vunpack.c.l.b16 %v2604
    %v2910 = vunpack.c.h.b16 %v2604
    %v2911 = vunpack.c.l.b16 %v2605
    %v2912 = vunpack.c.h.b16 %v2605
    %v2913 = vunpack.c.l.b16 %v2606
    %v2914 = vunpack.c.h.b16 %v2606
    %v2915 = vunpack.c.l.b16 %v2607
    %v2916 = vunpack.c.h.b16 %v2607
    %v2917 = vunpack.c.l.b16 %v2608
    %v2918 = vunpack.c.h.b16 %v2608
    %v2919 = vunpack.c.l.b16 %v2609
    %v2920 = vunpack.c.h.b16 %v2609
    %v2921 = vunpack.c.l.b16 %v2610
    %v2922 = vunpack.c.h.b16 %v2610
    %v2923 = vunpack.c.l.b16 %v2611
    %v2924 = vunpack.c.h.b16 %v2611
    %v2925 = vunpack.c.l.b16 %v2612
    %v2926 = vunpack.c.h.b16 %v2612
    %v2927 = vunpack.c.l.b16 %v2613
    %v2928 = vunpack.c.h.b16 %v2613
    %v2929 = vunpack.c.l.b16 %v2614
    %v2930 = vunpack.c.h.b16 %v2614
    %v2931 = vunpack.c.l.b16 %v2615
    %v2932 = vunpack.c.h.b16 %v2615
    %v2933 = vunpack.c.l.b16 %v2616
    %v2934 = vunpack.c.h.b16 %v2616
    %v2935 = vunpack.c.l.b16 %v2617
    %v2936 = vunpack.c.h.b16 %v2617
    %v2937 = vunpack.c.l.b16 %v2618
    %v2938 = vunpack.c.h.b16 %v2618
    %v2939 = vunpack.c.l.b16 %v2619
    %v2940 = vunpack.c.h.b16 %v2619
    %v2941 = vunpack.c.l.b16 %v2620
    %v2942 = vunpack.c.h.b16 %v2620
    %v2943 = vunpack.c.l.b16 %v2621
    %v2944 = vunpack.c.h.b16 %v2621
    %v2945 = vunpack.c.l.b16 %v2622
    %v2946 = vunpack.c.h.b16 %v2622
    %v2947 = vunpack.c.l.b16 %v2623
    %v2948 = vunpack.c.h.b16 %v2623
    %v2949 = vunpack.c.l.b16 %v2624
    %v2950 = vunpack.c.h.b16 %v2624
    %v2951 = vunpack.c.l.b16 %v2625
    %v2952 = vunpack.c.h.b16 %v2625
    %v2953 = vunpack.c.l.b16 %v2626
    %v2954 = vunpack.c.h.b16 %v2626
    %v2955 = vunpack.c.l.b16 %v2627
    %v2956 = vunpack.c.h.b16 %v2627
    %v2957 = vunpack.c.l.b16 %v2628
    %v2958 = vunpack.c.h.b16 %v2628
    %v2959 = vunpack.c.l.b16 %v2629
    %v2960 = vunpack.c.h.b16 %v2629
    %v2961 = vunpack.c.l.b16 %v2630
    %v2962 = vunpack.c.h.b16 %v2630
    %v2963 = vunpack.c.l.b16 %v2631
    %v2964 = vunpack.c.h.b16 %v2631
    %v2965 = vunpack.c.l.b16 %v2632
    %v2966 = vunpack.c.h.b16 %v2632
    %v2967 = vunpack.c.l.b16 %v2633
    %v2968 = vunpack.c.h.b16 %v2633
    %v2969 = vunpack.c.l.b16 %v2634
    %v2970 = vunpack.c.h.b16 %v2634
    %v2971 = vunpack.c.l.b16 %v2635
    %v2972 = vunpack.c.h.b16 %v2635
    %v2973 = vunpack.c.l.b16 %v2636
    %v2974 = vunpack.c.h.b16 %v2636
    %v2975 = vunpack.c.l.b16 %v2637
    %v2976 = vunpack.c.h.b16 %v2637
    %v2977 = vunpack.c.l.b16 %v2638
    %v2978 = vunpack.c.h.b16 %v2638
    %v2979 = vunpack.c.l.b16 %v2639
    %v2980 = vunpack.c.h.b16 %v2639
    %v2981 = vunpack.c.l.b16 %v2640
    %v2982 = vunpack.c.h.b16 %v2640
    %v2983 = vunpack.c.l.b16 %v2641
    %v2984 = vunpack.c.h.b16 %v2641
    %v2985 = vunpack.c.l.b16 %v2642
    %v2986 = vunpack.c.h.b16 %v2642
    %v2987 = vunpack.c.l.b16 %v2643
    %v2988 = vunpack.c.h.b16 %v2643
    %v2989 = vunpack.c.l.b16 %v2644
    %v2990 = vunpack.c.h.b16 %v2644
    %v2991 = vunpack.c.l.b16 %v2645
    %v2992 = vunpack.c.h.b16 %v2645
    %v2993 = vunpack.c.l.b16 %v2646
    %v2994 = vunpack.c.h.b16 %v2646
    %v2995 = vunpack.c.l.b16 %v2647
    %v2996 = vunpack.c.h.b16 %v2647
    %v2997 = vunpack.c.l.b16 %v2648
    %v2998 = vunpack.c.h.b16 %v2648
    %v2999 = vunpack.c.l.b16 %v2649
    %v3000 = vunpack.c.h.b16 %v2649
    %v3001 = vunpack.c.l.b16 %v2650
    %v3002 = vunpack.c.h.b16 %v2650
    %v3003 = vunpack.c.l.b16 %v2651
    %v3004 = vunpack.c.h.b16 %v2651
    %v3005 = vunpack.c.l.b16 %v2652
    %v3006 = vunpack.c.h.b16 %v2652
    %v3007 = vunpack.c.l.b16 %v2653
    %v3008 = vunpack.c.h.b16 %v2653
    %v3009 = vunpack.c.l.b16 %v2654
    %v3010 = vunpack.c.h.b16 %v2654
    %v3011 = vunpack.c.l.b16 %v2655
    %v3012 = vunpack.c.h.b16 %v2655
    %v3013 = vunpack.c.l.b16 %v2656
    %v3014 = vunpack.c.h.b16 %v2656
    %v3015 = vunpack.c.l.b16 %v2657
    %v3016 = vunpack.c.h.b16 %v2657
    %v3017 = vunpack.c.l.b16 %v2658
    %v3018 = vunpack.c.h.b16 %v2658
    %v3019 = vunpack.c.l.b16 %v2659
    %v3020 = vunpack.c.h.b16 %v2659
    %v3021 = vunpack.c.l.b16 %v2660
    %v3022 = vunpack.c.h.b16 %v2660
    %v3023 = vunpack.c.l.b16 %v2661
    %v3024 = vunpack.c.h.b16 %v2661
    %v3025 = vunpack.c.l.b16 %v2662
    %v3026 = vunpack.c.h.b16 %v2662
    %v3027 = vunpack.c.l.b16 %v2663
    %v3028 = vunpack.c.h.b16 %v2663
    %v3029 = vunpack.c.l.b16 %v2664
    %v3030 = vunpack.c.h.b16 %v2664
    %v3031 = vunpack.c.l.b16 %v2665
    %v3032 = vunpack.c.h.b16 %v2665
    %v3033 = vunpack.c.l.b16 %v2666
    %v3034 = vunpack.c.h.b16 %v2666
    %v3035 = vunpack.c.l.b16 %v2667
    %v3036 = vunpack.c.h.b16 %v2667
    %v3037 = vunpack.c.l.b16 %v2668
    %v3038 = vunpack.c.h.b16 %v2668
    %v3039 = vunpack.c.l.b16 %v2669
    %v3040 = vunpack.c.h.b16 %v2669
    %v3041 = vunpack.c.l.b16 %v2670
    %v3042 = vunpack.c.h.b16 %v2670
    %v3043 = vunpack.c.l.b16 %v2671
    %v3044 = vunpack.c.h.b16 %v2671
    %v3045 = vunpack.c.l.b16 %v2672
    %v3046 = vunpack.c.h.b16 %v2672
    %v3047 = vunpack.c.l.b16 %v2673
    %v3048 = vunpack.c.h.b16 %v2673
    %v3049 = vunpack.c.l.b16 %v2674
    %v3050 = vunpack.c.h.b16 %v2674
    %v3051 = vunpack.c.l.b16 %v2675
    %v3052 = vunpack.c.h.b16 %v2675
    %v3053 = vunpack.c.l.b16 %v2676
    %v3054 = vunpack.c.h.b16 %v2676
    %v3055 = vunpack.c.l.b16 %v2677
    %v3056 = vunpack.c.h.b16 %v2677
    %v3057 = vunpack.c.l.b16 %v2678
    %v3058 = vunpack.c.h.b16 %v2678
    %v3059 = vunpack.c.l.b16 %v2679
    %v3060 = vunpack.c.h.b16 %v2679
    %v3061 = vunpack.c.l.b16 %v2680
    %v3062 = vunpack.c.h.b16 %v2680
    %v3063 = vunpack.c.l.b16 %v2681
    %v3064 = vunpack.c.h.b16 %v2681
    %v3065 = vunpack.c.l.b16 %v2682
    %v3066 = vunpack.c.h.b16 %v2682
    %v3067 = vunpack.c.l.b16 %v2683
    %v3068 = vunpack.c.h.b16 %v2683
    %v3069 = vunpack.c.l.b16 %v2684
    %v3070 = vunpack.c.h.b16 %v2684
    %v3071 = vunpack.c.l.b16 %v2685
    %v3072 = vunpack.c.h.b16 %v2685
    %v3073 = vunpack.c.l.b16 %v2686
    %v3074 = vunpack.c.h.b16 %v2686
    %v3075 = vunpack.c.l.b16 %v2687
    %v3076 = vunpack.c.h.b16 %v2687
    %v3077 = vunpack.c.l.b16 %v2688
    %v3078 = vunpack.c.h.b16 %v2688
    %v3079 = vunpack.c.l.b16 %v2689
    %v3080 = vunpack.c.h.b16 %v2689
    %v3081 = vunpack.c.l.b16 %v2690
    %v3082 = vunpack.c.h.b16 %v2690
    %v3083 = vunpack.c.l.b16 %v2691
    %v3084 = vunpack.c.h.b16 %v2691
    %v3085 = vunpack.c.l.b16 %v2692
    %v3086 = vunpack.c.h.b16 %v2692
    %v3087 = vunpack.c.l.b16 %v2693
    %v3088 = vunpack.c.h.b16 %v2693
    %v3089 = vunpack.c.l.b16 %v2694
    %v3090 = vunpack.c.h.b16 %v2694
    %v3091 = vunpack.c.l.b16 %v2695
    %v3092 = vunpack.c.h.b16 %v2695
    %v3093 = vunpack.c.l.b16 %v2696
    %v3094 = vunpack.c.h.b16 %v2696
    %v3095 = vunpack.c.l.b16 %v2697
    %v3096 = vunpack.c.h.b16 %v2697
    %v3097 = vunpack.c.l.b16 %v2698
    %v3098 = vunpack.c.h.b16 %v2698
    %v3099 = vunpack.c.l.b16 %v2699
    %v3100 = vunpack.c.h.b16 %v2699
    %v3101 = vunpack.c.l.b16 %v2700
    %v3102 = vunpack.c.h.b16 %v2700
    %v3103 = vunpack.c.l.b16 %v2701
    %v3104 = vunpack.c.h.b16 %v2701
    %v3105 = vunpack.c.l.b16 %v2702
    %v3106 = vunpack.c.h.b16 %v2702
    %v3107 = vunpack.c.l.b16 %v2703
    %v3108 = vunpack.c.h.b16 %v2703
    %v3109 = vunpack.c.l.b16 %v2704
    %v3110 = vunpack.c.h.b16 %v2704
    %v3111 = vpack.c.b16 %v2859, %v2855
    %v3112 = vpack.c.b16 %v2860, %v2856
    %v3113 = vpack.c.b16 %v2861, %v2857
    %v3114 = vpack.c.b16 %v2862, %v2858
    %v3115 = vpack.c.b16 %v2867, %v2863
    %v3116 = vpack.c.b16 %v2868, %v2864
    %v3117 = vpack.c.b16 %v2869, %v2865
    %v3118 = vpack.c.b16 %v2870, %v2866
    %v3119 = vpack.c.b16 %v2875, %v2871
    %v3120 = vpack.c.b16 %v2876, %v2872
    %v3121 = vpack.c.b16 %v2877, %v2873
    %v3122 = vpack.c.b16 %v2878, %v2874
    %v3123 = vpack.c.b16 %v2883, %v2879
    %v3124 = vpack.c.b16 %v2884, %v2880
    %v3125 = vpack.c.b16 %v2885, %v2881
    %v3126 = vpack.c.b16 %v2886, %v2882
    %v3127 = vpack.c.b16 %v2891, %v2887
    %v3128 = vpack.c.b16 %v2892, %v2888
    %v3129 = vpack.c.b16 %v2893, %v2889
    %v3130 = vpack.c.b16 %v2894, %v2890
    %v3131 = vpack.c.b16 %v2899, %v2895
    %v3132 = vpack.c.b16 %v2900, %v2896
    %v3133 = vpack.c.b16 %v2901, %v2897
    %v3134 = vpack.c.b16 %v2902, %v2898
    %v3135 = vpack.c.b16 %v2907, %v2903
    %v3136 = vpack.c.b16 %v2908, %v2904
    %v3137 = vpack.c.b16 %v2909, %v2905
    %v3138 = vpack.c.b16 %v2910, %v2906
    %v3139 = vpack.c.b16 %v2915, %v2911
    %v3140 = vpack.c.b16 %v2916, %v2912
    %v3141 = vpack.c.b16 %v2917, %v2913
    %v3142 = vpack.c.b16 %v2918, %v2914
    %v3143 = vpack.c.b16 %v2923, %v2919
    %v3144 = vpack.c.b16 %v2924, %v2920
    %v3145 = vpack.c.b16 %v2925, %v2921
    %v3146 = vpack.c.b16 %v2926, %v2922
    %v3147 = vpack.c.b16 %v2931, %v2927
    %v3148 = vpack.c.b16 %v2932, %v2928
    %v3149 = vpack.c.b16 %v2933, %v2929
    %v3150 = vpack.c.b16 %v2934, %v2930
    %v3151 = vpack.c.b16 %v2939, %v2935
    %v3152 = vpack.c.b16 %v2940, %v2936
    %v3153 = vpack.c.b16 %v2941, %v2937
    %v3154 = vpack.c.b16 %v2942, %v2938
    %v3155 = vpack.c.b16 %v2947, %v2943
    %v3156 = vpack.c.b16 %v2948, %v2944
    %v3157 = vpack.c.b16 %v2949, %v2945
    %v3158 = vpack.c.b16 %v2950, %v2946
    %v3159 = vpack.c.b16 %v2955, %v2951
    %v3160 = vpack.c.b16 %v2956, %v2952
    %v3161 = vpack.c.b16 %v2957, %v2953
    %v3162 = vpack.c.b16 %v2958, %v2954
    %v3163 = vpack.c.b16 %v2963, %v2959
    %v3164 = vpack.c.b16 %v2964, %v2960
    %v3165 = vpack.c.b16 %v2965, %v2961
    %v3166 = vpack.c.b16 %v2966, %v2962
    %v3167 = vpack.c.b16 %v2971, %v2967
    %v3168 = vpack.c.b16 %v2972, %v2968
    %v3169 = vpack.c.b16 %v2973, %v2969
    %v3170 = vpack.c.b16 %v2974, %v2970
    %v3171 = vpack.c.b16 %v2979, %v2975
    %v3172 = vpack.c.b16 %v2980, %v2976
    %v3173 = vpack.c.b16 %v2981, %v2977
    %v3174 = vpack.c.b16 %v2982, %v2978
    %v3175 = vpack.c.b16 %v2987, %v2983
    %v3176 = vpack.c.b16 %v2988, %v2984
    %v3177 = vpack.c.b16 %v2989, %v2985
    %v3178 = vpack.c.b16 %v2990, %v2986
    %v3179 = vpack.c.b16 %v2995, %v2991
    %v3180 = vpack.c.b16 %v2996, %v2992
    %v3181 = vpack.c.b16 %v2997, %v2993
    %v3182 = vpack.c.b16 %v2998, %v2994
    %v3183 = vpack.c.b16 %v3003, %v2999
    %v3184 = vpack.c.b16 %v3004, %v3000
    %v3185 = vpack.c.b16 %v3005, %v3001
    %v3186 = vpack.c.b16 %v3006, %v3002
    %v3187 = vpack.c.b16 %v3011, %v3007
    %v3188 = vpack.c.b16 %v3012, %v3008
    %v3189 = vpack.c.b16 %v3013, %v3009
    %v3190 = vpack.c.b16 %v3014, %v3010
    %v3191 = vpack.c.b16 %v3019, %v3015
    %v3192 = vpack.c.b16 %v3020, %v3016
    %v3193 = vpack.c.b16 %v3021, %v3017
    %v3194 = vpack.c.b16 %v3022, %v3018
    %v3195 = vpack.c.b16 %v3027, %v3023
    %v3196 = vpack.c.b16 %v3028, %v3024
    %v3197 = vpack.c.b16 %v3029, %v3025
    %v3198 = vpack.c.b16 %v3030, %v3026
    %v3199 = vpack.c.b16 %v3035, %v3031
    %v3200 = vpack.c.b16 %v3036, %v3032
    %v3201 = vpack.c.b16 %v3037, %v3033
    %v3202 = vpack.c.b16 %v3038, %v3034
    %v3203 = vpack.c.b16 %v3043, %v3039
    %v3204 = vpack.c.b16 %v3044, %v3040
    %v3205 = vpack.c.b16 %v3045, %v3041
    %v3206 = vpack.c.b16 %v3046, %v3042
    %v3207 = vpack.c.b16 %v3051, %v3047
    %v3208 = vpack.c.b16 %v3052, %v3048
    %v3209 = vpack.c.b16 %v3053, %v3049
    %v3210 = vpack.c.b16 %v3054, %v3050
    %v3211 = vpack.c.b16 %v3059, %v3055
    %v3212 = vpack.c.b16 %v3060, %v3056
    %v3213 = vpack.c.b16 %v3061, %v3057
    %v3214 = vpack.c.b16 %v3062, %v3058
    %v3215 = vpack.c.b16 %v3067, %v3063
    %v3216 = vpack.c.b16 %v3068, %v3064
    %v3217 = vpack.c.b16 %v3069, %v3065
    %v3218 = vpack.c.b16 %v3070, %v3066
    %v3219 = vpack.c.b16 %v3075, %v3071
    %v3220 = vpack.c.b16 %v3076, %v3072
    %v3221 = vpack.c.b16 %v3077, %v3073
    %v3222 = vpack.c.b16 %v3078, %v3074
    %v3223 = vpack.c.b16 %v3083, %v3079
    %v3224 = vpack.c.b16 %v3084, %v3080
    %v3225 = vpack.c.b16 %v3085, %v3081
    %v3226 = vpack.c.b16 %v3086, %v3082
    %v3227 = vpack.c.b16 %v3091, %v3087
    %v3228 = vpack.c.b16 %v3092, %v3088
    %v3229 = vpack.c.b16 %v3093, %v3089
    %v3230 = vpack.c.b16 %v3094, %v3090
    %v3231 = vpack.c.b16 %v3099, %v3095
    %v3232 = vpack.c.b16 %v3100, %v3096
    %v3233 = vpack.c.b16 %v3101, %v3097
    %v3234 = vpack.c.b16 %v3102, %v3098
    %v3235 = vpack.c.b16 %v3107, %v3103
    %v3236 = vpack.c.b16 %v3108, %v3104
    %v3237 = vpack.c.b16 %v3109, %v3105
    %v3238 = vpack.c.b16 %v3110, %v3106
    %3367 = vmatprep.subr.bf16.mxu0 %v3112
    %3368 = vmatpush1.bf16.msra.mxu0 %v3111
    %3369 = vmatprep.subr.bf16.mxu0 %v3116
    %3370 = vmatpush1.bf16.msra.mxu0 %v3115
    %3371 = vmatprep.subr.bf16.mxu0 %v3120
    %3372 = vmatpush1.bf16.msra.mxu0 %v3119
    %3373 = vmatprep.subr.bf16.mxu0 %v3124
    %3374 = vmatpush1.bf16.msra.mxu0 %v3123
    %3375 = vmatprep.subr.bf16.mxu0 %v3128
    %3376 = vmatpush1.bf16.msra.mxu0 %v3127
    %3377 = vmatprep.subr.bf16.mxu0 %v3132
    %3378 = vmatpush1.bf16.msra.mxu0 %v3131
    %3379 = vmatprep.subr.bf16.mxu0 %v3136
    %3380 = vmatpush1.bf16.msra.mxu0 %v3135
    %3381 = vmatprep.subr.bf16.mxu0 %v3140
    %3382 = vmatpush1.bf16.msra.mxu0 %v3139
    %3383 = vmatprep.subr.bf16.mxu0 %v3144
    %3384 = vmatpush1.bf16.msra.mxu0 %v3143
    %3385 = vmatprep.subr.bf16.mxu0 %v3148
    %3386 = vmatpush1.bf16.msra.mxu0 %v3147
    %3387 = vmatprep.subr.bf16.mxu0 %v3152
    %3388 = vmatpush1.bf16.msra.mxu0 %v3151
    %3389 = vmatprep.subr.bf16.mxu0 %v3156
    %3390 = vmatpush1.bf16.msra.mxu0 %v3155
    %3391 = vmatprep.subr.bf16.mxu0 %v3160
    %3392 = vmatpush1.bf16.msra.mxu0 %v3159
    %3393 = vmatprep.subr.bf16.mxu0 %v3164
    %3394 = vmatpush1.bf16.msra.mxu0 %v3163
    %3395 = vmatprep.subr.bf16.mxu0 %v3168
    %3396 = vmatpush1.bf16.msra.mxu0 %v3167
    %3397 = vmatprep.subr.bf16.mxu0 %v3172
    %3398 = vmatpush1.bf16.msra.mxu0 %v3171
    %3399 = vmatprep.mubr.bf16.mxu0 %v2574
    %3400 = vmatmul.mubr.bf16.gmra.mrb[0].mxu0 %v2573
    %v3401 = vpop.f32.mrb[0].mxu0
    %v3402 = vadd.f32 %v2710, %v3401
    %v3403 = vpop.f32.mrb[0].mxu0
    %v3404 = vadd.f32 %v2714, %v3403
    %v3405 = vpop.f32.mrb[0].mxu0
    %v3406 = vadd.f32 %v2710, %v3405
    %v3407 = vpop.f32.mrb[0].mxu0
    %v3408 = vadd.f32 %v2714, %v3407
    %3409 = vdwg.mxu0
    %3410 = vmatprep.subr.bf16.mxu0 %v3176
    %3411 = vmatpush1.bf16.msra.mxu0 %v3175
    %3412 = vmatprep.subr.bf16.mxu0 %v3180
    %3413 = vmatpush1.bf16.msra.mxu0 %v3179
    %3414 = vmatprep.subr.bf16.mxu0 %v3184
    %3415 = vmatpush1.bf16.msra.mxu0 %v3183
    %3416 = vmatprep.subr.bf16.mxu0 %v3188
    %3417 = vmatpush1.bf16.msra.mxu0 %v3187
    %3418 = vmatprep.subr.bf16.mxu0 %v3192
    %3419 = vmatpush1.bf16.msra.mxu0 %v3191
    %3420 = vmatprep.subr.bf16.mxu0 %v3196
    %3421 = vmatpush1.bf16.msra.mxu0 %v3195
    %3422 = vmatprep.subr.bf16.mxu0 %v3200
    %3423 = vmatpush1.bf16.msra.mxu0 %v3199
    %3424 = vmatprep.subr.bf16.mxu0 %v3204
    %3425 = vmatpush1.bf16.msra.mxu0 %v3203
    %3426 = vmatprep.subr.bf16.mxu0 %v3208
    %3427 = vmatpush1.bf16.msra.mxu0 %v3207
    %3428 = vmatprep.subr.bf16.mxu0 %v3212
    %3429 = vmatpush1.bf16.msra.mxu0 %v3211
    %3430 = vmatprep.subr.bf16.mxu0 %v3216
    %3431 = vmatpush1.bf16.msra.mxu0 %v3215
    %3432 = vmatprep.subr.bf16.mxu0 %v3220
    %3433 = vmatpush1.bf16.msra.mxu0 %v3219
    %3434 = vmatprep.subr.bf16.mxu0 %v3224
    %3435 = vmatpush1.bf16.msra.mxu0 %v3223
    %3436 = vmatprep.subr.bf16.mxu0 %v3228
    %3437 = vmatpush1.bf16.msra.mxu0 %v3227
    %3438 = vmatprep.subr.bf16.mxu0 %v3232
    %3439 = vmatpush1.bf16.msra.mxu0 %v3231
    %3440 = vmatprep.subr.bf16.mxu0 %v3236
    %3441 = vmatpush1.bf16.msra.mxu0 %v3235
    %3442 = vmatprep.mubr.bf16.mxu0 %v2576
    %3443 = vmatmul.mubr.bf16.gmra.mrb[0].mxu0 %v2575
    %v3444 = vpop.f32.mrb[0].mxu0
    %v3445 = vadd.f32 %v3402, %v3444
    %v3446 = vpop.f32.mrb[0].mxu0
    %v3447 = vadd.f32 %v3404, %v3446
    %v3448 = vpop.f32.mrb[0].mxu0
    %v3449 = vadd.f32 %v3406, %v3448
    %v3450 = vpop.f32.mrb[0].mxu0
    %v3451 = vadd.f32 %v3408, %v3450
    %3452 = vdwg.mxu0
    %3453 = vmatprep.subr.bf16.mxu0 %v3114
    %3454 = vmatpush1.bf16.msra.mxu0 %v3113
    %3455 = vmatprep.subr.bf16.mxu0 %v3118
    %3456 = vmatpush1.bf16.msra.mxu0 %v3117
    %3457 = vmatprep.subr.bf16.mxu0 %v3122
    %3458 = vmatpush1.bf16.msra.mxu0 %v3121
    %3459 = vmatprep.subr.bf16.mxu0 %v3126
    %3460 = vmatpush1.bf16.msra.mxu0 %v3125
    %3461 = vmatprep.subr.bf16.mxu0 %v3130
    %3462 = vmatpush1.bf16.msra.mxu0 %v3129
    %3463 = vmatprep.subr.bf16.mxu0 %v3134
    %3464 = vmatpush1.bf16.msra.mxu0 %v3133
    %3465 = vmatprep.subr.bf16.mxu0 %v3138
    %3466 = vmatpush1.bf16.msra.mxu0 %v3137
    %3467 = vmatprep.subr.bf16.mxu0 %v3142
    %3468 = vmatpush1.bf16.msra.mxu0 %v3141
    %3469 = vmatprep.subr.bf16.mxu0 %v3146
    %3470 = vmatpush1.bf16.msra.mxu0 %v3145
    %3471 = vmatprep.subr.bf16.mxu0 %v3150
    %3472 = vmatpush1.bf16.msra.mxu0 %v3149
    %3473 = vmatprep.subr.bf16.mxu0 %v3154
    %3474 = vmatpush1.bf16.msra.mxu0 %v3153
    %3475 = vmatprep.subr.bf16.mxu0 %v3158
    %3476 = vmatpush1.bf16.msra.mxu0 %v3157
    %3477 = vmatprep.subr.bf16.mxu0 %v3162
    %3478 = vmatpush1.bf16.msra.mxu0 %v3161
    %3479 = vmatprep.subr.bf16.mxu0 %v3166
    %3480 = vmatpush1.bf16.msra.mxu0 %v3165
    %3481 = vmatprep.subr.bf16.mxu0 %v3170
    %3482 = vmatpush1.bf16.msra.mxu0 %v3169
    %3483 = vmatprep.subr.bf16.mxu0 %v3174
    %3484 = vmatpush1.bf16.msra.mxu0 %v3173
    %3485 = vmatprep.mubr.bf16.mxu0 %v2574
    %3486 = vmatmul.mubr.bf16.gmra.mrb[0].mxu0 %v2573
    %v3487 = vpop.f32.mrb[0].mxu0
    %v3488 = vadd.f32 %v2718, %v3487
    %v3489 = vpop.f32.mrb[0].mxu0
    %v3490 = vadd.f32 %v2722, %v3489
    %v3491 = vpop.f32.mrb[0].mxu0
    %v3492 = vadd.f32 %v2718, %v3491
    %v3493 = vpop.f32.mrb[0].mxu0
    %v3494 = vadd.f32 %v2722, %v3493
    %3495 = vdwg.mxu0
    %3496 = vmatprep.subr.bf16.mxu0 %v3178
    %3497 = vmatpush1.bf16.msra.mxu0 %v3177
    %3498 = vmatprep.subr.bf16.mxu0 %v3182
    %3499 = vmatpush1.bf16.msra.mxu0 %v3181
    %3500 = vmatprep.subr.bf16.mxu0 %v3186
    %3501 = vmatpush1.bf16.msra.mxu0 %v3185
    %3502 = vmatprep.subr.bf16.mxu0 %v3190
    %3503 = vmatpush1.bf16.msra.mxu0 %v3189
    %3504 = vmatprep.subr.bf16.mxu0 %v3194
    %3505 = vmatpush1.bf16.msra.mxu0 %v3193
    %3506 = vmatprep.subr.bf16.mxu0 %v3198
    %3507 = vmatpush1.bf16.msra.mxu0 %v3197
    %3508 = vmatprep.subr.bf16.mxu0 %v3202
    %3509 = vmatpush1.bf16.msra.mxu0 %v3201
    %3510 = vmatprep.subr.bf16.mxu0 %v3206
    %3511 = vmatpush1.bf16.msra.mxu0 %v3205
    %3512 = vmatprep.subr.bf16.mxu0 %v3210
    %3513 = vmatpush1.bf16.msra.mxu0 %v3209
    %3514 = vmatprep.subr.bf16.mxu0 %v3214
    %3515 = vmatpush1.bf16.msra.mxu0 %v3213
    %3516 = vmatprep.subr.bf16.mxu0 %v3218
    %3517 = vmatpush1.bf16.msra.mxu0 %v3217
    %3518 = vmatprep.subr.bf16.mxu0 %v3222
    %3519 = vmatpush1.bf16.msra.mxu0 %v3221
    %3520 = vmatprep.subr.bf16.mxu0 %v3226
    %3521 = vmatpush1.bf16.msra.mxu0 %v3225
    %3522 = vmatprep.subr.bf16.mxu0 %v3230
    %3523 = vmatpush1.bf16.msra.mxu0 %v3229
    %3524 = vmatprep.subr.bf16.mxu0 %v3234
    %3525 = vmatpush1.bf16.msra.mxu0 %v3233
    %3526 = vmatprep.subr.bf16.mxu0 %v3238
    %3527 = vmatpush1.bf16.msra.mxu0 %v3237
    %3528 = vmatprep.mubr.bf16.mxu0 %v2576
    %3529 = vmatmul.mubr.bf16.gmra.mrb[0].mxu0 %v2575
    %v3530 = vpop.f32.mrb[0].mxu0
    %v3531 = vadd.f32 %v3488, %v3530
    %v3532 = vpop.f32.mrb[0].mxu0
    %v3533 = vadd.f32 %v3490, %v3532
    %v3534 = vpop.f32.mrb[0].mxu0
    %v3535 = vadd.f32 %v3492, %v3534
    %v3536 = vpop.f32.mrb[0].mxu0
    %v3537 = vadd.f32 %v3494, %v3536
    %3538 = vdwg.mxu0
    %v3539 = vmax.f32 %v3445, 0.0
    %v3540 = vmax.f32 %v3447, 0.0
    %v3541 = vmax.f32 %v3531, 0.0
    %v3542 = vmax.f32 %v3533, 0.0
    %v3543 = vmax.f32 %v3449, 0.0
    %v3544 = vmax.f32 %v3451, 0.0
    %v3545 = vmax.f32 %v3535, 0.0
    %v3546 = vmax.f32 %v3537, 0.0
    %v3547 = vpack.c.bf16 %v3543, %v3539
    %v3548 = vpack.c.bf16 %v3544, %v3540
    %v3549 = vpack.c.bf16 %v3545, %v3541
    %v3550 = vpack.c.bf16 %v3546, %v3542
    %s3551 = scalar_lea.vmem [#allocation16], 1024
    %v3552 = vld [vmem:[%s3551] sm:$0xff]
    %v3553 = vld [vmem:[%s3551 + $0x8] sm:$0xff]
    %v3554 = vld [vmem:[%s3551 + $0x10] sm:$0xff]
    %v3555 = vld [vmem:[%s3551 + $0x18] sm:$0xff]
    %v3556 = vld [vmem:[%s3551 + $0x20] sm:$0xff]
    %v3557 = vld [vmem:[%s3551 + $0x28] sm:$0xff]
    %v3558 = vld [vmem:[%s3551 + $0x30] sm:$0xff]
    %v3559 = vld [vmem:[%s3551 + $0x38] sm:$0xff]
    %v3560 = vld [vmem:[%s3551 + $0x40] sm:$0xff]
    %v3561 = vld [vmem:[%s3551 + $0x48] sm:$0xff]
    %v3562 = vld [vmem:[%s3551 + $0x50] sm:$0xff]
    %v3563 = vld [vmem:[%s3551 + $0x58] sm:$0xff]
    %v3564 = vld [vmem:[%s3551 + $0x60] sm:$0xff]
    %v3565 = vld [vmem:[%s3551 + $0x68] sm:$0xff]
    %v3566 = vld [vmem:[%s3551 + $0x70] sm:$0xff]
    %v3567 = vld [vmem:[%s3551 + $0x78] sm:$0xff]
    %v3568 = vld [vmem:[%s3551 + $0x80] sm:$0xff]
    %v3569 = vld [vmem:[%s3551 + $0x88] sm:$0xff]
    %v3570 = vld [vmem:[%s3551 + $0x90] sm:$0xff]
    %v3571 = vld [vmem:[%s3551 + $0x98] sm:$0xff]
    %v3572 = vld [vmem:[%s3551 + $0xa0] sm:$0xff]
    %v3573 = vld [vmem:[%s3551 + $0xa8] sm:$0xff]
    %v3574 = vld [vmem:[%s3551 + $0xb0] sm:$0xff]
    %v3575 = vld [vmem:[%s3551 + $0xb8] sm:$0xff]
    %v3576 = vld [vmem:[%s3551 + $0xc0] sm:$0xff]
    %v3577 = vld [vmem:[%s3551 + $0xc8] sm:$0xff]
    %v3578 = vld [vmem:[%s3551 + $0xd0] sm:$0xff]
    %v3579 = vld [vmem:[%s3551 + $0xd8] sm:$0xff]
    %v3580 = vld [vmem:[%s3551 + $0xe0] sm:$0xff]
    %v3581 = vld [vmem:[%s3551 + $0xe8] sm:$0xff]
    %v3582 = vld [vmem:[%s3551 + $0xf0] sm:$0xff]
    %v3583 = vld [vmem:[%s3551 + $0xf8] sm:$0xff]
    %v3584 = vld [vmem:[%s3551 + $0x100] sm:$0xff]
    %v3585 = vld [vmem:[%s3551 + $0x108] sm:$0xff]
    %v3586 = vld [vmem:[%s3551 + $0x110] sm:$0xff]
    %v3587 = vld [vmem:[%s3551 + $0x118] sm:$0xff]
    %v3588 = vld [vmem:[%s3551 + $0x120] sm:$0xff]
    %v3589 = vld [vmem:[%s3551 + $0x128] sm:$0xff]
    %v3590 = vld [vmem:[%s3551 + $0x130] sm:$0xff]
    %v3591 = vld [vmem:[%s3551 + $0x138] sm:$0xff]
    %v3592 = vld [vmem:[%s3551 + $0x140] sm:$0xff]
    %v3593 = vld [vmem:[%s3551 + $0x148] sm:$0xff]
    %v3594 = vld [vmem:[%s3551 + $0x150] sm:$0xff]
    %v3595 = vld [vmem:[%s3551 + $0x158] sm:$0xff]
    %v3596 = vld [vmem:[%s3551 + $0x160] sm:$0xff]
    %v3597 = vld [vmem:[%s3551 + $0x168] sm:$0xff]
    %v3598 = vld [vmem:[%s3551 + $0x170] sm:$0xff]
    %v3599 = vld [vmem:[%s3551 + $0x178] sm:$0xff]
    %v3600 = vld [vmem:[%s3551 + $0x180] sm:$0xff]
    %v3601 = vld [vmem:[%s3551 + $0x188] sm:$0xff]
    %v3602 = vld [vmem:[%s3551 + $0x190] sm:$0xff]
    %v3603 = vld [vmem:[%s3551 + $0x198] sm:$0xff]
    %v3604 = vld [vmem:[%s3551 + $0x1a0] sm:$0xff]
    %v3605 = vld [vmem:[%s3551 + $0x1a8] sm:$0xff]
    %v3606 = vld [vmem:[%s3551 + $0x1b0] sm:$0xff]
    %v3607 = vld [vmem:[%s3551 + $0x1b8] sm:$0xff]
    %v3608 = vld [vmem:[%s3551 + $0x1c0] sm:$0xff]
    %v3609 = vld [vmem:[%s3551 + $0x1c8] sm:$0xff]
    %v3610 = vld [vmem:[%s3551 + $0x1d0] sm:$0xff]
    %v3611 = vld [vmem:[%s3551 + $0x1d8] sm:$0xff]
    %v3612 = vld [vmem:[%s3551 + $0x1e0] sm:$0xff]
    %v3613 = vld [vmem:[%s3551 + $0x1e8] sm:$0xff]
    %v3614 = vld [vmem:[%s3551 + $0x1f0] sm:$0xff]
    %v3615 = vld [vmem:[%s3551 + $0x1f8] sm:$0xff]
    %v3616 = vld [vmem:[%s3551 + $0x200] sm:$0xff]
    %v3617 = vld [vmem:[%s3551 + $0x208] sm:$0xff]
    %v3618 = vld [vmem:[%s3551 + $0x210] sm:$0xff]
    %v3619 = vld [vmem:[%s3551 + $0x218] sm:$0xff]
    %v3620 = vld [vmem:[%s3551 + $0x220] sm:$0xff]
    %v3621 = vld [vmem:[%s3551 + $0x228] sm:$0xff]
    %v3622 = vld [vmem:[%s3551 + $0x230] sm:$0xff]
    %v3623 = vld [vmem:[%s3551 + $0x238] sm:$0xff]
    %v3624 = vld [vmem:[%s3551 + $0x240] sm:$0xff]
    %v3625 = vld [vmem:[%s3551 + $0x248] sm:$0xff]
    %v3626 = vld [vmem:[%s3551 + $0x250] sm:$0xff]
    %v3627 = vld [vmem:[%s3551 + $0x258] sm:$0xff]
    %v3628 = vld [vmem:[%s3551 + $0x260] sm:$0xff]
    %v3629 = vld [vmem:[%s3551 + $0x268] sm:$0xff]
    %v3630 = vld [vmem:[%s3551 + $0x270] sm:$0xff]
    %v3631 = vld [vmem:[%s3551 + $0x278] sm:$0xff]
    %v3632 = vld [vmem:[%s3551 + $0x280] sm:$0xff]
    %v3633 = vld [vmem:[%s3551 + $0x288] sm:$0xff]
    %v3634 = vld [vmem:[%s3551 + $0x290] sm:$0xff]
    %v3635 = vld [vmem:[%s3551 + $0x298] sm:$0xff]
    %v3636 = vld [vmem:[%s3551 + $0x2a0] sm:$0xff]
    %v3637 = vld [vmem:[%s3551 + $0x2a8] sm:$0xff]
    %v3638 = vld [vmem:[%s3551 + $0x2b0] sm:$0xff]
    %v3639 = vld [vmem:[%s3551 + $0x2b8] sm:$0xff]
    %v3640 = vld [vmem:[%s3551 + $0x2c0] sm:$0xff]
    %v3641 = vld [vmem:[%s3551 + $0x2c8] sm:$0xff]
    %v3642 = vld [vmem:[%s3551 + $0x2d0] sm:$0xff]
    %v3643 = vld [vmem:[%s3551 + $0x2d8] sm:$0xff]
    %v3644 = vld [vmem:[%s3551 + $0x2e0] sm:$0xff]
    %v3645 = vld [vmem:[%s3551 + $0x2e8] sm:$0xff]
    %v3646 = vld [vmem:[%s3551 + $0x2f0] sm:$0xff]
    %v3647 = vld [vmem:[%s3551 + $0x2f8] sm:$0xff]
    %v3648 = vld [vmem:[%s3551 + $0x300] sm:$0xff]
    %v3649 = vld [vmem:[%s3551 + $0x308] sm:$0xff]
    %v3650 = vld [vmem:[%s3551 + $0x310] sm:$0xff]
    %v3651 = vld [vmem:[%s3551 + $0x318] sm:$0xff]
    %v3652 = vld [vmem:[%s3551 + $0x320] sm:$0xff]
    %v3653 = vld [vmem:[%s3551 + $0x328] sm:$0xff]
    %v3654 = vld [vmem:[%s3551 + $0x330] sm:$0xff]
    %v3655 = vld [vmem:[%s3551 + $0x338] sm:$0xff]
    %v3656 = vld [vmem:[%s3551 + $0x340] sm:$0xff]
    %v3657 = vld [vmem:[%s3551 + $0x348] sm:$0xff]
    %v3658 = vld [vmem:[%s3551 + $0x350] sm:$0xff]
    %v3659 = vld [vmem:[%s3551 + $0x358] sm:$0xff]
    %v3660 = vld [vmem:[%s3551 + $0x360] sm:$0xff]
    %v3661 = vld [vmem:[%s3551 + $0x368] sm:$0xff]
    %v3662 = vld [vmem:[%s3551 + $0x370] sm:$0xff]
    %v3663 = vld [vmem:[%s3551 + $0x378] sm:$0xff]
    %v3664 = vld [vmem:[%s3551 + $0x380] sm:$0xff]
    %v3665 = vld [vmem:[%s3551 + $0x388] sm:$0xff]
    %v3666 = vld [vmem:[%s3551 + $0x390] sm:$0xff]
    %v3667 = vld [vmem:[%s3551 + $0x398] sm:$0xff]
    %v3668 = vld [vmem:[%s3551 + $0x3a0] sm:$0xff]
    %v3669 = vld [vmem:[%s3551 + $0x3a8] sm:$0xff]
    %v3670 = vld [vmem:[%s3551 + $0x3b0] sm:$0xff]
    %v3671 = vld [vmem:[%s3551 + $0x3b8] sm:$0xff]
    %v3672 = vld [vmem:[%s3551 + $0x3c0] sm:$0xff]
    %v3673 = vld [vmem:[%s3551 + $0x3c8] sm:$0xff]
    %v3674 = vld [vmem:[%s3551 + $0x3d0] sm:$0xff]
    %v3675 = vld [vmem:[%s3551 + $0x3d8] sm:$0xff]
    %v3676 = vld [vmem:[%s3551 + $0x3e0] sm:$0xff]
    %v3677 = vld [vmem:[%s3551 + $0x3e8] sm:$0xff]
    %v3678 = vld [vmem:[%s3551 + $0x3f0] sm:$0xff]
    %v3679 = vld [vmem:[%s3551 + $0x3f8] sm:$0xff]
    %s3680 = scalar_lea.vmem [#allocation17], 1
    %v3681 = vld [vmem:[%s3680] ss:$8 sm:$0xf]
    %v3683 = vlaneseq
    %v3684 = vshrl.u32 %v3683, 7
    %v3685 = vsub.s32 0, %v3684
    %v3686 = vrot.slane %v3681, %v3685
    %v3687 = vlaneseq
    %v3688 = vshrl.u32 %v3687, 7
    %v3689 = vsub.s32 1, %v3688
    %v3690 = vrot.slane %v3681, %v3689
    %v3691 = vlaneseq
    %v3692 = vshrl.u32 %v3691, 7
    %v3693 = vsub.s32 2, %v3692
    %v3694 = vrot.slane %v3681, %v3693
    %v3695 = vlaneseq
    %v3696 = vshrl.u32 %v3695, 7
    %v3697 = vsub.s32 3, %v3696
    %v3698 = vrot.slane %v3681, %v3697
    %v3831 = vunpack.c.l.b16 %v3552
    %v3832 = vunpack.c.h.b16 %v3552
    %v3833 = vunpack.c.l.b16 %v3553
    %v3834 = vunpack.c.h.b16 %v3553
    %v3835 = vunpack.c.l.b16 %v3554
    %v3836 = vunpack.c.h.b16 %v3554
    %v3837 = vunpack.c.l.b16 %v3555
    %v3838 = vunpack.c.h.b16 %v3555
    %v3839 = vunpack.c.l.b16 %v3556
    %v3840 = vunpack.c.h.b16 %v3556
    %v3841 = vunpack.c.l.b16 %v3557
    %v3842 = vunpack.c.h.b16 %v3557
    %v3843 = vunpack.c.l.b16 %v3558
    %v3844 = vunpack.c.h.b16 %v3558
    %v3845 = vunpack.c.l.b16 %v3559
    %v3846 = vunpack.c.h.b16 %v3559
    %v3847 = vunpack.c.l.b16 %v3560
    %v3848 = vunpack.c.h.b16 %v3560
    %v3849 = vunpack.c.l.b16 %v3561
    %v3850 = vunpack.c.h.b16 %v3561
    %v3851 = vunpack.c.l.b16 %v3562
    %v3852 = vunpack.c.h.b16 %v3562
    %v3853 = vunpack.c.l.b16 %v3563
    %v3854 = vunpack.c.h.b16 %v3563
    %v3855 = vunpack.c.l.b16 %v3564
    %v3856 = vunpack.c.h.b16 %v3564
    %v3857 = vunpack.c.l.b16 %v3565
    %v3858 = vunpack.c.h.b16 %v3565
    %v3859 = vunpack.c.l.b16 %v3566
    %v3860 = vunpack.c.h.b16 %v3566
    %v3861 = vunpack.c.l.b16 %v3567
    %v3862 = vunpack.c.h.b16 %v3567
    %v3863 = vunpack.c.l.b16 %v3568
    %v3864 = vunpack.c.h.b16 %v3568
    %v3865 = vunpack.c.l.b16 %v3569
    %v3866 = vunpack.c.h.b16 %v3569
    %v3867 = vunpack.c.l.b16 %v3570
    %v3868 = vunpack.c.h.b16 %v3570
    %v3869 = vunpack.c.l.b16 %v3571
    %v3870 = vunpack.c.h.b16 %v3571
    %v3871 = vunpack.c.l.b16 %v3572
    %v3872 = vunpack.c.h.b16 %v3572
    %v3873 = vunpack.c.l.b16 %v3573
    %v3874 = vunpack.c.h.b16 %v3573
    %v3875 = vunpack.c.l.b16 %v3574
    %v3876 = vunpack.c.h.b16 %v3574
    %v3877 = vunpack.c.l.b16 %v3575
    %v3878 = vunpack.c.h.b16 %v3575
    %v3879 = vunpack.c.l.b16 %v3576
    %v3880 = vunpack.c.h.b16 %v3576
    %v3881 = vunpack.c.l.b16 %v3577
    %v3882 = vunpack.c.h.b16 %v3577
    %v3883 = vunpack.c.l.b16 %v3578
    %v3884 = vunpack.c.h.b16 %v3578
    %v3885 = vunpack.c.l.b16 %v3579
    %v3886 = vunpack.c.h.b16 %v3579
    %v3887 = vunpack.c.l.b16 %v3580
    %v3888 = vunpack.c.h.b16 %v3580
    %v3889 = vunpack.c.l.b16 %v3581
    %v3890 = vunpack.c.h.b16 %v3581
    %v3891 = vunpack.c.l.b16 %v3582
    %v3892 = vunpack.c.h.b16 %v3582
    %v3893 = vunpack.c.l.b16 %v3583
    %v3894 = vunpack.c.h.b16 %v3583
    %v3895 = vunpack.c.l.b16 %v3584
    %v3896 = vunpack.c.h.b16 %v3584
    %v3897 = vunpack.c.l.b16 %v3585
    %v3898 = vunpack.c.h.b16 %v3585
    %v3899 = vunpack.c.l.b16 %v3586
    %v3900 = vunpack.c.h.b16 %v3586
    %v3901 = vunpack.c.l.b16 %v3587
    %v3902 = vunpack.c.h.b16 %v3587
    %v3903 = vunpack.c.l.b16 %v3588
    %v3904 = vunpack.c.h.b16 %v3588
    %v3905 = vunpack.c.l.b16 %v3589
    %v3906 = vunpack.c.h.b16 %v3589
    %v3907 = vunpack.c.l.b16 %v3590
    %v3908 = vunpack.c.h.b16 %v3590
    %v3909 = vunpack.c.l.b16 %v3591
    %v3910 = vunpack.c.h.b16 %v3591
    %v3911 = vunpack.c.l.b16 %v3592
    %v3912 = vunpack.c.h.b16 %v3592
    %v3913 = vunpack.c.l.b16 %v3593
    %v3914 = vunpack.c.h.b16 %v3593
    %v3915 = vunpack.c.l.b16 %v3594
    %v3916 = vunpack.c.h.b16 %v3594
    %v3917 = vunpack.c.l.b16 %v3595
    %v3918 = vunpack.c.h.b16 %v3595
    %v3919 = vunpack.c.l.b16 %v3596
    %v3920 = vunpack.c.h.b16 %v3596
    %v3921 = vunpack.c.l.b16 %v3597
    %v3922 = vunpack.c.h.b16 %v3597
    %v3923 = vunpack.c.l.b16 %v3598
    %v3924 = vunpack.c.h.b16 %v3598
    %v3925 = vunpack.c.l.b16 %v3599
    %v3926 = vunpack.c.h.b16 %v3599
    %v3927 = vunpack.c.l.b16 %v3600
    %v3928 = vunpack.c.h.b16 %v3600
    %v3929 = vunpack.c.l.b16 %v3601
    %v3930 = vunpack.c.h.b16 %v3601
    %v3931 = vunpack.c.l.b16 %v3602
    %v3932 = vunpack.c.h.b16 %v3602
    %v3933 = vunpack.c.l.b16 %v3603
    %v3934 = vunpack.c.h.b16 %v3603
    %v3935 = vunpack.c.l.b16 %v3604
    %v3936 = vunpack.c.h.b16 %v3604
    %v3937 = vunpack.c.l.b16 %v3605
    %v3938 = vunpack.c.h.b16 %v3605
    %v3939 = vunpack.c.l.b16 %v3606
    %v3940 = vunpack.c.h.b16 %v3606
    %v3941 = vunpack.c.l.b16 %v3607
    %v3942 = vunpack.c.h.b16 %v3607
    %v3943 = vunpack.c.l.b16 %v3608
    %v3944 = vunpack.c.h.b16 %v3608
    %v3945 = vunpack.c.l.b16 %v3609
    %v3946 = vunpack.c.h.b16 %v3609
    %v3947 = vunpack.c.l.b16 %v3610
    %v3948 = vunpack.c.h.b16 %v3610
    %v3949 = vunpack.c.l.b16 %v3611
    %v3950 = vunpack.c.h.b16 %v3611
    %v3951 = vunpack.c.l.b16 %v3612
    %v3952 = vunpack.c.h.b16 %v3612
    %v3953 = vunpack.c.l.b16 %v3613
    %v3954 = vunpack.c.h.b16 %v3613
    %v3955 = vunpack.c.l.b16 %v3614
    %v3956 = vunpack.c.h.b16 %v3614
    %v3957 = vunpack.c.l.b16 %v3615
    %v3958 = vunpack.c.h.b16 %v3615
    %v3959 = vunpack.c.l.b16 %v3616
    %v3960 = vunpack.c.h.b16 %v3616
    %v3961 = vunpack.c.l.b16 %v3617
    %v3962 = vunpack.c.h.b16 %v3617
    %v3963 = vunpack.c.l.b16 %v3618
    %v3964 = vunpack.c.h.b16 %v3618
    %v3965 = vunpack.c.l.b16 %v3619
    %v3966 = vunpack.c.h.b16 %v3619
    %v3967 = vunpack.c.l.b16 %v3620
    %v3968 = vunpack.c.h.b16 %v3620
    %v3969 = vunpack.c.l.b16 %v3621
    %v3970 = vunpack.c.h.b16 %v3621
    %v3971 = vunpack.c.l.b16 %v3622
    %v3972 = vunpack.c.h.b16 %v3622
    %v3973 = vunpack.c.l.b16 %v3623
    %v3974 = vunpack.c.h.b16 %v3623
    %v3975 = vunpack.c.l.b16 %v3624
    %v3976 = vunpack.c.h.b16 %v3624
    %v3977 = vunpack.c.l.b16 %v3625
    %v3978 = vunpack.c.h.b16 %v3625
    %v3979 = vunpack.c.l.b16 %v3626
    %v3980 = vunpack.c.h.b16 %v3626
    %v3981 = vunpack.c.l.b16 %v3627
    %v3982 = vunpack.c.h.b16 %v3627
    %v3983 = vunpack.c.l.b16 %v3628
    %v3984 = vunpack.c.h.b16 %v3628
    %v3985 = vunpack.c.l.b16 %v3629
    %v3986 = vunpack.c.h.b16 %v3629
    %v3987 = vunpack.c.l.b16 %v3630
    %v3988 = vunpack.c.h.b16 %v3630
    %v3989 = vunpack.c.l.b16 %v3631
    %v3990 = vunpack.c.h.b16 %v3631
    %v3991 = vunpack.c.l.b16 %v3632
    %v3992 = vunpack.c.h.b16 %v3632
    %v3993 = vunpack.c.l.b16 %v3633
    %v3994 = vunpack.c.h.b16 %v3633
    %v3995 = vunpack.c.l.b16 %v3634
    %v3996 = vunpack.c.h.b16 %v3634
    %v3997 = vunpack.c.l.b16 %v3635
    %v3998 = vunpack.c.h.b16 %v3635
    %v3999 = vunpack.c.l.b16 %v3636
    %v4000 = vunpack.c.h.b16 %v3636
    %v4001 = vunpack.c.l.b16 %v3637
    %v4002 = vunpack.c.h.b16 %v3637
    %v4003 = vunpack.c.l.b16 %v3638
    %v4004 = vunpack.c.h.b16 %v3638
    %v4005 = vunpack.c.l.b16 %v3639
    %v4006 = vunpack.c.h.b16 %v3639
    %v4007 = vunpack.c.l.b16 %v3640
    %v4008 = vunpack.c.h.b16 %v3640
    %v4009 = vunpack.c.l.b16 %v3641
    %v4010 = vunpack.c.h.b16 %v3641
    %v4011 = vunpack.c.l.b16 %v3642
    %v4012 = vunpack.c.h.b16 %v3642
    %v4013 = vunpack.c.l.b16 %v3643
    %v4014 = vunpack.c.h.b16 %v3643
    %v4015 = vunpack.c.l.b16 %v3644
    %v4016 = vunpack.c.h.b16 %v3644
    %v4017 = vunpack.c.l.b16 %v3645
    %v4018 = vunpack.c.h.b16 %v3645
    %v4019 = vunpack.c.l.b16 %v3646
    %v4020 = vunpack.c.h.b16 %v3646
    %v4021 = vunpack.c.l.b16 %v3647
    %v4022 = vunpack.c.h.b16 %v3647
    %v4023 = vunpack.c.l.b16 %v3648
    %v4024 = vunpack.c.h.b16 %v3648
    %v4025 = vunpack.c.l.b16 %v3649
    %v4026 = vunpack.c.h.b16 %v3649
    %v4027 = vunpack.c.l.b16 %v3650
    %v4028 = vunpack.c.h.b16 %v3650
    %v4029 = vunpack.c.l.b16 %v3651
    %v4030 = vunpack.c.h.b16 %v3651
    %v4031 = vunpack.c.l.b16 %v3652
    %v4032 = vunpack.c.h.b16 %v3652
    %v4033 = vunpack.c.l.b16 %v3653
    %v4034 = vunpack.c.h.b16 %v3653
    %v4035 = vunpack.c.l.b16 %v3654
    %v4036 = vunpack.c.h.b16 %v3654
    %v4037 = vunpack.c.l.b16 %v3655
    %v4038 = vunpack.c.h.b16 %v3655
    %v4039 = vunpack.c.l.b16 %v3656
    %v4040 = vunpack.c.h.b16 %v3656
    %v4041 = vunpack.c.l.b16 %v3657
    %v4042 = vunpack.c.h.b16 %v3657
    %v4043 = vunpack.c.l.b16 %v3658
    %v4044 = vunpack.c.h.b16 %v3658
    %v4045 = vunpack.c.l.b16 %v3659
    %v4046 = vunpack.c.h.b16 %v3659
    %v4047 = vunpack.c.l.b16 %v3660
    %v4048 = vunpack.c.h.b16 %v3660
    %v4049 = vunpack.c.l.b16 %v3661
    %v4050 = vunpack.c.h.b16 %v3661
    %v4051 = vunpack.c.l.b16 %v3662
    %v4052 = vunpack.c.h.b16 %v3662
    %v4053 = vunpack.c.l.b16 %v3663
    %v4054 = vunpack.c.h.b16 %v3663
    %v4055 = vunpack.c.l.b16 %v3664
    %v4056 = vunpack.c.h.b16 %v3664
    %v4057 = vunpack.c.l.b16 %v3665
    %v4058 = vunpack.c.h.b16 %v3665
    %v4059 = vunpack.c.l.b16 %v3666
    %v4060 = vunpack.c.h.b16 %v3666
    %v4061 = vunpack.c.l.b16 %v3667
    %v4062 = vunpack.c.h.b16 %v3667
    %v4063 = vunpack.c.l.b16 %v3668
    %v4064 = vunpack.c.h.b16 %v3668
    %v4065 = vunpack.c.l.b16 %v3669
    %v4066 = vunpack.c.h.b16 %v3669
    %v4067 = vunpack.c.l.b16 %v3670
    %v4068 = vunpack.c.h.b16 %v3670
    %v4069 = vunpack.c.l.b16 %v3671
    %v4070 = vunpack.c.h.b16 %v3671
    %v4071 = vunpack.c.l.b16 %v3672
    %v4072 = vunpack.c.h.b16 %v3672
    %v4073 = vunpack.c.l.b16 %v3673
    %v4074 = vunpack.c.h.b16 %v3673
    %v4075 = vunpack.c.l.b16 %v3674
    %v4076 = vunpack.c.h.b16 %v3674
    %v4077 = vunpack.c.l.b16 %v3675
    %v4078 = vunpack.c.h.b16 %v3675
    %v4079 = vunpack.c.l.b16 %v3676
    %v4080 = vunpack.c.h.b16 %v3676
    %v4081 = vunpack.c.l.b16 %v3677
    %v4082 = vunpack.c.h.b16 %v3677
    %v4083 = vunpack.c.l.b16 %v3678
    %v4084 = vunpack.c.h.b16 %v3678
    %v4085 = vunpack.c.l.b16 %v3679
    %v4086 = vunpack.c.h.b16 %v3679
    %v4087 = vpack.c.b16 %v3835, %v3831
    %v4088 = vpack.c.b16 %v3836, %v3832
    %v4089 = vpack.c.b16 %v3837, %v3833
    %v4090 = vpack.c.b16 %v3838, %v3834
    %v4091 = vpack.c.b16 %v3843, %v3839
    %v4092 = vpack.c.b16 %v3844, %v3840
    %v4093 = vpack.c.b16 %v3845, %v3841
    %v4094 = vpack.c.b16 %v3846, %v3842
    %v4095 = vpack.c.b16 %v3851, %v3847
    %v4096 = vpack.c.b16 %v3852, %v3848
    %v4097 = vpack.c.b16 %v3853, %v3849
    %v4098 = vpack.c.b16 %v3854, %v3850
    %v4099 = vpack.c.b16 %v3859, %v3855
    %v4100 = vpack.c.b16 %v3860, %v3856
    %v4101 = vpack.c.b16 %v3861, %v3857
    %v4102 = vpack.c.b16 %v3862, %v3858
    %v4103 = vpack.c.b16 %v3867, %v3863
    %v4104 = vpack.c.b16 %v3868, %v3864
    %v4105 = vpack.c.b16 %v3869, %v3865
    %v4106 = vpack.c.b16 %v3870, %v3866
    %v4107 = vpack.c.b16 %v3875, %v3871
    %v4108 = vpack.c.b16 %v3876, %v3872
    %v4109 = vpack.c.b16 %v3877, %v3873
    %v4110 = vpack.c.b16 %v3878, %v3874
    %v4111 = vpack.c.b16 %v3883, %v3879
    %v4112 = vpack.c.b16 %v3884, %v3880
    %v4113 = vpack.c.b16 %v3885, %v3881
    %v4114 = vpack.c.b16 %v3886, %v3882
    %v4115 = vpack.c.b16 %v3891, %v3887
    %v4116 = vpack.c.b16 %v3892, %v3888
    %v4117 = vpack.c.b16 %v3893, %v3889
    %v4118 = vpack.c.b16 %v3894, %v3890
    %v4119 = vpack.c.b16 %v3899, %v3895
    %v4120 = vpack.c.b16 %v3900, %v3896
    %v4121 = vpack.c.b16 %v3901, %v3897
    %v4122 = vpack.c.b16 %v3902, %v3898
    %v4123 = vpack.c.b16 %v3907, %v3903
    %v4124 = vpack.c.b16 %v3908, %v3904
    %v4125 = vpack.c.b16 %v3909, %v3905
    %v4126 = vpack.c.b16 %v3910, %v3906
    %v4127 = vpack.c.b16 %v3915, %v3911
    %v4128 = vpack.c.b16 %v3916, %v3912
    %v4129 = vpack.c.b16 %v3917, %v3913
    %v4130 = vpack.c.b16 %v3918, %v3914
    %v4131 = vpack.c.b16 %v3923, %v3919
    %v4132 = vpack.c.b16 %v3924, %v3920
    %v4133 = vpack.c.b16 %v3925, %v3921
    %v4134 = vpack.c.b16 %v3926, %v3922
    %v4135 = vpack.c.b16 %v3931, %v3927
    %v4136 = vpack.c.b16 %v3932, %v3928
    %v4137 = vpack.c.b16 %v3933, %v3929
    %v4138 = vpack.c.b16 %v3934, %v3930
    %v4139 = vpack.c.b16 %v3939, %v3935
    %v4140 = vpack.c.b16 %v3940, %v3936
    %v4141 = vpack.c.b16 %v3941, %v3937
    %v4142 = vpack.c.b16 %v3942, %v3938
    %v4143 = vpack.c.b16 %v3947, %v3943
    %v4144 = vpack.c.b16 %v3948, %v3944
    %v4145 = vpack.c.b16 %v3949, %v3945
    %v4146 = vpack.c.b16 %v3950, %v3946
    %v4147 = vpack.c.b16 %v3955, %v3951
    %v4148 = vpack.c.b16 %v3956, %v3952
    %v4149 = vpack.c.b16 %v3957, %v3953
    %v4150 = vpack.c.b16 %v3958, %v3954
    %v4151 = vpack.c.b16 %v3963, %v3959
    %v4152 = vpack.c.b16 %v3964, %v3960
    %v4153 = vpack.c.b16 %v3965, %v3961
    %v4154 = vpack.c.b16 %v3966, %v3962
    %v4155 = vpack.c.b16 %v3971, %v3967
    %v4156 = vpack.c.b16 %v3972, %v3968
    %v4157 = vpack.c.b16 %v3973, %v3969
    %v4158 = vpack.c.b16 %v3974, %v3970
    %v4159 = vpack.c.b16 %v3979, %v3975
    %v4160 = vpack.c.b16 %v3980, %v3976
    %v4161 = vpack.c.b16 %v3981, %v3977
    %v4162 = vpack.c.b16 %v3982, %v3978
    %v4163 = vpack.c.b16 %v3987, %v3983
    %v4164 = vpack.c.b16 %v3988, %v3984
    %v4165 = vpack.c.b16 %v3989, %v3985
    %v4166 = vpack.c.b16 %v3990, %v3986
    %v4167 = vpack.c.b16 %v3995, %v3991
    %v4168 = vpack.c.b16 %v3996, %v3992
    %v4169 = vpack.c.b16 %v3997, %v3993
    %v4170 = vpack.c.b16 %v3998, %v3994
    %v4171 = vpack.c.b16 %v4003, %v3999
    %v4172 = vpack.c.b16 %v4004, %v4000
    %v4173 = vpack.c.b16 %v4005, %v4001
    %v4174 = vpack.c.b16 %v4006, %v4002
    %v4175 = vpack.c.b16 %v4011, %v4007
    %v4176 = vpack.c.b16 %v4012, %v4008
    %v4177 = vpack.c.b16 %v4013, %v4009
    %v4178 = vpack.c.b16 %v4014, %v4010
    %v4179 = vpack.c.b16 %v4019, %v4015
    %v4180 = vpack.c.b16 %v4020, %v4016
    %v4181 = vpack.c.b16 %v4021, %v4017
    %v4182 = vpack.c.b16 %v4022, %v4018
    %v4183 = vpack.c.b16 %v4027, %v4023
    %v4184 = vpack.c.b16 %v4028, %v4024
    %v4185 = vpack.c.b16 %v4029, %v4025
    %v4186 = vpack.c.b16 %v4030, %v4026
    %v4187 = vpack.c.b16 %v4035, %v4031
    %v4188 = vpack.c.b16 %v4036, %v4032
    %v4189 = vpack.c.b16 %v4037, %v4033
    %v4190 = vpack.c.b16 %v4038, %v4034
    %v4191 = vpack.c.b16 %v4043, %v4039
    %v4192 = vpack.c.b16 %v4044, %v4040
    %v4193 = vpack.c.b16 %v4045, %v4041
    %v4194 = vpack.c.b16 %v4046, %v4042
    %v4195 = vpack.c.b16 %v4051, %v4047
    %v4196 = vpack.c.b16 %v4052, %v4048
    %v4197 = vpack.c.b16 %v4053, %v4049
    %v4198 = vpack.c.b16 %v4054, %v4050
    %v4199 = vpack.c.b16 %v4059, %v4055
    %v4200 = vpack.c.b16 %v4060, %v4056
    %v4201 = vpack.c.b16 %v4061, %v4057
    %v4202 = vpack.c.b16 %v4062, %v4058
    %v4203 = vpack.c.b16 %v4067, %v4063
    %v4204 = vpack.c.b16 %v4068, %v4064
    %v4205 = vpack.c.b16 %v4069, %v4065
    %v4206 = vpack.c.b16 %v4070, %v4066
    %v4207 = vpack.c.b16 %v4075, %v4071
    %v4208 = vpack.c.b16 %v4076, %v4072
    %v4209 = vpack.c.b16 %v4077, %v4073
    %v4210 = vpack.c.b16 %v4078, %v4074
    %v4211 = vpack.c.b16 %v4083, %v4079
    %v4212 = vpack.c.b16 %v4084, %v4080
    %v4213 = vpack.c.b16 %v4085, %v4081
    %v4214 = vpack.c.b16 %v4086, %v4082
    %4343 = vmatprep.subr.bf16.mxu0 %v4088
    %4344 = vmatpush1.bf16.msra.mxu0 %v4087
    %4345 = vmatprep.subr.bf16.mxu0 %v4092
    %4346 = vmatpush1.bf16.msra.mxu0 %v4091
    %4347 = vmatprep.subr.bf16.mxu0 %v4096
    %4348 = vmatpush1.bf16.msra.mxu0 %v4095
    %4349 = vmatprep.subr.bf16.mxu0 %v4100
    %4350 = vmatpush1.bf16.msra.mxu0 %v4099
    %4351 = vmatprep.subr.bf16.mxu0 %v4104
    %4352 = vmatpush1.bf16.msra.mxu0 %v4103
    %4353 = vmatprep.subr.bf16.mxu0 %v4108
    %4354 = vmatpush1.bf16.msra.mxu0 %v4107
    %4355 = vmatprep.subr.bf16.mxu0 %v4112
    %4356 = vmatpush1.bf16.msra.mxu0 %v4111
    %4357 = vmatprep.subr.bf16.mxu0 %v4116
    %4358 = vmatpush1.bf16.msra.mxu0 %v4115
    %4359 = vmatprep.subr.bf16.mxu0 %v4120
    %4360 = vmatpush1.bf16.msra.mxu0 %v4119
    %4361 = vmatprep.subr.bf16.mxu0 %v4124
    %4362 = vmatpush1.bf16.msra.mxu0 %v4123
    %4363 = vmatprep.subr.bf16.mxu0 %v4128
    %4364 = vmatpush1.bf16.msra.mxu0 %v4127
    %4365 = vmatprep.subr.bf16.mxu0 %v4132
    %4366 = vmatpush1.bf16.msra.mxu0 %v4131
    %4367 = vmatprep.subr.bf16.mxu0 %v4136
    %4368 = vmatpush1.bf16.msra.mxu0 %v4135
    %4369 = vmatprep.subr.bf16.mxu0 %v4140
    %4370 = vmatpush1.bf16.msra.mxu0 %v4139
    %4371 = vmatprep.subr.bf16.mxu0 %v4144
    %4372 = vmatpush1.bf16.msra.mxu0 %v4143
    %4373 = vmatprep.subr.bf16.mxu0 %v4148
    %4374 = vmatpush1.bf16.msra.mxu0 %v4147
    %4375 = vmatprep.mubr.bf16.mxu0 %v3548
    %4376 = vmatmul.mubr.bf16.gmra.mrb[0].mxu0 %v3547
    %v4377 = vpop.f32.mrb[0].mxu0
    %v4378 = vadd.f32 %v3686, %v4377
    %v4379 = vpop.f32.mrb[0].mxu0
    %v4380 = vadd.f32 %v3690, %v4379
    %v4381 = vpop.f32.mrb[0].mxu0
    %v4382 = vadd.f32 %v3686, %v4381
    %v4383 = vpop.f32.mrb[0].mxu0
    %v4384 = vadd.f32 %v3690, %v4383
    %4385 = vdwg.mxu0
    %4386 = vmatprep.subr.bf16.mxu0 %v4152
    %4387 = vmatpush1.bf16.msra.mxu0 %v4151
    %4388 = vmatprep.subr.bf16.mxu0 %v4156
    %4389 = vmatpush1.bf16.msra.mxu0 %v4155
    %4390 = vmatprep.subr.bf16.mxu0 %v4160
    %4391 = vmatpush1.bf16.msra.mxu0 %v4159
    %4392 = vmatprep.subr.bf16.mxu0 %v4164
    %4393 = vmatpush1.bf16.msra.mxu0 %v4163
    %4394 = vmatprep.subr.bf16.mxu0 %v4168
    %4395 = vmatpush1.bf16.msra.mxu0 %v4167
    %4396 = vmatprep.subr.bf16.mxu0 %v4172
    %4397 = vmatpush1.bf16.msra.mxu0 %v4171
    %4398 = vmatprep.subr.bf16.mxu0 %v4176
    %4399 = vmatpush1.bf16.msra.mxu0 %v4175
    %4400 = vmatprep.subr.bf16.mxu0 %v4180
    %4401 = vmatpush1.bf16.msra.mxu0 %v4179
    %4402 = vmatprep.subr.bf16.mxu0 %v4184
    %4403 = vmatpush1.bf16.msra.mxu0 %v4183
    %4404 = vmatprep.subr.bf16.mxu0 %v4188
    %4405 = vmatpush1.bf16.msra.mxu0 %v4187
    %4406 = vmatprep.subr.bf16.mxu0 %v4192
    %4407 = vmatpush1.bf16.msra.mxu0 %v4191
    %4408 = vmatprep.subr.bf16.mxu0 %v4196
    %4409 = vmatpush1.bf16.msra.mxu0 %v4195
    %4410 = vmatprep.subr.bf16.mxu0 %v4200
    %4411 = vmatpush1.bf16.msra.mxu0 %v4199
    %4412 = vmatprep.subr.bf16.mxu0 %v4204
    %4413 = vmatpush1.bf16.msra.mxu0 %v4203
    %4414 = vmatprep.subr.bf16.mxu0 %v4208
    %4415 = vmatpush1.bf16.msra.mxu0 %v4207
    %4416 = vmatprep.subr.bf16.mxu0 %v4212
    %4417 = vmatpush1.bf16.msra.mxu0 %v4211
    %4418 = vmatprep.mubr.bf16.mxu0 %v3550
    %4419 = vmatmul.mubr.bf16.gmra.mrb[0].mxu0 %v3549
    %v4420 = vpop.f32.mrb[0].mxu0
    %v4421 = vadd.f32 %v4378, %v4420
    %v4422 = vpop.f32.mrb[0].mxu0
    %v4423 = vadd.f32 %v4380, %v4422
    %v4424 = vpop.f32.mrb[0].mxu0
    %v4425 = vadd.f32 %v4382, %v4424
    %v4426 = vpop.f32.mrb[0].mxu0
    %v4427 = vadd.f32 %v4384, %v4426
    %4428 = vdwg.mxu0
    %4429 = vmatprep.subr.bf16.mxu0 %v4090
    %4430 = vmatpush1.bf16.msra.mxu0 %v4089
    %4431 = vmatprep.subr.bf16.mxu0 %v4094
    %4432 = vmatpush1.bf16.msra.mxu0 %v4093
    %4433 = vmatprep.subr.bf16.mxu0 %v4098
    %4434 = vmatpush1.bf16.msra.mxu0 %v4097
    %4435 = vmatprep.subr.bf16.mxu0 %v4102
    %4436 = vmatpush1.bf16.msra.mxu0 %v4101
    %4437 = vmatprep.subr.bf16.mxu0 %v4106
    %4438 = vmatpush1.bf16.msra.mxu0 %v4105
    %4439 = vmatprep.subr.bf16.mxu0 %v4110
    %4440 = vmatpush1.bf16.msra.mxu0 %v4109
    %4441 = vmatprep.subr.bf16.mxu0 %v4114
    %4442 = vmatpush1.bf16.msra.mxu0 %v4113
    %4443 = vmatprep.subr.bf16.mxu0 %v4118
    %4444 = vmatpush1.bf16.msra.mxu0 %v4117
    %4445 = vmatprep.subr.bf16.mxu0 %v4122
    %4446 = vmatpush1.bf16.msra.mxu0 %v4121
    %4447 = vmatprep.subr.bf16.mxu0 %v4126
    %4448 = vmatpush1.bf16.msra.mxu0 %v4125
    %4449 = vmatprep.subr.bf16.mxu0 %v4130
    %4450 = vmatpush1.bf16.msra.mxu0 %v4129
    %4451 = vmatprep.subr.bf16.mxu0 %v4134
    %4452 = vmatpush1.bf16.msra.mxu0 %v4133
    %4453 = vmatprep.subr.bf16.mxu0 %v4138
    %4454 = vmatpush1.bf16.msra.mxu0 %v4137
    %4455 = vmatprep.subr.bf16.mxu0 %v4142
    %4456 = vmatpush1.bf16.msra.mxu0 %v4141
    %4457 = vmatprep.subr.bf16.mxu0 %v4146
    %4458 = vmatpush1.bf16.msra.mxu0 %v4145
    %4459 = vmatprep.subr.bf16.mxu0 %v4150
    %4460 = vmatpush1.bf16.msra.mxu0 %v4149
    %4461 = vmatprep.mubr.bf16.mxu0 %v3548
    %4462 = vmatmul.mubr.bf16.gmra.mrb[0].mxu0 %v3547
    %v4463 = vpop.f32.mrb[0].mxu0
    %v4464 = vadd.f32 %v3694, %v4463
    %v4465 = vpop.f32.mrb[0].mxu0
    %v4466 = vadd.f32 %v3698, %v4465
    %v4467 = vpop.f32.mrb[0].mxu0
    %v4468 = vadd.f32 %v3694, %v4467
    %v4469 = vpop.f32.mrb[0].mxu0
    %v4470 = vadd.f32 %v3698, %v4469
    %4471 = vdwg.mxu0
    %4472 = vmatprep.subr.bf16.mxu0 %v4154
    %4473 = vmatpush1.bf16.msra.mxu0 %v4153
    %4474 = vmatprep.subr.bf16.mxu0 %v4158
    %4475 = vmatpush1.bf16.msra.mxu0 %v4157
    %4476 = vmatprep.subr.bf16.mxu0 %v4162
    %4477 = vmatpush1.bf16.msra.mxu0 %v4161
    %4478 = vmatprep.subr.bf16.mxu0 %v4166
    %4479 = vmatpush1.bf16.msra.mxu0 %v4165
    %4480 = vmatprep.subr.bf16.mxu0 %v4170
    %4481 = vmatpush1.bf16.msra.mxu0 %v4169
    %4482 = vmatprep.subr.bf16.mxu0 %v4174
    %4483 = vmatpush1.bf16.msra.mxu0 %v4173
    %4484 = vmatprep.subr.bf16.mxu0 %v4178
    %4485 = vmatpush1.bf16.msra.mxu0 %v4177
    %4486 = vmatprep.subr.bf16.mxu0 %v4182
    %4487 = vmatpush1.bf16.msra.mxu0 %v4181
    %4488 = vmatprep.subr.bf16.mxu0 %v4186
    %4489 = vmatpush1.bf16.msra.mxu0 %v4185
    %4490 = vmatprep.subr.bf16.mxu0 %v4190
    %4491 = vmatpush1.bf16.msra.mxu0 %v4189
    %4492 = vmatprep.subr.bf16.mxu0 %v4194
    %4493 = vmatpush1.bf16.msra.mxu0 %v4193
    %4494 = vmatprep.subr.bf16.mxu0 %v4198
    %4495 = vmatpush1.bf16.msra.mxu0 %v4197
    %4496 = vmatprep.subr.bf16.mxu0 %v4202
    %4497 = vmatpush1.bf16.msra.mxu0 %v4201
    %4498 = vmatprep.subr.bf16.mxu0 %v4206
    %4499 = vmatpush1.bf16.msra.mxu0 %v4205
    %4500 = vmatprep.subr.bf16.mxu0 %v4210
    %4501 = vmatpush1.bf16.msra.mxu0 %v4209
    %4502 = vmatprep.subr.bf16.mxu0 %v4214
    %4503 = vmatpush1.bf16.msra.mxu0 %v4213
    %4504 = vmatprep.mubr.bf16.mxu0 %v3550
    %4505 = vmatmul.mubr.bf16.gmra.mrb[0].mxu0 %v3549
    %v4506 = vpop.f32.mrb[0].mxu0
    %v4507 = vadd.f32 %v4464, %v4506
    %v4508 = vpop.f32.mrb[0].mxu0
    %v4509 = vadd.f32 %v4466, %v4508
    %v4510 = vpop.f32.mrb[0].mxu0
    %v4511 = vadd.f32 %v4468, %v4510
    %v4512 = vpop.f32.mrb[0].mxu0
    %v4513 = vadd.f32 %v4470, %v4512
    %4514 = vdwg.mxu0
    %v4515 = vmax.f32 %v4421, 0.0
    %v4516 = vmax.f32 %v4423, 0.0
    %v4517 = vmax.f32 %v4507, 0.0
    %v4518 = vmax.f32 %v4509, 0.0
    %v4519 = vmax.f32 %v4425, 0.0
    %v4520 = vmax.f32 %v4427, 0.0
    %v4521 = vmax.f32 %v4511, 0.0
    %v4522 = vmax.f32 %v4513, 0.0
    %v4523 = vpack.c.bf16 %v4519, %v4515
    %v4524 = vpack.c.bf16 %v4520, %v4516
    %v4525 = vpack.c.bf16 %v4521, %v4517
    %v4526 = vpack.c.bf16 %v4522, %v4518
    %s4527 = scalar_lea.vmem [#allocation16], 2048
    %v4528 = vld [vmem:[%s4527] sm:$0xff]
    %v4529 = vld [vmem:[%s4527 + $0x8] sm:$0xff]
    %v4530 = vld [vmem:[%s4527 + $0x10] sm:$0xff]
    %v4531 = vld [vmem:[%s4527 + $0x18] sm:$0xff]
    %v4532 = vld [vmem:[%s4527 + $0x20] sm:$0xff]
    %v4533 = vld [vmem:[%s4527 + $0x28] sm:$0xff]
    %v4534 = vld [vmem:[%s4527 + $0x30] sm:$0xff]
    %v4535 = vld [vmem:[%s4527 + $0x38] sm:$0xff]
    %v4536 = vld [vmem:[%s4527 + $0x40] sm:$0xff]
    %v4537 = vld [vmem:[%s4527 + $0x48] sm:$0xff]
    %v4538 = vld [vmem:[%s4527 + $0x50] sm:$0xff]
    %v4539 = vld [vmem:[%s4527 + $0x58] sm:$0xff]
    %v4540 = vld [vmem:[%s4527 + $0x60] sm:$0xff]
    %v4541 = vld [vmem:[%s4527 + $0x68] sm:$0xff]
    %v4542 = vld [vmem:[%s4527 + $0x70] sm:$0xff]
    %v4543 = vld [vmem:[%s4527 + $0x78] sm:$0xff]
    %v4544 = vld [vmem:[%s4527 + $0x80] sm:$0xff]
    %v4545 = vld [vmem:[%s4527 + $0x88] sm:$0xff]
    %v4546 = vld [vmem:[%s4527 + $0x90] sm:$0xff]
    %v4547 = vld [vmem:[%s4527 + $0x98] sm:$0xff]
    %v4548 = vld [vmem:[%s4527 + $0xa0] sm:$0xff]
    %v4549 = vld [vmem:[%s4527 + $0xa8] sm:$0xff]
    %v4550 = vld [vmem:[%s4527 + $0xb0] sm:$0xff]
    %v4551 = vld [vmem:[%s4527 + $0xb8] sm:$0xff]
    %v4552 = vld [vmem:[%s4527 + $0xc0] sm:$0xff]
    %v4553 = vld [vmem:[%s4527 + $0xc8] sm:$0xff]
    %v4554 = vld [vmem:[%s4527 + $0xd0] sm:$0xff]
    %v4555 = vld [vmem:[%s4527 + $0xd8] sm:$0xff]
    %v4556 = vld [vmem:[%s4527 + $0xe0] sm:$0xff]
    %v4557 = vld [vmem:[%s4527 + $0xe8] sm:$0xff]
    %v4558 = vld [vmem:[%s4527 + $0xf0] sm:$0xff]
    %v4559 = vld [vmem:[%s4527 + $0xf8] sm:$0xff]
    %v4560 = vld [vmem:[%s4527 + $0x100] sm:$0xff]
    %v4561 = vld [vmem:[%s4527 + $0x108] sm:$0xff]
    %v4562 = vld [vmem:[%s4527 + $0x110] sm:$0xff]
    %v4563 = vld [vmem:[%s4527 + $0x118] sm:$0xff]
    %v4564 = vld [vmem:[%s4527 + $0x120] sm:$0xff]
    %v4565 = vld [vmem:[%s4527 + $0x128] sm:$0xff]
    %v4566 = vld [vmem:[%s4527 + $0x130] sm:$0xff]
    %v4567 = vld [vmem:[%s4527 + $0x138] sm:$0xff]
    %v4568 = vld [vmem:[%s4527 + $0x140] sm:$0xff]
    %v4569 = vld [vmem:[%s4527 + $0x148] sm:$0xff]
    %v4570 = vld [vmem:[%s4527 + $0x150] sm:$0xff]
    %v4571 = vld [vmem:[%s4527 + $0x158] sm:$0xff]
    %v4572 = vld [vmem:[%s4527 + $0x160] sm:$0xff]
    %v4573 = vld [vmem:[%s4527 + $0x168] sm:$0xff]
    %v4574 = vld [vmem:[%s4527 + $0x170] sm:$0xff]
    %v4575 = vld [vmem:[%s4527 + $0x178] sm:$0xff]
    %v4576 = vld [vmem:[%s4527 + $0x180] sm:$0xff]
    %v4577 = vld [vmem:[%s4527 + $0x188] sm:$0xff]
    %v4578 = vld [vmem:[%s4527 + $0x190] sm:$0xff]
    %v4579 = vld [vmem:[%s4527 + $0x198] sm:$0xff]
    %v4580 = vld [vmem:[%s4527 + $0x1a0] sm:$0xff]
    %v4581 = vld [vmem:[%s4527 + $0x1a8] sm:$0xff]
    %v4582 = vld [vmem:[%s4527 + $0x1b0] sm:$0xff]
    %v4583 = vld [vmem:[%s4527 + $0x1b8] sm:$0xff]
    %v4584 = vld [vmem:[%s4527 + $0x1c0] sm:$0xff]
    %v4585 = vld [vmem:[%s4527 + $0x1c8] sm:$0xff]
    %v4586 = vld [vmem:[%s4527 + $0x1d0] sm:$0xff]
    %v4587 = vld [vmem:[%s4527 + $0x1d8] sm:$0xff]
    %v4588 = vld [vmem:[%s4527 + $0x1e0] sm:$0xff]
    %v4589 = vld [vmem:[%s4527 + $0x1e8] sm:$0xff]
    %v4590 = vld [vmem:[%s4527 + $0x1f0] sm:$0xff]
    %v4591 = vld [vmem:[%s4527 + $0x1f8] sm:$0xff]
    %v4592 = vld [vmem:[%s4527 + $0x200] sm:$0xff]
    %v4593 = vld [vmem:[%s4527 + $0x208] sm:$0xff]
    %v4594 = vld [vmem:[%s4527 + $0x210] sm:$0xff]
    %v4595 = vld [vmem:[%s4527 + $0x218] sm:$0xff]
    %v4596 = vld [vmem:[%s4527 + $0x220] sm:$0xff]
    %v4597 = vld [vmem:[%s4527 + $0x228] sm:$0xff]
    %v4598 = vld [vmem:[%s4527 + $0x230] sm:$0xff]
    %v4599 = vld [vmem:[%s4527 + $0x238] sm:$0xff]
    %v4600 = vld [vmem:[%s4527 + $0x240] sm:$0xff]
    %v4601 = vld [vmem:[%s4527 + $0x248] sm:$0xff]
    %v4602 = vld [vmem:[%s4527 + $0x250] sm:$0xff]
    %v4603 = vld [vmem:[%s4527 + $0x258] sm:$0xff]
    %v4604 = vld [vmem:[%s4527 + $0x260] sm:$0xff]
    %v4605 = vld [vmem:[%s4527 + $0x268] sm:$0xff]
    %v4606 = vld [vmem:[%s4527 + $0x270] sm:$0xff]
    %v4607 = vld [vmem:[%s4527 + $0x278] sm:$0xff]
    %v4608 = vld [vmem:[%s4527 + $0x280] sm:$0xff]
    %v4609 = vld [vmem:[%s4527 + $0x288] sm:$0xff]
    %v4610 = vld [vmem:[%s4527 + $0x290] sm:$0xff]
    %v4611 = vld [vmem:[%s4527 + $0x298] sm:$0xff]
    %v4612 = vld [vmem:[%s4527 + $0x2a0] sm:$0xff]
    %v4613 = vld [vmem:[%s4527 + $0x2a8] sm:$0xff]
    %v4614 = vld [vmem:[%s4527 + $0x2b0] sm:$0xff]
    %v4615 = vld [vmem:[%s4527 + $0x2b8] sm:$0xff]
    %v4616 = vld [vmem:[%s4527 + $0x2c0] sm:$0xff]
    %v4617 = vld [vmem:[%s4527 + $0x2c8] sm:$0xff]
    %v4618 = vld [vmem:[%s4527 + $0x2d0] sm:$0xff]
    %v4619 = vld [vmem:[%s4527 + $0x2d8] sm:$0xff]
    %v4620 = vld [vmem:[%s4527 + $0x2e0] sm:$0xff]
    %v4621 = vld [vmem:[%s4527 + $0x2e8] sm:$0xff]
    %v4622 = vld [vmem:[%s4527 + $0x2f0] sm:$0xff]
    %v4623 = vld [vmem:[%s4527 + $0x2f8] sm:$0xff]
    %v4624 = vld [vmem:[%s4527 + $0x300] sm:$0xff]
    %v4625 = vld [vmem:[%s4527 + $0x308] sm:$0xff]
    %v4626 = vld [vmem:[%s4527 + $0x310] sm:$0xff]
    %v4627 = vld [vmem:[%s4527 + $0x318] sm:$0xff]
    %v4628 = vld [vmem:[%s4527 + $0x320] sm:$0xff]
    %v4629 = vld [vmem:[%s4527 + $0x328] sm:$0xff]
    %v4630 = vld [vmem:[%s4527 + $0x330] sm:$0xff]
    %v4631 = vld [vmem:[%s4527 + $0x338] sm:$0xff]
    %v4632 = vld [vmem:[%s4527 + $0x340] sm:$0xff]
    %v4633 = vld [vmem:[%s4527 + $0x348] sm:$0xff]
    %v4634 = vld [vmem:[%s4527 + $0x350] sm:$0xff]
    %v4635 = vld [vmem:[%s4527 + $0x358] sm:$0xff]
    %v4636 = vld [vmem:[%s4527 + $0x360] sm:$0xff]
    %v4637 = vld [vmem:[%s4527 + $0x368] sm:$0xff]
    %v4638 = vld [vmem:[%s4527 + $0x370] sm:$0xff]
    %v4639 = vld [vmem:[%s4527 + $0x378] sm:$0xff]
    %v4640 = vld [vmem:[%s4527 + $0x380] sm:$0xff]
    %v4641 = vld [vmem:[%s4527 + $0x388] sm:$0xff]
    %v4642 = vld [vmem:[%s4527 + $0x390] sm:$0xff]
    %v4643 = vld [vmem:[%s4527 + $0x398] sm:$0xff]
    %v4644 = vld [vmem:[%s4527 + $0x3a0] sm:$0xff]
    %v4645 = vld [vmem:[%s4527 + $0x3a8] sm:$0xff]
    %v4646 = vld [vmem:[%s4527 + $0x3b0] sm:$0xff]
    %v4647 = vld [vmem:[%s4527 + $0x3b8] sm:$0xff]
    %v4648 = vld [vmem:[%s4527 + $0x3c0] sm:$0xff]
    %v4649 = vld [vmem:[%s4527 + $0x3c8] sm:$0xff]
    %v4650 = vld [vmem:[%s4527 + $0x3d0] sm:$0xff]
    %v4651 = vld [vmem:[%s4527 + $0x3d8] sm:$0xff]
    %v4652 = vld [vmem:[%s4527 + $0x3e0] sm:$0xff]
    %v4653 = vld [vmem:[%s4527 + $0x3e8] sm:$0xff]
    %v4654 = vld [vmem:[%s4527 + $0x3f0] sm:$0xff]
    %v4655 = vld [vmem:[%s4527 + $0x3f8] sm:$0xff]
    %s4656 = scalar_lea.vmem [#allocation17], 2
    %v4657 = vld [vmem:[%s4656] ss:$8 sm:$0xf]
    %v4659 = vlaneseq
    %v4660 = vshrl.u32 %v4659, 7
    %v4661 = vsub.s32 0, %v4660
    %v4662 = vrot.slane %v4657, %v4661
    %v4663 = vlaneseq
    %v4664 = vshrl.u32 %v4663, 7
    %v4665 = vsub.s32 1, %v4664
    %v4666 = vrot.slane %v4657, %v4665
    %v4667 = vlaneseq
    %v4668 = vshrl.u32 %v4667, 7
    %v4669 = vsub.s32 2, %v4668
    %v4670 = vrot.slane %v4657, %v4669
    %v4671 = vlaneseq
    %v4672 = vshrl.u32 %v4671, 7
    %v4673 = vsub.s32 3, %v4672
    %v4674 = vrot.slane %v4657, %v4673
    %v4807 = vunpack.c.l.b16 %v4528
    %v4808 = vunpack.c.h.b16 %v4528
    %v4809 = vunpack.c.l.b16 %v4529
    %v4810 = vunpack.c.h.b16 %v4529
    %v4811 = vunpack.c.l.b16 %v4530
    %v4812 = vunpack.c.h.b16 %v4530
    %v4813 = vunpack.c.l.b16 %v4531
    %v4814 = vunpack.c.h.b16 %v4531
    %v4815 = vunpack.c.l.b16 %v4532
    %v4816 = vunpack.c.h.b16 %v4532
    %v4817 = vunpack.c.l.b16 %v4533
    %v4818 = vunpack.c.h.b16 %v4533
    %v4819 = vunpack.c.l.b16 %v4534
    %v4820 = vunpack.c.h.b16 %v4534
    %v4821 = vunpack.c.l.b16 %v4535
    %v4822 = vunpack.c.h.b16 %v4535
    %v4823 = vunpack.c.l.b16 %v4536
    %v4824 = vunpack.c.h.b16 %v4536
    %v4825 = vunpack.c.l.b16 %v4537
    %v4826 = vunpack.c.h.b16 %v4537
    %v4827 = vunpack.c.l.b16 %v4538
    %v4828 = vunpack.c.h.b16 %v4538
    %v4829 = vunpack.c.l.b16 %v4539
    %v4830 = vunpack.c.h.b16 %v4539
    %v4831 = vunpack.c.l.b16 %v4540
    %v4832 = vunpack.c.h.b16 %v4540
    %v4833 = vunpack.c.l.b16 %v4541
    %v4834 = vunpack.c.h.b16 %v4541
    %v4835 = vunpack.c.l.b16 %v4542
    %v4836 = vunpack.c.h.b16 %v4542
    %v4837 = vunpack.c.l.b16 %v4543
    %v4838 = vunpack.c.h.b16 %v4543
    %v4839 = vunpack.c.l.b16 %v4544
    %v4840 = vunpack.c.h.b16 %v4544
    %v4841 = vunpack.c.l.b16 %v4545
    %v4842 = vunpack.c.h.b16 %v4545
    %v4843 = vunpack.c.l.b16 %v4546
    %v4844 = vunpack.c.h.b16 %v4546
    %v4845 = vunpack.c.l.b16 %v4547
    %v4846 = vunpack.c.h.b16 %v4547
    %v4847 = vunpack.c.l.b16 %v4548
    %v4848 = vunpack.c.h.b16 %v4548
    %v4849 = vunpack.c.l.b16 %v4549
    %v4850 = vunpack.c.h.b16 %v4549
    %v4851 = vunpack.c.l.b16 %v4550
    %v4852 = vunpack.c.h.b16 %v4550
    %v4853 = vunpack.c.l.b16 %v4551
    %v4854 = vunpack.c.h.b16 %v4551
    %v4855 = vunpack.c.l.b16 %v4552
    %v4856 = vunpack.c.h.b16 %v4552
    %v4857 = vunpack.c.l.b16 %v4553
    %v4858 = vunpack.c.h.b16 %v4553
    %v4859 = vunpack.c.l.b16 %v4554
    %v4860 = vunpack.c.h.b16 %v4554
    %v4861 = vunpack.c.l.b16 %v4555
    %v4862 = vunpack.c.h.b16 %v4555
    %v4863 = vunpack.c.l.b16 %v4556
    %v4864 = vunpack.c.h.b16 %v4556
    %v4865 = vunpack.c.l.b16 %v4557
    %v4866 = vunpack.c.h.b16 %v4557
    %v4867 = vunpack.c.l.b16 %v4558
    %v4868 = vunpack.c.h.b16 %v4558
    %v4869 = vunpack.c.l.b16 %v4559
    %v4870 = vunpack.c.h.b16 %v4559
    %v4871 = vunpack.c.l.b16 %v4560
    %v4872 = vunpack.c.h.b16 %v4560
    %v4873 = vunpack.c.l.b16 %v4561
    %v4874 = vunpack.c.h.b16 %v4561
    %v4875 = vunpack.c.l.b16 %v4562
    %v4876 = vunpack.c.h.b16 %v4562
    %v4877 = vunpack.c.l.b16 %v4563
    %v4878 = vunpack.c.h.b16 %v4563
    %v4879 = vunpack.c.l.b16 %v4564
    %v4880 = vunpack.c.h.b16 %v4564
    %v4881 = vunpack.c.l.b16 %v4565
    %v4882 = vunpack.c.h.b16 %v4565
    %v4883 = vunpack.c.l.b16 %v4566
    %v4884 = vunpack.c.h.b16 %v4566
    %v4885 = vunpack.c.l.b16 %v4567
    %v4886 = vunpack.c.h.b16 %v4567
    %v4887 = vunpack.c.l.b16 %v4568
    %v4888 = vunpack.c.h.b16 %v4568
    %v4889 = vunpack.c.l.b16 %v4569
    %v4890 = vunpack.c.h.b16 %v4569
    %v4891 = vunpack.c.l.b16 %v4570
    %v4892 = vunpack.c.h.b16 %v4570
    %v4893 = vunpack.c.l.b16 %v4571
    %v4894 = vunpack.c.h.b16 %v4571
    %v4895 = vunpack.c.l.b16 %v4572
    %v4896 = vunpack.c.h.b16 %v4572
    %v4897 = vunpack.c.l.b16 %v4573
    %v4898 = vunpack.c.h.b16 %v4573
    %v4899 = vunpack.c.l.b16 %v4574
    %v4900 = vunpack.c.h.b16 %v4574
    %v4901 = vunpack.c.l.b16 %v4575
    %v4902 = vunpack.c.h.b16 %v4575
    %v4903 = vunpack.c.l.b16 %v4576
    %v4904 = vunpack.c.h.b16 %v4576
    %v4905 = vunpack.c.l.b16 %v4577
    %v4906 = vunpack.c.h.b16 %v4577
    %v4907 = vunpack.c.l.b16 %v4578
    %v4908 = vunpack.c.h.b16 %v4578
    %v4909 = vunpack.c.l.b16 %v4579
    %v4910 = vunpack.c.h.b16 %v4579
    %v4911 = vunpack.c.l.b16 %v4580
    %v4912 = vunpack.c.h.b16 %v4580
    %v4913 = vunpack.c.l.b16 %v4581
    %v4914 = vunpack.c.h.b16 %v4581
    %v4915 = vunpack.c.l.b16 %v4582
    %v4916 = vunpack.c.h.b16 %v4582
    %v4917 = vunpack.c.l.b16 %v4583
    %v4918 = vunpack.c.h.b16 %v4583
    %v4919 = vunpack.c.l.b16 %v4584
    %v4920 = vunpack.c.h.b16 %v4584
    %v4921 = vunpack.c.l.b16 %v4585
    %v4922 = vunpack.c.h.b16 %v4585
    %v4923 = vunpack.c.l.b16 %v4586
    %v4924 = vunpack.c.h.b16 %v4586
    %v4925 = vunpack.c.l.b16 %v4587
    %v4926 = vunpack.c.h.b16 %v4587
    %v4927 = vunpack.c.l.b16 %v4588
    %v4928 = vunpack.c.h.b16 %v4588
    %v4929 = vunpack.c.l.b16 %v4589
    %v4930 = vunpack.c.h.b16 %v4589
    %v4931 = vunpack.c.l.b16 %v4590
    %v4932 = vunpack.c.h.b16 %v4590
    %v4933 = vunpack.c.l.b16 %v4591
    %v4934 = vunpack.c.h.b16 %v4591
    %v4935 = vunpack.c.l.b16 %v4592
    %v4936 = vunpack.c.h.b16 %v4592
    %v4937 = vunpack.c.l.b16 %v4593
    %v4938 = vunpack.c.h.b16 %v4593
    %v4939 = vunpack.c.l.b16 %v4594
    %v4940 = vunpack.c.h.b16 %v4594
    %v4941 = vunpack.c.l.b16 %v4595
    %v4942 = vunpack.c.h.b16 %v4595
    %v4943 = vunpack.c.l.b16 %v4596
    %v4944 = vunpack.c.h.b16 %v4596
    %v4945 = vunpack.c.l.b16 %v4597
    %v4946 = vunpack.c.h.b16 %v4597
    %v4947 = vunpack.c.l.b16 %v4598
    %v4948 = vunpack.c.h.b16 %v4598
    %v4949 = vunpack.c.l.b16 %v4599
    %v4950 = vunpack.c.h.b16 %v4599
    %v4951 = vunpack.c.l.b16 %v4600
    %v4952 = vunpack.c.h.b16 %v4600
    %v4953 = vunpack.c.l.b16 %v4601
    %v4954 = vunpack.c.h.b16 %v4601
    %v4955 = vunpack.c.l.b16 %v4602
    %v4956 = vunpack.c.h.b16 %v4602
    %v4957 = vunpack.c.l.b16 %v4603
    %v4958 = vunpack.c.h.b16 %v4603
    %v4959 = vunpack.c.l.b16 %v4604
    %v4960 = vunpack.c.h.b16 %v4604
    %v4961 = vunpack.c.l.b16 %v4605
    %v4962 = vunpack.c.h.b16 %v4605
    %v4963 = vunpack.c.l.b16 %v4606
    %v4964 = vunpack.c.h.b16 %v4606
    %v4965 = vunpack.c.l.b16 %v4607
    %v4966 = vunpack.c.h.b16 %v4607
    %v4967 = vunpack.c.l.b16 %v4608
    %v4968 = vunpack.c.h.b16 %v4608
    %v4969 = vunpack.c.l.b16 %v4609
    %v4970 = vunpack.c.h.b16 %v4609
    %v4971 = vunpack.c.l.b16 %v4610
    %v4972 = vunpack.c.h.b16 %v4610
    %v4973 = vunpack.c.l.b16 %v4611
    %v4974 = vunpack.c.h.b16 %v4611
    %v4975 = vunpack.c.l.b16 %v4612
    %v4976 = vunpack.c.h.b16 %v4612
    %v4977 = vunpack.c.l.b16 %v4613
    %v4978 = vunpack.c.h.b16 %v4613
    %v4979 = vunpack.c.l.b16 %v4614
    %v4980 = vunpack.c.h.b16 %v4614
    %v4981 = vunpack.c.l.b16 %v4615
    %v4982 = vunpack.c.h.b16 %v4615
    %v4983 = vunpack.c.l.b16 %v4616
    %v4984 = vunpack.c.h.b16 %v4616
    %v4985 = vunpack.c.l.b16 %v4617
    %v4986 = vunpack.c.h.b16 %v4617
    %v4987 = vunpack.c.l.b16 %v4618
    %v4988 = vunpack.c.h.b16 %v4618
    %v4989 = vunpack.c.l.b16 %v4619
    %v4990 = vunpack.c.h.b16 %v4619
    %v4991 = vunpack.c.l.b16 %v4620
    %v4992 = vunpack.c.h.b16 %v4620
    %v4993 = vunpack.c.l.b16 %v4621
    %v4994 = vunpack.c.h.b16 %v4621
    %v4995 = vunpack.c.l.b16 %v4622
    %v4996 = vunpack.c.h.b16 %v4622
    %v4997 = vunpack.c.l.b16 %v4623
    %v4998 = vunpack.c.h.b16 %v4623
    %v4999 = vunpack.c.l.b16 %v4624
    %v5000 = vunpack.c.h.b16 %v4624
    %v5001 = vunpack.c.l.b16 %v4625
    %v5002 = vunpack.c.h.b16 %v4625
    %v5003 = vunpack.c.l.b16 %v4626
    %v5004 = vunpack.c.h.b16 %v4626
    %v5005 = vunpack.c.l.b16 %v4627
    %v5006 = vunpack.c.h.b16 %v4627
    %v5007 = vunpack.c.l.b16 %v4628
    %v5008 = vunpack.c.h.b16 %v4628
    %v5009 = vunpack.c.l.b16 %v4629
    %v5010 = vunpack.c.h.b16 %v4629
    %v5011 = vunpack.c.l.b16 %v4630
    %v5012 = vunpack.c.h.b16 %v4630
    %v5013 = vunpack.c.l.b16 %v4631
    %v5014 = vunpack.c.h.b16 %v4631
    %v5015 = vunpack.c.l.b16 %v4632
    %v5016 = vunpack.c.h.b16 %v4632
    %v5017 = vunpack.c.l.b16 %v4633
    %v5018 = vunpack.c.h.b16 %v4633
    %v5019 = vunpack.c.l.b16 %v4634
    %v5020 = vunpack.c.h.b16 %v4634
    %v5021 = vunpack.c.l.b16 %v4635
    %v5022 = vunpack.c.h.b16 %v4635
    %v5023 = vunpack.c.l.b16 %v4636
    %v5024 = vunpack.c.h.b16 %v4636
    %v5025 = vunpack.c.l.b16 %v4637
    %v5026 = vunpack.c.h.b16 %v4637
    %v5027 = vunpack.c.l.b16 %v4638
    %v5028 = vunpack.c.h.b16 %v4638
    %v5029 = vunpack.c.l.b16 %v4639
    %v5030 = vunpack.c.h.b16 %v4639
    %v5031 = vunpack.c.l.b16 %v4640
    %v5032 = vunpack.c.h.b16 %v4640
    %v5033 = vunpack.c.l.b16 %v4641
    %v5034 = vunpack.c.h.b16 %v4641
    %v5035 = vunpack.c.l.b16 %v4642
    %v5036 = vunpack.c.h.b16 %v4642
    %v5037 = vunpack.c.l.b16 %v4643
    %v5038 = vunpack.c.h.b16 %v4643
    %v5039 = vunpack.c.l.b16 %v4644
    %v5040 = vunpack.c.h.b16 %v4644
    %v5041 = vunpack.c.l.b16 %v4645
    %v5042 = vunpack.c.h.b16 %v4645
    %v5043 = vunpack.c.l.b16 %v4646
    %v5044 = vunpack.c.h.b16 %v4646
    %v5045 = vunpack.c.l.b16 %v4647
    %v5046 = vunpack.c.h.b16 %v4647
    %v5047 = vunpack.c.l.b16 %v4648
    %v5048 = vunpack.c.h.b16 %v4648
    %v5049 = vunpack.c.l.b16 %v4649
    %v5050 = vunpack.c.h.b16 %v4649
    %v5051 = vunpack.c.l.b16 %v4650
    %v5052 = vunpack.c.h.b16 %v4650
    %v5053 = vunpack.c.l.b16 %v4651
    %v5054 = vunpack.c.h.b16 %v4651
    %v5055 = vunpack.c.l.b16 %v4652
    %v5056 = vunpack.c.h.b16 %v4652
    %v5057 = vunpack.c.l.b16 %v4653
    %v5058 = vunpack.c.h.b16 %v4653
    %v5059 = vunpack.c.l.b16 %v4654
    %v5060 = vunpack.c.h.b16 %v4654
    %v5061 = vunpack.c.l.b16 %v4655
    %v5062 = vunpack.c.h.b16 %v4655
    %v5063 = vpack.c.b16 %v4811, %v4807
    %v5064 = vpack.c.b16 %v4812, %v4808
    %v5065 = vpack.c.b16 %v4813, %v4809
    %v5066 = vpack.c.b16 %v4814, %v4810
    %v5067 = vpack.c.b16 %v4819, %v4815
    %v5068 = vpack.c.b16 %v4820, %v4816
    %v5069 = vpack.c.b16 %v4821, %v4817
    %v5070 = vpack.c.b16 %v4822, %v4818
    %v5071 = vpack.c.b16 %v4827, %v4823
    %v5072 = vpack.c.b16 %v4828, %v4824
    %v5073 = vpack.c.b16 %v4829, %v4825
    %v5074 = vpack.c.b16 %v4830, %v4826
    %v5075 = vpack.c.b16 %v4835, %v4831
    %v5076 = vpack.c.b16 %v4836, %v4832
    %v5077 = vpack.c.b16 %v4837, %v4833
    %v5078 = vpack.c.b16 %v4838, %v4834
    %v5079 = vpack.c.b16 %v4843, %v4839
    %v5080 = vpack.c.b16 %v4844, %v4840
    %v5081 = vpack.c.b16 %v4845, %v4841
    %v5082 = vpack.c.b16 %v4846, %v4842
    %v5083 = vpack.c.b16 %v4851, %v4847
    %v5084 = vpack.c.b16 %v4852, %v4848
    %v5085 = vpack.c.b16 %v4853, %v4849
    %v5086 = vpack.c.b16 %v4854, %v4850
    %v5087 = vpack.c.b16 %v4859, %v4855
    %v5088 = vpack.c.b16 %v4860, %v4856
    %v5089 = vpack.c.b16 %v4861, %v4857
    %v5090 = vpack.c.b16 %v4862, %v4858
    %v5091 = vpack.c.b16 %v4867, %v4863
    %v5092 = vpack.c.b16 %v4868, %v4864
    %v5093 = vpack.c.b16 %v4869, %v4865
    %v5094 = vpack.c.b16 %v4870, %v4866
    %v5095 = vpack.c.b16 %v4875, %v4871
    %v5096 = vpack.c.b16 %v4876, %v4872
    %v5097 = vpack.c.b16 %v4877, %v4873
    %v5098 = vpack.c.b16 %v4878, %v4874
    %v5099 = vpack.c.b16 %v4883, %v4879
    %v5100 = vpack.c.b16 %v4884, %v4880
    %v5101 = vpack.c.b16 %v4885, %v4881
    %v5102 = vpack.c.b16 %v4886, %v4882
    %v5103 = vpack.c.b16 %v4891, %v4887
    %v5104 = vpack.c.b16 %v4892, %v4888
    %v5105 = vpack.c.b16 %v4893, %v4889
    %v5106 = vpack.c.b16 %v4894, %v4890
    %v5107 = vpack.c.b16 %v4899, %v4895
    %v5108 = vpack.c.b16 %v4900, %v4896
    %v5109 = vpack.c.b16 %v4901, %v4897
    %v5110 = vpack.c.b16 %v4902, %v4898
    %v5111 = vpack.c.b16 %v4907, %v4903
    %v5112 = vpack.c.b16 %v4908, %v4904
    %v5113 = vpack.c.b16 %v4909, %v4905
    %v5114 = vpack.c.b16 %v4910, %v4906
    %v5115 = vpack.c.b16 %v4915, %v4911
    %v5116 = vpack.c.b16 %v4916, %v4912
    %v5117 = vpack.c.b16 %v4917, %v4913
    %v5118 = vpack.c.b16 %v4918, %v4914
    %v5119 = vpack.c.b16 %v4923, %v4919
    %v5120 = vpack.c.b16 %v4924, %v4920
    %v5121 = vpack.c.b16 %v4925, %v4921
    %v5122 = vpack.c.b16 %v4926, %v4922
    %v5123 = vpack.c.b16 %v4931, %v4927
    %v5124 = vpack.c.b16 %v4932, %v4928
    %v5125 = vpack.c.b16 %v4933, %v4929
    %v5126 = vpack.c.b16 %v4934, %v4930
    %v5127 = vpack.c.b16 %v4939, %v4935
    %v5128 = vpack.c.b16 %v4940, %v4936
    %v5129 = vpack.c.b16 %v4941, %v4937
    %v5130 = vpack.c.b16 %v4942, %v4938
    %v5131 = vpack.c.b16 %v4947, %v4943
    %v5132 = vpack.c.b16 %v4948, %v4944
    %v5133 = vpack.c.b16 %v4949, %v4945
    %v5134 = vpack.c.b16 %v4950, %v4946
    %v5135 = vpack.c.b16 %v4955, %v4951
    %v5136 = vpack.c.b16 %v4956, %v4952
    %v5137 = vpack.c.b16 %v4957, %v4953
    %v5138 = vpack.c.b16 %v4958, %v4954
    %v5139 = vpack.c.b16 %v4963, %v4959
    %v5140 = vpack.c.b16 %v4964, %v4960
    %v5141 = vpack.c.b16 %v4965, %v4961
    %v5142 = vpack.c.b16 %v4966, %v4962
    %v5143 = vpack.c.b16 %v4971, %v4967
    %v5144 = vpack.c.b16 %v4972, %v4968
    %v5145 = vpack.c.b16 %v4973, %v4969
    %v5146 = vpack.c.b16 %v4974, %v4970
    %v5147 = vpack.c.b16 %v4979, %v4975
    %v5148 = vpack.c.b16 %v4980, %v4976
    %v5149 = vpack.c.b16 %v4981, %v4977
    %v5150 = vpack.c.b16 %v4982, %v4978
    %v5151 = vpack.c.b16 %v4987, %v4983
    %v5152 = vpack.c.b16 %v4988, %v4984
    %v5153 = vpack.c.b16 %v4989, %v4985
    %v5154 = vpack.c.b16 %v4990, %v4986
    %v5155 = vpack.c.b16 %v4995, %v4991
    %v5156 = vpack.c.b16 %v4996, %v4992
    %v5157 = vpack.c.b16 %v4997, %v4993
    %v5158 = vpack.c.b16 %v4998, %v4994
    %v5159 = vpack.c.b16 %v5003, %v4999
    %v5160 = vpack.c.b16 %v5004, %v5000
    %v5161 = vpack.c.b16 %v5005, %v5001
    %v5162 = vpack.c.b16 %v5006, %v5002
    %v5163 = vpack.c.b16 %v5011, %v5007
    %v5164 = vpack.c.b16 %v5012, %v5008
    %v5165 = vpack.c.b16 %v5013, %v5009
    %v5166 = vpack.c.b16 %v5014, %v5010
    %v5167 = vpack.c.b16 %v5019, %v5015
    %v5168 = vpack.c.b16 %v5020, %v5016
    %v5169 = vpack.c.b16 %v5021, %v5017
    %v5170 = vpack.c.b16 %v5022, %v5018
    %v5171 = vpack.c.b16 %v5027, %v5023
    %v5172 = vpack.c.b16 %v5028, %v5024
    %v5173 = vpack.c.b16 %v5029, %v5025
    %v5174 = vpack.c.b16 %v5030, %v5026
    %v5175 = vpack.c.b16 %v5035, %v5031
    %v5176 = vpack.c.b16 %v5036, %v5032
    %v5177 = vpack.c.b16 %v5037, %v5033
    %v5178 = vpack.c.b16 %v5038, %v5034
    %v5179 = vpack.c.b16 %v5043, %v5039
    %v5180 = vpack.c.b16 %v5044, %v5040
    %v5181 = vpack.c.b16 %v5045, %v5041
    %v5182 = vpack.c.b16 %v5046, %v5042
    %v5183 = vpack.c.b16 %v5051, %v5047
    %v5184 = vpack.c.b16 %v5052, %v5048
    %v5185 = vpack.c.b16 %v5053, %v5049
    %v5186 = vpack.c.b16 %v5054, %v5050
    %v5187 = vpack.c.b16 %v5059, %v5055
    %v5188 = vpack.c.b16 %v5060, %v5056
    %v5189 = vpack.c.b16 %v5061, %v5057
    %v5190 = vpack.c.b16 %v5062, %v5058
    %5319 = vmatprep.subr.bf16.mxu0 %v5064
    %5320 = vmatpush1.bf16.msra.mxu0 %v5063
    %5321 = vmatprep.subr.bf16.mxu0 %v5068
    %5322 = vmatpush1.bf16.msra.mxu0 %v5067
    %5323 = vmatprep.subr.bf16.mxu0 %v5072
    %5324 = vmatpush1.bf16.msra.mxu0 %v5071
    %5325 = vmatprep.subr.bf16.mxu0 %v5076
    %5326 = vmatpush1.bf16.msra.mxu0 %v5075
    %5327 = vmatprep.subr.bf16.mxu0 %v5080
    %5328 = vmatpush1.bf16.msra.mxu0 %v5079
    %5329 = vmatprep.subr.bf16.mxu0 %v5084
    %5330 = vmatpush1.bf16.msra.mxu0 %v5083
    %5331 = vmatprep.subr.bf16.mxu0 %v5088
    %5332 = vmatpush1.bf16.msra.mxu0 %v5087
    %5333 = vmatprep.subr.bf16.mxu0 %v5092
    %5334 = vmatpush1.bf16.msra.mxu0 %v5091
    %5335 = vmatprep.subr.bf16.mxu0 %v5096
    %5336 = vmatpush1.bf16.msra.mxu0 %v5095
    %5337 = vmatprep.subr.bf16.mxu0 %v5100
    %5338 = vmatpush1.bf16.msra.mxu0 %v5099
    %5339 = vmatprep.subr.bf16.mxu0 %v5104
    %5340 = vmatpush1.bf16.msra.mxu0 %v5103
    %5341 = vmatprep.subr.bf16.mxu0 %v5108
    %5342 = vmatpush1.bf16.msra.mxu0 %v5107
    %5343 = vmatprep.subr.bf16.mxu0 %v5112
    %5344 = vmatpush1.bf16.msra.mxu0 %v5111
    %5345 = vmatprep.subr.bf16.mxu0 %v5116
    %5346 = vmatpush1.bf16.msra.mxu0 %v5115
    %5347 = vmatprep.subr.bf16.mxu0 %v5120
    %5348 = vmatpush1.bf16.msra.mxu0 %v5119
    %5349 = vmatprep.subr.bf16.mxu0 %v5124
    %5350 = vmatpush1.bf16.msra.mxu0 %v5123
    %5351 = vmatprep.mubr.bf16.mxu0 %v4524
    %5352 = vmatmul.mubr.bf16.gmra.mrb[0].mxu0 %v4523
    %v5353 = vpop.f32.mrb[0].mxu0
    %v5354 = vadd.f32 %v4662, %v5353
    %v5355 = vpop.f32.mrb[0].mxu0
    %v5356 = vadd.f32 %v4666, %v5355
    %v5357 = vpop.f32.mrb[0].mxu0
    %v5358 = vadd.f32 %v4662, %v5357
    %v5359 = vpop.f32.mrb[0].mxu0
    %v5360 = vadd.f32 %v4666, %v5359
    %5361 = vdwg.mxu0
    %5362 = vmatprep.subr.bf16.mxu0 %v5128
    %5363 = vmatpush1.bf16.msra.mxu0 %v5127
    %5364 = vmatprep.subr.bf16.mxu0 %v5132
    %5365 = vmatpush1.bf16.msra.mxu0 %v5131
    %5366 = vmatprep.subr.bf16.mxu0 %v5136
    %5367 = vmatpush1.bf16.msra.mxu0 %v5135
    %5368 = vmatprep.subr.bf16.mxu0 %v5140
    %5369 = vmatpush1.bf16.msra.mxu0 %v5139
    %5370 = vmatprep.subr.bf16.mxu0 %v5144
    %5371 = vmatpush1.bf16.msra.mxu0 %v5143
    %5372 = vmatprep.subr.bf16.mxu0 %v5148
    %5373 = vmatpush1.bf16.msra.mxu0 %v5147
    %5374 = vmatprep.subr.bf16.mxu0 %v5152
    %5375 = vmatpush1.bf16.msra.mxu0 %v5151
    %5376 = vmatprep.subr.bf16.mxu0 %v5156
    %5377 = vmatpush1.bf16.msra.mxu0 %v5155
    %5378 = vmatprep.subr.bf16.mxu0 %v5160
    %5379 = vmatpush1.bf16.msra.mxu0 %v5159
    %5380 = vmatprep.subr.bf16.mxu0 %v5164
    %5381 = vmatpush1.bf16.msra.mxu0 %v5163
    %5382 = vmatprep.subr.bf16.mxu0 %v5168
    %5383 = vmatpush1.bf16.msra.mxu0 %v5167
    %5384 = vmatprep.subr.bf16.mxu0 %v5172
    %5385 = vmatpush1.bf16.msra.mxu0 %v5171
    %5386 = vmatprep.subr.bf16.mxu0 %v5176
    %5387 = vmatpush1.bf16.msra.mxu0 %v5175
    %5388 = vmatprep.subr.bf16.mxu0 %v5180
    %5389 = vmatpush1.bf16.msra.mxu0 %v5179
    %5390 = vmatprep.subr.bf16.mxu0 %v5184
    %5391 = vmatpush1.bf16.msra.mxu0 %v5183
    %5392 = vmatprep.subr.bf16.mxu0 %v5188
    %5393 = vmatpush1.bf16.msra.mxu0 %v5187
    %5394 = vmatprep.mubr.bf16.mxu0 %v4526
    %5395 = vmatmul.mubr.bf16.gmra.mrb[0].mxu0 %v4525
    %v5396 = vpop.f32.mrb[0].mxu0
    %v5397 = vadd.f32 %v5354, %v5396
    %v5398 = vpop.f32.mrb[0].mxu0
    %v5399 = vadd.f32 %v5356, %v5398
    %v5400 = vpop.f32.mrb[0].mxu0
    %v5401 = vadd.f32 %v5358, %v5400
    %v5402 = vpop.f32.mrb[0].mxu0
    %v5403 = vadd.f32 %v5360, %v5402
    %5404 = vdwg.mxu0
    %5405 = vmatprep.subr.bf16.mxu0 %v5066
    %5406 = vmatpush1.bf16.msra.mxu0 %v5065
    %5407 = vmatprep.subr.bf16.mxu0 %v5070
    %5408 = vmatpush1.bf16.msra.mxu0 %v5069
    %5409 = vmatprep.subr.bf16.mxu0 %v5074
    %5410 = vmatpush1.bf16.msra.mxu0 %v5073
    %5411 = vmatprep.subr.bf16.mxu0 %v5078
    %5412 = vmatpush1.bf16.msra.mxu0 %v5077
    %5413 = vmatprep.subr.bf16.mxu0 %v5082
    %5414 = vmatpush1.bf16.msra.mxu0 %v5081
    %5415 = vmatprep.subr.bf16.mxu0 %v5086
    %5416 = vmatpush1.bf16.msra.mxu0 %v5085
    %5417 = vmatprep.subr.bf16.mxu0 %v5090
    %5418 = vmatpush1.bf16.msra.mxu0 %v5089
    %5419 = vmatprep.subr.bf16.mxu0 %v5094
    %5420 = vmatpush1.bf16.msra.mxu0 %v5093
    %5421 = vmatprep.subr.bf16.mxu0 %v5098
    %5422 = vmatpush1.bf16.msra.mxu0 %v5097
    %5423 = vmatprep.subr.bf16.mxu0 %v5102
    %5424 = vmatpush1.bf16.msra.mxu0 %v5101
    %5425 = vmatprep.subr.bf16.mxu0 %v5106
    %5426 = vmatpush1.bf16.msra.mxu0 %v5105
    %5427 = vmatprep.subr.bf16.mxu0 %v5110
    %5428 = vmatpush1.bf16.msra.mxu0 %v5109
    %5429 = vmatprep.subr.bf16.mxu0 %v5114
    %5430 = vmatpush1.bf16.msra.mxu0 %v5113
    %5431 = vmatprep.subr.bf16.mxu0 %v5118
    %5432 = vmatpush1.bf16.msra.mxu0 %v5117
    %5433 = vmatprep.subr.bf16.mxu0 %v5122
    %5434 = vmatpush1.bf16.msra.mxu0 %v5121
    %5435 = vmatprep.subr.bf16.mxu0 %v5126
    %5436 = vmatpush1.bf16.msra.mxu0 %v5125
    %5437 = vmatprep.mubr.bf16.mxu0 %v4524
    %5438 = vmatmul.mubr.bf16.gmra.mrb[0].mxu0 %v4523
    %v5439 = vpop.f32.mrb[0].mxu0
    %v5440 = vadd.f32 %v4670, %v5439
    %v5441 = vpop.f32.mrb[0].mxu0
    %v5442 = vadd.f32 %v4674, %v5441
    %v5443 = vpop.f32.mrb[0].mxu0
    %v5444 = vadd.f32 %v4670, %v5443
    %v5445 = vpop.f32.mrb[0].mxu0
    %v5446 = vadd.f32 %v4674, %v5445
    %5447 = vdwg.mxu0
    %5448 = vmatprep.subr.bf16.mxu0 %v5130
    %5449 = vmatpush1.bf16.msra.mxu0 %v5129
    %5450 = vmatprep.subr.bf16.mxu0 %v5134
    %5451 = vmatpush1.bf16.msra.mxu0 %v5133
    %5452 = vmatprep.subr.bf16.mxu0 %v5138
    %5453 = vmatpush1.bf16.msra.mxu0 %v5137
    %5454 = vmatprep.subr.bf16.mxu0 %v5142
    %5455 = vmatpush1.bf16.msra.mxu0 %v5141
    %5456 = vmatprep.subr.bf16.mxu0 %v5146
    %5457 = vmatpush1.bf16.msra.mxu0 %v5145
    %5458 = vmatprep.subr.bf16.mxu0 %v5150
    %5459 = vmatpush1.bf16.msra.mxu0 %v5149
    %5460 = vmatprep.subr.bf16.mxu0 %v5154
    %5461 = vmatpush1.bf16.msra.mxu0 %v5153
    %5462 = vmatprep.subr.bf16.mxu0 %v5158
    %5463 = vmatpush1.bf16.msra.mxu0 %v5157
    %5464 = vmatprep.subr.bf16.mxu0 %v5162
    %5465 = vmatpush1.bf16.msra.mxu0 %v5161
    %5466 = vmatprep.subr.bf16.mxu0 %v5166
    %5467 = vmatpush1.bf16.msra.mxu0 %v5165
    %5468 = vmatprep.subr.bf16.mxu0 %v5170
    %5469 = vmatpush1.bf16.msra.mxu0 %v5169
    %5470 = vmatprep.subr.bf16.mxu0 %v5174
    %5471 = vmatpush1.bf16.msra.mxu0 %v5173
    %5472 = vmatprep.subr.bf16.mxu0 %v5178
    %5473 = vmatpush1.bf16.msra.mxu0 %v5177
    %5474 = vmatprep.subr.bf16.mxu0 %v5182
    %5475 = vmatpush1.bf16.msra.mxu0 %v5181
    %5476 = vmatprep.subr.bf16.mxu0 %v5186
    %5477 = vmatpush1.bf16.msra.mxu0 %v5185
    %5478 = vmatprep.subr.bf16.mxu0 %v5190
    %5479 = vmatpush1.bf16.msra.mxu0 %v5189
    %5480 = vmatprep.mubr.bf16.mxu0 %v4526
    %5481 = vmatmul.mubr.bf16.gmra.mrb[0].mxu0 %v4525
    %v5482 = vpop.f32.mrb[0].mxu0
    %v5483 = vadd.f32 %v5440, %v5482
    %v5484 = vpop.f32.mrb[0].mxu0
    %v5485 = vadd.f32 %v5442, %v5484
    %v5486 = vpop.f32.mrb[0].mxu0
    %v5487 = vadd.f32 %v5444, %v5486
    %v5488 = vpop.f32.mrb[0].mxu0
    %v5489 = vadd.f32 %v5446, %v5488
    %5490 = vdwg.mxu0
    %v5491 = vmax.f32 %v5397, 0.0
    %v5492 = vmax.f32 %v5399, 0.0
    %v5493 = vmax.f32 %v5483, 0.0
    %v5494 = vmax.f32 %v5485, 0.0
    %v5495 = vmax.f32 %v5401, 0.0
    %v5496 = vmax.f32 %v5403, 0.0
    %v5497 = vmax.f32 %v5487, 0.0
    %v5498 = vmax.f32 %v5489, 0.0
    %v5499 = vpack.c.bf16 %v5495, %v5491
    %v5500 = vpack.c.bf16 %v5496, %v5492
    %v5501 = vpack.c.bf16 %v5497, %v5493
    %v5502 = vpack.c.bf16 %v5498, %v5494
    %s5503 = scalar_lea.vmem [#allocation16], 3072
    %v5504 = vld [vmem:[%s5503] sm:$0xff]
    %v5505 = vld [vmem:[%s5503 + $0x8] sm:$0xff]
    %v5506 = vld [vmem:[%s5503 + $0x10] sm:$0xff]
    %v5507 = vld [vmem:[%s5503 + $0x18] sm:$0xff]
    %v5508 = vld [vmem:[%s5503 + $0x20] sm:$0xff]
    %v5509 = vld [vmem:[%s5503 + $0x28] sm:$0xff]
    %v5510 = vld [vmem:[%s5503 + $0x30] sm:$0xff]
    %v5511 = vld [vmem:[%s5503 + $0x38] sm:$0xff]
    %v5512 = vld [vmem:[%s5503 + $0x40] sm:$0xff]
    %v5513 = vld [vmem:[%s5503 + $0x48] sm:$0xff]
    %v5514 = vld [vmem:[%s5503 + $0x50] sm:$0xff]
    %v5515 = vld [vmem:[%s5503 + $0x58] sm:$0xff]
    %v5516 = vld [vmem:[%s5503 + $0x60] sm:$0xff]
    %v5517 = vld [vmem:[%s5503 + $0x68] sm:$0xff]
    %v5518 = vld [vmem:[%s5503 + $0x70] sm:$0xff]
    %v5519 = vld [vmem:[%s5503 + $0x78] sm:$0xff]
    %v5520 = vld [vmem:[%s5503 + $0x80] sm:$0xff]
    %v5521 = vld [vmem:[%s5503 + $0x88] sm:$0xff]
    %v5522 = vld [vmem:[%s5503 + $0x90] sm:$0xff]
    %v5523 = vld [vmem:[%s5503 + $0x98] sm:$0xff]
    %v5524 = vld [vmem:[%s5503 + $0xa0] sm:$0xff]
    %v5525 = vld [vmem:[%s5503 + $0xa8] sm:$0xff]
    %v5526 = vld [vmem:[%s5503 + $0xb0] sm:$0xff]
    %v5527 = vld [vmem:[%s5503 + $0xb8] sm:$0xff]
    %v5528 = vld [vmem:[%s5503 + $0xc0] sm:$0xff]
    %v5529 = vld [vmem:[%s5503 + $0xc8] sm:$0xff]
    %v5530 = vld [vmem:[%s5503 + $0xd0] sm:$0xff]
    %v5531 = vld [vmem:[%s5503 + $0xd8] sm:$0xff]
    %v5532 = vld [vmem:[%s5503 + $0xe0] sm:$0xff]
    %v5533 = vld [vmem:[%s5503 + $0xe8] sm:$0xff]
    %v5534 = vld [vmem:[%s5503 + $0xf0] sm:$0xff]
    %v5535 = vld [vmem:[%s5503 + $0xf8] sm:$0xff]
    %v5536 = vld [vmem:[%s5503 + $0x100] sm:$0xff]
    %v5537 = vld [vmem:[%s5503 + $0x108] sm:$0xff]
    %v5538 = vld [vmem:[%s5503 + $0x110] sm:$0xff]
    %v5539 = vld [vmem:[%s5503 + $0x118] sm:$0xff]
    %v5540 = vld [vmem:[%s5503 + $0x120] sm:$0xff]
    %v5541 = vld [vmem:[%s5503 + $0x128] sm:$0xff]
    %v5542 = vld [vmem:[%s5503 + $0x130] sm:$0xff]
    %v5543 = vld [vmem:[%s5503 + $0x138] sm:$0xff]
    %v5544 = vld [vmem:[%s5503 + $0x140] sm:$0xff]
    %v5545 = vld [vmem:[%s5503 + $0x148] sm:$0xff]
    %v5546 = vld [vmem:[%s5503 + $0x150] sm:$0xff]
    %v5547 = vld [vmem:[%s5503 + $0x158] sm:$0xff]
    %v5548 = vld [vmem:[%s5503 + $0x160] sm:$0xff]
    %v5549 = vld [vmem:[%s5503 + $0x168] sm:$0xff]
    %v5550 = vld [vmem:[%s5503 + $0x170] sm:$0xff]
    %v5551 = vld [vmem:[%s5503 + $0x178] sm:$0xff]
    %v5552 = vld [vmem:[%s5503 + $0x180] sm:$0xff]
    %v5553 = vld [vmem:[%s5503 + $0x188] sm:$0xff]
    %v5554 = vld [vmem:[%s5503 + $0x190] sm:$0xff]
    %v5555 = vld [vmem:[%s5503 + $0x198] sm:$0xff]
    %v5556 = vld [vmem:[%s5503 + $0x1a0] sm:$0xff]
    %v5557 = vld [vmem:[%s5503 + $0x1a8] sm:$0xff]
    %v5558 = vld [vmem:[%s5503 + $0x1b0] sm:$0xff]
    %v5559 = vld [vmem:[%s5503 + $0x1b8] sm:$0xff]
    %v5560 = vld [vmem:[%s5503 + $0x1c0] sm:$0xff]
    %v5561 = vld [vmem:[%s5503 + $0x1c8] sm:$0xff]
    %v5562 = vld [vmem:[%s5503 + $0x1d0] sm:$0xff]
    %v5563 = vld [vmem:[%s5503 + $0x1d8] sm:$0xff]
    %v5564 = vld [vmem:[%s5503 + $0x1e0] sm:$0xff]
    %v5565 = vld [vmem:[%s5503 + $0x1e8] sm:$0xff]
    %v5566 = vld [vmem:[%s5503 + $0x1f0] sm:$0xff]
    %v5567 = vld [vmem:[%s5503 + $0x1f8] sm:$0xff]
    %v5568 = vld [vmem:[%s5503 + $0x200] sm:$0xff]
    %v5569 = vld [vmem:[%s5503 + $0x208] sm:$0xff]
    %v5570 = vld [vmem:[%s5503 + $0x210] sm:$0xff]
    %v5571 = vld [vmem:[%s5503 + $0x218] sm:$0xff]
    %v5572 = vld [vmem:[%s5503 + $0x220] sm:$0xff]
    %v5573 = vld [vmem:[%s5503 + $0x228] sm:$0xff]
    %v5574 = vld [vmem:[%s5503 + $0x230] sm:$0xff]
    %v5575 = vld [vmem:[%s5503 + $0x238] sm:$0xff]
    %v5576 = vld [vmem:[%s5503 + $0x240] sm:$0xff]
    %v5577 = vld [vmem:[%s5503 + $0x248] sm:$0xff]
    %v5578 = vld [vmem:[%s5503 + $0x250] sm:$0xff]
    %v5579 = vld [vmem:[%s5503 + $0x258] sm:$0xff]
    %v5580 = vld [vmem:[%s5503 + $0x260] sm:$0xff]
    %v5581 = vld [vmem:[%s5503 + $0x268] sm:$0xff]
    %v5582 = vld [vmem:[%s5503 + $0x270] sm:$0xff]
    %v5583 = vld [vmem:[%s5503 + $0x278] sm:$0xff]
    %v5584 = vld [vmem:[%s5503 + $0x280] sm:$0xff]
    %v5585 = vld [vmem:[%s5503 + $0x288] sm:$0xff]
    %v5586 = vld [vmem:[%s5503 + $0x290] sm:$0xff]
    %v5587 = vld [vmem:[%s5503 + $0x298] sm:$0xff]
    %v5588 = vld [vmem:[%s5503 + $0x2a0] sm:$0xff]
    %v5589 = vld [vmem:[%s5503 + $0x2a8] sm:$0xff]
    %v5590 = vld [vmem:[%s5503 + $0x2b0] sm:$0xff]
    %v5591 = vld [vmem:[%s5503 + $0x2b8] sm:$0xff]
    %v5592 = vld [vmem:[%s5503 + $0x2c0] sm:$0xff]
    %v5593 = vld [vmem:[%s5503 + $0x2c8] sm:$0xff]
    %v5594 = vld [vmem:[%s5503 + $0x2d0] sm:$0xff]
    %v5595 = vld [vmem:[%s5503 + $0x2d8] sm:$0xff]
    %v5596 = vld [vmem:[%s5503 + $0x2e0] sm:$0xff]
    %v5597 = vld [vmem:[%s5503 + $0x2e8] sm:$0xff]
    %v5598 = vld [vmem:[%s5503 + $0x2f0] sm:$0xff]
    %v5599 = vld [vmem:[%s5503 + $0x2f8] sm:$0xff]
    %v5600 = vld [vmem:[%s5503 + $0x300] sm:$0xff]
    %v5601 = vld [vmem:[%s5503 + $0x308] sm:$0xff]
    %v5602 = vld [vmem:[%s5503 + $0x310] sm:$0xff]
    %v5603 = vld [vmem:[%s5503 + $0x318] sm:$0xff]
    %v5604 = vld [vmem:[%s5503 + $0x320] sm:$0xff]
    %v5605 = vld [vmem:[%s5503 + $0x328] sm:$0xff]
    %v5606 = vld [vmem:[%s5503 + $0x330] sm:$0xff]
    %v5607 = vld [vmem:[%s5503 + $0x338] sm:$0xff]
    %v5608 = vld [vmem:[%s5503 + $0x340] sm:$0xff]
    %v5609 = vld [vmem:[%s5503 + $0x348] sm:$0xff]
    %v5610 = vld [vmem:[%s5503 + $0x350] sm:$0xff]
    %v5611 = vld [vmem:[%s5503 + $0x358] sm:$0xff]
    %v5612 = vld [vmem:[%s5503 + $0x360] sm:$0xff]
    %v5613 = vld [vmem:[%s5503 + $0x368] sm:$0xff]
    %v5614 = vld [vmem:[%s5503 + $0x370] sm:$0xff]
    %v5615 = vld [vmem:[%s5503 + $0x378] sm:$0xff]
    %v5616 = vld [vmem:[%s5503 + $0x380] sm:$0xff]
    %v5617 = vld [vmem:[%s5503 + $0x388] sm:$0xff]
    %v5618 = vld [vmem:[%s5503 + $0x390] sm:$0xff]
    %v5619 = vld [vmem:[%s5503 + $0x398] sm:$0xff]
    %v5620 = vld [vmem:[%s5503 + $0x3a0] sm:$0xff]
    %v5621 = vld [vmem:[%s5503 + $0x3a8] sm:$0xff]
    %v5622 = vld [vmem:[%s5503 + $0x3b0] sm:$0xff]
    %v5623 = vld [vmem:[%s5503 + $0x3b8] sm:$0xff]
    %v5624 = vld [vmem:[%s5503 + $0x3c0] sm:$0xff]
    %v5625 = vld [vmem:[%s5503 + $0x3c8] sm:$0xff]
    %v5626 = vld [vmem:[%s5503 + $0x3d0] sm:$0xff]
    %v5627 = vld [vmem:[%s5503 + $0x3d8] sm:$0xff]
    %v5628 = vld [vmem:[%s5503 + $0x3e0] sm:$0xff]
    %v5629 = vld [vmem:[%s5503 + $0x3e8] sm:$0xff]
    %v5630 = vld [vmem:[%s5503 + $0x3f0] sm:$0xff]
    %v5631 = vld [vmem:[%s5503 + $0x3f8] sm:$0xff]
    %s5632 = scalar_lea.vmem [#allocation17], 3
    %v5633 = vld [vmem:[%s5632] ss:$8 sm:$0xf]
    %v5635 = vlaneseq
    %v5636 = vshrl.u32 %v5635, 7
    %v5637 = vsub.s32 0, %v5636
    %v5638 = vrot.slane %v5633, %v5637
    %v5639 = vlaneseq
    %v5640 = vshrl.u32 %v5639, 7
    %v5641 = vsub.s32 1, %v5640
    %v5642 = vrot.slane %v5633, %v5641
    %v5643 = vlaneseq
    %v5644 = vshrl.u32 %v5643, 7
    %v5645 = vsub.s32 2, %v5644
    %v5646 = vrot.slane %v5633, %v5645
    %v5647 = vlaneseq
    %v5648 = vshrl.u32 %v5647, 7
    %v5649 = vsub.s32 3, %v5648
    %v5650 = vrot.slane %v5633, %v5649
    %v5783 = vunpack.c.l.b16 %v5504
    %v5784 = vunpack.c.h.b16 %v5504
    %v5785 = vunpack.c.l.b16 %v5505
    %v5786 = vunpack.c.h.b16 %v5505
    %v5787 = vunpack.c.l.b16 %v5506
    %v5788 = vunpack.c.h.b16 %v5506
    %v5789 = vunpack.c.l.b16 %v5507
    %v5790 = vunpack.c.h.b16 %v5507
    %v5791 = vunpack.c.l.b16 %v5508
    %v5792 = vunpack.c.h.b16 %v5508
    %v5793 = vunpack.c.l.b16 %v5509
    %v5794 = vunpack.c.h.b16 %v5509
    %v5795 = vunpack.c.l.b16 %v5510
    %v5796 = vunpack.c.h.b16 %v5510
    %v5797 = vunpack.c.l.b16 %v5511
    %v5798 = vunpack.c.h.b16 %v5511
    %v5799 = vunpack.c.l.b16 %v5512
    %v5800 = vunpack.c.h.b16 %v5512
    %v5801 = vunpack.c.l.b16 %v5513
    %v5802 = vunpack.c.h.b16 %v5513
    %v5803 = vunpack.c.l.b16 %v5514
    %v5804 = vunpack.c.h.b16 %v5514
    %v5805 = vunpack.c.l.b16 %v5515
    %v5806 = vunpack.c.h.b16 %v5515
    %v5807 = vunpack.c.l.b16 %v5516
    %v5808 = vunpack.c.h.b16 %v5516
    %v5809 = vunpack.c.l.b16 %v5517
    %v5810 = vunpack.c.h.b16 %v5517
    %v5811 = vunpack.c.l.b16 %v5518
    %v5812 = vunpack.c.h.b16 %v5518
    %v5813 = vunpack.c.l.b16 %v5519
    %v5814 = vunpack.c.h.b16 %v5519
    %v5815 = vunpack.c.l.b16 %v5520
    %v5816 = vunpack.c.h.b16 %v5520
    %v5817 = vunpack.c.l.b16 %v5521
    %v5818 = vunpack.c.h.b16 %v5521
    %v5819 = vunpack.c.l.b16 %v5522
    %v5820 = vunpack.c.h.b16 %v5522
    %v5821 = vunpack.c.l.b16 %v5523
    %v5822 = vunpack.c.h.b16 %v5523
    %v5823 = vunpack.c.l.b16 %v5524
    %v5824 = vunpack.c.h.b16 %v5524
    %v5825 = vunpack.c.l.b16 %v5525
    %v5826 = vunpack.c.h.b16 %v5525
    %v5827 = vunpack.c.l.b16 %v5526
    %v5828 = vunpack.c.h.b16 %v5526
    %v5829 = vunpack.c.l.b16 %v5527
    %v5830 = vunpack.c.h.b16 %v5527
    %v5831 = vunpack.c.l.b16 %v5528
    %v5832 = vunpack.c.h.b16 %v5528
    %v5833 = vunpack.c.l.b16 %v5529
    %v5834 = vunpack.c.h.b16 %v5529
    %v5835 = vunpack.c.l.b16 %v5530
    %v5836 = vunpack.c.h.b16 %v5530
    %v5837 = vunpack.c.l.b16 %v5531
    %v5838 = vunpack.c.h.b16 %v5531
    %v5839 = vunpack.c.l.b16 %v5532
    %v5840 = vunpack.c.h.b16 %v5532
    %v5841 = vunpack.c.l.b16 %v5533
    %v5842 = vunpack.c.h.b16 %v5533
    %v5843 = vunpack.c.l.b16 %v5534
    %v5844 = vunpack.c.h.b16 %v5534
    %v5845 = vunpack.c.l.b16 %v5535
    %v5846 = vunpack.c.h.b16 %v5535
    %v5847 = vunpack.c.l.b16 %v5536
    %v5848 = vunpack.c.h.b16 %v5536
    %v5849 = vunpack.c.l.b16 %v5537
    %v5850 = vunpack.c.h.b16 %v5537
    %v5851 = vunpack.c.l.b16 %v5538
    %v5852 = vunpack.c.h.b16 %v5538
    %v5853 = vunpack.c.l.b16 %v5539
    %v5854 = vunpack.c.h.b16 %v5539
    %v5855 = vunpack.c.l.b16 %v5540
    %v5856 = vunpack.c.h.b16 %v5540
    %v5857 = vunpack.c.l.b16 %v5541
    %v5858 = vunpack.c.h.b16 %v5541
    %v5859 = vunpack.c.l.b16 %v5542
    %v5860 = vunpack.c.h.b16 %v5542
    %v5861 = vunpack.c.l.b16 %v5543
    %v5862 = vunpack.c.h.b16 %v5543
    %v5863 = vunpack.c.l.b16 %v5544
    %v5864 = vunpack.c.h.b16 %v5544
    %v5865 = vunpack.c.l.b16 %v5545
    %v5866 = vunpack.c.h.b16 %v5545
    %v5867 = vunpack.c.l.b16 %v5546
    %v5868 = vunpack.c.h.b16 %v5546
    %v5869 = vunpack.c.l.b16 %v5547
    %v5870 = vunpack.c.h.b16 %v5547
    %v5871 = vunpack.c.l.b16 %v5548
    %v5872 = vunpack.c.h.b16 %v5548
    %v5873 = vunpack.c.l.b16 %v5549
    %v5874 = vunpack.c.h.b16 %v5549
    %v5875 = vunpack.c.l.b16 %v5550
    %v5876 = vunpack.c.h.b16 %v5550
    %v5877 = vunpack.c.l.b16 %v5551
    %v5878 = vunpack.c.h.b16 %v5551
    %v5879 = vunpack.c.l.b16 %v5552
    %v5880 = vunpack.c.h.b16 %v5552
    %v5881 = vunpack.c.l.b16 %v5553
    %v5882 = vunpack.c.h.b16 %v5553
    %v5883 = vunpack.c.l.b16 %v5554
    %v5884 = vunpack.c.h.b16 %v5554
    %v5885 = vunpack.c.l.b16 %v5555
    %v5886 = vunpack.c.h.b16 %v5555
    %v5887 = vunpack.c.l.b16 %v5556
    %v5888 = vunpack.c.h.b16 %v5556
    %v5889 = vunpack.c.l.b16 %v5557
    %v5890 = vunpack.c.h.b16 %v5557
    %v5891 = vunpack.c.l.b16 %v5558
    %v5892 = vunpack.c.h.b16 %v5558
    %v5893 = vunpack.c.l.b16 %v5559
    %v5894 = vunpack.c.h.b16 %v5559
    %v5895 = vunpack.c.l.b16 %v5560
    %v5896 = vunpack.c.h.b16 %v5560
    %v5897 = vunpack.c.l.b16 %v5561
    %v5898 = vunpack.c.h.b16 %v5561
    %v5899 = vunpack.c.l.b16 %v5562
    %v5900 = vunpack.c.h.b16 %v5562
    %v5901 = vunpack.c.l.b16 %v5563
    %v5902 = vunpack.c.h.b16 %v5563
    %v5903 = vunpack.c.l.b16 %v5564
    %v5904 = vunpack.c.h.b16 %v5564
    %v5905 = vunpack.c.l.b16 %v5565
    %v5906 = vunpack.c.h.b16 %v5565
    %v5907 = vunpack.c.l.b16 %v5566
    %v5908 = vunpack.c.h.b16 %v5566
    %v5909 = vunpack.c.l.b16 %v5567
    %v5910 = vunpack.c.h.b16 %v5567
    %v5911 = vunpack.c.l.b16 %v5568
    %v5912 = vunpack.c.h.b16 %v5568
    %v5913 = vunpack.c.l.b16 %v5569
    %v5914 = vunpack.c.h.b16 %v5569
    %v5915 = vunpack.c.l.b16 %v5570
    %v5916 = vunpack.c.h.b16 %v5570
    %v5917 = vunpack.c.l.b16 %v5571
    %v5918 = vunpack.c.h.b16 %v5571
    %v5919 = vunpack.c.l.b16 %v5572
    %v5920 = vunpack.c.h.b16 %v5572
    %v5921 = vunpack.c.l.b16 %v5573
    %v5922 = vunpack.c.h.b16 %v5573
    %v5923 = vunpack.c.l.b16 %v5574
    %v5924 = vunpack.c.h.b16 %v5574
    %v5925 = vunpack.c.l.b16 %v5575
    %v5926 = vunpack.c.h.b16 %v5575
    %v5927 = vunpack.c.l.b16 %v5576
    %v5928 = vunpack.c.h.b16 %v5576
    %v5929 = vunpack.c.l.b16 %v5577
    %v5930 = vunpack.c.h.b16 %v5577
    %v5931 = vunpack.c.l.b16 %v5578
    %v5932 = vunpack.c.h.b16 %v5578
    %v5933 = vunpack.c.l.b16 %v5579
    %v5934 = vunpack.c.h.b16 %v5579
    %v5935 = vunpack.c.l.b16 %v5580
    %v5936 = vunpack.c.h.b16 %v5580
    %v5937 = vunpack.c.l.b16 %v5581
    %v5938 = vunpack.c.h.b16 %v5581
    %v5939 = vunpack.c.l.b16 %v5582
    %v5940 = vunpack.c.h.b16 %v5582
    %v5941 = vunpack.c.l.b16 %v5583
    %v5942 = vunpack.c.h.b16 %v5583
    %v5943 = vunpack.c.l.b16 %v5584
    %v5944 = vunpack.c.h.b16 %v5584
    %v5945 = vunpack.c.l.b16 %v5585
    %v5946 = vunpack.c.h.b16 %v5585
    %v5947 = vunpack.c.l.b16 %v5586
    %v5948 = vunpack.c.h.b16 %v5586
    %v5949 = vunpack.c.l.b16 %v5587
    %v5950 = vunpack.c.h.b16 %v5587
    %v5951 = vunpack.c.l.b16 %v5588
    %v5952 = vunpack.c.h.b16 %v5588
    %v5953 = vunpack.c.l.b16 %v5589
    %v5954 = vunpack.c.h.b16 %v5589
    %v5955 = vunpack.c.l.b16 %v5590
    %v5956 = vunpack.c.h.b16 %v5590
    %v5957 = vunpack.c.l.b16 %v5591
    %v5958 = vunpack.c.h.b16 %v5591
    %v5959 = vunpack.c.l.b16 %v5592
    %v5960 = vunpack.c.h.b16 %v5592
    %v5961 = vunpack.c.l.b16 %v5593
    %v5962 = vunpack.c.h.b16 %v5593
    %v5963 = vunpack.c.l.b16 %v5594
    %v5964 = vunpack.c.h.b16 %v5594
    %v5965 = vunpack.c.l.b16 %v5595
    %v5966 = vunpack.c.h.b16 %v5595
    %v5967 = vunpack.c.l.b16 %v5596
    %v5968 = vunpack.c.h.b16 %v5596
    %v5969 = vunpack.c.l.b16 %v5597
    %v5970 = vunpack.c.h.b16 %v5597
    %v5971 = vunpack.c.l.b16 %v5598
    %v5972 = vunpack.c.h.b16 %v5598
    %v5973 = vunpack.c.l.b16 %v5599
    %v5974 = vunpack.c.h.b16 %v5599
    %v5975 = vunpack.c.l.b16 %v5600
    %v5976 = vunpack.c.h.b16 %v5600
    %v5977 = vunpack.c.l.b16 %v5601
    %v5978 = vunpack.c.h.b16 %v5601
    %v5979 = vunpack.c.l.b16 %v5602
    %v5980 = vunpack.c.h.b16 %v5602
    %v5981 = vunpack.c.l.b16 %v5603
    %v5982 = vunpack.c.h.b16 %v5603
    %v5983 = vunpack.c.l.b16 %v5604
    %v5984 = vunpack.c.h.b16 %v5604
    %v5985 = vunpack.c.l.b16 %v5605
    %v5986 = vunpack.c.h.b16 %v5605
    %v5987 = vunpack.c.l.b16 %v5606
    %v5988 = vunpack.c.h.b16 %v5606
    %v5989 = vunpack.c.l.b16 %v5607
    %v5990 = vunpack.c.h.b16 %v5607
    %v5991 = vunpack.c.l.b16 %v5608
    %v5992 = vunpack.c.h.b16 %v5608
    %v5993 = vunpack.c.l.b16 %v5609
    %v5994 = vunpack.c.h.b16 %v5609
    %v5995 = vunpack.c.l.b16 %v5610
    %v5996 = vunpack.c.h.b16 %v5610
    %v5997 = vunpack.c.l.b16 %v5611
    %v5998 = vunpack.c.h.b16 %v5611
    %v5999 = vunpack.c.l.b16 %v5612
    %v6000 = vunpack.c.h.b16 %v5612
    %v6001 = vunpack.c.l.b16 %v5613
    %v6002 = vunpack.c.h.b16 %v5613
    %v6003 = vunpack.c.l.b16 %v5614
    %v6004 = vunpack.c.h.b16 %v5614
    %v6005 = vunpack.c.l.b16 %v5615
    %v6006 = vunpack.c.h.b16 %v5615
    %v6007 = vunpack.c.l.b16 %v5616
    %v6008 = vunpack.c.h.b16 %v5616
    %v6009 = vunpack.c.l.b16 %v5617
    %v6010 = vunpack.c.h.b16 %v5617
    %v6011 = vunpack.c.l.b16 %v5618
    %v6012 = vunpack.c.h.b16 %v5618
    %v6013 = vunpack.c.l.b16 %v5619
    %v6014 = vunpack.c.h.b16 %v5619
    %v6015 = vunpack.c.l.b16 %v5620
    %v6016 = vunpack.c.h.b16 %v5620
    %v6017 = vunpack.c.l.b16 %v5621
    %v6018 = vunpack.c.h.b16 %v5621
    %v6019 = vunpack.c.l.b16 %v5622
    %v6020 = vunpack.c.h.b16 %v5622
    %v6021 = vunpack.c.l.b16 %v5623
    %v6022 = vunpack.c.h.b16 %v5623
    %v6023 = vunpack.c.l.b16 %v5624
    %v6024 = vunpack.c.h.b16 %v5624
    %v6025 = vunpack.c.l.b16 %v5625
    %v6026 = vunpack.c.h.b16 %v5625
    %v6027 = vunpack.c.l.b16 %v5626
    %v6028 = vunpack.c.h.b16 %v5626
    %v6029 = vunpack.c.l.b16 %v5627
    %v6030 = vunpack.c.h.b16 %v5627
    %v6031 = vunpack.c.l.b16 %v5628
    %v6032 = vunpack.c.h.b16 %v5628
    %v6033 = vunpack.c.l.b16 %v5629
    %v6034 = vunpack.c.h.b16 %v5629
    %v6035 = vunpack.c.l.b16 %v5630
    %v6036 = vunpack.c.h.b16 %v5630
    %v6037 = vunpack.c.l.b16 %v5631
    %v6038 = vunpack.c.h.b16 %v5631
    %v6039 = vpack.c.b16 %v5787, %v5783
    %v6040 = vpack.c.b16 %v5788, %v5784
    %v6041 = vpack.c.b16 %v5789, %v5785
    %v6042 = vpack.c.b16 %v5790, %v5786
    %v6043 = vpack.c.b16 %v5795, %v5791
    %v6044 = vpack.c.b16 %v5796, %v5792
    %v6045 = vpack.c.b16 %v5797, %v5793
    %v6046 = vpack.c.b16 %v5798, %v5794
    %v6047 = vpack.c.b16 %v5803, %v5799
    %v6048 = vpack.c.b16 %v5804, %v5800
    %v6049 = vpack.c.b16 %v5805, %v5801
    %v6050 = vpack.c.b16 %v5806, %v5802
    %v6051 = vpack.c.b16 %v5811, %v5807
    %v6052 = vpack.c.b16 %v5812, %v5808
    %v6053 = vpack.c.b16 %v5813, %v5809
    %v6054 = vpack.c.b16 %v5814, %v5810
    %v6055 = vpack.c.b16 %v5819, %v5815
    %v6056 = vpack.c.b16 %v5820, %v5816
    %v6057 = vpack.c.b16 %v5821, %v5817
    %v6058 = vpack.c.b16 %v5822, %v5818
    %v6059 = vpack.c.b16 %v5827, %v5823
    %v6060 = vpack.c.b16 %v5828, %v5824
    %v6061 = vpack.c.b16 %v5829, %v5825
    %v6062 = vpack.c.b16 %v5830, %v5826
    %v6063 = vpack.c.b16 %v5835, %v5831
    %v6064 = vpack.c.b16 %v5836, %v5832
    %v6065 = vpack.c.b16 %v5837, %v5833
    %v6066 = vpack.c.b16 %v5838, %v5834
    %v6067 = vpack.c.b16 %v5843, %v5839
    %v6068 = vpack.c.b16 %v5844, %v5840
    %v6069 = vpack.c.b16 %v5845, %v5841
    %v6070 = vpack.c.b16 %v5846, %v5842
    %v6071 = vpack.c.b16 %v5851, %v5847
    %v6072 = vpack.c.b16 %v5852, %v5848
    %v6073 = vpack.c.b16 %v5853, %v5849
    %v6074 = vpack.c.b16 %v5854, %v5850
    %v6075 = vpack.c.b16 %v5859, %v5855
    %v6076 = vpack.c.b16 %v5860, %v5856
    %v6077 = vpack.c.b16 %v5861, %v5857
    %v6078 = vpack.c.b16 %v5862, %v5858
    %v6079 = vpack.c.b16 %v5867, %v5863
    %v6080 = vpack.c.b16 %v5868, %v5864
    %v6081 = vpack.c.b16 %v5869, %v5865
    %v6082 = vpack.c.b16 %v5870, %v5866
    %v6083 = vpack.c.b16 %v5875, %v5871
    %v6084 = vpack.c.b16 %v5876, %v5872
    %v6085 = vpack.c.b16 %v5877, %v5873
    %v6086 = vpack.c.b16 %v5878, %v5874
    %v6087 = vpack.c.b16 %v5883, %v5879
    %v6088 = vpack.c.b16 %v5884, %v5880
    %v6089 = vpack.c.b16 %v5885, %v5881
    %v6090 = vpack.c.b16 %v5886, %v5882
    %v6091 = vpack.c.b16 %v5891, %v5887
    %v6092 = vpack.c.b16 %v5892, %v5888
    %v6093 = vpack.c.b16 %v5893, %v5889
    %v6094 = vpack.c.b16 %v5894, %v5890
    %v6095 = vpack.c.b16 %v5899, %v5895
    %v6096 = vpack.c.b16 %v5900, %v5896
    %v6097 = vpack.c.b16 %v5901, %v5897
    %v6098 = vpack.c.b16 %v5902, %v5898
    %v6099 = vpack.c.b16 %v5907, %v5903
    %v6100 = vpack.c.b16 %v5908, %v5904
    %v6101 = vpack.c.b16 %v5909, %v5905
    %v6102 = vpack.c.b16 %v5910, %v5906
    %v6103 = vpack.c.b16 %v5915, %v5911
    %v6104 = vpack.c.b16 %v5916, %v5912
    %v6105 = vpack.c.b16 %v5917, %v5913
    %v6106 = vpack.c.b16 %v5918, %v5914
    %v6107 = vpack.c.b16 %v5923, %v5919
    %v6108 = vpack.c.b16 %v5924, %v5920
    %v6109 = vpack.c.b16 %v5925, %v5921
    %v6110 = vpack.c.b16 %v5926, %v5922
    %v6111 = vpack.c.b16 %v5931, %v5927
    %v6112 = vpack.c.b16 %v5932, %v5928
    %v6113 = vpack.c.b16 %v5933, %v5929
    %v6114 = vpack.c.b16 %v5934, %v5930
    %v6115 = vpack.c.b16 %v5939, %v5935
    %v6116 = vpack.c.b16 %v5940, %v5936
    %v6117 = vpack.c.b16 %v5941, %v5937
    %v6118 = vpack.c.b16 %v5942, %v5938
    %v6119 = vpack.c.b16 %v5947, %v5943
    %v6120 = vpack.c.b16 %v5948, %v5944
    %v6121 = vpack.c.b16 %v5949, %v5945
    %v6122 = vpack.c.b16 %v5950, %v5946
    %v6123 = vpack.c.b16 %v5955, %v5951
    %v6124 = vpack.c.b16 %v5956, %v5952
    %v6125 = vpack.c.b16 %v5957, %v5953
    %v6126 = vpack.c.b16 %v5958, %v5954
    %v6127 = vpack.c.b16 %v5963, %v5959
    %v6128 = vpack.c.b16 %v5964, %v5960
    %v6129 = vpack.c.b16 %v5965, %v5961
    %v6130 = vpack.c.b16 %v5966, %v5962
    %v6131 = vpack.c.b16 %v5971, %v5967
    %v6132 = vpack.c.b16 %v5972, %v5968
    %v6133 = vpack.c.b16 %v5973, %v5969
    %v6134 = vpack.c.b16 %v5974, %v5970
    %v6135 = vpack.c.b16 %v5979, %v5975
    %v6136 = vpack.c.b16 %v5980, %v5976
    %v6137 = vpack.c.b16 %v5981, %v5977
    %v6138 = vpack.c.b16 %v5982, %v5978
    %v6139 = vpack.c.b16 %v5987, %v5983
    %v6140 = vpack.c.b16 %v5988, %v5984
    %v6141 = vpack.c.b16 %v5989, %v5985
    %v6142 = vpack.c.b16 %v5990, %v5986
    %v6143 = vpack.c.b16 %v5995, %v5991
    %v6144 = vpack.c.b16 %v5996, %v5992
    %v6145 = vpack.c.b16 %v5997, %v5993
    %v6146 = vpack.c.b16 %v5998, %v5994
    %v6147 = vpack.c.b16 %v6003, %v5999
    %v6148 = vpack.c.b16 %v6004, %v6000
    %v6149 = vpack.c.b16 %v6005, %v6001
    %v6150 = vpack.c.b16 %v6006, %v6002
    %v6151 = vpack.c.b16 %v6011, %v6007
    %v6152 = vpack.c.b16 %v6012, %v6008
    %v6153 = vpack.c.b16 %v6013, %v6009
    %v6154 = vpack.c.b16 %v6014, %v6010
    %v6155 = vpack.c.b16 %v6019, %v6015
    %v6156 = vpack.c.b16 %v6020, %v6016
    %v6157 = vpack.c.b16 %v6021, %v6017
    %v6158 = vpack.c.b16 %v6022, %v6018
    %v6159 = vpack.c.b16 %v6027, %v6023
    %v6160 = vpack.c.b16 %v6028, %v6024
    %v6161 = vpack.c.b16 %v6029, %v6025
    %v6162 = vpack.c.b16 %v6030, %v6026
    %v6163 = vpack.c.b16 %v6035, %v6031
    %v6164 = vpack.c.b16 %v6036, %v6032
    %v6165 = vpack.c.b16 %v6037, %v6033
    %v6166 = vpack.c.b16 %v6038, %v6034
    %6295 = vmatprep.subr.bf16.mxu0 %v6040
    %6296 = vmatpush1.bf16.msra.mxu0 %v6039
    %6297 = vmatprep.subr.bf16.mxu0 %v6044
    %6298 = vmatpush1.bf16.msra.mxu0 %v6043
    %6299 = vmatprep.subr.bf16.mxu0 %v6048
    %6300 = vmatpush1.bf16.msra.mxu0 %v6047
    %6301 = vmatprep.subr.bf16.mxu0 %v6052
    %6302 = vmatpush1.bf16.msra.mxu0 %v6051
    %6303 = vmatprep.subr.bf16.mxu0 %v6056
    %6304 = vmatpush1.bf16.msra.mxu0 %v6055
    %6305 = vmatprep.subr.bf16.mxu0 %v6060
    %6306 = vmatpush1.bf16.msra.mxu0 %v6059
    %6307 = vmatprep.subr.bf16.mxu0 %v6064
    %6308 = vmatpush1.bf16.msra.mxu0 %v6063
    %6309 = vmatprep.subr.bf16.mxu0 %v6068
    %6310 = vmatpush1.bf16.msra.mxu0 %v6067
    %6311 = vmatprep.subr.bf16.mxu0 %v6072
    %6312 = vmatpush1.bf16.msra.mxu0 %v6071
    %6313 = vmatprep.subr.bf16.mxu0 %v6076
    %6314 = vmatpush1.bf16.msra.mxu0 %v6075
    %6315 = vmatprep.subr.bf16.mxu0 %v6080
    %6316 = vmatpush1.bf16.msra.mxu0 %v6079
    %6317 = vmatprep.subr.bf16.mxu0 %v6084
    %6318 = vmatpush1.bf16.msra.mxu0 %v6083
    %6319 = vmatprep.subr.bf16.mxu0 %v6088
    %6320 = vmatpush1.bf16.msra.mxu0 %v6087
    %6321 = vmatprep.subr.bf16.mxu0 %v6092
    %6322 = vmatpush1.bf16.msra.mxu0 %v6091
    %6323 = vmatprep.subr.bf16.mxu0 %v6096
    %6324 = vmatpush1.bf16.msra.mxu0 %v6095
    %6325 = vmatprep.subr.bf16.mxu0 %v6100
    %6326 = vmatpush1.bf16.msra.mxu0 %v6099
    %6327 = vmatprep.mubr.bf16.mxu0 %v5500
    %6328 = vmatmul.mubr.bf16.gmra.mrb[0].mxu0 %v5499
    %v6329 = vpop.f32.mrb[0].mxu0
    %v6330 = vadd.f32 %v5638, %v6329
    %v6331 = vpop.f32.mrb[0].mxu0
    %v6332 = vadd.f32 %v5642, %v6331
    %v6333 = vpop.f32.mrb[0].mxu0
    %v6334 = vadd.f32 %v5638, %v6333
    %v6335 = vpop.f32.mrb[0].mxu0
    %v6336 = vadd.f32 %v5642, %v6335
    %6337 = vdwg.mxu0
    %6338 = vmatprep.subr.bf16.mxu0 %v6104
    %6339 = vmatpush1.bf16.msra.mxu0 %v6103
    %6340 = vmatprep.subr.bf16.mxu0 %v6108
    %6341 = vmatpush1.bf16.msra.mxu0 %v6107
    %6342 = vmatprep.subr.bf16.mxu0 %v6112
    %6343 = vmatpush1.bf16.msra.mxu0 %v6111
    %6344 = vmatprep.subr.bf16.mxu0 %v6116
    %6345 = vmatpush1.bf16.msra.mxu0 %v6115
    %6346 = vmatprep.subr.bf16.mxu0 %v6120
    %6347 = vmatpush1.bf16.msra.mxu0 %v6119
    %6348 = vmatprep.subr.bf16.mxu0 %v6124
    %6349 = vmatpush1.bf16.msra.mxu0 %v6123
    %6350 = vmatprep.subr.bf16.mxu0 %v6128
    %6351 = vmatpush1.bf16.msra.mxu0 %v6127
    %6352 = vmatprep.subr.bf16.mxu0 %v6132
    %6353 = vmatpush1.bf16.msra.mxu0 %v6131
    %6354 = vmatprep.subr.bf16.mxu0 %v6136
    %6355 = vmatpush1.bf16.msra.mxu0 %v6135
    %6356 = vmatprep.subr.bf16.mxu0 %v6140
    %6357 = vmatpush1.bf16.msra.mxu0 %v6139
    %6358 = vmatprep.subr.bf16.mxu0 %v6144
    %6359 = vmatpush1.bf16.msra.mxu0 %v6143
    %6360 = vmatprep.subr.bf16.mxu0 %v6148
    %6361 = vmatpush1.bf16.msra.mxu0 %v6147
    %6362 = vmatprep.subr.bf16.mxu0 %v6152
    %6363 = vmatpush1.bf16.msra.mxu0 %v6151
    %6364 = vmatprep.subr.bf16.mxu0 %v6156
    %6365 = vmatpush1.bf16.msra.mxu0 %v6155
    %6366 = vmatprep.subr.bf16.mxu0 %v6160
    %6367 = vmatpush1.bf16.msra.mxu0 %v6159
    %6368 = vmatprep.subr.bf16.mxu0 %v6164
    %6369 = vmatpush1.bf16.msra.mxu0 %v6163
    %6370 = vmatprep.mubr.bf16.mxu0 %v5502
    %6371 = vmatmul.mubr.bf16.gmra.mrb[0].mxu0 %v5501
    %v6372 = vpop.f32.mrb[0].mxu0
    %v6373 = vadd.f32 %v6330, %v6372
    %v6374 = vpop.f32.mrb[0].mxu0
    %v6375 = vadd.f32 %v6332, %v6374
    %v6376 = vpop.f32.mrb[0].mxu0
    %v6377 = vadd.f32 %v6334, %v6376
    %v6378 = vpop.f32.mrb[0].mxu0
    %v6379 = vadd.f32 %v6336, %v6378
    %6380 = vdwg.mxu0
    %6381 = vmatprep.subr.bf16.mxu0 %v6042
    %6382 = vmatpush1.bf16.msra.mxu0 %v6041
    %6383 = vmatprep.subr.bf16.mxu0 %v6046
    %6384 = vmatpush1.bf16.msra.mxu0 %v6045
    %6385 = vmatprep.subr.bf16.mxu0 %v6050
    %6386 = vmatpush1.bf16.msra.mxu0 %v6049
    %6387 = vmatprep.subr.bf16.mxu0 %v6054
    %6388 = vmatpush1.bf16.msra.mxu0 %v6053
    %6389 = vmatprep.subr.bf16.mxu0 %v6058
    %6390 = vmatpush1.bf16.msra.mxu0 %v6057
    %6391 = vmatprep.subr.bf16.mxu0 %v6062
    %6392 = vmatpush1.bf16.msra.mxu0 %v6061
    %6393 = vmatprep.subr.bf16.mxu0 %v6066
    %6394 = vmatpush1.bf16.msra.mxu0 %v6065
    %6395 = vmatprep.subr.bf16.mxu0 %v6070
    %6396 = vmatpush1.bf16.msra.mxu0 %v6069
    %6397 = vmatprep.subr.bf16.mxu0 %v6074
    %6398 = vmatpush1.bf16.msra.mxu0 %v6073
    %6399 = vmatprep.subr.bf16.mxu0 %v6078
    %6400 = vmatpush1.bf16.msra.mxu0 %v6077
    %6401 = vmatprep.subr.bf16.mxu0 %v6082
    %6402 = vmatpush1.bf16.msra.mxu0 %v6081
    %6403 = vmatprep.subr.bf16.mxu0 %v6086
    %6404 = vmatpush1.bf16.msra.mxu0 %v6085
    %6405 = vmatprep.subr.bf16.mxu0 %v6090
    %6406 = vmatpush1.bf16.msra.mxu0 %v6089
    %6407 = vmatprep.subr.bf16.mxu0 %v6094
    %6408 = vmatpush1.bf16.msra.mxu0 %v6093
    %6409 = vmatprep.subr.bf16.mxu0 %v6098
    %6410 = vmatpush1.bf16.msra.mxu0 %v6097
    %6411 = vmatprep.subr.bf16.mxu0 %v6102
    %6412 = vmatpush1.bf16.msra.mxu0 %v6101
    %6413 = vmatprep.mubr.bf16.mxu0 %v5500
    %6414 = vmatmul.mubr.bf16.gmra.mrb[0].mxu0 %v5499
    %v6415 = vpop.f32.mrb[0].mxu0
    %v6416 = vadd.f32 %v5646, %v6415
    %v6417 = vpop.f32.mrb[0].mxu0
    %v6418 = vadd.f32 %v5650, %v6417
    %v6419 = vpop.f32.mrb[0].mxu0
    %v6420 = vadd.f32 %v5646, %v6419
    %v6421 = vpop.f32.mrb[0].mxu0
    %v6422 = vadd.f32 %v5650, %v6421
    %6423 = vdwg.mxu0
    %6424 = vmatprep.subr.bf16.mxu0 %v6106
    %6425 = vmatpush1.bf16.msra.mxu0 %v6105
    %6426 = vmatprep.subr.bf16.mxu0 %v6110
    %6427 = vmatpush1.bf16.msra.mxu0 %v6109
    %6428 = vmatprep.subr.bf16.mxu0 %v6114
    %6429 = vmatpush1.bf16.msra.mxu0 %v6113
    %6430 = vmatprep.subr.bf16.mxu0 %v6118
    %6431 = vmatpush1.bf16.msra.mxu0 %v6117
    %6432 = vmatprep.subr.bf16.mxu0 %v6122
    %6433 = vmatpush1.bf16.msra.mxu0 %v6121
    %6434 = vmatprep.subr.bf16.mxu0 %v6126
    %6435 = vmatpush1.bf16.msra.mxu0 %v6125
    %6436 = vmatprep.subr.bf16.mxu0 %v6130
    %6437 = vmatpush1.bf16.msra.mxu0 %v6129
    %6438 = vmatprep.subr.bf16.mxu0 %v6134
    %6439 = vmatpush1.bf16.msra.mxu0 %v6133
    %6440 = vmatprep.subr.bf16.mxu0 %v6138
    %6441 = vmatpush1.bf16.msra.mxu0 %v6137
    %6442 = vmatprep.subr.bf16.mxu0 %v6142
    %6443 = vmatpush1.bf16.msra.mxu0 %v6141
    %6444 = vmatprep.subr.bf16.mxu0 %v6146
    %6445 = vmatpush1.bf16.msra.mxu0 %v6145
    %6446 = vmatprep.subr.bf16.mxu0 %v6150
    %6447 = vmatpush1.bf16.msra.mxu0 %v6149
    %6448 = vmatprep.subr.bf16.mxu0 %v6154
    %6449 = vmatpush1.bf16.msra.mxu0 %v6153
    %6450 = vmatprep.subr.bf16.mxu0 %v6158
    %6451 = vmatpush1.bf16.msra.mxu0 %v6157
    %6452 = vmatprep.subr.bf16.mxu0 %v6162
    %6453 = vmatpush1.bf16.msra.mxu0 %v6161
    %6454 = vmatprep.subr.bf16.mxu0 %v6166
    %6455 = vmatpush1.bf16.msra.mxu0 %v6165
    %6456 = vmatprep.mubr.bf16.mxu0 %v5502
    %6457 = vmatmul.mubr.bf16.gmra.mrb[0].mxu0 %v5501
    %v6458 = vpop.f32.mrb[0].mxu0
    %v6459 = vadd.f32 %v6416, %v6458
    %v6460 = vpop.f32.mrb[0].mxu0
    %v6461 = vadd.f32 %v6418, %v6460
    %v6462 = vpop.f32.mrb[0].mxu0
    %v6463 = vadd.f32 %v6420, %v6462
    %v6464 = vpop.f32.mrb[0].mxu0
    %v6465 = vadd.f32 %v6422, %v6464
    %6466 = vdwg.mxu0
    %v6467 = vmax.f32 %v6373, 0.0
    %v6468 = vmax.f32 %v6375, 0.0
    %v6469 = vmax.f32 %v6459, 0.0
    %v6470 = vmax.f32 %v6461, 0.0
    %v6471 = vmax.f32 %v6377, 0.0
    %v6472 = vmax.f32 %v6379, 0.0
    %v6473 = vmax.f32 %v6463, 0.0
    %v6474 = vmax.f32 %v6465, 0.0
    %v6475 = vpack.c.bf16 %v6471, %v6467
    %v6476 = vpack.c.bf16 %v6472, %v6468
    %v6477 = vpack.c.bf16 %v6473, %v6469
    %v6478 = vpack.c.bf16 %v6474, %v6470
    %s6479 = scalar_lea.vmem [#allocation16], 4096
    %v6480 = vld [vmem:[%s6479] sm:$0xff]
    %v6481 = vld [vmem:[%s6479 + $0x8] sm:$0xff]
    %v6482 = vld [vmem:[%s6479 + $0x10] sm:$0xff]
    %v6483 = vld [vmem:[%s6479 + $0x18] sm:$0xff]
    %v6484 = vld [vmem:[%s6479 + $0x20] sm:$0xff]
    %v6485 = vld [vmem:[%s6479 + $0x28] sm:$0xff]
    %v6486 = vld [vmem:[%s6479 + $0x30] sm:$0xff]
    %v6487 = vld [vmem:[%s6479 + $0x38] sm:$0xff]
    %v6488 = vld [vmem:[%s6479 + $0x40] sm:$0xff]
    %v6489 = vld [vmem:[%s6479 + $0x48] sm:$0xff]
    %v6490 = vld [vmem:[%s6479 + $0x50] sm:$0xff]
    %v6491 = vld [vmem:[%s6479 + $0x58] sm:$0xff]
    %v6492 = vld [vmem:[%s6479 + $0x60] sm:$0xff]
    %v6493 = vld [vmem:[%s6479 + $0x68] sm:$0xff]
    %v6494 = vld [vmem:[%s6479 + $0x70] sm:$0xff]
    %v6495 = vld [vmem:[%s6479 + $0x78] sm:$0xff]
    %v6496 = vld [vmem:[%s6479 + $0x80] sm:$0xff]
    %v6497 = vld [vmem:[%s6479 + $0x88] sm:$0xff]
    %v6498 = vld [vmem:[%s6479 + $0x90] sm:$0xff]
    %v6499 = vld [vmem:[%s6479 + $0x98] sm:$0xff]
    %v6500 = vld [vmem:[%s6479 + $0xa0] sm:$0xff]
    %v6501 = vld [vmem:[%s6479 + $0xa8] sm:$0xff]
    %v6502 = vld [vmem:[%s6479 + $0xb0] sm:$0xff]
    %v6503 = vld [vmem:[%s6479 + $0xb8] sm:$0xff]
    %v6504 = vld [vmem:[%s6479 + $0xc0] sm:$0xff]
    %v6505 = vld [vmem:[%s6479 + $0xc8] sm:$0xff]
    %v6506 = vld [vmem:[%s6479 + $0xd0] sm:$0xff]
    %v6507 = vld [vmem:[%s6479 + $0xd8] sm:$0xff]
    %v6508 = vld [vmem:[%s6479 + $0xe0] sm:$0xff]
    %v6509 = vld [vmem:[%s6479 + $0xe8] sm:$0xff]
    %v6510 = vld [vmem:[%s6479 + $0xf0] sm:$0xff]
    %v6511 = vld [vmem:[%s6479 + $0xf8] sm:$0xff]
    %v6512 = vld [vmem:[%s6479 + $0x100] sm:$0xff]
    %v6513 = vld [vmem:[%s6479 + $0x108] sm:$0xff]
    %v6514 = vld [vmem:[%s6479 + $0x110] sm:$0xff]
    %v6515 = vld [vmem:[%s6479 + $0x118] sm:$0xff]
    %v6516 = vld [vmem:[%s6479 + $0x120] sm:$0xff]
    %v6517 = vld [vmem:[%s6479 + $0x128] sm:$0xff]
    %v6518 = vld [vmem:[%s6479 + $0x130] sm:$0xff]
    %v6519 = vld [vmem:[%s6479 + $0x138] sm:$0xff]
    %v6520 = vld [vmem:[%s6479 + $0x140] sm:$0xff]
    %v6521 = vld [vmem:[%s6479 + $0x148] sm:$0xff]
    %v6522 = vld [vmem:[%s6479 + $0x150] sm:$0xff]
    %v6523 = vld [vmem:[%s6479 + $0x158] sm:$0xff]
    %v6524 = vld [vmem:[%s6479 + $0x160] sm:$0xff]
    %v6525 = vld [vmem:[%s6479 + $0x168] sm:$0xff]
    %v6526 = vld [vmem:[%s6479 + $0x170] sm:$0xff]
    %v6527 = vld [vmem:[%s6479 + $0x178] sm:$0xff]
    %v6528 = vld [vmem:[%s6479 + $0x180] sm:$0xff]
    %v6529 = vld [vmem:[%s6479 + $0x188] sm:$0xff]
    %v6530 = vld [vmem:[%s6479 + $0x190] sm:$0xff]
    %v6531 = vld [vmem:[%s6479 + $0x198] sm:$0xff]
    %v6532 = vld [vmem:[%s6479 + $0x1a0] sm:$0xff]
    %v6533 = vld [vmem:[%s6479 + $0x1a8] sm:$0xff]
    %v6534 = vld [vmem:[%s6479 + $0x1b0] sm:$0xff]
    %v6535 = vld [vmem:[%s6479 + $0x1b8] sm:$0xff]
    %v6536 = vld [vmem:[%s6479 + $0x1c0] sm:$0xff]
    %v6537 = vld [vmem:[%s6479 + $0x1c8] sm:$0xff]
    %v6538 = vld [vmem:[%s6479 + $0x1d0] sm:$0xff]
    %v6539 = vld [vmem:[%s6479 + $0x1d8] sm:$0xff]
    %v6540 = vld [vmem:[%s6479 + $0x1e0] sm:$0xff]
    %v6541 = vld [vmem:[%s6479 + $0x1e8] sm:$0xff]
    %v6542 = vld [vmem:[%s6479 + $0x1f0] sm:$0xff]
    %v6543 = vld [vmem:[%s6479 + $0x1f8] sm:$0xff]
    %v6544 = vld [vmem:[%s6479 + $0x200] sm:$0xff]
    %v6545 = vld [vmem:[%s6479 + $0x208] sm:$0xff]
    %v6546 = vld [vmem:[%s6479 + $0x210] sm:$0xff]
    %v6547 = vld [vmem:[%s6479 + $0x218] sm:$0xff]
    %v6548 = vld [vmem:[%s6479 + $0x220] sm:$0xff]
    %v6549 = vld [vmem:[%s6479 + $0x228] sm:$0xff]
    %v6550 = vld [vmem:[%s6479 + $0x230] sm:$0xff]
    %v6551 = vld [vmem:[%s6479 + $0x238] sm:$0xff]
    %v6552 = vld [vmem:[%s6479 + $0x240] sm:$0xff]
    %v6553 = vld [vmem:[%s6479 + $0x248] sm:$0xff]
    %v6554 = vld [vmem:[%s6479 + $0x250] sm:$0xff]
    %v6555 = vld [vmem:[%s6479 + $0x258] sm:$0xff]
    %v6556 = vld [vmem:[%s6479 + $0x260] sm:$0xff]
    %v6557 = vld [vmem:[%s6479 + $0x268] sm:$0xff]
    %v6558 = vld [vmem:[%s6479 + $0x270] sm:$0xff]
    %v6559 = vld [vmem:[%s6479 + $0x278] sm:$0xff]
    %v6560 = vld [vmem:[%s6479 + $0x280] sm:$0xff]
    %v6561 = vld [vmem:[%s6479 + $0x288] sm:$0xff]
    %v6562 = vld [vmem:[%s6479 + $0x290] sm:$0xff]
    %v6563 = vld [vmem:[%s6479 + $0x298] sm:$0xff]
    %v6564 = vld [vmem:[%s6479 + $0x2a0] sm:$0xff]
    %v6565 = vld [vmem:[%s6479 + $0x2a8] sm:$0xff]
    %v6566 = vld [vmem:[%s6479 + $0x2b0] sm:$0xff]
    %v6567 = vld [vmem:[%s6479 + $0x2b8] sm:$0xff]
    %v6568 = vld [vmem:[%s6479 + $0x2c0] sm:$0xff]
    %v6569 = vld [vmem:[%s6479 + $0x2c8] sm:$0xff]
    %v6570 = vld [vmem:[%s6479 + $0x2d0] sm:$0xff]
    %v6571 = vld [vmem:[%s6479 + $0x2d8] sm:$0xff]
    %v6572 = vld [vmem:[%s6479 + $0x2e0] sm:$0xff]
    %v6573 = vld [vmem:[%s6479 + $0x2e8] sm:$0xff]
    %v6574 = vld [vmem:[%s6479 + $0x2f0] sm:$0xff]
    %v6575 = vld [vmem:[%s6479 + $0x2f8] sm:$0xff]
    %v6576 = vld [vmem:[%s6479 + $0x300] sm:$0xff]
    %v6577 = vld [vmem:[%s6479 + $0x308] sm:$0xff]
    %v6578 = vld [vmem:[%s6479 + $0x310] sm:$0xff]
    %v6579 = vld [vmem:[%s6479 + $0x318] sm:$0xff]
    %v6580 = vld [vmem:[%s6479 + $0x320] sm:$0xff]
    %v6581 = vld [vmem:[%s6479 + $0x328] sm:$0xff]
    %v6582 = vld [vmem:[%s6479 + $0x330] sm:$0xff]
    %v6583 = vld [vmem:[%s6479 + $0x338] sm:$0xff]
    %v6584 = vld [vmem:[%s6479 + $0x340] sm:$0xff]
    %v6585 = vld [vmem:[%s6479 + $0x348] sm:$0xff]
    %v6586 = vld [vmem:[%s6479 + $0x350] sm:$0xff]
    %v6587 = vld [vmem:[%s6479 + $0x358] sm:$0xff]
    %v6588 = vld [vmem:[%s6479 + $0x360] sm:$0xff]
    %v6589 = vld [vmem:[%s6479 + $0x368] sm:$0xff]
    %v6590 = vld [vmem:[%s6479 + $0x370] sm:$0xff]
    %v6591 = vld [vmem:[%s6479 + $0x378] sm:$0xff]
    %v6592 = vld [vmem:[%s6479 + $0x380] sm:$0xff]
    %v6593 = vld [vmem:[%s6479 + $0x388] sm:$0xff]
    %v6594 = vld [vmem:[%s6479 + $0x390] sm:$0xff]
    %v6595 = vld [vmem:[%s6479 + $0x398] sm:$0xff]
    %v6596 = vld [vmem:[%s6479 + $0x3a0] sm:$0xff]
    %v6597 = vld [vmem:[%s6479 + $0x3a8] sm:$0xff]
    %v6598 = vld [vmem:[%s6479 + $0x3b0] sm:$0xff]
    %v6599 = vld [vmem:[%s6479 + $0x3b8] sm:$0xff]
    %v6600 = vld [vmem:[%s6479 + $0x3c0] sm:$0xff]
    %v6601 = vld [vmem:[%s6479 + $0x3c8] sm:$0xff]
    %v6602 = vld [vmem:[%s6479 + $0x3d0] sm:$0xff]
    %v6603 = vld [vmem:[%s6479 + $0x3d8] sm:$0xff]
    %v6604 = vld [vmem:[%s6479 + $0x3e0] sm:$0xff]
    %v6605 = vld [vmem:[%s6479 + $0x3e8] sm:$0xff]
    %v6606 = vld [vmem:[%s6479 + $0x3f0] sm:$0xff]
    %v6607 = vld [vmem:[%s6479 + $0x3f8] sm:$0xff]
    %s6608 = scalar_lea.vmem [#allocation17], 4
    %v6609 = vld [vmem:[%s6608] ss:$8 sm:$0xf]
    %v6611 = vlaneseq
    %v6612 = vshrl.u32 %v6611, 7
    %v6613 = vsub.s32 0, %v6612
    %v6614 = vrot.slane %v6609, %v6613
    %v6615 = vlaneseq
    %v6616 = vshrl.u32 %v6615, 7
    %v6617 = vsub.s32 1, %v6616
    %v6618 = vrot.slane %v6609, %v6617
    %v6619 = vlaneseq
    %v6620 = vshrl.u32 %v6619, 7
    %v6621 = vsub.s32 2, %v6620
    %v6622 = vrot.slane %v6609, %v6621
    %v6623 = vlaneseq
    %v6624 = vshrl.u32 %v6623, 7
    %v6625 = vsub.s32 3, %v6624
    %v6626 = vrot.slane %v6609, %v6625
    %v6759 = vunpack.c.l.b16 %v6480
    %v6760 = vunpack.c.h.b16 %v6480
    %v6761 = vunpack.c.l.b16 %v6481
    %v6762 = vunpack.c.h.b16 %v6481
    %v6763 = vunpack.c.l.b16 %v6482
    %v6764 = vunpack.c.h.b16 %v6482
    %v6765 = vunpack.c.l.b16 %v6483
    %v6766 = vunpack.c.h.b16 %v6483
    %v6767 = vunpack.c.l.b16 %v6484
    %v6768 = vunpack.c.h.b16 %v6484
    %v6769 = vunpack.c.l.b16 %v6485
    %v6770 = vunpack.c.h.b16 %v6485
    %v6771 = vunpack.c.l.b16 %v6486
    %v6772 = vunpack.c.h.b16 %v6486
    %v6773 = vunpack.c.l.b16 %v6487
    %v6774 = vunpack.c.h.b16 %v6487
    %v6775 = vunpack.c.l.b16 %v6488
    %v6776 = vunpack.c.h.b16 %v6488
    %v6777 = vunpack.c.l.b16 %v6489
    %v6778 = vunpack.c.h.b16 %v6489
    %v6779 = vunpack.c.l.b16 %v6490
    %v6780 = vunpack.c.h.b16 %v6490
    %v6781 = vunpack.c.l.b16 %v6491
    %v6782 = vunpack.c.h.b16 %v6491
    %v6783 = vunpack.c.l.b16 %v6492
    %v6784 = vunpack.c.h.b16 %v6492
    %v6785 = vunpack.c.l.b16 %v6493
    %v6786 = vunpack.c.h.b16 %v6493
    %v6787 = vunpack.c.l.b16 %v6494
    %v6788 = vunpack.c.h.b16 %v6494
    %v6789 = vunpack.c.l.b16 %v6495
    %v6790 = vunpack.c.h.b16 %v6495
    %v6791 = vunpack.c.l.b16 %v6496
    %v6792 = vunpack.c.h.b16 %v6496
    %v6793 = vunpack.c.l.b16 %v6497
    %v6794 = vunpack.c.h.b16 %v6497
    %v6795 = vunpack.c.l.b16 %v6498
    %v6796 = vunpack.c.h.b16 %v6498
    %v6797 = vunpack.c.l.b16 %v6499
    %v6798 = vunpack.c.h.b16 %v6499
    %v6799 = vunpack.c.l.b16 %v6500
    %v6800 = vunpack.c.h.b16 %v6500
    %v6801 = vunpack.c.l.b16 %v6501
    %v6802 = vunpack.c.h.b16 %v6501
    %v6803 = vunpack.c.l.b16 %v6502
    %v6804 = vunpack.c.h.b16 %v6502
    %v6805 = vunpack.c.l.b16 %v6503
    %v6806 = vunpack.c.h.b16 %v6503
    %v6807 = vunpack.c.l.b16 %v6504
    %v6808 = vunpack.c.h.b16 %v6504
    %v6809 = vunpack.c.l.b16 %v6505
    %v6810 = vunpack.c.h.b16 %v6505
    %v6811 = vunpack.c.l.b16 %v6506
    %v6812 = vunpack.c.h.b16 %v6506
    %v6813 = vunpack.c.l.b16 %v6507
    %v6814 = vunpack.c.h.b16 %v6507
    %v6815 = vunpack.c.l.b16 %v6508
    %v6816 = vunpack.c.h.b16 %v6508
    %v6817 = vunpack.c.l.b16 %v6509
    %v6818 = vunpack.c.h.b16 %v6509
    %v6819 = vunpack.c.l.b16 %v6510
    %v6820 = vunpack.c.h.b16 %v6510
    %v6821 = vunpack.c.l.b16 %v6511
    %v6822 = vunpack.c.h.b16 %v6511
    %v6823 = vunpack.c.l.b16 %v6512
    %v6824 = vunpack.c.h.b16 %v6512
    %v6825 = vunpack.c.l.b16 %v6513
    %v6826 = vunpack.c.h.b16 %v6513
    %v6827 = vunpack.c.l.b16 %v6514
    %v6828 = vunpack.c.h.b16 %v6514
    %v6829 = vunpack.c.l.b16 %v6515
    %v6830 = vunpack.c.h.b16 %v6515
    %v6831 = vunpack.c.l.b16 %v6516
    %v6832 = vunpack.c.h.b16 %v6516
    %v6833 = vunpack.c.l.b16 %v6517
    %v6834 = vunpack.c.h.b16 %v6517
    %v6835 = vunpack.c.l.b16 %v6518
    %v6836 = vunpack.c.h.b16 %v6518
    %v6837 = vunpack.c.l.b16 %v6519
    %v6838 = vunpack.c.h.b16 %v6519
    %v6839 = vunpack.c.l.b16 %v6520
    %v6840 = vunpack.c.h.b16 %v6520
    %v6841 = vunpack.c.l.b16 %v6521
    %v6842 = vunpack.c.h.b16 %v6521
    %v6843 = vunpack.c.l.b16 %v6522
    %v6844 = vunpack.c.h.b16 %v6522
    %v6845 = vunpack.c.l.b16 %v6523
    %v6846 = vunpack.c.h.b16 %v6523
    %v6847 = vunpack.c.l.b16 %v6524
    %v6848 = vunpack.c.h.b16 %v6524
    %v6849 = vunpack.c.l.b16 %v6525
    %v6850 = vunpack.c.h.b16 %v6525
    %v6851 = vunpack.c.l.b16 %v6526
    %v6852 = vunpack.c.h.b16 %v6526
    %v6853 = vunpack.c.l.b16 %v6527
    %v6854 = vunpack.c.h.b16 %v6527
    %v6855 = vunpack.c.l.b16 %v6528
    %v6856 = vunpack.c.h.b16 %v6528
    %v6857 = vunpack.c.l.b16 %v6529
    %v6858 = vunpack.c.h.b16 %v6529
    %v6859 = vunpack.c.l.b16 %v6530
    %v6860 = vunpack.c.h.b16 %v6530
    %v6861 = vunpack.c.l.b16 %v6531
    %v6862 = vunpack.c.h.b16 %v6531
    %v6863 = vunpack.c.l.b16 %v6532
    %v6864 = vunpack.c.h.b16 %v6532
    %v6865 = vunpack.c.l.b16 %v6533
    %v6866 = vunpack.c.h.b16 %v6533
    %v6867 = vunpack.c.l.b16 %v6534
    %v6868 = vunpack.c.h.b16 %v6534
    %v6869 = vunpack.c.l.b16 %v6535
    %v6870 = vunpack.c.h.b16 %v6535
    %v6871 = vunpack.c.l.b16 %v6536
    %v6872 = vunpack.c.h.b16 %v6536
    %v6873 = vunpack.c.l.b16 %v6537
    %v6874 = vunpack.c.h.b16 %v6537
    %v6875 = vunpack.c.l.b16 %v6538
    %v6876 = vunpack.c.h.b16 %v6538
    %v6877 = vunpack.c.l.b16 %v6539
    %v6878 = vunpack.c.h.b16 %v6539
    %v6879 = vunpack.c.l.b16 %v6540
    %v6880 = vunpack.c.h.b16 %v6540
    %v6881 = vunpack.c.l.b16 %v6541
    %v6882 = vunpack.c.h.b16 %v6541
    %v6883 = vunpack.c.l.b16 %v6542
    %v6884 = vunpack.c.h.b16 %v6542
    %v6885 = vunpack.c.l.b16 %v6543
    %v6886 = vunpack.c.h.b16 %v6543
    %v6887 = vunpack.c.l.b16 %v6544
    %v6888 = vunpack.c.h.b16 %v6544
    %v6889 = vunpack.c.l.b16 %v6545
    %v6890 = vunpack.c.h.b16 %v6545
    %v6891 = vunpack.c.l.b16 %v6546
    %v6892 = vunpack.c.h.b16 %v6546
    %v6893 = vunpack.c.l.b16 %v6547
    %v6894 = vunpack.c.h.b16 %v6547
    %v6895 = vunpack.c.l.b16 %v6548
    %v6896 = vunpack.c.h.b16 %v6548
    %v6897 = vunpack.c.l.b16 %v6549
    %v6898 = vunpack.c.h.b16 %v6549
    %v6899 = vunpack.c.l.b16 %v6550
    %v6900 = vunpack.c.h.b16 %v6550
    %v6901 = vunpack.c.l.b16 %v6551
    %v6902 = vunpack.c.h.b16 %v6551
    %v6903 = vunpack.c.l.b16 %v6552
    %v6904 = vunpack.c.h.b16 %v6552
    %v6905 = vunpack.c.l.b16 %v6553
    %v6906 = vunpack.c.h.b16 %v6553
    %v6907 = vunpack.c.l.b16 %v6554
    %v6908 = vunpack.c.h.b16 %v6554
    %v6909 = vunpack.c.l.b16 %v6555
    %v6910 = vunpack.c.h.b16 %v6555
    %v6911 = vunpack.c.l.b16 %v6556
    %v6912 = vunpack.c.h.b16 %v6556
    %v6913 = vunpack.c.l.b16 %v6557
    %v6914 = vunpack.c.h.b16 %v6557
    %v6915 = vunpack.c.l.b16 %v6558
    %v6916 = vunpack.c.h.b16 %v6558
    %v6917 = vunpack.c.l.b16 %v6559
    %v6918 = vunpack.c.h.b16 %v6559
    %v6919 = vunpack.c.l.b16 %v6560
    %v6920 = vunpack.c.h.b16 %v6560
    %v6921 = vunpack.c.l.b16 %v6561
    %v6922 = vunpack.c.h.b16 %v6561
    %v6923 = vunpack.c.l.b16 %v6562
    %v6924 = vunpack.c.h.b16 %v6562
    %v6925 = vunpack.c.l.b16 %v6563
    %v6926 = vunpack.c.h.b16 %v6563
    %v6927 = vunpack.c.l.b16 %v6564
    %v6928 = vunpack.c.h.b16 %v6564
    %v6929 = vunpack.c.l.b16 %v6565
    %v6930 = vunpack.c.h.b16 %v6565
    %v6931 = vunpack.c.l.b16 %v6566
    %v6932 = vunpack.c.h.b16 %v6566
    %v6933 = vunpack.c.l.b16 %v6567
    %v6934 = vunpack.c.h.b16 %v6567
    %v6935 = vunpack.c.l.b16 %v6568
    %v6936 = vunpack.c.h.b16 %v6568
    %v6937 = vunpack.c.l.b16 %v6569
    %v6938 = vunpack.c.h.b16 %v6569
    %v6939 = vunpack.c.l.b16 %v6570
    %v6940 = vunpack.c.h.b16 %v6570
    %v6941 = vunpack.c.l.b16 %v6571
    %v6942 = vunpack.c.h.b16 %v6571
    %v6943 = vunpack.c.l.b16 %v6572
    %v6944 = vunpack.c.h.b16 %v6572
    %v6945 = vunpack.c.l.b16 %v6573
    %v6946 = vunpack.c.h.b16 %v6573
    %v6947 = vunpack.c.l.b16 %v6574
    %v6948 = vunpack.c.h.b16 %v6574
    %v6949 = vunpack.c.l.b16 %v6575
    %v6950 = vunpack.c.h.b16 %v6575
    %v6951 = vunpack.c.l.b16 %v6576
    %v6952 = vunpack.c.h.b16 %v6576
    %v6953 = vunpack.c.l.b16 %v6577
    %v6954 = vunpack.c.h.b16 %v6577
    %v6955 = vunpack.c.l.b16 %v6578
    %v6956 = vunpack.c.h.b16 %v6578
    %v6957 = vunpack.c.l.b16 %v6579
    %v6958 = vunpack.c.h.b16 %v6579
    %v6959 = vunpack.c.l.b16 %v6580
    %v6960 = vunpack.c.h.b16 %v6580
    %v6961 = vunpack.c.l.b16 %v6581
    %v6962 = vunpack.c.h.b16 %v6581
    %v6963 = vunpack.c.l.b16 %v6582
    %v6964 = vunpack.c.h.b16 %v6582
    %v6965 = vunpack.c.l.b16 %v6583
    %v6966 = vunpack.c.h.b16 %v6583
    %v6967 = vunpack.c.l.b16 %v6584
    %v6968 = vunpack.c.h.b16 %v6584
    %v6969 = vunpack.c.l.b16 %v6585
    %v6970 = vunpack.c.h.b16 %v6585
    %v6971 = vunpack.c.l.b16 %v6586
    %v6972 = vunpack.c.h.b16 %v6586
    %v6973 = vunpack.c.l.b16 %v6587
    %v6974 = vunpack.c.h.b16 %v6587
    %v6975 = vunpack.c.l.b16 %v6588
    %v6976 = vunpack.c.h.b16 %v6588
    %v6977 = vunpack.c.l.b16 %v6589
    %v6978 = vunpack.c.h.b16 %v6589
    %v6979 = vunpack.c.l.b16 %v6590
    %v6980 = vunpack.c.h.b16 %v6590
    %v6981 = vunpack.c.l.b16 %v6591
    %v6982 = vunpack.c.h.b16 %v6591
    %v6983 = vunpack.c.l.b16 %v6592
    %v6984 = vunpack.c.h.b16 %v6592
    %v6985 = vunpack.c.l.b16 %v6593
    %v6986 = vunpack.c.h.b16 %v6593
    %v6987 = vunpack.c.l.b16 %v6594
    %v6988 = vunpack.c.h.b16 %v6594
    %v6989 = vunpack.c.l.b16 %v6595
    %v6990 = vunpack.c.h.b16 %v6595
    %v6991 = vunpack.c.l.b16 %v6596
    %v6992 = vunpack.c.h.b16 %v6596
    %v6993 = vunpack.c.l.b16 %v6597
    %v6994 = vunpack.c.h.b16 %v6597
    %v6995 = vunpack.c.l.b16 %v6598
    %v6996 = vunpack.c.h.b16 %v6598
    %v6997 = vunpack.c.l.b16 %v6599
    %v6998 = vunpack.c.h.b16 %v6599
    %v6999 = vunpack.c.l.b16 %v6600
    %v7000 = vunpack.c.h.b16 %v6600
    %v7001 = vunpack.c.l.b16 %v6601
    %v7002 = vunpack.c.h.b16 %v6601
    %v7003 = vunpack.c.l.b16 %v6602
    %v7004 = vunpack.c.h.b16 %v6602
    %v7005 = vunpack.c.l.b16 %v6603
    %v7006 = vunpack.c.h.b16 %v6603
    %v7007 = vunpack.c.l.b16 %v6604
    %v7008 = vunpack.c.h.b16 %v6604
    %v7009 = vunpack.c.l.b16 %v6605
    %v7010 = vunpack.c.h.b16 %v6605
    %v7011 = vunpack.c.l.b16 %v6606
    %v7012 = vunpack.c.h.b16 %v6606
    %v7013 = vunpack.c.l.b16 %v6607
    %v7014 = vunpack.c.h.b16 %v6607
    %v7015 = vpack.c.b16 %v6763, %v6759
    %v7016 = vpack.c.b16 %v6764, %v6760
    %v7017 = vpack.c.b16 %v6765, %v6761
    %v7018 = vpack.c.b16 %v6766, %v6762
    %v7019 = vpack.c.b16 %v6771, %v6767
    %v7020 = vpack.c.b16 %v6772, %v6768
    %v7021 = vpack.c.b16 %v6773, %v6769
    %v7022 = vpack.c.b16 %v6774, %v6770
    %v7023 = vpack.c.b16 %v6779, %v6775
    %v7024 = vpack.c.b16 %v6780, %v6776
    %v7025 = vpack.c.b16 %v6781, %v6777
    %v7026 = vpack.c.b16 %v6782, %v6778
    %v7027 = vpack.c.b16 %v6787, %v6783
    %v7028 = vpack.c.b16 %v6788, %v6784
    %v7029 = vpack.c.b16 %v6789, %v6785
    %v7030 = vpack.c.b16 %v6790, %v6786
    %v7031 = vpack.c.b16 %v6795, %v6791
    %v7032 = vpack.c.b16 %v6796, %v6792
    %v7033 = vpack.c.b16 %v6797, %v6793
    %v7034 = vpack.c.b16 %v6798, %v6794
    %v7035 = vpack.c.b16 %v6803, %v6799
    %v7036 = vpack.c.b16 %v6804, %v6800
    %v7037 = vpack.c.b16 %v6805, %v6801
    %v7038 = vpack.c.b16 %v6806, %v6802
    %v7039 = vpack.c.b16 %v6811, %v6807
    %v7040 = vpack.c.b16 %v6812, %v6808
    %v7041 = vpack.c.b16 %v6813, %v6809
    %v7042 = vpack.c.b16 %v6814, %v6810
    %v7043 = vpack.c.b16 %v6819, %v6815
    %v7044 = vpack.c.b16 %v6820, %v6816
    %v7045 = vpack.c.b16 %v6821, %v6817
    %v7046 = vpack.c.b16 %v6822, %v6818
    %v7047 = vpack.c.b16 %v6827, %v6823
    %v7048 = vpack.c.b16 %v6828, %v6824
    %v7049 = vpack.c.b16 %v6829, %v6825
    %v7050 = vpack.c.b16 %v6830, %v6826
    %v7051 = vpack.c.b16 %v6835, %v6831
    %v7052 = vpack.c.b16 %v6836, %v6832
    %v7053 = vpack.c.b16 %v6837, %v6833
    %v7054 = vpack.c.b16 %v6838, %v6834
    %v7055 = vpack.c.b16 %v6843, %v6839
    %v7056 = vpack.c.b16 %v6844, %v6840
    %v7057 = vpack.c.b16 %v6845, %v6841
    %v7058 = vpack.c.b16 %v6846, %v6842
    %v7059 = vpack.c.b16 %v6851, %v6847
    %v7060 = vpack.c.b16 %v6852, %v6848
    %v7061 = vpack.c.b16 %v6853, %v6849
    %v7062 = vpack.c.b16 %v6854, %v6850
    %v7063 = vpack.c.b16 %v6859, %v6855
    %v7064 = vpack.c.b16 %v6860, %v6856
    %v7065 = vpack.c.b16 %v6861, %v6857
    %v7066 = vpack.c.b16 %v6862, %v6858
    %v7067 = vpack.c.b16 %v6867, %v6863
    %v7068 = vpack.c.b16 %v6868, %v6864
    %v7069 = vpack.c.b16 %v6869, %v6865
    %v7070 = vpack.c.b16 %v6870, %v6866
    %v7071 = vpack.c.b16 %v6875, %v6871
    %v7072 = vpack.c.b16 %v6876, %v6872
    %v7073 = vpack.c.b16 %v6877, %v6873
    %v7074 = vpack.c.b16 %v6878, %v6874
    %v7075 = vpack.c.b16 %v6883, %v6879
    %v7076 = vpack.c.b16 %v6884, %v6880
    %v7077 = vpack.c.b16 %v6885, %v6881
    %v7078 = vpack.c.b16 %v6886, %v6882
    %v7079 = vpack.c.b16 %v6891, %v6887
    %v7080 = vpack.c.b16 %v6892, %v6888
    %v7081 = vpack.c.b16 %v6893, %v6889
    %v7082 = vpack.c.b16 %v6894, %v6890
    %v7083 = vpack.c.b16 %v6899, %v6895
    %v7084 = vpack.c.b16 %v6900, %v6896
    %v7085 = vpack.c.b16 %v6901, %v6897
    %v7086 = vpack.c.b16 %v6902, %v6898
    %v7087 = vpack.c.b16 %v6907, %v6903
    %v7088 = vpack.c.b16 %v6908, %v6904
    %v7089 = vpack.c.b16 %v6909, %v6905
    %v7090 = vpack.c.b16 %v6910, %v6906
    %v7091 = vpack.c.b16 %v6915, %v6911
    %v7092 = vpack.c.b16 %v6916, %v6912
    %v7093 = vpack.c.b16 %v6917, %v6913
    %v7094 = vpack.c.b16 %v6918, %v6914
    %v7095 = vpack.c.b16 %v6923, %v6919
    %v7096 = vpack.c.b16 %v6924, %v6920
    %v7097 = vpack.c.b16 %v6925, %v6921
    %v7098 = vpack.c.b16 %v6926, %v6922
    %v7099 = vpack.c.b16 %v6931, %v6927
    %v7100 = vpack.c.b16 %v6932, %v6928
    %v7101 = vpack.c.b16 %v6933, %v6929
    %v7102 = vpack.c.b16 %v6934, %v6930
    %v7103 = vpack.c.b16 %v6939, %v6935
    %v7104 = vpack.c.b16 %v6940, %v6936
    %v7105 = vpack.c.b16 %v6941, %v6937
    %v7106 = vpack.c.b16 %v6942, %v6938
    %v7107 = vpack.c.b16 %v6947, %v6943
    %v7108 = vpack.c.b16 %v6948, %v6944
    %v7109 = vpack.c.b16 %v6949, %v6945
    %v7110 = vpack.c.b16 %v6950, %v6946
    %v7111 = vpack.c.b16 %v6955, %v6951
    %v7112 = vpack.c.b16 %v6956, %v6952
    %v7113 = vpack.c.b16 %v6957, %v6953
    %v7114 = vpack.c.b16 %v6958, %v6954
    %v7115 = vpack.c.b16 %v6963, %v6959
    %v7116 = vpack.c.b16 %v6964, %v6960
    %v7117 = vpack.c.b16 %v6965, %v6961
    %v7118 = vpack.c.b16 %v6966, %v6962
    %v7119 = vpack.c.b16 %v6971, %v6967
    %v7120 = vpack.c.b16 %v6972, %v6968
    %v7121 = vpack.c.b16 %v6973, %v6969
    %v7122 = vpack.c.b16 %v6974, %v6970
    %v7123 = vpack.c.b16 %v6979, %v6975
    %v7124 = vpack.c.b16 %v6980, %v6976
    %v7125 = vpack.c.b16 %v6981, %v6977
    %v7126 = vpack.c.b16 %v6982, %v6978
    %v7127 = vpack.c.b16 %v6987, %v6983
    %v7128 = vpack.c.b16 %v6988, %v6984
    %v7129 = vpack.c.b16 %v6989, %v6985
    %v7130 = vpack.c.b16 %v6990, %v6986
    %v7131 = vpack.c.b16 %v6995, %v6991
    %v7132 = vpack.c.b16 %v6996, %v6992
    %v7133 = vpack.c.b16 %v6997, %v6993
    %v7134 = vpack.c.b16 %v6998, %v6994
    %v7135 = vpack.c.b16 %v7003, %v6999
    %v7136 = vpack.c.b16 %v7004, %v7000
    %v7137 = vpack.c.b16 %v7005, %v7001
    %v7138 = vpack.c.b16 %v7006, %v7002
    %v7139 = vpack.c.b16 %v7011, %v7007
    %v7140 = vpack.c.b16 %v7012, %v7008
    %v7141 = vpack.c.b16 %v7013, %v7009
    %v7142 = vpack.c.b16 %v7014, %v7010
    %7271 = vmatprep.subr.bf16.mxu0 %v7016
    %7272 = vmatpush1.bf16.msra.mxu0 %v7015
    %7273 = vmatprep.subr.bf16.mxu0 %v7020
    %7274 = vmatpush1.bf16.msra.mxu0 %v7019
    %7275 = vmatprep.subr.bf16.mxu0 %v7024
    %7276 = vmatpush1.bf16.msra.mxu0 %v7023
    %7277 = vmatprep.subr.bf16.mxu0 %v7028
    %7278 = vmatpush1.bf16.msra.mxu0 %v7027
    %7279 = vmatprep.subr.bf16.mxu0 %v7032
    %7280 = vmatpush1.bf16.msra.mxu0 %v7031
    %7281 = vmatprep.subr.bf16.mxu0 %v7036
    %7282 = vmatpush1.bf16.msra.mxu0 %v7035
    %7283 = vmatprep.subr.bf16.mxu0 %v7040
    %7284 = vmatpush1.bf16.msra.mxu0 %v7039
    %7285 = vmatprep.subr.bf16.mxu0 %v7044
    %7286 = vmatpush1.bf16.msra.mxu0 %v7043
    %7287 = vmatprep.subr.bf16.mxu0 %v7048
    %7288 = vmatpush1.bf16.msra.mxu0 %v7047
    %7289 = vmatprep.subr.bf16.mxu0 %v7052
    %7290 = vmatpush1.bf16.msra.mxu0 %v7051
    %7291 = vmatprep.subr.bf16.mxu0 %v7056
    %7292 = vmatpush1.bf16.msra.mxu0 %v7055
    %7293 = vmatprep.subr.bf16.mxu0 %v7060
    %7294 = vmatpush1.bf16.msra.mxu0 %v7059
    %7295 = vmatprep.subr.bf16.mxu0 %v7064
    %7296 = vmatpush1.bf16.msra.mxu0 %v7063
    %7297 = vmatprep.subr.bf16.mxu0 %v7068
    %7298 = vmatpush1.bf16.msra.mxu0 %v7067
    %7299 = vmatprep.subr.bf16.mxu0 %v7072
    %7300 = vmatpush1.bf16.msra.mxu0 %v7071
    %7301 = vmatprep.subr.bf16.mxu0 %v7076
    %7302 = vmatpush1.bf16.msra.mxu0 %v7075
    %7303 = vmatprep.mubr.bf16.mxu0 %v6476
    %7304 = vmatmul.mubr.bf16.gmra.mrb[0].mxu0 %v6475
    %v7305 = vpop.f32.mrb[0].mxu0
    %v7306 = vadd.f32 %v6614, %v7305
    %v7307 = vpop.f32.mrb[0].mxu0
    %v7308 = vadd.f32 %v6618, %v7307
    %v7309 = vpop.f32.mrb[0].mxu0
    %v7310 = vadd.f32 %v6614, %v7309
    %v7311 = vpop.f32.mrb[0].mxu0
    %v7312 = vadd.f32 %v6618, %v7311
    %7313 = vdwg.mxu0
    %7314 = vmatprep.subr.bf16.mxu0 %v7080
    %7315 = vmatpush1.bf16.msra.mxu0 %v7079
    %7316 = vmatprep.subr.bf16.mxu0 %v7084
    %7317 = vmatpush1.bf16.msra.mxu0 %v7083
    %7318 = vmatprep.subr.bf16.mxu0 %v7088
    %7319 = vmatpush1.bf16.msra.mxu0 %v7087
    %7320 = vmatprep.subr.bf16.mxu0 %v7092
    %7321 = vmatpush1.bf16.msra.mxu0 %v7091
    %7322 = vmatprep.subr.bf16.mxu0 %v7096
    %7323 = vmatpush1.bf16.msra.mxu0 %v7095
    %7324 = vmatprep.subr.bf16.mxu0 %v7100
    %7325 = vmatpush1.bf16.msra.mxu0 %v7099
    %7326 = vmatprep.subr.bf16.mxu0 %v7104
    %7327 = vmatpush1.bf16.msra.mxu0 %v7103
    %7328 = vmatprep.subr.bf16.mxu0 %v7108
    %7329 = vmatpush1.bf16.msra.mxu0 %v7107
    %7330 = vmatprep.subr.bf16.mxu0 %v7112
    %7331 = vmatpush1.bf16.msra.mxu0 %v7111
    %7332 = vmatprep.subr.bf16.mxu0 %v7116
    %7333 = vmatpush1.bf16.msra.mxu0 %v7115
    %7334 = vmatprep.subr.bf16.mxu0 %v7120
    %7335 = vmatpush1.bf16.msra.mxu0 %v7119
    %7336 = vmatprep.subr.bf16.mxu0 %v7124
    %7337 = vmatpush1.bf16.msra.mxu0 %v7123
    %7338 = vmatprep.subr.bf16.mxu0 %v7128
    %7339 = vmatpush1.bf16.msra.mxu0 %v7127
    %7340 = vmatprep.subr.bf16.mxu0 %v7132
    %7341 = vmatpush1.bf16.msra.mxu0 %v7131
    %7342 = vmatprep.subr.bf16.mxu0 %v7136
    %7343 = vmatpush1.bf16.msra.mxu0 %v7135
    %7344 = vmatprep.subr.bf16.mxu0 %v7140
    %7345 = vmatpush1.bf16.msra.mxu0 %v7139
    %7346 = vmatprep.mubr.bf16.mxu0 %v6478
    %7347 = vmatmul.mubr.bf16.gmra.mrb[0].mxu0 %v6477
    %v7348 = vpop.f32.mrb[0].mxu0
    %v7349 = vadd.f32 %v7306, %v7348
    %v7350 = vpop.f32.mrb[0].mxu0
    %v7351 = vadd.f32 %v7308, %v7350
    %v7352 = vpop.f32.mrb[0].mxu0
    %v7353 = vadd.f32 %v7310, %v7352
    %v7354 = vpop.f32.mrb[0].mxu0
    %v7355 = vadd.f32 %v7312, %v7354
    %7356 = vdwg.mxu0
    %7357 = vmatprep.subr.bf16.mxu0 %v7018
    %7358 = vmatpush1.bf16.msra.mxu0 %v7017
    %7359 = vmatprep.subr.bf16.mxu0 %v7022
    %7360 = vmatpush1.bf16.msra.mxu0 %v7021
    %7361 = vmatprep.subr.bf16.mxu0 %v7026
    %7362 = vmatpush1.bf16.msra.mxu0 %v7025
    %7363 = vmatprep.subr.bf16.mxu0 %v7030
    %7364 = vmatpush1.bf16.msra.mxu0 %v7029
    %7365 = vmatprep.subr.bf16.mxu0 %v7034
    %7366 = vmatpush1.bf16.msra.mxu0 %v7033
    %7367 = vmatprep.subr.bf16.mxu0 %v7038
    %7368 = vmatpush1.bf16.msra.mxu0 %v7037
    %7369 = vmatprep.subr.bf16.mxu0 %v7042
    %7370 = vmatpush1.bf16.msra.mxu0 %v7041
    %7371 = vmatprep.subr.bf16.mxu0 %v7046
    %7372 = vmatpush1.bf16.msra.mxu0 %v7045
    %7373 = vmatprep.subr.bf16.mxu0 %v7050
    %7374 = vmatpush1.bf16.msra.mxu0 %v7049
    %7375 = vmatprep.subr.bf16.mxu0 %v7054
    %7376 = vmatpush1.bf16.msra.mxu0 %v7053
    %7377 = vmatprep.subr.bf16.mxu0 %v7058
    %7378 = vmatpush1.bf16.msra.mxu0 %v7057
    %7379 = vmatprep.subr.bf16.mxu0 %v7062
    %7380 = vmatpush1.bf16.msra.mxu0 %v7061
    %7381 = vmatprep.subr.bf16.mxu0 %v7066
    %7382 = vmatpush1.bf16.msra.mxu0 %v7065
    %7383 = vmatprep.subr.bf16.mxu0 %v7070
    %7384 = vmatpush1.bf16.msra.mxu0 %v7069
    %7385 = vmatprep.subr.bf16.mxu0 %v7074
    %7386 = vmatpush1.bf16.msra.mxu0 %v7073
    %7387 = vmatprep.subr.bf16.mxu0 %v7078
    %7388 = vmatpush1.bf16.msra.mxu0 %v7077
    %7389 = vmatprep.mubr.bf16.mxu0 %v6476
    %7390 = vmatmul.mubr.bf16.gmra.mrb[0].mxu0 %v6475
    %v7391 = vpop.f32.mrb[0].mxu0
    %v7392 = vadd.f32 %v6622, %v7391
    %v7393 = vpop.f32.mrb[0].mxu0
    %v7394 = vadd.f32 %v6626, %v7393
    %v7395 = vpop.f32.mrb[0].mxu0
    %v7396 = vadd.f32 %v6622, %v7395
    %v7397 = vpop.f32.mrb[0].mxu0
    %v7398 = vadd.f32 %v6626, %v7397
    %7399 = vdwg.mxu0
    %7400 = vmatprep.subr.bf16.mxu0 %v7082
    %7401 = vmatpush1.bf16.msra.mxu0 %v7081
    %7402 = vmatprep.subr.bf16.mxu0 %v7086
    %7403 = vmatpush1.bf16.msra.mxu0 %v7085
    %7404 = vmatprep.subr.bf16.mxu0 %v7090
    %7405 = vmatpush1.bf16.msra.mxu0 %v7089
    %7406 = vmatprep.subr.bf16.mxu0 %v7094
    %7407 = vmatpush1.bf16.msra.mxu0 %v7093
    %7408 = vmatprep.subr.bf16.mxu0 %v7098
    %7409 = vmatpush1.bf16.msra.mxu0 %v7097
    %7410 = vmatprep.subr.bf16.mxu0 %v7102
    %7411 = vmatpush1.bf16.msra.mxu0 %v7101
    %7412 = vmatprep.subr.bf16.mxu0 %v7106
    %7413 = vmatpush1.bf16.msra.mxu0 %v7105
    %7414 = vmatprep.subr.bf16.mxu0 %v7110
    %7415 = vmatpush1.bf16.msra.mxu0 %v7109
    %7416 = vmatprep.subr.bf16.mxu0 %v7114
    %7417 = vmatpush1.bf16.msra.mxu0 %v7113
    %7418 = vmatprep.subr.bf16.mxu0 %v7118
    %7419 = vmatpush1.bf16.msra.mxu0 %v7117
    %7420 = vmatprep.subr.bf16.mxu0 %v7122
    %7421 = vmatpush1.bf16.msra.mxu0 %v7121
    %7422 = vmatprep.subr.bf16.mxu0 %v7126
    %7423 = vmatpush1.bf16.msra.mxu0 %v7125
    %7424 = vmatprep.subr.bf16.mxu0 %v7130
    %7425 = vmatpush1.bf16.msra.mxu0 %v7129
    %7426 = vmatprep.subr.bf16.mxu0 %v7134
    %7427 = vmatpush1.bf16.msra.mxu0 %v7133
    %7428 = vmatprep.subr.bf16.mxu0 %v7138
    %7429 = vmatpush1.bf16.msra.mxu0 %v7137
    %7430 = vmatprep.subr.bf16.mxu0 %v7142
    %7431 = vmatpush1.bf16.msra.mxu0 %v7141
    %7432 = vmatprep.mubr.bf16.mxu0 %v6478
    %7433 = vmatmul.mubr.bf16.gmra.mrb[0].mxu0 %v6477
    %v7434 = vpop.f32.mrb[0].mxu0
    %v7435 = vadd.f32 %v7392, %v7434
    %v7436 = vpop.f32.mrb[0].mxu0
    %v7437 = vadd.f32 %v7394, %v7436
    %v7438 = vpop.f32.mrb[0].mxu0
    %v7439 = vadd.f32 %v7396, %v7438
    %v7440 = vpop.f32.mrb[0].mxu0
    %v7441 = vadd.f32 %v7398, %v7440
    %7442 = vdwg.mxu0
    %v7443 = vmax.f32 %v7349, 0.0
    %v7444 = vmax.f32 %v7351, 0.0
    %v7445 = vmax.f32 %v7435, 0.0
    %v7446 = vmax.f32 %v7437, 0.0
    %v7447 = vmax.f32 %v7353, 0.0
    %v7448 = vmax.f32 %v7355, 0.0
    %v7449 = vmax.f32 %v7439, 0.0
    %v7450 = vmax.f32 %v7441, 0.0
    %v7451 = vpack.c.bf16 %v7447, %v7443
    %v7452 = vpack.c.bf16 %v7448, %v7444
    %v7453 = vpack.c.bf16 %v7449, %v7445
    %v7454 = vpack.c.bf16 %v7450, %v7446
    %s7455 = scalar_lea.vmem [#allocation16], 5120
    %v7456 = vld [vmem:[%s7455] sm:$0xff]
    %v7457 = vld [vmem:[%s7455 + $0x8] sm:$0xff]
    %v7458 = vld [vmem:[%s7455 + $0x10] sm:$0xff]
    %v7459 = vld [vmem:[%s7455 + $0x18] sm:$0xff]
    %v7460 = vld [vmem:[%s7455 + $0x20] sm:$0xff]
    %v7461 = vld [vmem:[%s7455 + $0x28] sm:$0xff]
    %v7462 = vld [vmem:[%s7455 + $0x30] sm:$0xff]
    %v7463 = vld [vmem:[%s7455 + $0x38] sm:$0xff]
    %v7464 = vld [vmem:[%s7455 + $0x40] sm:$0xff]
    %v7465 = vld [vmem:[%s7455 + $0x48] sm:$0xff]
    %v7466 = vld [vmem:[%s7455 + $0x50] sm:$0xff]
    %v7467 = vld [vmem:[%s7455 + $0x58] sm:$0xff]
    %v7468 = vld [vmem:[%s7455 + $0x60] sm:$0xff]
    %v7469 = vld [vmem:[%s7455 + $0x68] sm:$0xff]
    %v7470 = vld [vmem:[%s7455 + $0x70] sm:$0xff]
    %v7471 = vld [vmem:[%s7455 + $0x78] sm:$0xff]
    %v7472 = vld [vmem:[%s7455 + $0x80] sm:$0xff]
    %v7473 = vld [vmem:[%s7455 + $0x88] sm:$0xff]
    %v7474 = vld [vmem:[%s7455 + $0x90] sm:$0xff]
    %v7475 = vld [vmem:[%s7455 + $0x98] sm:$0xff]
    %v7476 = vld [vmem:[%s7455 + $0xa0] sm:$0xff]
    %v7477 = vld [vmem:[%s7455 + $0xa8] sm:$0xff]
    %v7478 = vld [vmem:[%s7455 + $0xb0] sm:$0xff]
    %v7479 = vld [vmem:[%s7455 + $0xb8] sm:$0xff]
    %v7480 = vld [vmem:[%s7455 + $0xc0] sm:$0xff]
    %v7481 = vld [vmem:[%s7455 + $0xc8] sm:$0xff]
    %v7482 = vld [vmem:[%s7455 + $0xd0] sm:$0xff]
    %v7483 = vld [vmem:[%s7455 + $0xd8] sm:$0xff]
    %v7484 = vld [vmem:[%s7455 + $0xe0] sm:$0xff]
    %v7485 = vld [vmem:[%s7455 + $0xe8] sm:$0xff]
    %v7486 = vld [vmem:[%s7455 + $0xf0] sm:$0xff]
    %v7487 = vld [vmem:[%s7455 + $0xf8] sm:$0xff]
    %v7488 = vld [vmem:[%s7455 + $0x100] sm:$0xff]
    %v7489 = vld [vmem:[%s7455 + $0x108] sm:$0xff]
    %v7490 = vld [vmem:[%s7455 + $0x110] sm:$0xff]
    %v7491 = vld [vmem:[%s7455 + $0x118] sm:$0xff]
    %v7492 = vld [vmem:[%s7455 + $0x120] sm:$0xff]
    %v7493 = vld [vmem:[%s7455 + $0x128] sm:$0xff]
    %v7494 = vld [vmem:[%s7455 + $0x130] sm:$0xff]
    %v7495 = vld [vmem:[%s7455 + $0x138] sm:$0xff]
    %v7496 = vld [vmem:[%s7455 + $0x140] sm:$0xff]
    %v7497 = vld [vmem:[%s7455 + $0x148] sm:$0xff]
    %v7498 = vld [vmem:[%s7455 + $0x150] sm:$0xff]
    %v7499 = vld [vmem:[%s7455 + $0x158] sm:$0xff]
    %v7500 = vld [vmem:[%s7455 + $0x160] sm:$0xff]
    %v7501 = vld [vmem:[%s7455 + $0x168] sm:$0xff]
    %v7502 = vld [vmem:[%s7455 + $0x170] sm:$0xff]
    %v7503 = vld [vmem:[%s7455 + $0x178] sm:$0xff]
    %v7504 = vld [vmem:[%s7455 + $0x180] sm:$0xff]
    %v7505 = vld [vmem:[%s7455 + $0x188] sm:$0xff]
    %v7506 = vld [vmem:[%s7455 + $0x190] sm:$0xff]
    %v7507 = vld [vmem:[%s7455 + $0x198] sm:$0xff]
    %v7508 = vld [vmem:[%s7455 + $0x1a0] sm:$0xff]
    %v7509 = vld [vmem:[%s7455 + $0x1a8] sm:$0xff]
    %v7510 = vld [vmem:[%s7455 + $0x1b0] sm:$0xff]
    %v7511 = vld [vmem:[%s7455 + $0x1b8] sm:$0xff]
    %v7512 = vld [vmem:[%s7455 + $0x1c0] sm:$0xff]
    %v7513 = vld [vmem:[%s7455 + $0x1c8] sm:$0xff]
    %v7514 = vld [vmem:[%s7455 + $0x1d0] sm:$0xff]
    %v7515 = vld [vmem:[%s7455 + $0x1d8] sm:$0xff]
    %v7516 = vld [vmem:[%s7455 + $0x1e0] sm:$0xff]
    %v7517 = vld [vmem:[%s7455 + $0x1e8] sm:$0xff]
    %v7518 = vld [vmem:[%s7455 + $0x1f0] sm:$0xff]
    %v7519 = vld [vmem:[%s7455 + $0x1f8] sm:$0xff]
    %v7520 = vld [vmem:[%s7455 + $0x200] sm:$0xff]
    %v7521 = vld [vmem:[%s7455 + $0x208] sm:$0xff]
    %v7522 = vld [vmem:[%s7455 + $0x210] sm:$0xff]
    %v7523 = vld [vmem:[%s7455 + $0x218] sm:$0xff]
    %v7524 = vld [vmem:[%s7455 + $0x220] sm:$0xff]
    %v7525 = vld [vmem:[%s7455 + $0x228] sm:$0xff]
    %v7526 = vld [vmem:[%s7455 + $0x230] sm:$0xff]
    %v7527 = vld [vmem:[%s7455 + $0x238] sm:$0xff]
    %v7528 = vld [vmem:[%s7455 + $0x240] sm:$0xff]
    %v7529 = vld [vmem:[%s7455 + $0x248] sm:$0xff]
    %v7530 = vld [vmem:[%s7455 + $0x250] sm:$0xff]
    %v7531 = vld [vmem:[%s7455 + $0x258] sm:$0xff]
    %v7532 = vld [vmem:[%s7455 + $0x260] sm:$0xff]
    %v7533 = vld [vmem:[%s7455 + $0x268] sm:$0xff]
    %v7534 = vld [vmem:[%s7455 + $0x270] sm:$0xff]
    %v7535 = vld [vmem:[%s7455 + $0x278] sm:$0xff]
    %v7536 = vld [vmem:[%s7455 + $0x280] sm:$0xff]
    %v7537 = vld [vmem:[%s7455 + $0x288] sm:$0xff]
    %v7538 = vld [vmem:[%s7455 + $0x290] sm:$0xff]
    %v7539 = vld [vmem:[%s7455 + $0x298] sm:$0xff]
    %v7540 = vld [vmem:[%s7455 + $0x2a0] sm:$0xff]
    %v7541 = vld [vmem:[%s7455 + $0x2a8] sm:$0xff]
    %v7542 = vld [vmem:[%s7455 + $0x2b0] sm:$0xff]
    %v7543 = vld [vmem:[%s7455 + $0x2b8] sm:$0xff]
    %v7544 = vld [vmem:[%s7455 + $0x2c0] sm:$0xff]
    %v7545 = vld [vmem:[%s7455 + $0x2c8] sm:$0xff]
    %v7546 = vld [vmem:[%s7455 + $0x2d0] sm:$0xff]
    %v7547 = vld [vmem:[%s7455 + $0x2d8] sm:$0xff]
    %v7548 = vld [vmem:[%s7455 + $0x2e0] sm:$0xff]
    %v7549 = vld [vmem:[%s7455 + $0x2e8] sm:$0xff]
    %v7550 = vld [vmem:[%s7455 + $0x2f0] sm:$0xff]
    %v7551 = vld [vmem:[%s7455 + $0x2f8] sm:$0xff]
    %v7552 = vld [vmem:[%s7455 + $0x300] sm:$0xff]
    %v7553 = vld [vmem:[%s7455 + $0x308] sm:$0xff]
    %v7554 = vld [vmem:[%s7455 + $0x310] sm:$0xff]
    %v7555 = vld [vmem:[%s7455 + $0x318] sm:$0xff]
    %v7556 = vld [vmem:[%s7455 + $0x320] sm:$0xff]
    %v7557 = vld [vmem:[%s7455 + $0x328] sm:$0xff]
    %v7558 = vld [vmem:[%s7455 + $0x330] sm:$0xff]
    %v7559 = vld [vmem:[%s7455 + $0x338] sm:$0xff]
    %v7560 = vld [vmem:[%s7455 + $0x340] sm:$0xff]
    %v7561 = vld [vmem:[%s7455 + $0x348] sm:$0xff]
    %v7562 = vld [vmem:[%s7455 + $0x350] sm:$0xff]
    %v7563 = vld [vmem:[%s7455 + $0x358] sm:$0xff]
    %v7564 = vld [vmem:[%s7455 + $0x360] sm:$0xff]
    %v7565 = vld [vmem:[%s7455 + $0x368] sm:$0xff]
    %v7566 = vld [vmem:[%s7455 + $0x370] sm:$0xff]
    %v7567 = vld [vmem:[%s7455 + $0x378] sm:$0xff]
    %v7568 = vld [vmem:[%s7455 + $0x380] sm:$0xff]
    %v7569 = vld [vmem:[%s7455 + $0x388] sm:$0xff]
    %v7570 = vld [vmem:[%s7455 + $0x390] sm:$0xff]
    %v7571 = vld [vmem:[%s7455 + $0x398] sm:$0xff]
    %v7572 = vld [vmem:[%s7455 + $0x3a0] sm:$0xff]
    %v7573 = vld [vmem:[%s7455 + $0x3a8] sm:$0xff]
    %v7574 = vld [vmem:[%s7455 + $0x3b0] sm:$0xff]
    %v7575 = vld [vmem:[%s7455 + $0x3b8] sm:$0xff]
    %v7576 = vld [vmem:[%s7455 + $0x3c0] sm:$0xff]
    %v7577 = vld [vmem:[%s7455 + $0x3c8] sm:$0xff]
    %v7578 = vld [vmem:[%s7455 + $0x3d0] sm:$0xff]
    %v7579 = vld [vmem:[%s7455 + $0x3d8] sm:$0xff]
    %v7580 = vld [vmem:[%s7455 + $0x3e0] sm:$0xff]
    %v7581 = vld [vmem:[%s7455 + $0x3e8] sm:$0xff]
    %v7582 = vld [vmem:[%s7455 + $0x3f0] sm:$0xff]
    %v7583 = vld [vmem:[%s7455 + $0x3f8] sm:$0xff]
    %s7584 = scalar_lea.vmem [#allocation17], 5
    %v7585 = vld [vmem:[%s7584] ss:$8 sm:$0xf]
    %v7587 = vlaneseq
    %v7588 = vshrl.u32 %v7587, 7
    %v7589 = vsub.s32 0, %v7588
    %v7590 = vrot.slane %v7585, %v7589
    %v7591 = vlaneseq
    %v7592 = vshrl.u32 %v7591, 7
    %v7593 = vsub.s32 1, %v7592
    %v7594 = vrot.slane %v7585, %v7593
    %v7595 = vlaneseq
    %v7596 = vshrl.u32 %v7595, 7
    %v7597 = vsub.s32 2, %v7596
    %v7598 = vrot.slane %v7585, %v7597
    %v7599 = vlaneseq
    %v7600 = vshrl.u32 %v7599, 7
    %v7601 = vsub.s32 3, %v7600
    %v7602 = vrot.slane %v7585, %v7601
    %v7735 = vunpack.c.l.b16 %v7456
    %v7736 = vunpack.c.h.b16 %v7456
    %v7737 = vunpack.c.l.b16 %v7457
    %v7738 = vunpack.c.h.b16 %v7457
    %v7739 = vunpack.c.l.b16 %v7458
    %v7740 = vunpack.c.h.b16 %v7458
    %v7741 = vunpack.c.l.b16 %v7459
    %v7742 = vunpack.c.h.b16 %v7459
    %v7743 = vunpack.c.l.b16 %v7460
    %v7744 = vunpack.c.h.b16 %v7460
    %v7745 = vunpack.c.l.b16 %v7461
    %v7746 = vunpack.c.h.b16 %v7461
    %v7747 = vunpack.c.l.b16 %v7462
    %v7748 = vunpack.c.h.b16 %v7462
    %v7749 = vunpack.c.l.b16 %v7463
    %v7750 = vunpack.c.h.b16 %v7463
    %v7751 = vunpack.c.l.b16 %v7464
    %v7752 = vunpack.c.h.b16 %v7464
    %v7753 = vunpack.c.l.b16 %v7465
    %v7754 = vunpack.c.h.b16 %v7465
    %v7755 = vunpack.c.l.b16 %v7466
    %v7756 = vunpack.c.h.b16 %v7466
    %v7757 = vunpack.c.l.b16 %v7467
    %v7758 = vunpack.c.h.b16 %v7467
    %v7759 = vunpack.c.l.b16 %v7468
    %v7760 = vunpack.c.h.b16 %v7468
    %v7761 = vunpack.c.l.b16 %v7469
    %v7762 = vunpack.c.h.b16 %v7469
    %v7763 = vunpack.c.l.b16 %v7470
    %v7764 = vunpack.c.h.b16 %v7470
    %v7765 = vunpack.c.l.b16 %v7471
    %v7766 = vunpack.c.h.b16 %v7471
    %v7767 = vunpack.c.l.b16 %v7472
    %v7768 = vunpack.c.h.b16 %v7472
    %v7769 = vunpack.c.l.b16 %v7473
    %v7770 = vunpack.c.h.b16 %v7473
    %v7771 = vunpack.c.l.b16 %v7474
    %v7772 = vunpack.c.h.b16 %v7474
    %v7773 = vunpack.c.l.b16 %v7475
    %v7774 = vunpack.c.h.b16 %v7475
    %v7775 = vunpack.c.l.b16 %v7476
    %v7776 = vunpack.c.h.b16 %v7476
    %v7777 = vunpack.c.l.b16 %v7477
    %v7778 = vunpack.c.h.b16 %v7477
    %v7779 = vunpack.c.l.b16 %v7478
    %v7780 = vunpack.c.h.b16 %v7478
    %v7781 = vunpack.c.l.b16 %v7479
    %v7782 = vunpack.c.h.b16 %v7479
    %v7783 = vunpack.c.l.b16 %v7480
    %v7784 = vunpack.c.h.b16 %v7480
    %v7785 = vunpack.c.l.b16 %v7481
    %v7786 = vunpack.c.h.b16 %v7481
    %v7787 = vunpack.c.l.b16 %v7482
    %v7788 = vunpack.c.h.b16 %v7482
    %v7789 = vunpack.c.l.b16 %v7483
    %v7790 = vunpack.c.h.b16 %v7483
    %v7791 = vunpack.c.l.b16 %v7484
    %v7792 = vunpack.c.h.b16 %v7484
    %v7793 = vunpack.c.l.b16 %v7485
    %v7794 = vunpack.c.h.b16 %v7485
    %v7795 = vunpack.c.l.b16 %v7486
    %v7796 = vunpack.c.h.b16 %v7486
    %v7797 = vunpack.c.l.b16 %v7487
    %v7798 = vunpack.c.h.b16 %v7487
    %v7799 = vunpack.c.l.b16 %v7488
    %v7800 = vunpack.c.h.b16 %v7488
    %v7801 = vunpack.c.l.b16 %v7489
    %v7802 = vunpack.c.h.b16 %v7489
    %v7803 = vunpack.c.l.b16 %v7490
    %v7804 = vunpack.c.h.b16 %v7490
    %v7805 = vunpack.c.l.b16 %v7491
    %v7806 = vunpack.c.h.b16 %v7491
    %v7807 = vunpack.c.l.b16 %v7492
    %v7808 = vunpack.c.h.b16 %v7492
    %v7809 = vunpack.c.l.b16 %v7493
    %v7810 = vunpack.c.h.b16 %v7493
    %v7811 = vunpack.c.l.b16 %v7494
    %v7812 = vunpack.c.h.b16 %v7494
    %v7813 = vunpack.c.l.b16 %v7495
    %v7814 = vunpack.c.h.b16 %v7495
    %v7815 = vunpack.c.l.b16 %v7496
    %v7816 = vunpack.c.h.b16 %v7496
    %v7817 = vunpack.c.l.b16 %v7497
    %v7818 = vunpack.c.h.b16 %v7497
    %v7819 = vunpack.c.l.b16 %v7498
    %v7820 = vunpack.c.h.b16 %v7498
    %v7821 = vunpack.c.l.b16 %v7499
    %v7822 = vunpack.c.h.b16 %v7499
    %v7823 = vunpack.c.l.b16 %v7500
    %v7824 = vunpack.c.h.b16 %v7500
    %v7825 = vunpack.c.l.b16 %v7501
    %v7826 = vunpack.c.h.b16 %v7501
    %v7827 = vunpack.c.l.b16 %v7502
    %v7828 = vunpack.c.h.b16 %v7502
    %v7829 = vunpack.c.l.b16 %v7503
    %v7830 = vunpack.c.h.b16 %v7503
    %v7831 = vunpack.c.l.b16 %v7504
    %v7832 = vunpack.c.h.b16 %v7504
    %v7833 = vunpack.c.l.b16 %v7505
    %v7834 = vunpack.c.h.b16 %v7505
    %v7835 = vunpack.c.l.b16 %v7506
    %v7836 = vunpack.c.h.b16 %v7506
    %v7837 = vunpack.c.l.b16 %v7507
    %v7838 = vunpack.c.h.b16 %v7507
    %v7839 = vunpack.c.l.b16 %v7508
    %v7840 = vunpack.c.h.b16 %v7508
    %v7841 = vunpack.c.l.b16 %v7509
    %v7842 = vunpack.c.h.b16 %v7509
    %v7843 = vunpack.c.l.b16 %v7510
    %v7844 = vunpack.c.h.b16 %v7510
    %v7845 = vunpack.c.l.b16 %v7511
    %v7846 = vunpack.c.h.b16 %v7511
    %v7847 = vunpack.c.l.b16 %v7512
    %v7848 = vunpack.c.h.b16 %v7512
    %v7849 = vunpack.c.l.b16 %v7513
    %v7850 = vunpack.c.h.b16 %v7513
    %v7851 = vunpack.c.l.b16 %v7514
    %v7852 = vunpack.c.h.b16 %v7514
    %v7853 = vunpack.c.l.b16 %v7515
    %v7854 = vunpack.c.h.b16 %v7515
    %v7855 = vunpack.c.l.b16 %v7516
    %v7856 = vunpack.c.h.b16 %v7516
    %v7857 = vunpack.c.l.b16 %v7517
    %v7858 = vunpack.c.h.b16 %v7517
    %v7859 = vunpack.c.l.b16 %v7518
    %v7860 = vunpack.c.h.b16 %v7518
    %v7861 = vunpack.c.l.b16 %v7519
    %v7862 = vunpack.c.h.b16 %v7519
    %v7863 = vunpack.c.l.b16 %v7520
    %v7864 = vunpack.c.h.b16 %v7520
    %v7865 = vunpack.c.l.b16 %v7521
    %v7866 = vunpack.c.h.b16 %v7521
    %v7867 = vunpack.c.l.b16 %v7522
    %v7868 = vunpack.c.h.b16 %v7522
    %v7869 = vunpack.c.l.b16 %v7523
    %v7870 = vunpack.c.h.b16 %v7523
    %v7871 = vunpack.c.l.b16 %v7524
    %v7872 = vunpack.c.h.b16 %v7524
    %v7873 = vunpack.c.l.b16 %v7525
    %v7874 = vunpack.c.h.b16 %v7525
    %v7875 = vunpack.c.l.b16 %v7526
    %v7876 = vunpack.c.h.b16 %v7526
    %v7877 = vunpack.c.l.b16 %v7527
    %v7878 = vunpack.c.h.b16 %v7527
    %v7879 = vunpack.c.l.b16 %v7528
    %v7880 = vunpack.c.h.b16 %v7528
    %v7881 = vunpack.c.l.b16 %v7529
    %v7882 = vunpack.c.h.b16 %v7529
    %v7883 = vunpack.c.l.b16 %v7530
    %v7884 = vunpack.c.h.b16 %v7530
    %v7885 = vunpack.c.l.b16 %v7531
    %v7886 = vunpack.c.h.b16 %v7531
    %v7887 = vunpack.c.l.b16 %v7532
    %v7888 = vunpack.c.h.b16 %v7532
    %v7889 = vunpack.c.l.b16 %v7533
    %v7890 = vunpack.c.h.b16 %v7533
    %v7891 = vunpack.c.l.b16 %v7534
    %v7892 = vunpack.c.h.b16 %v7534
    %v7893 = vunpack.c.l.b16 %v7535
    %v7894 = vunpack.c.h.b16 %v7535
    %v7895 = vunpack.c.l.b16 %v7536
    %v7896 = vunpack.c.h.b16 %v7536
    %v7897 = vunpack.c.l.b16 %v7537
    %v7898 = vunpack.c.h.b16 %v7537
    %v7899 = vunpack.c.l.b16 %v7538
    %v7900 = vunpack.c.h.b16 %v7538
    %v7901 = vunpack.c.l.b16 %v7539
    %v7902 = vunpack.c.h.b16 %v7539
    %v7903 = vunpack.c.l.b16 %v7540
    %v7904 = vunpack.c.h.b16 %v7540
    %v7905 = vunpack.c.l.b16 %v7541
    %v7906 = vunpack.c.h.b16 %v7541
    %v7907 = vunpack.c.l.b16 %v7542
    %v7908 = vunpack.c.h.b16 %v7542
    %v7909 = vunpack.c.l.b16 %v7543
    %v7910 = vunpack.c.h.b16 %v7543
    %v7911 = vunpack.c.l.b16 %v7544
    %v7912 = vunpack.c.h.b16 %v7544
    %v7913 = vunpack.c.l.b16 %v7545
    %v7914 = vunpack.c.h.b16 %v7545
    %v7915 = vunpack.c.l.b16 %v7546
    %v7916 = vunpack.c.h.b16 %v7546
    %v7917 = vunpack.c.l.b16 %v7547
    %v7918 = vunpack.c.h.b16 %v7547
    %v7919 = vunpack.c.l.b16 %v7548
    %v7920 = vunpack.c.h.b16 %v7548
    %v7921 = vunpack.c.l.b16 %v7549
    %v7922 = vunpack.c.h.b16 %v7549
    %v7923 = vunpack.c.l.b16 %v7550
    %v7924 = vunpack.c.h.b16 %v7550
    %v7925 = vunpack.c.l.b16 %v7551
    %v7926 = vunpack.c.h.b16 %v7551
    %v7927 = vunpack.c.l.b16 %v7552
    %v7928 = vunpack.c.h.b16 %v7552
    %v7929 = vunpack.c.l.b16 %v7553
    %v7930 = vunpack.c.h.b16 %v7553
    %v7931 = vunpack.c.l.b16 %v7554
    %v7932 = vunpack.c.h.b16 %v7554
    %v7933 = vunpack.c.l.b16 %v7555
    %v7934 = vunpack.c.h.b16 %v7555
    %v7935 = vunpack.c.l.b16 %v7556
    %v7936 = vunpack.c.h.b16 %v7556
    %v7937 = vunpack.c.l.b16 %v7557
    %v7938 = vunpack.c.h.b16 %v7557
    %v7939 = vunpack.c.l.b16 %v7558
    %v7940 = vunpack.c.h.b16 %v7558
    %v7941 = vunpack.c.l.b16 %v7559
    %v7942 = vunpack.c.h.b16 %v7559
    %v7943 = vunpack.c.l.b16 %v7560
    %v7944 = vunpack.c.h.b16 %v7560
    %v7945 = vunpack.c.l.b16 %v7561
    %v7946 = vunpack.c.h.b16 %v7561
    %v7947 = vunpack.c.l.b16 %v7562
    %v7948 = vunpack.c.h.b16 %v7562
    %v7949 = vunpack.c.l.b16 %v7563
    %v7950 = vunpack.c.h.b16 %v7563
    %v7951 = vunpack.c.l.b16 %v7564
    %v7952 = vunpack.c.h.b16 %v7564
    %v7953 = vunpack.c.l.b16 %v7565
    %v7954 = vunpack.c.h.b16 %v7565
    %v7955 = vunpack.c.l.b16 %v7566
    %v7956 = vunpack.c.h.b16 %v7566
    %v7957 = vunpack.c.l.b16 %v7567
    %v7958 = vunpack.c.h.b16 %v7567
    %v7959 = vunpack.c.l.b16 %v7568
    %v7960 = vunpack.c.h.b16 %v7568
    %v7961 = vunpack.c.l.b16 %v7569
    %v7962 = vunpack.c.h.b16 %v7569
    %v7963 = vunpack.c.l.b16 %v7570
    %v7964 = vunpack.c.h.b16 %v7570
    %v7965 = vunpack.c.l.b16 %v7571
    %v7966 = vunpack.c.h.b16 %v7571
    %v7967 = vunpack.c.l.b16 %v7572
    %v7968 = vunpack.c.h.b16 %v7572
    %v7969 = vunpack.c.l.b16 %v7573
    %v7970 = vunpack.c.h.b16 %v7573
    %v7971 = vunpack.c.l.b16 %v7574
    %v7972 = vunpack.c.h.b16 %v7574
    %v7973 = vunpack.c.l.b16 %v7575
    %v7974 = vunpack.c.h.b16 %v7575
    %v7975 = vunpack.c.l.b16 %v7576
    %v7976 = vunpack.c.h.b16 %v7576
    %v7977 = vunpack.c.l.b16 %v7577
    %v7978 = vunpack.c.h.b16 %v7577
    %v7979 = vunpack.c.l.b16 %v7578
    %v7980 = vunpack.c.h.b16 %v7578
    %v7981 = vunpack.c.l.b16 %v7579
    %v7982 = vunpack.c.h.b16 %v7579
    %v7983 = vunpack.c.l.b16 %v7580
    %v7984 = vunpack.c.h.b16 %v7580
    %v7985 = vunpack.c.l.b16 %v7581
    %v7986 = vunpack.c.h.b16 %v7581
    %v7987 = vunpack.c.l.b16 %v7582
    %v7988 = vunpack.c.h.b16 %v7582
    %v7989 = vunpack.c.l.b16 %v7583
    %v7990 = vunpack.c.h.b16 %v7583
    %v7991 = vpack.c.b16 %v7739, %v7735
    %v7992 = vpack.c.b16 %v7740, %v7736
    %v7993 = vpack.c.b16 %v7741, %v7737
    %v7994 = vpack.c.b16 %v7742, %v7738
    %v7995 = vpack.c.b16 %v7747, %v7743
    %v7996 = vpack.c.b16 %v7748, %v7744
    %v7997 = vpack.c.b16 %v7749, %v7745
    %v7998 = vpack.c.b16 %v7750, %v7746
    %v7999 = vpack.c.b16 %v7755, %v7751
    %v8000 = vpack.c.b16 %v7756, %v7752
    %v8001 = vpack.c.b16 %v7757, %v7753
    %v8002 = vpack.c.b16 %v7758, %v7754
    %v8003 = vpack.c.b16 %v7763, %v7759
    %v8004 = vpack.c.b16 %v7764, %v7760
    %v8005 = vpack.c.b16 %v7765, %v7761
    %v8006 = vpack.c.b16 %v7766, %v7762
    %v8007 = vpack.c.b16 %v7771, %v7767
    %v8008 = vpack.c.b16 %v7772, %v7768
    %v8009 = vpack.c.b16 %v7773, %v7769
    %v8010 = vpack.c.b16 %v7774, %v7770
    %v8011 = vpack.c.b16 %v7779, %v7775
    %v8012 = vpack.c.b16 %v7780, %v7776
    %v8013 = vpack.c.b16 %v7781, %v7777
    %v8014 = vpack.c.b16 %v7782, %v7778
    %v8015 = vpack.c.b16 %v7787, %v7783
    %v8016 = vpack.c.b16 %v7788, %v7784
    %v8017 = vpack.c.b16 %v7789, %v7785
    %v8018 = vpack.c.b16 %v7790, %v7786
    %v8019 = vpack.c.b16 %v7795, %v7791
    %v8020 = vpack.c.b16 %v7796, %v7792
    %v8021 = vpack.c.b16 %v7797, %v7793
    %v8022 = vpack.c.b16 %v7798, %v7794
    %v8023 = vpack.c.b16 %v7803, %v7799
    %v8024 = vpack.c.b16 %v7804, %v7800
    %v8025 = vpack.c.b16 %v7805, %v7801
    %v8026 = vpack.c.b16 %v7806, %v7802
    %v8027 = vpack.c.b16 %v7811, %v7807
    %v8028 = vpack.c.b16 %v7812, %v7808
    %v8029 = vpack.c.b16 %v7813, %v7809
    %v8030 = vpack.c.b16 %v7814, %v7810
    %v8031 = vpack.c.b16 %v7819, %v7815
    %v8032 = vpack.c.b16 %v7820, %v7816
    %v8033 = vpack.c.b16 %v7821, %v7817
    %v8034 = vpack.c.b16 %v7822, %v7818
    %v8035 = vpack.c.b16 %v7827, %v7823
    %v8036 = vpack.c.b16 %v7828, %v7824
    %v8037 = vpack.c.b16 %v7829, %v7825
    %v8038 = vpack.c.b16 %v7830, %v7826
    %v8039 = vpack.c.b16 %v7835, %v7831
    %v8040 = vpack.c.b16 %v7836, %v7832
    %v8041 = vpack.c.b16 %v7837, %v7833
    %v8042 = vpack.c.b16 %v7838, %v7834
    %v8043 = vpack.c.b16 %v7843, %v7839
    %v8044 = vpack.c.b16 %v7844, %v7840
    %v8045 = vpack.c.b16 %v7845, %v7841
    %v8046 = vpack.c.b16 %v7846, %v7842
    %v8047 = vpack.c.b16 %v7851, %v7847
    %v8048 = vpack.c.b16 %v7852, %v7848
    %v8049 = vpack.c.b16 %v7853, %v7849
    %v8050 = vpack.c.b16 %v7854, %v7850
    %v8051 = vpack.c.b16 %v7859, %v7855
    %v8052 = vpack.c.b16 %v7860, %v7856
    %v8053 = vpack.c.b16 %v7861, %v7857
    %v8054 = vpack.c.b16 %v7862, %v7858
    %v8055 = vpack.c.b16 %v7867, %v7863
    %v8056 = vpack.c.b16 %v7868, %v7864
    %v8057 = vpack.c.b16 %v7869, %v7865
    %v8058 = vpack.c.b16 %v7870, %v7866
    %v8059 = vpack.c.b16 %v7875, %v7871
    %v8060 = vpack.c.b16 %v7876, %v7872
    %v8061 = vpack.c.b16 %v7877, %v7873
    %v8062 = vpack.c.b16 %v7878, %v7874
    %v8063 = vpack.c.b16 %v7883, %v7879
    %v8064 = vpack.c.b16 %v7884, %v7880
    %v8065 = vpack.c.b16 %v7885, %v7881
    %v8066 = vpack.c.b16 %v7886, %v7882
    %v8067 = vpack.c.b16 %v7891, %v7887
    %v8068 = vpack.c.b16 %v7892, %v7888
    %v8069 = vpack.c.b16 %v7893, %v7889
    %v8070 = vpack.c.b16 %v7894, %v7890
    %v8071 = vpack.c.b16 %v7899, %v7895
    %v8072 = vpack.c.b16 %v7900, %v7896
    %v8073 = vpack.c.b16 %v7901, %v7897
    %v8074 = vpack.c.b16 %v7902, %v7898
    %v8075 = vpack.c.b16 %v7907, %v7903
    %v8076 = vpack.c.b16 %v7908, %v7904
    %v8077 = vpack.c.b16 %v7909, %v7905
    %v8078 = vpack.c.b16 %v7910, %v7906
    %v8079 = vpack.c.b16 %v7915, %v7911
    %v8080 = vpack.c.b16 %v7916, %v7912
    %v8081 = vpack.c.b16 %v7917, %v7913
    %v8082 = vpack.c.b16 %v7918, %v7914
    %v8083 = vpack.c.b16 %v7923, %v7919
    %v8084 = vpack.c.b16 %v7924, %v7920
    %v8085 = vpack.c.b16 %v7925, %v7921
    %v8086 = vpack.c.b16 %v7926, %v7922
    %v8087 = vpack.c.b16 %v7931, %v7927
    %v8088 = vpack.c.b16 %v7932, %v7928
    %v8089 = vpack.c.b16 %v7933, %v7929
    %v8090 = vpack.c.b16 %v7934, %v7930
    %v8091 = vpack.c.b16 %v7939, %v7935
    %v8092 = vpack.c.b16 %v7940, %v7936
    %v8093 = vpack.c.b16 %v7941, %v7937
    %v8094 = vpack.c.b16 %v7942, %v7938
    %v8095 = vpack.c.b16 %v7947, %v7943
    %v8096 = vpack.c.b16 %v7948, %v7944
    %v8097 = vpack.c.b16 %v7949, %v7945
    %v8098 = vpack.c.b16 %v7950, %v7946
    %v8099 = vpack.c.b16 %v7955, %v7951
    %v8100 = vpack.c.b16 %v7956, %v7952
    %v8101 = vpack.c.b16 %v7957, %v7953
    %v8102 = vpack.c.b16 %v7958, %v7954
    %v8103 = vpack.c.b16 %v7963, %v7959
    %v8104 = vpack.c.b16 %v7964, %v7960
    %v8105 = vpack.c.b16 %v7965, %v7961
    %v8106 = vpack.c.b16 %v7966, %v7962
    %v8107 = vpack.c.b16 %v7971, %v7967
    %v8108 = vpack.c.b16 %v7972, %v7968
    %v8109 = vpack.c.b16 %v7973, %v7969
    %v8110 = vpack.c.b16 %v7974, %v7970
    %v8111 = vpack.c.b16 %v7979, %v7975
    %v8112 = vpack.c.b16 %v7980, %v7976
    %v8113 = vpack.c.b16 %v7981, %v7977
    %v8114 = vpack.c.b16 %v7982, %v7978
    %v8115 = vpack.c.b16 %v7987, %v7983
    %v8116 = vpack.c.b16 %v7988, %v7984
    %v8117 = vpack.c.b16 %v7989, %v7985
    %v8118 = vpack.c.b16 %v7990, %v7986
    %8247 = vmatprep.subr.bf16.mxu0 %v7992
    %8248 = vmatpush1.bf16.msra.mxu0 %v7991
    %8249 = vmatprep.subr.bf16.mxu0 %v7996
    %8250 = vmatpush1.bf16.msra.mxu0 %v7995
    %8251 = vmatprep.subr.bf16.mxu0 %v8000
    %8252 = vmatpush1.bf16.msra.mxu0 %v7999
    %8253 = vmatprep.subr.bf16.mxu0 %v8004
    %8254 = vmatpush1.bf16.msra.mxu0 %v8003
    %8255 = vmatprep.subr.bf16.mxu0 %v8008
    %8256 = vmatpush1.bf16.msra.mxu0 %v8007
    %8257 = vmatprep.subr.bf16.mxu0 %v8012
    %8258 = vmatpush1.bf16.msra.mxu0 %v8011
    %8259 = vmatprep.subr.bf16.mxu0 %v8016
    %8260 = vmatpush1.bf16.msra.mxu0 %v8015
    %8261 = vmatprep.subr.bf16.mxu0 %v8020
    %8262 = vmatpush1.bf16.msra.mxu0 %v8019
    %8263 = vmatprep.subr.bf16.mxu0 %v8024
    %8264 = vmatpush1.bf16.msra.mxu0 %v8023
    %8265 = vmatprep.subr.bf16.mxu0 %v8028
    %8266 = vmatpush1.bf16.msra.mxu0 %v8027
    %8267 = vmatprep.subr.bf16.mxu0 %v8032
    %8268 = vmatpush1.bf16.msra.mxu0 %v8031
    %8269 = vmatprep.subr.bf16.mxu0 %v8036
    %8270 = vmatpush1.bf16.msra.mxu0 %v8035
    %8271 = vmatprep.subr.bf16.mxu0 %v8040
    %8272 = vmatpush1.bf16.msra.mxu0 %v8039
    %8273 = vmatprep.subr.bf16.mxu0 %v8044
    %8274 = vmatpush1.bf16.msra.mxu0 %v8043
    %8275 = vmatprep.subr.bf16.mxu0 %v8048
    %8276 = vmatpush1.bf16.msra.mxu0 %v8047
    %8277 = vmatprep.subr.bf16.mxu0 %v8052
    %8278 = vmatpush1.bf16.msra.mxu0 %v8051
    %8279 = vmatprep.mubr.bf16.mxu0 %v7452
    %8280 = vmatmul.mubr.bf16.gmra.mrb[0].mxu0 %v7451
    %v8281 = vpop.f32.mrb[0].mxu0
    %v8282 = vadd.f32 %v7590, %v8281
    %v8283 = vpop.f32.mrb[0].mxu0
    %v8284 = vadd.f32 %v7594, %v8283
    %v8285 = vpop.f32.mrb[0].mxu0
    %v8286 = vadd.f32 %v7590, %v8285
    %v8287 = vpop.f32.mrb[0].mxu0
    %v8288 = vadd.f32 %v7594, %v8287
    %8289 = vdwg.mxu0
    %8290 = vmatprep.subr.bf16.mxu0 %v8056
    %8291 = vmatpush1.bf16.msra.mxu0 %v8055
    %8292 = vmatprep.subr.bf16.mxu0 %v8060
    %8293 = vmatpush1.bf16.msra.mxu0 %v8059
    %8294 = vmatprep.subr.bf16.mxu0 %v8064
    %8295 = vmatpush1.bf16.msra.mxu0 %v8063
    %8296 = vmatprep.subr.bf16.mxu0 %v8068
    %8297 = vmatpush1.bf16.msra.mxu0 %v8067
    %8298 = vmatprep.subr.bf16.mxu0 %v8072
    %8299 = vmatpush1.bf16.msra.mxu0 %v8071
    %8300 = vmatprep.subr.bf16.mxu0 %v8076
    %8301 = vmatpush1.bf16.msra.mxu0 %v8075
    %8302 = vmatprep.subr.bf16.mxu0 %v8080
    %8303 = vmatpush1.bf16.msra.mxu0 %v8079
    %8304 = vmatprep.subr.bf16.mxu0 %v8084
    %8305 = vmatpush1.bf16.msra.mxu0 %v8083
    %8306 = vmatprep.subr.bf16.mxu0 %v8088
    %8307 = vmatpush1.bf16.msra.mxu0 %v8087
    %8308 = vmatprep.subr.bf16.mxu0 %v8092
    %8309 = vmatpush1.bf16.msra.mxu0 %v8091
    %8310 = vmatprep.subr.bf16.mxu0 %v8096
    %8311 = vmatpush1.bf16.msra.mxu0 %v8095
    %8312 = vmatprep.subr.bf16.mxu0 %v8100
    %8313 = vmatpush1.bf16.msra.mxu0 %v8099
    %8314 = vmatprep.subr.bf16.mxu0 %v8104
    %8315 = vmatpush1.bf16.msra.mxu0 %v8103
    %8316 = vmatprep.subr.bf16.mxu0 %v8108
    %8317 = vmatpush1.bf16.msra.mxu0 %v8107
    %8318 = vmatprep.subr.bf16.mxu0 %v8112
    %8319 = vmatpush1.bf16.msra.mxu0 %v8111
    %8320 = vmatprep.subr.bf16.mxu0 %v8116
    %8321 = vmatpush1.bf16.msra.mxu0 %v8115
    %8322 = vmatprep.mubr.bf16.mxu0 %v7454
    %8323 = vmatmul.mubr.bf16.gmra.mrb[0].mxu0 %v7453
    %v8324 = vpop.f32.mrb[0].mxu0
    %v8325 = vadd.f32 %v8282, %v8324
    %v8326 = vpop.f32.mrb[0].mxu0
    %v8327 = vadd.f32 %v8284, %v8326
    %v8328 = vpop.f32.mrb[0].mxu0
    %v8329 = vadd.f32 %v8286, %v8328
    %v8330 = vpop.f32.mrb[0].mxu0
    %v8331 = vadd.f32 %v8288, %v8330
    %8332 = vdwg.mxu0
    %8333 = vmatprep.subr.bf16.mxu0 %v7994
    %8334 = vmatpush1.bf16.msra.mxu0 %v7993
    %8335 = vmatprep.subr.bf16.mxu0 %v7998
    %8336 = vmatpush1.bf16.msra.mxu0 %v7997
    %8337 = vmatprep.subr.bf16.mxu0 %v8002
    %8338 = vmatpush1.bf16.msra.mxu0 %v8001
    %8339 = vmatprep.subr.bf16.mxu0 %v8006
    %8340 = vmatpush1.bf16.msra.mxu0 %v8005
    %8341 = vmatprep.subr.bf16.mxu0 %v8010
    %8342 = vmatpush1.bf16.msra.mxu0 %v8009
    %8343 = vmatprep.subr.bf16.mxu0 %v8014
    %8344 = vmatpush1.bf16.msra.mxu0 %v8013
    %8345 = vmatprep.subr.bf16.mxu0 %v8018
    %8346 = vmatpush1.bf16.msra.mxu0 %v8017
    %8347 = vmatprep.subr.bf16.mxu0 %v8022
    %8348 = vmatpush1.bf16.msra.mxu0 %v8021
    %8349 = vmatprep.subr.bf16.mxu0 %v8026
    %8350 = vmatpush1.bf16.msra.mxu0 %v8025
    %8351 = vmatprep.subr.bf16.mxu0 %v8030
    %8352 = vmatpush1.bf16.msra.mxu0 %v8029
    %8353 = vmatprep.subr.bf16.mxu0 %v8034
    %8354 = vmatpush1.bf16.msra.mxu0 %v8033
    %8355 = vmatprep.subr.bf16.mxu0 %v8038
    %8356 = vmatpush1.bf16.msra.mxu0 %v8037
    %8357 = vmatprep.subr.bf16.mxu0 %v8042
    %8358 = vmatpush1.bf16.msra.mxu0 %v8041
    %8359 = vmatprep.subr.bf16.mxu0 %v8046
    %8360 = vmatpush1.bf16.msra.mxu0 %v8045
    %8361 = vmatprep.subr.bf16.mxu0 %v8050
    %8362 = vmatpush1.bf16.msra.mxu0 %v8049
    %8363 = vmatprep.subr.bf16.mxu0 %v8054
    %8364 = vmatpush1.bf16.msra.mxu0 %v8053
    %8365 = vmatprep.mubr.bf16.mxu0 %v7452
    %8366 = vmatmul.mubr.bf16.gmra.mrb[0].mxu0 %v7451
    %v8367 = vpop.f32.mrb[0].mxu0
    %v8368 = vadd.f32 %v7598, %v8367
    %v8369 = vpop.f32.mrb[0].mxu0
    %v8370 = vadd.f32 %v7602, %v8369
    %v8371 = vpop.f32.mrb[0].mxu0
    %v8372 = vadd.f32 %v7598, %v8371
    %v8373 = vpop.f32.mrb[0].mxu0
    %v8374 = vadd.f32 %v7602, %v8373
    %8375 = vdwg.mxu0
    %8376 = vmatprep.subr.bf16.mxu0 %v8058
    %8377 = vmatpush1.bf16.msra.mxu0 %v8057
    %8378 = vmatprep.subr.bf16.mxu0 %v8062
    %8379 = vmatpush1.bf16.msra.mxu0 %v8061
    %8380 = vmatprep.subr.bf16.mxu0 %v8066
    %8381 = vmatpush1.bf16.msra.mxu0 %v8065
    %8382 = vmatprep.subr.bf16.mxu0 %v8070
    %8383 = vmatpush1.bf16.msra.mxu0 %v8069
    %8384 = vmatprep.subr.bf16.mxu0 %v8074
    %8385 = vmatpush1.bf16.msra.mxu0 %v8073
    %8386 = vmatprep.subr.bf16.mxu0 %v8078
    %8387 = vmatpush1.bf16.msra.mxu0 %v8077
    %8388 = vmatprep.subr.bf16.mxu0 %v8082
    %8389 = vmatpush1.bf16.msra.mxu0 %v8081
    %8390 = vmatprep.subr.bf16.mxu0 %v8086
    %8391 = vmatpush1.bf16.msra.mxu0 %v8085
    %8392 = vmatprep.subr.bf16.mxu0 %v8090
    %8393 = vmatpush1.bf16.msra.mxu0 %v8089
    %8394 = vmatprep.subr.bf16.mxu0 %v8094
    %8395 = vmatpush1.bf16.msra.mxu0 %v8093
    %8396 = vmatprep.subr.bf16.mxu0 %v8098
    %8397 = vmatpush1.bf16.msra.mxu0 %v8097
    %8398 = vmatprep.subr.bf16.mxu0 %v8102
    %8399 = vmatpush1.bf16.msra.mxu0 %v8101
    %8400 = vmatprep.subr.bf16.mxu0 %v8106
    %8401 = vmatpush1.bf16.msra.mxu0 %v8105
    %8402 = vmatprep.subr.bf16.mxu0 %v8110
    %8403 = vmatpush1.bf16.msra.mxu0 %v8109
    %8404 = vmatprep.subr.bf16.mxu0 %v8114
    %8405 = vmatpush1.bf16.msra.mxu0 %v8113
    %8406 = vmatprep.subr.bf16.mxu0 %v8118
    %8407 = vmatpush1.bf16.msra.mxu0 %v8117
    %8408 = vmatprep.mubr.bf16.mxu0 %v7454
    %8409 = vmatmul.mubr.bf16.gmra.mrb[0].mxu0 %v7453
    %v8410 = vpop.f32.mrb[0].mxu0
    %v8411 = vadd.f32 %v8368, %v8410
    %v8412 = vpop.f32.mrb[0].mxu0
    %v8413 = vadd.f32 %v8370, %v8412
    %v8414 = vpop.f32.mrb[0].mxu0
    %v8415 = vadd.f32 %v8372, %v8414
    %v8416 = vpop.f32.mrb[0].mxu0
    %v8417 = vadd.f32 %v8374, %v8416
    %8418 = vdwg.mxu0
    %v8419 = vmax.f32 %v8325, 0.0
    %v8420 = vmax.f32 %v8327, 0.0
    %v8421 = vmax.f32 %v8411, 0.0
    %v8422 = vmax.f32 %v8413, 0.0
    %v8423 = vmax.f32 %v8329, 0.0
    %v8424 = vmax.f32 %v8331, 0.0
    %v8425 = vmax.f32 %v8415, 0.0
    %v8426 = vmax.f32 %v8417, 0.0
    %v8427 = vpack.c.bf16 %v8423, %v8419
    %v8428 = vpack.c.bf16 %v8424, %v8420
    %v8429 = vpack.c.bf16 %v8425, %v8421
    %v8430 = vpack.c.bf16 %v8426, %v8422
    %s8431 = scalar_lea.vmem [#allocation16], 6144
    %v8432 = vld [vmem:[%s8431] sm:$0xff]
    %v8433 = vld [vmem:[%s8431 + $0x8] sm:$0xff]
    %v8434 = vld [vmem:[%s8431 + $0x10] sm:$0xff]
    %v8435 = vld [vmem:[%s8431 + $0x18] sm:$0xff]
    %v8436 = vld [vmem:[%s8431 + $0x20] sm:$0xff]
    %v8437 = vld [vmem:[%s8431 + $0x28] sm:$0xff]
    %v8438 = vld [vmem:[%s8431 + $0x30] sm:$0xff]
    %v8439 = vld [vmem:[%s8431 + $0x38] sm:$0xff]
    %v8440 = vld [vmem:[%s8431 + $0x40] sm:$0xff]
    %v8441 = vld [vmem:[%s8431 + $0x48] sm:$0xff]
    %v8442 = vld [vmem:[%s8431 + $0x50] sm:$0xff]
    %v8443 = vld [vmem:[%s8431 + $0x58] sm:$0xff]
    %v8444 = vld [vmem:[%s8431 + $0x60] sm:$0xff]
    %v8445 = vld [vmem:[%s8431 + $0x68] sm:$0xff]
    %v8446 = vld [vmem:[%s8431 + $0x70] sm:$0xff]
    %v8447 = vld [vmem:[%s8431 + $0x78] sm:$0xff]
    %v8448 = vld [vmem:[%s8431 + $0x80] sm:$0xff]
    %v8449 = vld [vmem:[%s8431 + $0x88] sm:$0xff]
    %v8450 = vld [vmem:[%s8431 + $0x90] sm:$0xff]
    %v8451 = vld [vmem:[%s8431 + $0x98] sm:$0xff]
    %v8452 = vld [vmem:[%s8431 + $0xa0] sm:$0xff]
    %v8453 = vld [vmem:[%s8431 + $0xa8] sm:$0xff]
    %v8454 = vld [vmem:[%s8431 + $0xb0] sm:$0xff]
    %v8455 = vld [vmem:[%s8431 + $0xb8] sm:$0xff]
    %v8456 = vld [vmem:[%s8431 + $0xc0] sm:$0xff]
    %v8457 = vld [vmem:[%s8431 + $0xc8] sm:$0xff]
    %v8458 = vld [vmem:[%s8431 + $0xd0] sm:$0xff]
    %v8459 = vld [vmem:[%s8431 + $0xd8] sm:$0xff]
    %v8460 = vld [vmem:[%s8431 + $0xe0] sm:$0xff]
    %v8461 = vld [vmem:[%s8431 + $0xe8] sm:$0xff]
    %v8462 = vld [vmem:[%s8431 + $0xf0] sm:$0xff]
    %v8463 = vld [vmem:[%s8431 + $0xf8] sm:$0xff]
    %v8464 = vld [vmem:[%s8431 + $0x100] sm:$0xff]
    %v8465 = vld [vmem:[%s8431 + $0x108] sm:$0xff]
    %v8466 = vld [vmem:[%s8431 + $0x110] sm:$0xff]
    %v8467 = vld [vmem:[%s8431 + $0x118] sm:$0xff]
    %v8468 = vld [vmem:[%s8431 + $0x120] sm:$0xff]
    %v8469 = vld [vmem:[%s8431 + $0x128] sm:$0xff]
    %v8470 = vld [vmem:[%s8431 + $0x130] sm:$0xff]
    %v8471 = vld [vmem:[%s8431 + $0x138] sm:$0xff]
    %v8472 = vld [vmem:[%s8431 + $0x140] sm:$0xff]
    %v8473 = vld [vmem:[%s8431 + $0x148] sm:$0xff]
    %v8474 = vld [vmem:[%s8431 + $0x150] sm:$0xff]
    %v8475 = vld [vmem:[%s8431 + $0x158] sm:$0xff]
    %v8476 = vld [vmem:[%s8431 + $0x160] sm:$0xff]
    %v8477 = vld [vmem:[%s8431 + $0x168] sm:$0xff]
    %v8478 = vld [vmem:[%s8431 + $0x170] sm:$0xff]
    %v8479 = vld [vmem:[%s8431 + $0x178] sm:$0xff]
    %v8480 = vld [vmem:[%s8431 + $0x180] sm:$0xff]
    %v8481 = vld [vmem:[%s8431 + $0x188] sm:$0xff]
    %v8482 = vld [vmem:[%s8431 + $0x190] sm:$0xff]
    %v8483 = vld [vmem:[%s8431 + $0x198] sm:$0xff]
    %v8484 = vld [vmem:[%s8431 + $0x1a0] sm:$0xff]
    %v8485 = vld [vmem:[%s8431 + $0x1a8] sm:$0xff]
    %v8486 = vld [vmem:[%s8431 + $0x1b0] sm:$0xff]
    %v8487 = vld [vmem:[%s8431 + $0x1b8] sm:$0xff]
    %v8488 = vld [vmem:[%s8431 + $0x1c0] sm:$0xff]
    %v8489 = vld [vmem:[%s8431 + $0x1c8] sm:$0xff]
    %v8490 = vld [vmem:[%s8431 + $0x1d0] sm:$0xff]
    %v8491 = vld [vmem:[%s8431 + $0x1d8] sm:$0xff]
    %v8492 = vld [vmem:[%s8431 + $0x1e0] sm:$0xff]
    %v8493 = vld [vmem:[%s8431 + $0x1e8] sm:$0xff]
    %v8494 = vld [vmem:[%s8431 + $0x1f0] sm:$0xff]
    %v8495 = vld [vmem:[%s8431 + $0x1f8] sm:$0xff]
    %v8496 = vld [vmem:[%s8431 + $0x200] sm:$0xff]
    %v8497 = vld [vmem:[%s8431 + $0x208] sm:$0xff]
    %v8498 = vld [vmem:[%s8431 + $0x210] sm:$0xff]
    %v8499 = vld [vmem:[%s8431 + $0x218] sm:$0xff]
    %v8500 = vld [vmem:[%s8431 + $0x220] sm:$0xff]
    %v8501 = vld [vmem:[%s8431 + $0x228] sm:$0xff]
    %v8502 = vld [vmem:[%s8431 + $0x230] sm:$0xff]
    %v8503 = vld [vmem:[%s8431 + $0x238] sm:$0xff]
    %v8504 = vld [vmem:[%s8431 + $0x240] sm:$0xff]
    %v8505 = vld [vmem:[%s8431 + $0x248] sm:$0xff]
    %v8506 = vld [vmem:[%s8431 + $0x250] sm:$0xff]
    %v8507 = vld [vmem:[%s8431 + $0x258] sm:$0xff]
    %v8508 = vld [vmem:[%s8431 + $0x260] sm:$0xff]
    %v8509 = vld [vmem:[%s8431 + $0x268] sm:$0xff]
    %v8510 = vld [vmem:[%s8431 + $0x270] sm:$0xff]
    %v8511 = vld [vmem:[%s8431 + $0x278] sm:$0xff]
    %v8512 = vld [vmem:[%s8431 + $0x280] sm:$0xff]
    %v8513 = vld [vmem:[%s8431 + $0x288] sm:$0xff]
    %v8514 = vld [vmem:[%s8431 + $0x290] sm:$0xff]
    %v8515 = vld [vmem:[%s8431 + $0x298] sm:$0xff]
    %v8516 = vld [vmem:[%s8431 + $0x2a0] sm:$0xff]
    %v8517 = vld [vmem:[%s8431 + $0x2a8] sm:$0xff]
    %v8518 = vld [vmem:[%s8431 + $0x2b0] sm:$0xff]
    %v8519 = vld [vmem:[%s8431 + $0x2b8] sm:$0xff]
    %v8520 = vld [vmem:[%s8431 + $0x2c0] sm:$0xff]
    %v8521 = vld [vmem:[%s8431 + $0x2c8] sm:$0xff]
    %v8522 = vld [vmem:[%s8431 + $0x2d0] sm:$0xff]
    %v8523 = vld [vmem:[%s8431 + $0x2d8] sm:$0xff]
    %v8524 = vld [vmem:[%s8431 + $0x2e0] sm:$0xff]
    %v8525 = vld [vmem:[%s8431 + $0x2e8] sm:$0xff]
    %v8526 = vld [vmem:[%s8431 + $0x2f0] sm:$0xff]
    %v8527 = vld [vmem:[%s8431 + $0x2f8] sm:$0xff]
    %v8528 = vld [vmem:[%s8431 + $0x300] sm:$0xff]
    %v8529 = vld [vmem:[%s8431 + $0x308] sm:$0xff]
    %v8530 = vld [vmem:[%s8431 + $0x310] sm:$0xff]
    %v8531 = vld [vmem:[%s8431 + $0x318] sm:$0xff]
    %v8532 = vld [vmem:[%s8431 + $0x320] sm:$0xff]
    %v8533 = vld [vmem:[%s8431 + $0x328] sm:$0xff]
    %v8534 = vld [vmem:[%s8431 + $0x330] sm:$0xff]
    %v8535 = vld [vmem:[%s8431 + $0x338] sm:$0xff]
    %v8536 = vld [vmem:[%s8431 + $0x340] sm:$0xff]
    %v8537 = vld [vmem:[%s8431 + $0x348] sm:$0xff]
    %v8538 = vld [vmem:[%s8431 + $0x350] sm:$0xff]
    %v8539 = vld [vmem:[%s8431 + $0x358] sm:$0xff]
    %v8540 = vld [vmem:[%s8431 + $0x360] sm:$0xff]
    %v8541 = vld [vmem:[%s8431 + $0x368] sm:$0xff]
    %v8542 = vld [vmem:[%s8431 + $0x370] sm:$0xff]
    %v8543 = vld [vmem:[%s8431 + $0x378] sm:$0xff]
    %v8544 = vld [vmem:[%s8431 + $0x380] sm:$0xff]
    %v8545 = vld [vmem:[%s8431 + $0x388] sm:$0xff]
    %v8546 = vld [vmem:[%s8431 + $0x390] sm:$0xff]
    %v8547 = vld [vmem:[%s8431 + $0x398] sm:$0xff]
    %v8548 = vld [vmem:[%s8431 + $0x3a0] sm:$0xff]
    %v8549 = vld [vmem:[%s8431 + $0x3a8] sm:$0xff]
    %v8550 = vld [vmem:[%s8431 + $0x3b0] sm:$0xff]
    %v8551 = vld [vmem:[%s8431 + $0x3b8] sm:$0xff]
    %v8552 = vld [vmem:[%s8431 + $0x3c0] sm:$0xff]
    %v8553 = vld [vmem:[%s8431 + $0x3c8] sm:$0xff]
    %v8554 = vld [vmem:[%s8431 + $0x3d0] sm:$0xff]
    %v8555 = vld [vmem:[%s8431 + $0x3d8] sm:$0xff]
    %v8556 = vld [vmem:[%s8431 + $0x3e0] sm:$0xff]
    %v8557 = vld [vmem:[%s8431 + $0x3e8] sm:$0xff]
    %v8558 = vld [vmem:[%s8431 + $0x3f0] sm:$0xff]
    %v8559 = vld [vmem:[%s8431 + $0x3f8] sm:$0xff]
    %s8560 = scalar_lea.vmem [#allocation17], 6
    %v8561 = vld [vmem:[%s8560] ss:$8 sm:$0xf]
    %v8563 = vlaneseq
    %v8564 = vshrl.u32 %v8563, 7
    %v8565 = vsub.s32 0, %v8564
    %v8566 = vrot.slane %v8561, %v8565
    %v8567 = vlaneseq
    %v8568 = vshrl.u32 %v8567, 7
    %v8569 = vsub.s32 1, %v8568
    %v8570 = vrot.slane %v8561, %v8569
    %v8571 = vlaneseq
    %v8572 = vshrl.u32 %v8571, 7
    %v8573 = vsub.s32 2, %v8572
    %v8574 = vrot.slane %v8561, %v8573
    %v8575 = vlaneseq
    %v8576 = vshrl.u32 %v8575, 7
    %v8577 = vsub.s32 3, %v8576
    %v8578 = vrot.slane %v8561, %v8577
    %v8711 = vunpack.c.l.b16 %v8432
    %v8712 = vunpack.c.h.b16 %v8432
    %v8713 = vunpack.c.l.b16 %v8433
    %v8714 = vunpack.c.h.b16 %v8433
    %v8715 = vunpack.c.l.b16 %v8434
    %v8716 = vunpack.c.h.b16 %v8434
    %v8717 = vunpack.c.l.b16 %v8435
    %v8718 = vunpack.c.h.b16 %v8435
    %v8719 = vunpack.c.l.b16 %v8436
    %v8720 = vunpack.c.h.b16 %v8436
    %v8721 = vunpack.c.l.b16 %v8437
    %v8722 = vunpack.c.h.b16 %v8437
    %v8723 = vunpack.c.l.b16 %v8438
    %v8724 = vunpack.c.h.b16 %v8438
    %v8725 = vunpack.c.l.b16 %v8439
    %v8726 = vunpack.c.h.b16 %v8439
    %v8727 = vunpack.c.l.b16 %v8440
    %v8728 = vunpack.c.h.b16 %v8440
    %v8729 = vunpack.c.l.b16 %v8441
    %v8730 = vunpack.c.h.b16 %v8441
    %v8731 = vunpack.c.l.b16 %v8442
    %v8732 = vunpack.c.h.b16 %v8442
    %v8733 = vunpack.c.l.b16 %v8443
    %v8734 = vunpack.c.h.b16 %v8443
    %v8735 = vunpack.c.l.b16 %v8444
    %v8736 = vunpack.c.h.b16 %v8444
    %v8737 = vunpack.c.l.b16 %v8445
    %v8738 = vunpack.c.h.b16 %v8445
    %v8739 = vunpack.c.l.b16 %v8446
    %v8740 = vunpack.c.h.b16 %v8446
    %v8741 = vunpack.c.l.b16 %v8447
    %v8742 = vunpack.c.h.b16 %v8447
    %v8743 = vunpack.c.l.b16 %v8448
    %v8744 = vunpack.c.h.b16 %v8448
    %v8745 = vunpack.c.l.b16 %v8449
    %v8746 = vunpack.c.h.b16 %v8449
    %v8747 = vunpack.c.l.b16 %v8450
    %v8748 = vunpack.c.h.b16 %v8450
    %v8749 = vunpack.c.l.b16 %v8451
    %v8750 = vunpack.c.h.b16 %v8451
    %v8751 = vunpack.c.l.b16 %v8452
    %v8752 = vunpack.c.h.b16 %v8452
    %v8753 = vunpack.c.l.b16 %v8453
    %v8754 = vunpack.c.h.b16 %v8453
    %v8755 = vunpack.c.l.b16 %v8454
    %v8756 = vunpack.c.h.b16 %v8454
    %v8757 = vunpack.c.l.b16 %v8455
    %v8758 = vunpack.c.h.b16 %v8455
    %v8759 = vunpack.c.l.b16 %v8456
    %v8760 = vunpack.c.h.b16 %v8456
    %v8761 = vunpack.c.l.b16 %v8457
    %v8762 = vunpack.c.h.b16 %v8457
    %v8763 = vunpack.c.l.b16 %v8458
    %v8764 = vunpack.c.h.b16 %v8458
    %v8765 = vunpack.c.l.b16 %v8459
    %v8766 = vunpack.c.h.b16 %v8459
    %v8767 = vunpack.c.l.b16 %v8460
    %v8768 = vunpack.c.h.b16 %v8460
    %v8769 = vunpack.c.l.b16 %v8461
    %v8770 = vunpack.c.h.b16 %v8461
    %v8771 = vunpack.c.l.b16 %v8462
    %v8772 = vunpack.c.h.b16 %v8462
    %v8773 = vunpack.c.l.b16 %v8463
    %v8774 = vunpack.c.h.b16 %v8463
    %v8775 = vunpack.c.l.b16 %v8464
    %v8776 = vunpack.c.h.b16 %v8464
    %v8777 = vunpack.c.l.b16 %v8465
    %v8778 = vunpack.c.h.b16 %v8465
    %v8779 = vunpack.c.l.b16 %v8466
    %v8780 = vunpack.c.h.b16 %v8466
    %v8781 = vunpack.c.l.b16 %v8467
    %v8782 = vunpack.c.h.b16 %v8467
    %v8783 = vunpack.c.l.b16 %v8468
    %v8784 = vunpack.c.h.b16 %v8468
    %v8785 = vunpack.c.l.b16 %v8469
    %v8786 = vunpack.c.h.b16 %v8469
    %v8787 = vunpack.c.l.b16 %v8470
    %v8788 = vunpack.c.h.b16 %v8470
    %v8789 = vunpack.c.l.b16 %v8471
    %v8790 = vunpack.c.h.b16 %v8471
    %v8791 = vunpack.c.l.b16 %v8472
    %v8792 = vunpack.c.h.b16 %v8472
    %v8793 = vunpack.c.l.b16 %v8473
    %v8794 = vunpack.c.h.b16 %v8473
    %v8795 = vunpack.c.l.b16 %v8474
    %v8796 = vunpack.c.h.b16 %v8474
    %v8797 = vunpack.c.l.b16 %v8475
    %v8798 = vunpack.c.h.b16 %v8475
    %v8799 = vunpack.c.l.b16 %v8476
    %v8800 = vunpack.c.h.b16 %v8476
    %v8801 = vunpack.c.l.b16 %v8477
    %v8802 = vunpack.c.h.b16 %v8477
    %v8803 = vunpack.c.l.b16 %v8478
    %v8804 = vunpack.c.h.b16 %v8478
    %v8805 = vunpack.c.l.b16 %v8479
    %v8806 = vunpack.c.h.b16 %v8479
    %v8807 = vunpack.c.l.b16 %v8480
    %v8808 = vunpack.c.h.b16 %v8480
    %v8809 = vunpack.c.l.b16 %v8481
    %v8810 = vunpack.c.h.b16 %v8481
    %v8811 = vunpack.c.l.b16 %v8482
    %v8812 = vunpack.c.h.b16 %v8482
    %v8813 = vunpack.c.l.b16 %v8483
    %v8814 = vunpack.c.h.b16 %v8483
    %v8815 = vunpack.c.l.b16 %v8484
    %v8816 = vunpack.c.h.b16 %v8484
    %v8817 = vunpack.c.l.b16 %v8485
    %v8818 = vunpack.c.h.b16 %v8485
    %v8819 = vunpack.c.l.b16 %v8486
    %v8820 = vunpack.c.h.b16 %v8486
    %v8821 = vunpack.c.l.b16 %v8487
    %v8822 = vunpack.c.h.b16 %v8487
    %v8823 = vunpack.c.l.b16 %v8488
    %v8824 = vunpack.c.h.b16 %v8488
    %v8825 = vunpack.c.l.b16 %v8489
    %v8826 = vunpack.c.h.b16 %v8489
    %v8827 = vunpack.c.l.b16 %v8490
    %v8828 = vunpack.c.h.b16 %v8490
    %v8829 = vunpack.c.l.b16 %v8491
    %v8830 = vunpack.c.h.b16 %v8491
    %v8831 = vunpack.c.l.b16 %v8492
    %v8832 = vunpack.c.h.b16 %v8492
    %v8833 = vunpack.c.l.b16 %v8493
    %v8834 = vunpack.c.h.b16 %v8493
    %v8835 = vunpack.c.l.b16 %v8494
    %v8836 = vunpack.c.h.b16 %v8494
    %v8837 = vunpack.c.l.b16 %v8495
    %v8838 = vunpack.c.h.b16 %v8495
    %v8839 = vunpack.c.l.b16 %v8496
    %v8840 = vunpack.c.h.b16 %v8496
    %v8841 = vunpack.c.l.b16 %v8497
    %v8842 = vunpack.c.h.b16 %v8497
    %v8843 = vunpack.c.l.b16 %v8498
    %v8844 = vunpack.c.h.b16 %v8498
    %v8845 = vunpack.c.l.b16 %v8499
    %v8846 = vunpack.c.h.b16 %v8499
    %v8847 = vunpack.c.l.b16 %v8500
    %v8848 = vunpack.c.h.b16 %v8500
    %v8849 = vunpack.c.l.b16 %v8501
    %v8850 = vunpack.c.h.b16 %v8501
    %v8851 = vunpack.c.l.b16 %v8502
    %v8852 = vunpack.c.h.b16 %v8502
    %v8853 = vunpack.c.l.b16 %v8503
    %v8854 = vunpack.c.h.b16 %v8503
    %v8855 = vunpack.c.l.b16 %v8504
    %v8856 = vunpack.c.h.b16 %v8504
    %v8857 = vunpack.c.l.b16 %v8505
    %v8858 = vunpack.c.h.b16 %v8505
    %v8859 = vunpack.c.l.b16 %v8506
    %v8860 = vunpack.c.h.b16 %v8506
    %v8861 = vunpack.c.l.b16 %v8507
    %v8862 = vunpack.c.h.b16 %v8507
    %v8863 = vunpack.c.l.b16 %v8508
    %v8864 = vunpack.c.h.b16 %v8508
    %v8865 = vunpack.c.l.b16 %v8509
    %v8866 = vunpack.c.h.b16 %v8509
    %v8867 = vunpack.c.l.b16 %v8510
    %v8868 = vunpack.c.h.b16 %v8510
    %v8869 = vunpack.c.l.b16 %v8511
    %v8870 = vunpack.c.h.b16 %v8511
    %v8871 = vunpack.c.l.b16 %v8512
    %v8872 = vunpack.c.h.b16 %v8512
    %v8873 = vunpack.c.l.b16 %v8513
    %v8874 = vunpack.c.h.b16 %v8513
    %v8875 = vunpack.c.l.b16 %v8514
    %v8876 = vunpack.c.h.b16 %v8514
    %v8877 = vunpack.c.l.b16 %v8515
    %v8878 = vunpack.c.h.b16 %v8515
    %v8879 = vunpack.c.l.b16 %v8516
    %v8880 = vunpack.c.h.b16 %v8516
    %v8881 = vunpack.c.l.b16 %v8517
    %v8882 = vunpack.c.h.b16 %v8517
    %v8883 = vunpack.c.l.b16 %v8518
    %v8884 = vunpack.c.h.b16 %v8518
    %v8885 = vunpack.c.l.b16 %v8519
    %v8886 = vunpack.c.h.b16 %v8519
    %v8887 = vunpack.c.l.b16 %v8520
    %v8888 = vunpack.c.h.b16 %v8520
    %v8889 = vunpack.c.l.b16 %v8521
    %v8890 = vunpack.c.h.b16 %v8521
    %v8891 = vunpack.c.l.b16 %v8522
    %v8892 = vunpack.c.h.b16 %v8522
    %v8893 = vunpack.c.l.b16 %v8523
    %v8894 = vunpack.c.h.b16 %v8523
    %v8895 = vunpack.c.l.b16 %v8524
    %v8896 = vunpack.c.h.b16 %v8524
    %v8897 = vunpack.c.l.b16 %v8525
    %v8898 = vunpack.c.h.b16 %v8525
    %v8899 = vunpack.c.l.b16 %v8526
    %v8900 = vunpack.c.h.b16 %v8526
    %v8901 = vunpack.c.l.b16 %v8527
    %v8902 = vunpack.c.h.b16 %v8527
    %v8903 = vunpack.c.l.b16 %v8528
    %v8904 = vunpack.c.h.b16 %v8528
    %v8905 = vunpack.c.l.b16 %v8529
    %v8906 = vunpack.c.h.b16 %v8529
    %v8907 = vunpack.c.l.b16 %v8530
    %v8908 = vunpack.c.h.b16 %v8530
    %v8909 = vunpack.c.l.b16 %v8531
    %v8910 = vunpack.c.h.b16 %v8531
    %v8911 = vunpack.c.l.b16 %v8532
    %v8912 = vunpack.c.h.b16 %v8532
    %v8913 = vunpack.c.l.b16 %v8533
    %v8914 = vunpack.c.h.b16 %v8533
    %v8915 = vunpack.c.l.b16 %v8534
    %v8916 = vunpack.c.h.b16 %v8534
    %v8917 = vunpack.c.l.b16 %v8535
    %v8918 = vunpack.c.h.b16 %v8535
    %v8919 = vunpack.c.l.b16 %v8536
    %v8920 = vunpack.c.h.b16 %v8536
    %v8921 = vunpack.c.l.b16 %v8537
    %v8922 = vunpack.c.h.b16 %v8537
    %v8923 = vunpack.c.l.b16 %v8538
    %v8924 = vunpack.c.h.b16 %v8538
    %v8925 = vunpack.c.l.b16 %v8539
    %v8926 = vunpack.c.h.b16 %v8539
    %v8927 = vunpack.c.l.b16 %v8540
    %v8928 = vunpack.c.h.b16 %v8540
    %v8929 = vunpack.c.l.b16 %v8541
    %v8930 = vunpack.c.h.b16 %v8541
    %v8931 = vunpack.c.l.b16 %v8542
    %v8932 = vunpack.c.h.b16 %v8542
    %v8933 = vunpack.c.l.b16 %v8543
    %v8934 = vunpack.c.h.b16 %v8543
    %v8935 = vunpack.c.l.b16 %v8544
    %v8936 = vunpack.c.h.b16 %v8544
    %v8937 = vunpack.c.l.b16 %v8545
    %v8938 = vunpack.c.h.b16 %v8545
    %v8939 = vunpack.c.l.b16 %v8546
    %v8940 = vunpack.c.h.b16 %v8546
    %v8941 = vunpack.c.l.b16 %v8547
    %v8942 = vunpack.c.h.b16 %v8547
    %v8943 = vunpack.c.l.b16 %v8548
    %v8944 = vunpack.c.h.b16 %v8548
    %v8945 = vunpack.c.l.b16 %v8549
    %v8946 = vunpack.c.h.b16 %v8549
    %v8947 = vunpack.c.l.b16 %v8550
    %v8948 = vunpack.c.h.b16 %v8550
    %v8949 = vunpack.c.l.b16 %v8551
    %v8950 = vunpack.c.h.b16 %v8551
    %v8951 = vunpack.c.l.b16 %v8552
    %v8952 = vunpack.c.h.b16 %v8552
    %v8953 = vunpack.c.l.b16 %v8553
    %v8954 = vunpack.c.h.b16 %v8553
    %v8955 = vunpack.c.l.b16 %v8554
    %v8956 = vunpack.c.h.b16 %v8554
    %v8957 = vunpack.c.l.b16 %v8555
    %v8958 = vunpack.c.h.b16 %v8555
    %v8959 = vunpack.c.l.b16 %v8556
    %v8960 = vunpack.c.h.b16 %v8556
    %v8961 = vunpack.c.l.b16 %v8557
    %v8962 = vunpack.c.h.b16 %v8557
    %v8963 = vunpack.c.l.b16 %v8558
    %v8964 = vunpack.c.h.b16 %v8558
    %v8965 = vunpack.c.l.b16 %v8559
    %v8966 = vunpack.c.h.b16 %v8559
    %v8967 = vpack.c.b16 %v8715, %v8711
    %v8968 = vpack.c.b16 %v8716, %v8712
    %v8969 = vpack.c.b16 %v8717, %v8713
    %v8970 = vpack.c.b16 %v8718, %v8714
    %v8971 = vpack.c.b16 %v8723, %v8719
    %v8972 = vpack.c.b16 %v8724, %v8720
    %v8973 = vpack.c.b16 %v8725, %v8721
    %v8974 = vpack.c.b16 %v8726, %v8722
    %v8975 = vpack.c.b16 %v8731, %v8727
    %v8976 = vpack.c.b16 %v8732, %v8728
    %v8977 = vpack.c.b16 %v8733, %v8729
    %v8978 = vpack.c.b16 %v8734, %v8730
    %v8979 = vpack.c.b16 %v8739, %v8735
    %v8980 = vpack.c.b16 %v8740, %v8736
    %v8981 = vpack.c.b16 %v8741, %v8737
    %v8982 = vpack.c.b16 %v8742, %v8738
    %v8983 = vpack.c.b16 %v8747, %v8743
    %v8984 = vpack.c.b16 %v8748, %v8744
    %v8985 = vpack.c.b16 %v8749, %v8745
    %v8986 = vpack.c.b16 %v8750, %v8746
    %v8987 = vpack.c.b16 %v8755, %v8751
    %v8988 = vpack.c.b16 %v8756, %v8752
    %v8989 = vpack.c.b16 %v8757, %v8753
    %v8990 = vpack.c.b16 %v8758, %v8754
    %v8991 = vpack.c.b16 %v8763, %v8759
    %v8992 = vpack.c.b16 %v8764, %v8760
    %v8993 = vpack.c.b16 %v8765, %v8761
    %v8994 = vpack.c.b16 %v8766, %v8762
    %v8995 = vpack.c.b16 %v8771, %v8767
    %v8996 = vpack.c.b16 %v8772, %v8768
    %v8997 = vpack.c.b16 %v8773, %v8769
    %v8998 = vpack.c.b16 %v8774, %v8770
    %v8999 = vpack.c.b16 %v8779, %v8775
    %v9000 = vpack.c.b16 %v8780, %v8776
    %v9001 = vpack.c.b16 %v8781, %v8777
    %v9002 = vpack.c.b16 %v8782, %v8778
    %v9003 = vpack.c.b16 %v8787, %v8783
    %v9004 = vpack.c.b16 %v8788, %v8784
    %v9005 = vpack.c.b16 %v8789, %v8785
    %v9006 = vpack.c.b16 %v8790, %v8786
    %v9007 = vpack.c.b16 %v8795, %v8791
    %v9008 = vpack.c.b16 %v8796, %v8792
    %v9009 = vpack.c.b16 %v8797, %v8793
    %v9010 = vpack.c.b16 %v8798, %v8794
    %v9011 = vpack.c.b16 %v8803, %v8799
    %v9012 = vpack.c.b16 %v8804, %v8800
    %v9013 = vpack.c.b16 %v8805, %v8801
    %v9014 = vpack.c.b16 %v8806, %v8802
    %v9015 = vpack.c.b16 %v8811, %v8807
    %v9016 = vpack.c.b16 %v8812, %v8808
    %v9017 = vpack.c.b16 %v8813, %v8809
    %v9018 = vpack.c.b16 %v8814, %v8810
    %v9019 = vpack.c.b16 %v8819, %v8815
    %v9020 = vpack.c.b16 %v8820, %v8816
    %v9021 = vpack.c.b16 %v8821, %v8817
    %v9022 = vpack.c.b16 %v8822, %v8818
    %v9023 = vpack.c.b16 %v8827, %v8823
    %v9024 = vpack.c.b16 %v8828, %v8824
    %v9025 = vpack.c.b16 %v8829, %v8825
    %v9026 = vpack.c.b16 %v8830, %v8826
    %v9027 = vpack.c.b16 %v8835, %v8831
    %v9028 = vpack.c.b16 %v8836, %v8832
    %v9029 = vpack.c.b16 %v8837, %v8833
    %v9030 = vpack.c.b16 %v8838, %v8834
    %v9031 = vpack.c.b16 %v8843, %v8839
    %v9032 = vpack.c.b16 %v8844, %v8840
    %v9033 = vpack.c.b16 %v8845, %v8841
    %v9034 = vpack.c.b16 %v8846, %v8842
    %v9035 = vpack.c.b16 %v8851, %v8847
    %v9036 = vpack.c.b16 %v8852, %v8848
    %v9037 = vpack.c.b16 %v8853, %v8849
    %v9038 = vpack.c.b16 %v8854, %v8850
    %v9039 = vpack.c.b16 %v8859, %v8855
    %v9040 = vpack.c.b16 %v8860, %v8856
    %v9041 = vpack.c.b16 %v8861, %v8857
    %v9042 = vpack.c.b16 %v8862, %v8858
    %v9043 = vpack.c.b16 %v8867, %v8863
    %v9044 = vpack.c.b16 %v8868, %v8864
    %v9045 = vpack.c.b16 %v8869, %v8865
    %v9046 = vpack.c.b16 %v8870, %v8866
    %v9047 = vpack.c.b16 %v8875, %v8871
    %v9048 = vpack.c.b16 %v8876, %v8872
    %v9049 = vpack.c.b16 %v8877, %v8873
    %v9050 = vpack.c.b16 %v8878, %v8874
    %v9051 = vpack.c.b16 %v8883, %v8879
    %v9052 = vpack.c.b16 %v8884, %v8880
    %v9053 = vpack.c.b16 %v8885, %v8881
    %v9054 = vpack.c.b16 %v8886, %v8882
    %v9055 = vpack.c.b16 %v8891, %v8887
    %v9056 = vpack.c.b16 %v8892, %v8888
    %v9057 = vpack.c.b16 %v8893, %v8889
    %v9058 = vpack.c.b16 %v8894, %v8890
    %v9059 = vpack.c.b16 %v8899, %v8895
    %v9060 = vpack.c.b16 %v8900, %v8896
    %v9061 = vpack.c.b16 %v8901, %v8897
    %v9062 = vpack.c.b16 %v8902, %v8898
    %v9063 = vpack.c.b16 %v8907, %v8903
    %v9064 = vpack.c.b16 %v8908, %v8904
    %v9065 = vpack.c.b16 %v8909, %v8905
    %v9066 = vpack.c.b16 %v8910, %v8906
    %v9067 = vpack.c.b16 %v8915, %v8911
    %v9068 = vpack.c.b16 %v8916, %v8912
    %v9069 = vpack.c.b16 %v8917, %v8913
    %v9070 = vpack.c.b16 %v8918, %v8914
    %v9071 = vpack.c.b16 %v8923, %v8919
    %v9072 = vpack.c.b16 %v8924, %v8920
    %v9073 = vpack.c.b16 %v8925, %v8921
    %v9074 = vpack.c.b16 %v8926, %v8922
    %v9075 = vpack.c.b16 %v8931, %v8927
    %v9076 = vpack.c.b16 %v8932, %v8928
    %v9077 = vpack.c.b16 %v8933, %v8929
    %v9078 = vpack.c.b16 %v8934, %v8930
    %v9079 = vpack.c.b16 %v8939, %v8935
    %v9080 = vpack.c.b16 %v8940, %v8936
    %v9081 = vpack.c.b16 %v8941, %v8937
    %v9082 = vpack.c.b16 %v8942, %v8938
    %v9083 = vpack.c.b16 %v8947, %v8943
    %v9084 = vpack.c.b16 %v8948, %v8944
    %v9085 = vpack.c.b16 %v8949, %v8945
    %v9086 = vpack.c.b16 %v8950, %v8946
    %v9087 = vpack.c.b16 %v8955, %v8951
    %v9088 = vpack.c.b16 %v8956, %v8952
    %v9089 = vpack.c.b16 %v8957, %v8953
    %v9090 = vpack.c.b16 %v8958, %v8954
    %v9091 = vpack.c.b16 %v8963, %v8959
    %v9092 = vpack.c.b16 %v8964, %v8960
    %v9093 = vpack.c.b16 %v8965, %v8961
    %v9094 = vpack.c.b16 %v8966, %v8962
    %9223 = vmatprep.subr.bf16.mxu0 %v8968
    %9224 = vmatpush1.bf16.msra.mxu0 %v8967
    %9225 = vmatprep.subr.bf16.mxu0 %v8972
    %9226 = vmatpush1.bf16.msra.mxu0 %v8971
    %9227 = vmatprep.subr.bf16.mxu0 %v8976
    %9228 = vmatpush1.bf16.msra.mxu0 %v8975
    %9229 = vmatprep.subr.bf16.mxu0 %v8980
    %9230 = vmatpush1.bf16.msra.mxu0 %v8979
    %9231 = vmatprep.subr.bf16.mxu0 %v8984
    %9232 = vmatpush1.bf16.msra.mxu0 %v8983
    %9233 = vmatprep.subr.bf16.mxu0 %v8988
    %9234 = vmatpush1.bf16.msra.mxu0 %v8987
    %9235 = vmatprep.subr.bf16.mxu0 %v8992
    %9236 = vmatpush1.bf16.msra.mxu0 %v8991
    %9237 = vmatprep.subr.bf16.mxu0 %v8996
    %9238 = vmatpush1.bf16.msra.mxu0 %v8995
    %9239 = vmatprep.subr.bf16.mxu0 %v9000
    %9240 = vmatpush1.bf16.msra.mxu0 %v8999
    %9241 = vmatprep.subr.bf16.mxu0 %v9004
    %9242 = vmatpush1.bf16.msra.mxu0 %v9003
    %9243 = vmatprep.subr.bf16.mxu0 %v9008
    %9244 = vmatpush1.bf16.msra.mxu0 %v9007
    %9245 = vmatprep.subr.bf16.mxu0 %v9012
    %9246 = vmatpush1.bf16.msra.mxu0 %v9011
    %9247 = vmatprep.subr.bf16.mxu0 %v9016
    %9248 = vmatpush1.bf16.msra.mxu0 %v9015
    %9249 = vmatprep.subr.bf16.mxu0 %v9020
    %9250 = vmatpush1.bf16.msra.mxu0 %v9019
    %9251 = vmatprep.subr.bf16.mxu0 %v9024
    %9252 = vmatpush1.bf16.msra.mxu0 %v9023
    %9253 = vmatprep.subr.bf16.mxu0 %v9028
    %9254 = vmatpush1.bf16.msra.mxu0 %v9027
    %9255 = vmatprep.mubr.bf16.mxu0 %v8428
    %9256 = vmatmul.mubr.bf16.gmra.mrb[0].mxu0 %v8427
    %v9257 = vpop.f32.mrb[0].mxu0
    %v9258 = vadd.f32 %v8566, %v9257
    %v9259 = vpop.f32.mrb[0].mxu0
    %v9260 = vadd.f32 %v8570, %v9259
    %v9261 = vpop.f32.mrb[0].mxu0
    %v9262 = vadd.f32 %v8566, %v9261
    %v9263 = vpop.f32.mrb[0].mxu0
    %v9264 = vadd.f32 %v8570, %v9263
    %9265 = vdwg.mxu0
    %9266 = vmatprep.subr.bf16.mxu0 %v9032
    %9267 = vmatpush1.bf16.msra.mxu0 %v9031
    %9268 = vmatprep.subr.bf16.mxu0 %v9036
    %9269 = vmatpush1.bf16.msra.mxu0 %v9035
    %9270 = vmatprep.subr.bf16.mxu0 %v9040
    %9271 = vmatpush1.bf16.msra.mxu0 %v9039
    %9272 = vmatprep.subr.bf16.mxu0 %v9044
    %9273 = vmatpush1.bf16.msra.mxu0 %v9043
    %9274 = vmatprep.subr.bf16.mxu0 %v9048
    %9275 = vmatpush1.bf16.msra.mxu0 %v9047
    %9276 = vmatprep.subr.bf16.mxu0 %v9052
    %9277 = vmatpush1.bf16.msra.mxu0 %v9051
    %9278 = vmatprep.subr.bf16.mxu0 %v9056
    %9279 = vmatpush1.bf16.msra.mxu0 %v9055
    %9280 = vmatprep.subr.bf16.mxu0 %v9060
    %9281 = vmatpush1.bf16.msra.mxu0 %v9059
    %9282 = vmatprep.subr.bf16.mxu0 %v9064
    %9283 = vmatpush1.bf16.msra.mxu0 %v9063
    %9284 = vmatprep.subr.bf16.mxu0 %v9068
    %9285 = vmatpush1.bf16.msra.mxu0 %v9067
    %9286 = vmatprep.subr.bf16.mxu0 %v9072
    %9287 = vmatpush1.bf16.msra.mxu0 %v9071
    %9288 = vmatprep.subr.bf16.mxu0 %v9076
    %9289 = vmatpush1.bf16.msra.mxu0 %v9075
    %9290 = vmatprep.subr.bf16.mxu0 %v9080
    %9291 = vmatpush1.bf16.msra.mxu0 %v9079
    %9292 = vmatprep.subr.bf16.mxu0 %v9084
    %9293 = vmatpush1.bf16.msra.mxu0 %v9083
    %9294 = vmatprep.subr.bf16.mxu0 %v9088
    %9295 = vmatpush1.bf16.msra.mxu0 %v9087
    %9296 = vmatprep.subr.bf16.mxu0 %v9092
    %9297 = vmatpush1.bf16.msra.mxu0 %v9091
    %9298 = vmatprep.mubr.bf16.mxu0 %v8430
    %9299 = vmatmul.mubr.bf16.gmra.mrb[0].mxu0 %v8429
    %v9300 = vpop.f32.mrb[0].mxu0
    %v9301 = vadd.f32 %v9258, %v9300
    %v9302 = vpop.f32.mrb[0].mxu0
    %v9303 = vadd.f32 %v9260, %v9302
    %v9304 = vpop.f32.mrb[0].mxu0
    %v9305 = vadd.f32 %v9262, %v9304
    %v9306 = vpop.f32.mrb[0].mxu0
    %v9307 = vadd.f32 %v9264, %v9306
    %9308 = vdwg.mxu0
    %9309 = vmatprep.subr.bf16.mxu0 %v8970
    %9310 = vmatpush1.bf16.msra.mxu0 %v8969
    %9311 = vmatprep.subr.bf16.mxu0 %v8974
    %9312 = vmatpush1.bf16.msra.mxu0 %v8973
    %9313 = vmatprep.subr.bf16.mxu0 %v8978
    %9314 = vmatpush1.bf16.msra.mxu0 %v8977
    %9315 = vmatprep.subr.bf16.mxu0 %v8982
    %9316 = vmatpush1.bf16.msra.mxu0 %v8981
    %9317 = vmatprep.subr.bf16.mxu0 %v8986
    %9318 = vmatpush1.bf16.msra.mxu0 %v8985
    %9319 = vmatprep.subr.bf16.mxu0 %v8990
    %9320 = vmatpush1.bf16.msra.mxu0 %v8989
    %9321 = vmatprep.subr.bf16.mxu0 %v8994
    %9322 = vmatpush1.bf16.msra.mxu0 %v8993
    %9323 = vmatprep.subr.bf16.mxu0 %v8998
    %9324 = vmatpush1.bf16.msra.mxu0 %v8997
    %9325 = vmatprep.subr.bf16.mxu0 %v9002
    %9326 = vmatpush1.bf16.msra.mxu0 %v9001
    %9327 = vmatprep.subr.bf16.mxu0 %v9006
    %9328 = vmatpush1.bf16.msra.mxu0 %v9005
    %9329 = vmatprep.subr.bf16.mxu0 %v9010
    %9330 = vmatpush1.bf16.msra.mxu0 %v9009
    %9331 = vmatprep.subr.bf16.mxu0 %v9014
    %9332 = vmatpush1.bf16.msra.mxu0 %v9013
    %9333 = vmatprep.subr.bf16.mxu0 %v9018
    %9334 = vmatpush1.bf16.msra.mxu0 %v9017
    %9335 = vmatprep.subr.bf16.mxu0 %v9022
    %9336 = vmatpush1.bf16.msra.mxu0 %v9021
    %9337 = vmatprep.subr.bf16.mxu0 %v9026
    %9338 = vmatpush1.bf16.msra.mxu0 %v9025
    %9339 = vmatprep.subr.bf16.mxu0 %v9030
    %9340 = vmatpush1.bf16.msra.mxu0 %v9029
    %9341 = vmatprep.mubr.bf16.mxu0 %v8428
    %9342 = vmatmul.mubr.bf16.gmra.mrb[0].mxu0 %v8427
    %v9343 = vpop.f32.mrb[0].mxu0
    %v9344 = vadd.f32 %v8574, %v9343
    %v9345 = vpop.f32.mrb[0].mxu0
    %v9346 = vadd.f32 %v8578, %v9345
    %v9347 = vpop.f32.mrb[0].mxu0
    %v9348 = vadd.f32 %v8574, %v9347
    %v9349 = vpop.f32.mrb[0].mxu0
    %v9350 = vadd.f32 %v8578, %v9349
    %9351 = vdwg.mxu0
    %9352 = vmatprep.subr.bf16.mxu0 %v9034
    %9353 = vmatpush1.bf16.msra.mxu0 %v9033
    %9354 = vmatprep.subr.bf16.mxu0 %v9038
    %9355 = vmatpush1.bf16.msra.mxu0 %v9037
    %9356 = vmatprep.subr.bf16.mxu0 %v9042
    %9357 = vmatpush1.bf16.msra.mxu0 %v9041
    %9358 = vmatprep.subr.bf16.mxu0 %v9046
    %9359 = vmatpush1.bf16.msra.mxu0 %v9045
    %9360 = vmatprep.subr.bf16.mxu0 %v9050
    %9361 = vmatpush1.bf16.msra.mxu0 %v9049
    %9362 = vmatprep.subr.bf16.mxu0 %v9054
    %9363 = vmatpush1.bf16.msra.mxu0 %v9053
    %9364 = vmatprep.subr.bf16.mxu0 %v9058
    %9365 = vmatpush1.bf16.msra.mxu0 %v9057
    %9366 = vmatprep.subr.bf16.mxu0 %v9062
    %9367 = vmatpush1.bf16.msra.mxu0 %v9061
    %9368 = vmatprep.subr.bf16.mxu0 %v9066
    %9369 = vmatpush1.bf16.msra.mxu0 %v9065
    %9370 = vmatprep.subr.bf16.mxu0 %v9070
    %9371 = vmatpush1.bf16.msra.mxu0 %v9069
    %9372 = vmatprep.subr.bf16.mxu0 %v9074
    %9373 = vmatpush1.bf16.msra.mxu0 %v9073
    %9374 = vmatprep.subr.bf16.mxu0 %v9078
    %9375 = vmatpush1.bf16.msra.mxu0 %v9077
    %9376 = vmatprep.subr.bf16.mxu0 %v9082
    %9377 = vmatpush1.bf16.msra.mxu0 %v9081
    %9378 = vmatprep.subr.bf16.mxu0 %v9086
    %9379 = vmatpush1.bf16.msra.mxu0 %v9085
    %9380 = vmatprep.subr.bf16.mxu0 %v9090
    %9381 = vmatpush1.bf16.msra.mxu0 %v9089
    %9382 = vmatprep.subr.bf16.mxu0 %v9094
    %9383 = vmatpush1.bf16.msra.mxu0 %v9093
    %9384 = vmatprep.mubr.bf16.mxu0 %v8430
    %9385 = vmatmul.mubr.bf16.gmra.mrb[0].mxu0 %v8429
    %v9386 = vpop.f32.mrb[0].mxu0
    %v9387 = vadd.f32 %v9344, %v9386
    %v9388 = vpop.f32.mrb[0].mxu0
    %v9389 = vadd.f32 %v9346, %v9388
    %v9390 = vpop.f32.mrb[0].mxu0
    %v9391 = vadd.f32 %v9348, %v9390
    %v9392 = vpop.f32.mrb[0].mxu0
    %v9393 = vadd.f32 %v9350, %v9392
    %9394 = vdwg.mxu0
    %v9395 = vmax.f32 %v9301, 0.0
    %v9396 = vmax.f32 %v9303, 0.0
    %v9397 = vmax.f32 %v9387, 0.0
    %v9398 = vmax.f32 %v9389, 0.0
    %v9399 = vmax.f32 %v9305, 0.0
    %v9400 = vmax.f32 %v9307, 0.0
    %v9401 = vmax.f32 %v9391, 0.0
    %v9402 = vmax.f32 %v9393, 0.0
    %v9403 = vpack.c.bf16 %v9399, %v9395
    %v9404 = vpack.c.bf16 %v9400, %v9396
    %v9405 = vpack.c.bf16 %v9401, %v9397
    %v9406 = vpack.c.bf16 %v9402, %v9398
    %v9407 = vunpack.c.l.bf16 %v9403
    %v9408 = vunpack.c.l.bf16 %v9404
    %v9409 = vunpack.c.l.bf16 %v9405
    %v9410 = vunpack.c.l.bf16 %v9406
    %v9411 = vunpack.c.h.bf16 %v9403
    %v9412 = vunpack.c.h.bf16 %v9404
    %v9413 = vunpack.c.h.bf16 %v9405
    %v9414 = vunpack.c.h.bf16 %v9406
    %v9415 = vld [vmem:[#allocation19] sm:$0xf]
    %v9417 = vlaneseq
    %v9418 = vshrl.u32 %v9417, 7
    %v9419 = vsub.s32 0, %v9418
    %v9420 = vrot.slane %v9415, %v9419
    %v9421 = vlaneseq
    %v9422 = vshrl.u32 %v9421, 7
    %v9423 = vsub.s32 1, %v9422
    %v9424 = vrot.slane %v9415, %v9423
    %v9425 = vlaneseq
    %v9426 = vshrl.u32 %v9425, 7
    %v9427 = vsub.s32 2, %v9426
    %v9428 = vrot.slane %v9415, %v9427
    %v9429 = vlaneseq
    %v9430 = vshrl.u32 %v9429, 7
    %v9431 = vsub.s32 3, %v9430
    %v9432 = vrot.slane %v9415, %v9431
    %v9437 = vmul.f32 %v9407, %v9420
    %v9438 = vmul.f32 %v9408, %v9424
    %v9439 = vmul.f32 %v9409, %v9428
    %v9440 = vmul.f32 %v9410, %v9432
    %v9441 = vmul.f32 %v9411, %v9420
    %v9442 = vmul.f32 %v9412, %v9424
    %v9443 = vmul.f32 %v9413, %v9428
    %v9444 = vmul.f32 %v9414, %v9432
    %v9445 = vadd.f32 %v9437, %v9438
    %v9446 = vadd.f32 %v9445, %v9439
    %v9447 = vadd.f32 %v9446, %v9440
    %9448 = vadd.xlane.f32.xlu0 %v9447
    %v9449 = vpop.xlane.xlu0 %9448
    %v9450 = vadd.f32 %v9441, %v9442
    %v9451 = vadd.f32 %v9450, %v9443
    %v9452 = vadd.f32 %v9451, %v9444
    %9453 = vadd.xlane.f32.xlu0 %v9452
    %v9454 = vpop.xlane.xlu0 %9453
    %v9455 = vld [vmem:[#allocation2] sm:$0x1]
    %v9457 = vlaneseq
    %v9458 = vshrl.u32 %v9457, 7
    %v9459 = vsub.s32 0, %v9458
    %v9460 = vrot.slane %v9455, %v9459
    %v9462 = vadd.f32 %v9449, %v9460
    %v9463 = vadd.f32 %v9454, %v9460
    %vm9464 = vcmask 7168
    %9465 = vst.msk [vmem:[%s13] sm:$0xff] %vm9464, %v9462
    %9466 = vst.msk [vmem:[%s13 + $0x8] sm:$0xff] %vm9464, %v9463
    // Predicated region
    $region98: #{tpu_custom_call.1} parent=1 // pred_check
      _
    $region99: #{tpu_custom_call.1} parent=1 // pred_check_branch
      %9468 = sbr.rel (0) target = $region101
    $region100: #{tpu_custom_call.1} parent=1 // pred_region
      _
    $region101: #{tpu_custom_call.1} parent=1 // pred_fallthru
      _
    // Predicated region
    $region102: #{tpu_custom_call.1} parent=1 // pred_check
      _
    $region103: #{tpu_custom_call.1} parent=1 // pred_check_branch
      %9470 = sbr.rel (0) target = $region105
    $region104: #{tpu_custom_call.1} parent=1 // pred_region
      _
    $region105: #{tpu_custom_call.1} parent=1 // pred_fallthru
      _
    %9471 = vsyncpa [#allocation4], 1
    %9472 = vsyncpa [#allocation6], 1
    %9473 = vsyncpa [#allocation9], 1
    %9474 = vsyncpa [#allocation12], 1
    %9475 = vsyncpa [#allocation15], 1
    %9476 = vsyncpa [#allocation18], 1

</llo_original>
